<compile_context>
chip_gen: v7x
topology: tpu7x:2x2x1
jax: 0.10.0
libtpu: 0.0.40
codegen_flags: <defaults>
</compile_context>

<pallas_src>
import functools
import math

import numpy as np

import jax
import jax.numpy as jnp
from jax.experimental import pallas as pl
from jax.experimental.pallas import tpu as pltpu


MXU_DTYPE = jnp.bfloat16              # MXU operand / activation-handoff dtype
VMEM_LIMIT = 48 * 1024 * 1024         # scoped VMEM budget (v7x has 64 MiB per TC)
MAX_ROW_TILE = 512                    # row tile for the fused linear kernels


def getHW(size):
    if isinstance(size, int):
        return (size, size)
    return tuple(size)


def _row_tile(M, max_tile=MAX_ROW_TILE):
    """Row tile for the linear kernels: as large as possible, but split into >=2
    grid steps whenever we can so both v7x TensorCores get work."""
    if M <= max_tile:
        if M >= 32 and M % 16 == 0:
            return M // 2                    # two grid steps
        return M
    for t in range(max_tile, 7, -8):
        if M % t == 0:
            return t
    return max_tile                          # non-divisible edge block is masked


def _pick_window_block(WT, B, cap=32):
    """Windows per attention grid step (divides WT; keeps >=2 steps when B == 1)."""
    cap = min(cap, WT)
    if B == 1 and WT > 1:
        cap = min(cap, WT // 2)
    for w in range(cap, 0, -1):
        if WT % w == 0:
            return w
    return 1


# ----------------------------- in-kernel math helpers -----------------------------

def _gelu_tanh(x):
    # tanh-approximate GELU: the tanh runs on the (otherwise idle) EUP slot.
    return 0.5 * x * (1.0 + jnp.tanh(0.7978845608028654 * (x + 0.044715 * x * x * x)))


# ----------------------------- Pallas kernels -----------------------------

def _ln_matmul_kernel(x_ref, g_ref, b_ref, w_ref, bias_ref, o_ref, *, eps, gelu):
    # fused: LayerNorm (f32 stats) -> bf16 MXU matmul (f32 acc) -> +bias [-> GELU]
    x = x_ref[...].astype(jnp.float32)
    mu = jnp.mean(x, axis=-1, keepdims=True)
    xc = x - mu
    var = jnp.mean(xc * xc, axis=-1, keepdims=True)
    xn = xc * jax.lax.rsqrt(var + eps)
    xn = xn * g_ref[...] + b_ref[...]
    acc = jnp.dot(xn.astype(MXU_DTYPE), w_ref[...],
                  preferred_element_type=jnp.float32)
    acc = acc + bias_ref[...]
    if gelu:
        acc = _gelu_tanh(acc)
    o_ref[...] = acc.astype(o_ref.dtype)


def _matmul_residual_kernel(x_ref, w_ref, bias_ref, r_ref, o_ref):
    # fused: bf16 MXU matmul (f32 acc) -> +bias -> +residual (f32 stream)
    acc = jnp.dot(x_ref[...].astype(MXU_DTYPE), w_ref[...],
                  preferred_element_type=jnp.float32)
    acc = acc + bias_ref[...] + r_ref[...].astype(jnp.float32)
    o_ref[...] = acc.astype(o_ref.dtype)


def _window_attn_kernel(*refs, nh, scale, has_mask):
    # qkv_ref: (1, Wb, 3*nh, WD, hd) bf16 (head-major slabs)
    # bias_ref: (nh, WD, WD) f32 (resident)   mask_ref: (Wb, WD, WD) f32 (optional)
    # o_ref:   (1, Wb, nh, WD, hd) bf16
    if has_mask:
        qkv_ref, bias_ref, mask_ref, o_ref = refs
    else:
        qkv_ref, bias_ref, o_ref = refs
        mask_ref = None
    qkv = qkv_ref[0]                               # (Wb, 3nh, WD, hd)
    Wb, _, WD, hd = qkv.shape
    # head slabs on leading axes -> no lane slicing, no lane concat
    q = qkv[:, 0:nh].reshape(Wb * nh, WD, hd)
    k = qkv[:, nh:2 * nh].reshape(Wb * nh, WD, hd)
    v = qkv[:, 2 * nh:3 * nh].reshape(Wb * nh, WD, hd)

    # one batched dot_general over the (Wb*nh) batch
    s = jnp.einsum("bqd,bkd->bqk", q, k,
                   preferred_element_type=jnp.float32) * scale
    s = s.reshape(Wb, nh, WD, WD)
    s = s + bias_ref[...][None]                    # rel-pos bias (resident)
    if has_mask:
        s = s + mask_ref[...][:, None]             # shift mask (per window block)

    s = s - jnp.max(s, axis=-1, keepdims=True)
    p = jnp.exp(s)
    p = p * pl.reciprocal(jnp.sum(p, axis=-1, keepdims=True), approx=True)

    p = p.reshape(Wb * nh, WD, WD).astype(MXU_DTYPE)
    o = jnp.einsum("bqk,bkd->bqd", p, v, preferred_element_type=jnp.float32)
    o_ref[0] = o.reshape(Wb, nh, WD, hd).astype(o_ref.dtype)


def _conv3x3_residual_kernel(xpad_ref, w_ref, b_ref, res_ref, o_ref, *, H, W):
    # fused 3x3 conv (halo input) + bias + block residual.
    # xpad_ref: (1, H+2, W+2, D) bf16, w_ref: (9, D, D) bf16,
    # b_ref: (1, D) f32, res_ref/o_ref: (1, H, W, D) f32.
    D = w_ref.shape[-1]
    xp = xpad_ref[0]                               # (H+2, W+2, D)
    acc = jnp.zeros((H * W, D), jnp.float32)
    for t in range(9):                             # static unroll over the 9 taps
        dy, dx = divmod(t, 3)
        patch = xp[dy:dy + H, dx:dx + W, :].reshape(H * W, D)
        acc = acc + jnp.dot(patch, w_ref[t], preferred_element_type=jnp.float32)
    acc = acc + b_ref[...] + res_ref[0].reshape(H * W, D).astype(jnp.float32)
    o_ref[0] = acc.reshape(H, W, D).astype(o_ref.dtype)


# ----------------------------- Pallas wrappers -----------------------------

def ln_linear_pallas(x2d, gamma, beta, w, b, *, gelu=False, eps=1e-5, out_dtype=None):
    M, D = x2d.shape
    Dout = w.shape[1]
    out_dtype = x2d.dtype if out_dtype is None else out_dtype
    tm = _row_tile(M)
    grid = (pl.cdiv(M, tm),)
    return pl.pallas_call(
        functools.partial(_ln_matmul_kernel, eps=eps, gelu=gelu),
        out_shape=jax.ShapeDtypeStruct((M, Dout), out_dtype),
        grid=grid,
        in_specs=[pl.BlockSpec((tm, D), lambda i: (i, 0)),
                  pl.BlockSpec((1, D), lambda i: (0, 0)),
                  pl.BlockSpec((1, D), lambda i: (0, 0)),
                  pl.BlockSpec((D, Dout), lambda i: (0, 0)),      # resident weight (bf16)
                  pl.BlockSpec((1, Dout), lambda i: (0, 0))],
        out_specs=pl.BlockSpec((tm, Dout), lambda i: (i, 0)),
        compiler_params=pltpu.CompilerParams(
            dimension_semantics=("parallel",),
            vmem_limit_bytes=VMEM_LIMIT),
    )(x2d, gamma.reshape(1, D), beta.reshape(1, D), w, b.reshape(1, Dout))


def linear_residual_pallas(x2d, w, b, res2d):
    M, K = x2d.shape
    Dout = w.shape[1]
    tm = _row_tile(M)
    grid = (pl.cdiv(M, tm),)
    return pl.pallas_call(
        _matmul_residual_kernel,
        out_shape=jax.ShapeDtypeStruct((M, Dout), res2d.dtype),
        grid=grid,
        in_specs=[pl.BlockSpec((tm, K), lambda i: (i, 0)),
                  pl.BlockSpec((K, Dout), lambda i: (0, 0)),      # resident weight (bf16)
                  pl.BlockSpec((1, Dout), lambda i: (0, 0)),
                  pl.BlockSpec((tm, Dout), lambda i: (i, 0))],
        out_specs=pl.BlockSpec((tm, Dout), lambda i: (i, 0)),
        compiler_params=pltpu.CompilerParams(
            dimension_semantics=("parallel",),
            vmem_limit_bytes=VMEM_LIMIT),
    )(x2d, w, b.reshape(1, Dout), res2d)


def window_attention_pallas(qkv, bias, mask, num_heads, head_dim):
    # qkv: (B, WT, 3*nh, WD, hd) bf16   bias: (nh, WD, WD) f32
    # mask: (WT, WD, WD) f32 or None    -> out: (B, WT, nh, WD, hd) bf16
    B, WT, threenh, WD, hd = qkv.shape
    nh = num_heads
    Wb = _pick_window_block(WT, B)
    grid = (B, WT // Wb)
    has_mask = mask is not None
    kern = functools.partial(_window_attn_kernel, nh=nh,
                             scale=1.0 / math.sqrt(head_dim), has_mask=has_mask)
    in_specs = [pl.BlockSpec((1, Wb, threenh, WD, hd), lambda b, j: (b, j, 0, 0, 0)),
                pl.BlockSpec((nh, WD, WD), lambda b, j: (0, 0, 0))]   # resident bias
    args = [qkv, bias]
    if has_mask:
        in_specs.append(pl.BlockSpec((Wb, WD, WD), lambda b, j: (j, 0, 0)))
        args.append(mask)
    return pl.pallas_call(
        kern,
        out_shape=jax.ShapeDtypeStruct((B, WT, nh, WD, hd), jnp.bfloat16),
        grid=grid,
        in_specs=in_specs,
        out_specs=pl.BlockSpec((1, Wb, nh, WD, hd), lambda b, j: (b, j, 0, 0, 0)),
        compiler_params=pltpu.CompilerParams(
            dimension_semantics=("parallel", "parallel"),
            vmem_limit_bytes=VMEM_LIMIT),
    )(*args)


def conv3x3_residual_pallas(xpad, w9, b, res):
    # xpad: (B, H+2, W+2, D) bf16, w9: (9, D, D) bf16, b: (D,) f32, res: (B, H, W, D) f32
    # TODO(synk): for large resolutions this should row-tile with manual halo DMA
    # (overlapping blocks); one full image per grid step is fine at SwinIR scales.
    B, Hp, Wp, D = xpad.shape
    H, W = Hp - 2, Wp - 2
    kern = functools.partial(_conv3x3_residual_kernel, H=H, W=W)
    return pl.pallas_call(
        kern,
        out_shape=jax.ShapeDtypeStruct((B, H, W, D), res.dtype),
        grid=(B,),
        in_specs=[pl.BlockSpec((1, Hp, Wp, D), lambda b: (b, 0, 0, 0)),
                  pl.BlockSpec((9, D, D), lambda b: (0, 0, 0)),   # resident weight
                  pl.BlockSpec((1, D), lambda b: (0, 0)),
                  pl.BlockSpec((1, H, W, D), lambda b: (b, 0, 0, 0))],
        out_specs=pl.BlockSpec((1, H, W, D), lambda b: (b, 0, 0, 0)),
        compiler_params=pltpu.CompilerParams(
            dimension_semantics=("parallel",),
            vmem_limit_bytes=VMEM_LIMIT),
    )(xpad, w9, b.reshape(1, D), res)


# ----------------------------- static helpers -----------------------------

def relative_position_index(window_size):
    wh, ww = window_size
    coords = np.stack(np.meshgrid(np.arange(wh), np.arange(ww), indexing="ij"))
    cf = coords.reshape(2, -1)
    rc = cf[:, :, None] - cf[:, None, :]
    rc = rc.transpose(1, 2, 0).copy()
    rc[:, :, 0] += wh - 1
    rc[:, :, 1] += ww - 1
    rc[:, :, 0] *= 2 * ww - 1
    return rc.sum(-1)                               # (WD, WD) ints


def make_swin_mask(image_resolution, window_size, shift_size):
    Hs, Ws = image_resolution
    wh, ww = window_size
    sh, sw = shift_size
    image_mask = np.zeros((1, Hs, Ws, 1), np.float32)
    h_slices = (slice(0, -wh), slice(-wh, -sh), slice(-sh, None))
    w_slices = (slice(0, -ww), slice(-ww, -sw), slice(-sw, None))
    cnt = 0
    for hs in h_slices:
        for ws_ in w_slices:
            image_mask[:, hs, ws_, :] = cnt
            cnt += 1
    WD = wh * ww
    WT = (Hs // wh) * (Ws // ww)
    m = (image_mask.reshape(1, Hs // wh, wh, Ws // ww, ww, 1)
         .transpose(0, 1, 3, 2, 4, 5).reshape(1, WT, WD))
    diff = m[:, :, None, :] - m[:, :, :, None]
    return np.where(diff != 0, np.float32(-100.0), np.float32(0.0))[0]   # (WT, WD, WD)


def build_full_qkv(qkv_w, qkv_b, num_heads):
    """Per-head shared (hd, 3hd) qkv -> block-diagonal (D, 3D) so qkv is one
    lane-dense MXU matmul (columns ordered (q|k|v, head, hd))."""
    hd = qkv_w.shape[0]
    eye = jnp.eye(num_heads, dtype=qkv_w.dtype)
    w_full = jnp.concatenate(
        [jnp.kron(eye, qkv_w[:, i * hd:(i + 1) * hd]) for i in range(3)], axis=1)
    b_full = jnp.concatenate(
        [jnp.tile(qkv_b[i * hd:(i + 1) * hd], num_heads) for i in range(3)])
    return w_full, b_full


# ----------------------------- module: JAX glue + Pallas kernels -----------------------------

def swmsa_apply(x, p, ln_g, ln_b, *, image_resolution, window_size,
                num_heads, shift_size):
    B, N, D = x.shape
    Hs, Ws = image_resolution
    wh, ww = window_size
    nh = num_heads
    hd = D // nh
    WD = wh * ww
    WT = (Hs // wh) * (Ws // ww)

    if shift_size == 0:
        x_sp = x.reshape(B, Hs, Ws, D)
        mask = None
    else:
        sh, sw = getHW(shift_size)
        # cycle_shift == roll by (-sh, -sw)
        x_sp = jnp.roll(x.reshape(B, Hs, Ws, D), shift=(-sh, -sw), axis=(1, 2))
        mask = jnp.asarray(make_swin_mask(image_resolution, window_size, (sh, sw)))

    # window partition (pure row permutation, layout glue)
    xw = (x_sp.reshape(B, Hs // wh, wh, Ws // ww, ww, D)
          .transpose(0, 1, 3, 2, 4, 5).reshape(B * WT * WD, D))

    # fused LayerNorm -> block-diagonal qkv projection: (M, D) @ (D, 3D) -> bf16
    qkv = ln_linear_pallas(xw, ln_g, ln_b, p["qkv_w_full"], p["qkv_b_full"],
                           out_dtype=jnp.bfloat16)
    # head-major slabs for the attention kernel (cheap XLA layout glue)
    qkv = qkv.reshape(B, WT, WD, 3 * nh, hd).transpose(0, 1, 3, 2, 4)

    # relative position bias (nh, WD, WD), resident in the attention kernel
    bias = (p["rpb_table"][p["rpi"].reshape(-1)]
            .reshape(WD, WD, nh).transpose(2, 0, 1))

    attn = window_attention_pallas(qkv, bias, mask, nh, hd)    # (B, WT, nh, WD, hd) bf16
    # merge heads back (XLA transpose); reference keeps window-major token order here
    out = attn.transpose(0, 1, 3, 2, 4).reshape(B, WT * WD, D)

    if shift_size != 0:
        sh, sw = getHW(shift_size)
        # reverse_cycle_shift == roll by (+sh, +sw), applied exactly as reference does
        out = jnp.roll(out.reshape(B, Hs, Ws, D), shift=(sh, sw),
                       axis=(1, 2)).reshape(B, N, D)

    # fused output projection + residual (dropout p=0.0 -> identity)
    y = linear_residual_pallas(out.reshape(B * N, D), p["proj_w"], p["proj_b"],
                               x.reshape(B * N, D))
    return y.reshape(B, N, D)


def mlp_apply(x, p, ln_g, ln_b):
    B, N, D = x.shape
    x2 = x.reshape(B * N, D)
    h = ln_linear_pallas(x2, ln_g, ln_b, p["w1"], p["b1"], gelu=True,
                         out_dtype=jnp.bfloat16)
    y = linear_residual_pallas(h, p["w2"], p["b2"], x2)
    return y.reshape(B, N, D)


def swin_transformer_layer(x, p, *, image_resolution, window_size, num_heads,
                           shift_size):
    kw = dict(image_resolution=image_resolution, window_size=window_size,
              num_heads=num_heads)
    # reference reuses ln1 for stages 1-2, ln2 for stages 3-4 and the same MLP twice
    x = swmsa_apply(x, p["wmsa"], p["ln1_g"], p["ln1_b"], shift_size=0, **kw)
    x = mlp_apply(x, p["mlp"], p["ln1_g"], p["ln1_b"])
    x = swmsa_apply(x, p["swmsa"], p["ln2_g"], p["ln2_b"],
                    shift_size=shift_size, **kw)
    x = mlp_apply(x, p["mlp"], p["ln2_g"], p["ln2_b"])
    return x


def residual_swin_block(x_nchw, params, *, image_resolution, window_size,
                        num_heads, shift_size):
    B, D, Hs, Ws = x_nchw.shape
    x_tokens = jnp.transpose(x_nchw, (0, 2, 3, 1)).reshape(B, Hs * Ws, D)
    t = x_tokens
    for lp in params["layers"]:
        t = swin_transformer_layer(t, lp, image_resolution=image_resolution,
                                   window_size=window_size,
                                   num_heads=num_heads, shift_size=shift_size)
    # fused halo 3x3 conv (padding=1) + bias + block residual
    t_sp = t.reshape(B, Hs, Ws, D).astype(MXU_DTYPE)
    xpad = jnp.pad(t_sp, ((0, 0), (1, 1), (1, 1), (0, 0)))
    res = x_tokens.reshape(B, Hs, Ws, D)
    y = conv3x3_residual_pallas(xpad, params["conv_w"], params["conv_b"], res)
    return y.transpose(0, 3, 1, 2)


# ----------------------------- deterministic params -----------------------------

def init_params(key, dim, num_heads, window_size, num_stl):
    wh, ww = window_size
    hd = dim // num_heads
    keys = jax.random.split(key, num_stl + 1)
    rpi = jnp.asarray(relative_position_index((wh, ww)))

    def dense(k, din, dout, scale=0.05):
        kw, kb = jax.random.split(k)
        return (scale * jax.random.normal(kw, (din, dout), jnp.float32),
                scale * jax.random.normal(kb, (dout,), jnp.float32))

    def swmsa_params(k):
        k1, k2, k3 = jax.random.split(k, 3)
        qkv_w, qkv_b = dense(k1, hd, 3 * hd)
        w_full, b_full = build_full_qkv(qkv_w, qkv_b, num_heads)
        proj_w, proj_b = dense(k2, dim, dim)
        rpb = 0.05 * jax.random.normal(
            k3, ((2 * wh - 1) * (2 * ww - 1), num_heads), jnp.float32)
        return dict(qkv_w_full=w_full.astype(MXU_DTYPE), qkv_b_full=b_full,
                    proj_w=proj_w.astype(MXU_DTYPE), proj_b=proj_b,
                    rpb_table=rpb, rpi=rpi)

    def layer_params(k):
        k1, k2, k3, k4 = jax.random.split(k, 4)
        w1, b1 = dense(k1, dim, dim)
        w2, b2 = dense(k2, dim, dim)
        return dict(
            ln1_g=jnp.ones((dim,), jnp.float32), ln1_b=jnp.zeros((dim,), jnp.float32),
            ln2_g=jnp.ones((dim,), jnp.float32), ln2_b=jnp.zeros((dim,), jnp.float32),
            mlp=dict(w1=w1.astype(MXU_DTYPE), b1=b1,
                     w2=w2.astype(MXU_DTYPE), b2=b2),
            wmsa=swmsa_params(k3), swmsa=swmsa_params(k4))

    layers = [layer_params(keys[i]) for i in range(num_stl)]
    kcw, kcb = jax.random.split(keys[-1])
    conv_w = 0.05 * jax.random.normal(kcw, (3, 3, dim, dim), jnp.float32)
    conv_b = 0.05 * jax.random.normal(kcb, (dim,), jnp.float32)
    # conv weight stored per-tap (9, Din, Dout), pre-cast to bf16
    return dict(layers=layers,
                conv_w=conv_w.reshape(9, dim, dim).astype(MXU_DTYPE),
                conv_b=conv_b)


if __name__ == "__main__":
    B = 2
    Hs = Ws = 8
    dim = 64
    num_heads = 4
    window = 4
    shift = 2
    num_stl = 2

    key = jax.random.PRNGKey(0)
    kx, kp = jax.random.split(key)
    x = jax.random.normal(kx, (B, dim, Hs, Ws), jnp.float32)
    params = init_params(kp, dim, num_heads, (window, window), num_stl)

    fwd = jax.jit(functools.partial(
        residual_swin_block,
        image_resolution=(Hs, Ws), window_size=(window, window),
        num_heads=num_heads, shift_size=shift))

    out = jax.block_until_ready(fwd(x, params))

    assert out.shape == (B, dim, Hs, Ws)
    assert bool(jnp.all(jnp.isfinite(out)))
    print("KERNEL_OK")
</pallas_src>

<mosaic_0001>
module attributes {stable_mosaic.version = 11 : i64} {
  func.func @_ln_matmul_kernel(%arg0: i32, %arg1: memref<64x64xf32, #tpu.memory_space<vmem>>, %arg2: memref<1x64xf32, #tpu.memory_space<vmem>>, %arg3: memref<1x64xf32, #tpu.memory_space<vmem>>, %arg4: memref<64x192xbf16, #tpu.memory_space<vmem>>, %arg5: memref<1x192xf32, #tpu.memory_space<vmem>>, %arg6: memref<64x192xbf16, #tpu.memory_space<vmem>>) attributes {dimension_semantics = [#tpu.dimension_semantics<parallel>], iteration_bounds = array<i64: 2>, scalar_prefetch = 0 : i64, scratch_operands = 0 : i64, tpu.core_type = #tpu.core_type<tc>, window_params = [{transform_indices = @transform_0, window_bounds = array<i64: 64, 64>}, {pipeline_mode = #tpu.pipeline_mode<synchronous>, transform_indices = @transform_1, window_bounds = array<i64: 1, 64>}, {pipeline_mode = #tpu.pipeline_mode<synchronous>, transform_indices = @transform_2, window_bounds = array<i64: 1, 64>}, {pipeline_mode = #tpu.pipeline_mode<synchronous>, transform_indices = @transform_3, window_bounds = array<i64: 64, 192>}, {pipeline_mode = #tpu.pipeline_mode<synchronous>, transform_indices = @transform_4, window_bounds = array<i64: 1, 192>}, {transform_indices = @transform_5, window_bounds = array<i64: 64, 192>}]} {
    %c0 = arith.constant 0 : index
    %c0_0 = arith.constant 0 : index
    %0 = vector.load %arg1[%c0, %c0_0] : memref<64x64xf32, #tpu.memory_space<vmem>>, vector<64x64xf32>
    %cst = arith.constant dense<0.000000e+00> : vector<64xf32>
    %1 = vector.multi_reduction <add>, %0, %cst [1] : vector<64x64xf32> to vector<64xf32>
    %2 = vector.shape_cast %1 : vector<64xf32> to vector<64x1xf32>
    %cst_1 = arith.constant 6.400000e+01 : f32
    %3 = vector.broadcast %cst_1 : f32 to vector<64x1xf32>
    %4 = arith.divf %2, %3 : vector<64x1xf32>
    %5 = vector.broadcast %4 : vector<64x1xf32> to vector<64x64xf32>
    %6 = arith.subf %0, %5 : vector<64x64xf32>
    %7 = arith.mulf %6, %6 : vector<64x64xf32>
    %cst_2 = arith.constant dense<0.000000e+00> : vector<64xf32>
    %8 = vector.multi_reduction <add>, %7, %cst_2 [1] : vector<64x64xf32> to vector<64xf32>
    %9 = vector.shape_cast %8 : vector<64xf32> to vector<64x1xf32>
    %cst_3 = arith.constant 6.400000e+01 : f32
    %10 = vector.broadcast %cst_3 : f32 to vector<64x1xf32>
    %11 = arith.divf %9, %10 : vector<64x1xf32>
    %cst_4 = arith.constant 9.99999974E-6 : f32
    %12 = vector.broadcast %cst_4 : f32 to vector<64x1xf32>
    %13 = arith.addf %11, %12 : vector<64x1xf32>
    %14 = math.rsqrt %13 : vector<64x1xf32>
    %15 = vector.broadcast %14 : vector<64x1xf32> to vector<64x64xf32>
    %16 = arith.mulf %6, %15 : vector<64x64xf32>
    %c0_5 = arith.constant 0 : index
    %c0_6 = arith.constant 0 : index
    %17 = vector.load %arg2[%c0_5, %c0_6] : memref<1x64xf32, #tpu.memory_space<vmem>>, vector<1x64xf32>
    %18 = vector.broadcast %17 : vector<1x64xf32> to vector<64x64xf32>
    %19 = arith.mulf %16, %18 : vector<64x64xf32>
    %c0_7 = arith.constant 0 : index
    %c0_8 = arith.constant 0 : index
    %20 = vector.load %arg3[%c0_7, %c0_8] : memref<1x64xf32, #tpu.memory_space<vmem>>, vector<1x64xf32>
    %21 = vector.broadcast %20 : vector<1x64xf32> to vector<64x64xf32>
    %22 = arith.addf %19, %21 : vector<64x64xf32>
    %23 = arith.truncf %22 : vector<64x64xf32> to vector<64x64xbf16>
    %c0_9 = arith.constant 0 : index
    %c0_10 = arith.constant 0 : index
    %24 = vector.load %arg4[%c0_9, %c0_10] : memref<64x192xbf16, #tpu.memory_space<vmem>>, vector<64x192xbf16>
    %cst_11 = arith.constant dense<0.000000e+00> : vector<64x192xf32>
    %25 = tpu.matmul %23, %24, %cst_11 {dimension_numbers = #tpu.dot_dimension_numbers<[1], [0], [0], [1], [0, 0, 1, 1], [], []>} : vector<64x64xbf16>, vector<64x192xbf16>, vector<64x192xf32> -> vector<64x192xf32>
    %c0_12 = arith.constant 0 : index
    %c0_13 = arith.constant 0 : index
    %26 = vector.load %arg5[%c0_12, %c0_13] : memref<1x192xf32, #tpu.memory_space<vmem>>, vector<1x192xf32>
    %27 = vector.broadcast %26 : vector<1x192xf32> to vector<64x192xf32>
    %28 = arith.addf %25, %27 : vector<64x192xf32>
    %29 = arith.truncf %28 : vector<64x192xf32> to vector<64x192xbf16>
    %c0_14 = arith.constant 0 : index
    %c0_15 = arith.constant 0 : index
    %30 = vector.load %arg6[%c0_14, %c0_15] : memref<64x192xbf16, #tpu.memory_space<vmem>>, vector<64x192xbf16>
    tpu.vector_store %arg6[%c0_14, %c0_15], %29 {strides = array<i32>} : memref<64x192xbf16, #tpu.memory_space<vmem>>, vector<64x192xbf16>,
    return
  }
  func.func @transform_0(%arg0: i32) -> (i32, i32) {
    %c0_i32 = arith.constant 0 : i32
    %c0_i32_0 = arith.constant 0 : i32
    return %arg0, %c0_i32 : i32, i32
  }
  func.func @transform_1(%arg0: i32) -> (i32, i32) {
    %c0_i32 = arith.constant 0 : i32
    %c0_i32_0 = arith.constant 0 : i32
    %c0_i32_1 = arith.constant 0 : i32
    return %c0_i32, %c0_i32_0 : i32, i32
  }
  func.func @transform_2(%arg0: i32) -> (i32, i32) {
    %c0_i32 = arith.constant 0 : i32
    %c0_i32_0 = arith.constant 0 : i32
    %c0_i32_1 = arith.constant 0 : i32
    return %c0_i32, %c0_i32_0 : i32, i32
  }
  func.func @transform_3(%arg0: i32) -> (i32, i32) {
    %c0_i32 = arith.constant 0 : i32
    %c0_i32_0 = arith.constant 0 : i32
    %c0_i32_1 = arith.constant 0 : i32
    return %c0_i32, %c0_i32_0 : i32, i32
  }
  func.func @transform_4(%arg0: i32) -> (i32, i32) {
    %c0_i32 = arith.constant 0 : i32
    %c0_i32_0 = arith.constant 0 : i32
    %c0_i32_1 = arith.constant 0 : i32
    return %c0_i32, %c0_i32_0 : i32, i32
  }
  func.func @transform_5(%arg0: i32) -> (i32, i32) {
    %c0_i32 = arith.constant 0 : i32
    %c0_i32_0 = arith.constant 0 : i32
    return %arg0, %c0_i32 : i32, i32
  }
}

module attributes {stable_mosaic.version = 11 : i64} {
  func.func @_window_attn_kernel(%arg0: i32, %arg1: i32, %arg2: memref<1x4x12x16x16xbf16, #tpu.memory_space<vmem>>, %arg3: memref<4x16x16xf32, #tpu.memory_space<vmem>>, %arg4: memref<1x4x4x16x16xbf16, #tpu.memory_space<vmem>>) attributes {dimension_semantics = [#tpu.dimension_semantics<parallel>, #tpu.dimension_semantics<parallel>], iteration_bounds = array<i64: 2, 1>, scalar_prefetch = 0 : i64, scratch_operands = 0 : i64, tpu.core_type = #tpu.core_type<tc>, window_params = [{transform_indices = @transform_0, window_bounds = array<i64: 1, 4, 12, 16, 16>}, {pipeline_mode = #tpu.pipeline_mode<synchronous>, transform_indices = @transform_1, window_bounds = array<i64: 4, 16, 16>}, {transform_indices = @transform_2, window_bounds = array<i64: 1, 4, 4, 16, 16>}]} {
    %c0 = arith.constant 0 : index
    %c0_0 = arith.constant 0 : index
    %c0_1 = arith.constant 0 : index
    %c0_2 = arith.constant 0 : index
    %c0_3 = arith.constant 0 : index
    %0 = vector.load %arg2[%c0, %c0_0, %c0_1, %c0_2, %c0_3] : memref<1x4x12x16x16xbf16, #tpu.memory_space<vmem>>, vector<1x4x12x16x16xbf16>
    %1 = vector.shape_cast %0 : vector<1x4x12x16x16xbf16> to vector<4x12x16x16xbf16>
    %2 = vector.extract_strided_slice %1 {offsets = [0, 0, 0, 0], sizes = [4, 4, 16, 16], strides = [1, 1, 1, 1]} : vector<4x12x16x16xbf16> to vector<4x4x16x16xbf16>
    %3 = vector.shape_cast %2 : vector<4x4x16x16xbf16> to vector<16x16x16xbf16>
    %4 = vector.extract_strided_slice %1 {offsets = [0, 4, 0, 0], sizes = [4, 4, 16, 16], strides = [1, 1, 1, 1]} : vector<4x12x16x16xbf16> to vector<4x4x16x16xbf16>
    %5 = vector.shape_cast %4 : vector<4x4x16x16xbf16> to vector<16x16x16xbf16>
    %6 = vector.extract_strided_slice %1 {offsets = [0, 8, 0, 0], sizes = [4, 4, 16, 16], strides = [1, 1, 1, 1]} : vector<4x12x16x16xbf16> to vector<4x4x16x16xbf16>
    %7 = vector.shape_cast %6 : vector<4x4x16x16xbf16> to vector<16x16x16xbf16>
    "tpu.trace_start"() <{level = 10 : i32, message = "bqd,bkd->bqk"}> : () -> ()
    %cst = arith.constant dense<0.000000e+00> : vector<16x16x16xf32>
    %8 = tpu.matmul %3, %5, %cst {dimension_numbers = #tpu.dot_dimension_numbers<[2], [2], [1], [1], [0, 0, 0, 1, 1, 1], [0], [0]>} : vector<16x16x16xbf16>, vector<16x16x16xbf16>, vector<16x16x16xf32> -> vector<16x16x16xf32>
    "tpu.trace_stop"() : () -> ()
    %cst_4 = arith.constant 2.500000e-01 : f32
    %9 = vector.broadcast %cst_4 : f32 to vector<16x16x16xf32>
    %10 = arith.mulf %8, %9 : vector<16x16x16xf32>
    %11 = vector.shape_cast %10 : vector<16x16x16xf32> to vector<4x4x16x16xf32>
    %c0_5 = arith.constant 0 : index
    %c0_6 = arith.constant 0 : index
    %c0_7 = arith.constant 0 : index
    %12 = vector.load %arg3[%c0_5, %c0_6, %c0_7] : memref<4x16x16xf32, #tpu.memory_space<vmem>>, vector<4x16x16xf32>
    %13 = vector.shape_cast %12 : vector<4x16x16xf32> to vector<1x4x16x16xf32>
    %14 = vector.broadcast %13 : vector<1x4x16x16xf32> to vector<4x4x16x16xf32>
    %15 = arith.addf %11, %14 : vector<4x4x16x16xf32>
    %cst_8 = arith.constant dense<0xFF800000> : vector<4x4x16xf32>
    %16 = vector.multi_reduction <maximumf>, %15, %cst_8 [3] : vector<4x4x16x16xf32> to vector<4x4x16xf32>
    %17 = vector.shape_cast %16 : vector<4x4x16xf32> to vector<4x4x16x1xf32>
    %18 = vector.broadcast %17 : vector<4x4x16x1xf32> to vector<4x4x16x16xf32>
    %19 = arith.subf %15, %18 : vector<4x4x16x16xf32>
    %20 = math.exp %19 : vector<4x4x16x16xf32>
    %cst_9 = arith.constant dense<0.000000e+00> : vector<4x4x16xf32>
    %21 = vector.multi_reduction <add>, %20, %cst_9 [3] : vector<4x4x16x16xf32> to vector<4x4x16xf32>
    %22 = vector.shape_cast %21 : vector<4x4x16xf32> to vector<4x4x16x1xf32>
    %23 = tpu.reciprocal %22 {approx = true} : vector<4x4x16x1xf32> -> vector<4x4x16x1xf32>
    %24 = vector.broadcast %23 : vector<4x4x16x1xf32> to vector<4x4x16x16xf32>
    %25 = arith.mulf %20, %24 : vector<4x4x16x16xf32>
    %26 = vector.shape_cast %25 : vector<4x4x16x16xf32> to vector<16x16x16xf32>
    %27 = arith.truncf %26 : vector<16x16x16xf32> to vector<16x16x16xbf16>
    "tpu.trace_start"() <{level = 10 : i32, message = "bqk,bkd->bqd"}> : () -> ()
    %cst_10 = arith.constant dense<0.000000e+00> : vector<16x16x16xf32>
    %28 = tpu.matmul %27, %7, %cst_10 {dimension_numbers = #tpu.dot_dimension_numbers<[2], [1], [1], [2], [0, 0, 0, 1, 1, 2], [0], [0]>} : vector<16x16x16xbf16>, vector<16x16x16xbf16>, vector<16x16x16xf32> -> vector<16x16x16xf32>
    "tpu.trace_stop"() : () -> ()
    %29 = vector.shape_cast %28 : vector<16x16x16xf32> to vector<4x4x16x16xf32>
    %30 = arith.truncf %29 : vector<4x4x16x16xf32> to vector<4x4x16x16xbf16>
    %c0_11 = arith.constant 0 : index
    %c0_12 = arith.constant 0 : index
    %c0_13 = arith.constant 0 : index
    %c0_14 = arith.constant 0 : index
    %c0_15 = arith.constant 0 : index
    %31 = vector.load %arg4[%c0_11, %c0_12, %c0_13, %c0_14, %c0_15] : memref<1x4x4x16x16xbf16, #tpu.memory_space<vmem>>, vector<1x4x4x16x16xbf16>
    %32 = vector.shape_cast %31 : vector<1x4x4x16x16xbf16> to vector<4x4x16x16xbf16>
    %33 = vector.shape_cast %30 : vector<4x4x16x16xbf16> to vector<1x4x4x16x16xbf16>
    tpu.vector_store %arg4[%c0_11, %c0_12, %c0_13, %c0_14, %c0_15], %33 {strides = array<i32>} : memref<1x4x4x16x16xbf16, #tpu.memory_space<vmem>>, vector<1x4x4x16x16xbf16>,
    return
  }
  func.func @transform_0(%arg0: i32, %arg1: i32) -> (i32, i32, i32, i32, i32) {
    %c0_i32 = arith.constant 0 : i32
    %c0_i32_0 = arith.constant 0 : i32
    %c0_i32_1 = arith.constant 0 : i32
    %c0_i32_2 = arith.constant 0 : i32
    return %arg0, %arg1, %c0_i32, %c0_i32_0, %c0_i32_1 : i32, i32, i32, i32, i32
  }
  func.func @transform_1(%arg0: i32, %arg1: i32) -> (i32, i32, i32) {
    %c0_i32 = arith.constant 0 : i32
    %c0_i32_0 = arith.constant 0 : i32
    %c0_i32_1 = arith.constant 0 : i32
    %c0_i32_2 = arith.constant 0 : i32
    return %c0_i32, %c0_i32_0, %c0_i32_1 : i32, i32, i32
  }
  func.func @transform_2(%arg0: i32, %arg1: i32) -> (i32, i32, i32, i32, i32) {
    %c0_i32 = arith.constant 0 : i32
    %c0_i32_0 = arith.constant 0 : i32
    %c0_i32_1 = arith.constant 0 : i32
    %c0_i32_2 = arith.constant 0 : i32
    return %arg0, %arg1, %c0_i32, %c0_i32_0, %c0_i32_1 : i32, i32, i32, i32, i32
  }
}

module attributes {stable_mosaic.version = 11 : i64} {
  func.func @_matmul_residual_kernel(%arg0: i32, %arg1: memref<64x64xbf16, #tpu.memory_space<vmem>>, %arg2: memref<64x64xbf16, #tpu.memory_space<vmem>>, %arg3: memref<1x64xf32, #tpu.memory_space<vmem>>, %arg4: memref<64x64xf32, #tpu.memory_space<vmem>>, %arg5: memref<64x64xf32, #tpu.memory_space<vmem>>) attributes {dimension_semantics = [#tpu.dimension_semantics<parallel>], iteration_bounds = array<i64: 2>, scalar_prefetch = 0 : i64, scratch_operands = 0 : i64, tpu.core_type = #tpu.core_type<tc>, window_params = [{transform_indices = @transform_0, window_bounds = array<i64: 64, 64>}, {pipeline_mode = #tpu.pipeline_mode<synchronous>, transform_indices = @transform_1, window_bounds = array<i64: 64, 64>}, {pipeline_mode = #tpu.pipeline_mode<synchronous>, transform_indices = @transform_2, window_bounds = array<i64: 1, 64>}, {transform_indices = @transform_3, window_bounds = array<i64: 64, 64>}, {transform_indices = @transform_4, window_bounds = array<i64: 64, 64>}]} {
    %c0 = arith.constant 0 : index
    %c0_0 = arith.constant 0 : index
    %0 = vector.load %arg1[%c0, %c0_0] : memref<64x64xbf16, #tpu.memory_space<vmem>>, vector<64x64xbf16>
    %c0_1 = arith.constant 0 : index
    %c0_2 = arith.constant 0 : index
    %1 = vector.load %arg2[%c0_1, %c0_2] : memref<64x64xbf16, #tpu.memory_space<vmem>>, vector<64x64xbf16>
    %cst = arith.constant dense<0.000000e+00> : vector<64x64xf32>
    %2 = tpu.matmul %0, %1, %cst {dimension_numbers = #tpu.dot_dimension_numbers<[1], [0], [0], [1], [0, 0, 1, 1], [], []>} : vector<64x64xbf16>, vector<64x64xbf16>, vector<64x64xf32> -> vector<64x64xf32>
    %c0_3 = arith.constant 0 : index
    %c0_4 = arith.constant 0 : index
    %3 = vector.load %arg3[%c0_3, %c0_4] : memref<1x64xf32, #tpu.memory_space<vmem>>, vector<1x64xf32>
    %4 = vector.broadcast %3 : vector<1x64xf32> to vector<64x64xf32>
    %5 = arith.addf %2, %4 : vector<64x64xf32>
    %c0_5 = arith.constant 0 : index
    %c0_6 = arith.constant 0 : index
    %6 = vector.load %arg4[%c0_5, %c0_6] : memref<64x64xf32, #tpu.memory_space<vmem>>, vector<64x64xf32>
    %7 = arith.addf %5, %6 : vector<64x64xf32>
    %c0_7 = arith.constant 0 : index
    %c0_8 = arith.constant 0 : index
    %8 = vector.load %arg5[%c0_7, %c0_8] : memref<64x64xf32, #tpu.memory_space<vmem>>, vector<64x64xf32>
    tpu.vector_store %arg5[%c0_7, %c0_8], %7 {strides = array<i32>} : memref<64x64xf32, #tpu.memory_space<vmem>>, vector<64x64xf32>,
    return
  }
  func.func @transform_0(%arg0: i32) -> (i32, i32) {
    %c0_i32 = arith.constant 0 : i32
    %c0_i32_0 = arith.constant 0 : i32
    return %arg0, %c0_i32 : i32, i32
  }
  func.func @transform_1(%arg0: i32) -> (i32, i32) {
    %c0_i32 = arith.constant 0 : i32
    %c0_i32_0 = arith.constant 0 : i32
    %c0_i32_1 = arith.constant 0 : i32
    return %c0_i32, %c0_i32_0 : i32, i32
  }
  func.func @transform_2(%arg0: i32) -> (i32, i32) {
    %c0_i32 = arith.constant 0 : i32
    %c0_i32_0 = arith.constant 0 : i32
    %c0_i32_1 = arith.constant 0 : i32
    return %c0_i32, %c0_i32_0 : i32, i32
  }
  func.func @transform_3(%arg0: i32) -> (i32, i32) {
    %c0_i32 = arith.constant 0 : i32
    %c0_i32_0 = arith.constant 0 : i32
    return %arg0, %c0_i32 : i32, i32
  }
  func.func @transform_4(%arg0: i32) -> (i32, i32) {
    %c0_i32 = arith.constant 0 : i32
    %c0_i32_0 = arith.constant 0 : i32
    return %arg0, %c0_i32 : i32, i32
  }
}

module attributes {stable_mosaic.version = 11 : i64} {
  func.func @_ln_matmul_kernel(%arg0: i32, %arg1: memref<64x64xf32, #tpu.memory_space<vmem>>, %arg2: memref<1x64xf32, #tpu.memory_space<vmem>>, %arg3: memref<1x64xf32, #tpu.memory_space<vmem>>, %arg4: memref<64x64xbf16, #tpu.memory_space<vmem>>, %arg5: memref<1x64xf32, #tpu.memory_space<vmem>>, %arg6: memref<64x64xbf16, #tpu.memory_space<vmem>>) attributes {dimension_semantics = [#tpu.dimension_semantics<parallel>], iteration_bounds = array<i64: 2>, scalar_prefetch = 0 : i64, scratch_operands = 0 : i64, tpu.core_type = #tpu.core_type<tc>, window_params = [{transform_indices = @transform_0, window_bounds = array<i64: 64, 64>}, {pipeline_mode = #tpu.pipeline_mode<synchronous>, transform_indices = @transform_1, window_bounds = array<i64: 1, 64>}, {pipeline_mode = #tpu.pipeline_mode<synchronous>, transform_indices = @transform_2, window_bounds = array<i64: 1, 64>}, {pipeline_mode = #tpu.pipeline_mode<synchronous>, transform_indices = @transform_3, window_bounds = array<i64: 64, 64>}, {pipeline_mode = #tpu.pipeline_mode<synchronous>, transform_indices = @transform_4, window_bounds = array<i64: 1, 64>}, {transform_indices = @transform_5, window_bounds = array<i64: 64, 64>}]} {
    %c0 = arith.constant 0 : index
    %c0_0 = arith.constant 0 : index
    %0 = vector.load %arg1[%c0, %c0_0] : memref<64x64xf32, #tpu.memory_space<vmem>>, vector<64x64xf32>
    %cst = arith.constant dense<0.000000e+00> : vector<64xf32>
    %1 = vector.multi_reduction <add>, %0, %cst [1] : vector<64x64xf32> to vector<64xf32>
    %2 = vector.shape_cast %1 : vector<64xf32> to vector<64x1xf32>
    %cst_1 = arith.constant 6.400000e+01 : f32
    %3 = vector.broadcast %cst_1 : f32 to vector<64x1xf32>
    %4 = arith.divf %2, %3 : vector<64x1xf32>
    %5 = vector.broadcast %4 : vector<64x1xf32> to vector<64x64xf32>
    %6 = arith.subf %0, %5 : vector<64x64xf32>
    %7 = arith.mulf %6, %6 : vector<64x64xf32>
    %cst_2 = arith.constant dense<0.000000e+00> : vector<64xf32>
    %8 = vector.multi_reduction <add>, %7, %cst_2 [1] : vector<64x64xf32> to vector<64xf32>
    %9 = vector.shape_cast %8 : vector<64xf32> to vector<64x1xf32>
    %cst_3 = arith.constant 6.400000e+01 : f32
    %10 = vector.broadcast %cst_3 : f32 to vector<64x1xf32>
    %11 = arith.divf %9, %10 : vector<64x1xf32>
    %cst_4 = arith.constant 9.99999974E-6 : f32
    %12 = vector.broadcast %cst_4 : f32 to vector<64x1xf32>
    %13 = arith.addf %11, %12 : vector<64x1xf32>
    %14 = math.rsqrt %13 : vector<64x1xf32>
    %15 = vector.broadcast %14 : vector<64x1xf32> to vector<64x64xf32>
    %16 = arith.mulf %6, %15 : vector<64x64xf32>
    %c0_5 = arith.constant 0 : index
    %c0_6 = arith.constant 0 : index
    %17 = vector.load %arg2[%c0_5, %c0_6] : memref<1x64xf32, #tpu.memory_space<vmem>>, vector<1x64xf32>
    %18 = vector.broadcast %17 : vector<1x64xf32> to vector<64x64xf32>
    %19 = arith.mulf %16, %18 : vector<64x64xf32>
    %c0_7 = arith.constant 0 : index
    %c0_8 = arith.constant 0 : index
    %20 = vector.load %arg3[%c0_7, %c0_8] : memref<1x64xf32, #tpu.memory_space<vmem>>, vector<1x64xf32>
    %21 = vector.broadcast %20 : vector<1x64xf32> to vector<64x64xf32>
    %22 = arith.addf %19, %21 : vector<64x64xf32>
    %23 = arith.truncf %22 : vector<64x64xf32> to vector<64x64xbf16>
    %c0_9 = arith.constant 0 : index
    %c0_10 = arith.constant 0 : index
    %24 = vector.load %arg4[%c0_9, %c0_10] : memref<64x64xbf16, #tpu.memory_space<vmem>>, vector<64x64xbf16>
    %cst_11 = arith.constant dense<0.000000e+00> : vector<64x64xf32>
    %25 = tpu.matmul %23, %24, %cst_11 {dimension_numbers = #tpu.dot_dimension_numbers<[1], [0], [0], [1], [0, 0, 1, 1], [], []>} : vector<64x64xbf16>, vector<64x64xbf16>, vector<64x64xf32> -> vector<64x64xf32>
    %c0_12 = arith.constant 0 : index
    %c0_13 = arith.constant 0 : index
    %26 = vector.load %arg5[%c0_12, %c0_13] : memref<1x64xf32, #tpu.memory_space<vmem>>, vector<1x64xf32>
    %27 = vector.broadcast %26 : vector<1x64xf32> to vector<64x64xf32>
    %28 = arith.addf %25, %27 : vector<64x64xf32>
    %cst_14 = arith.constant 5.000000e-01 : f32
    %29 = vector.broadcast %cst_14 : f32 to vector<64x64xf32>
    %30 = arith.mulf %29, %28 : vector<64x64xf32>
    %cst_15 = arith.constant 4.471500e-02 : f32
    %31 = vector.broadcast %cst_15 : f32 to vector<64x64xf32>
    %32 = arith.mulf %31, %28 : vector<64x64xf32>
    %33 = arith.mulf %32, %28 : vector<64x64xf32>
    %34 = arith.mulf %33, %28 : vector<64x64xf32>
    %35 = arith.addf %28, %34 : vector<64x64xf32>
    %cst_16 = arith.constant 0.797884583 : f32
    %36 = vector.broadcast %cst_16 : f32 to vector<64x64xf32>
    %37 = arith.mulf %36, %35 : vector<64x64xf32>
    %38 = math.tanh %37 : vector<64x64xf32>
    %cst_17 = arith.constant 1.000000e+00 : f32
    %39 = vector.broadcast %cst_17 : f32 to vector<64x64xf32>
    %40 = arith.addf %39, %38 : vector<64x64xf32>
    %41 = arith.mulf %30, %40 : vector<64x64xf32>
    %42 = arith.truncf %41 : vector<64x64xf32> to vector<64x64xbf16>
    %c0_18 = arith.constant 0 : index
    %c0_19 = arith.constant 0 : index
    %43 = vector.load %arg6[%c0_18, %c0_19] : memref<64x64xbf16, #tpu.memory_space<vmem>>, vector<64x64xbf16>
    tpu.vector_store %arg6[%c0_18, %c0_19], %42 {strides = array<i32>} : memref<64x64xbf16, #tpu.memory_space<vmem>>, vector<64x64xbf16>,
    return
  }
  func.func @transform_0(%arg0: i32) -> (i32, i32) {
    %c0_i32 = arith.constant 0 : i32
    %c0_i32_0 = arith.constant 0 : i32
    return %arg0, %c0_i32 : i32, i32
  }
  func.func @transform_1(%arg0: i32) -> (i32, i32) {
    %c0_i32 = arith.constant 0 : i32
    %c0_i32_0 = arith.constant 0 : i32
    %c0_i32_1 = arith.constant 0 : i32
    return %c0_i32, %c0_i32_0 : i32, i32
  }
  func.func @transform_2(%arg0: i32) -> (i32, i32) {
    %c0_i32 = arith.constant 0 : i32
    %c0_i32_0 = arith.constant 0 : i32
    %c0_i32_1 = arith.constant 0 : i32
    return %c0_i32, %c0_i32_0 : i32, i32
  }
  func.func @transform_3(%arg0: i32) -> (i32, i32) {
    %c0_i32 = arith.constant 0 : i32
    %c0_i32_0 = arith.constant 0 : i32
    %c0_i32_1 = arith.constant 0 : i32
    return %c0_i32, %c0_i32_0 : i32, i32
  }
  func.func @transform_4(%arg0: i32) -> (i32, i32) {
    %c0_i32 = arith.constant 0 : i32
    %c0_i32_0 = arith.constant 0 : i32
    %c0_i32_1 = arith.constant 0 : i32
    return %c0_i32, %c0_i32_0 : i32, i32
  }
  func.func @transform_5(%arg0: i32) -> (i32, i32) {
    %c0_i32 = arith.constant 0 : i32
    %c0_i32_0 = arith.constant 0 : i32
    return %arg0, %c0_i32 : i32, i32
  }
}

module attributes {stable_mosaic.version = 11 : i64} {
  func.func @_window_attn_kernel(%arg0: i32, %arg1: i32, %arg2: memref<1x4x12x16x16xbf16, #tpu.memory_space<vmem>>, %arg3: memref<4x16x16xf32, #tpu.memory_space<vmem>>, %arg4: memref<4x16x16xf32, #tpu.memory_space<vmem>>, %arg5: memref<1x4x4x16x16xbf16, #tpu.memory_space<vmem>>) attributes {dimension_semantics = [#tpu.dimension_semantics<parallel>, #tpu.dimension_semantics<parallel>], iteration_bounds = array<i64: 2, 1>, scalar_prefetch = 0 : i64, scratch_operands = 0 : i64, tpu.core_type = #tpu.core_type<tc>, window_params = [{transform_indices = @transform_0, window_bounds = array<i64: 1, 4, 12, 16, 16>}, {pipeline_mode = #tpu.pipeline_mode<synchronous>, transform_indices = @transform_1, window_bounds = array<i64: 4, 16, 16>}, {transform_indices = @transform_2, window_bounds = array<i64: 4, 16, 16>}, {transform_indices = @transform_3, window_bounds = array<i64: 1, 4, 4, 16, 16>}]} {
    %c0 = arith.constant 0 : index
    %c0_0 = arith.constant 0 : index
    %c0_1 = arith.constant 0 : index
    %c0_2 = arith.constant 0 : index
    %c0_3 = arith.constant 0 : index
    %0 = vector.load %arg2[%c0, %c0_0, %c0_1, %c0_2, %c0_3] : memref<1x4x12x16x16xbf16, #tpu.memory_space<vmem>>, vector<1x4x12x16x16xbf16>
    %1 = vector.shape_cast %0 : vector<1x4x12x16x16xbf16> to vector<4x12x16x16xbf16>
    %2 = vector.extract_strided_slice %1 {offsets = [0, 0, 0, 0], sizes = [4, 4, 16, 16], strides = [1, 1, 1, 1]} : vector<4x12x16x16xbf16> to vector<4x4x16x16xbf16>
    %3 = vector.shape_cast %2 : vector<4x4x16x16xbf16> to vector<16x16x16xbf16>
    %4 = vector.extract_strided_slice %1 {offsets = [0, 4, 0, 0], sizes = [4, 4, 16, 16], strides = [1, 1, 1, 1]} : vector<4x12x16x16xbf16> to vector<4x4x16x16xbf16>
    %5 = vector.shape_cast %4 : vector<4x4x16x16xbf16> to vector<16x16x16xbf16>
    %6 = vector.extract_strided_slice %1 {offsets = [0, 8, 0, 0], sizes = [4, 4, 16, 16], strides = [1, 1, 1, 1]} : vector<4x12x16x16xbf16> to vector<4x4x16x16xbf16>
    %7 = vector.shape_cast %6 : vector<4x4x16x16xbf16> to vector<16x16x16xbf16>
    "tpu.trace_start"() <{level = 10 : i32, message = "bqd,bkd->bqk"}> : () -> ()
    %cst = arith.constant dense<0.000000e+00> : vector<16x16x16xf32>
    %8 = tpu.matmul %3, %5, %cst {dimension_numbers = #tpu.dot_dimension_numbers<[2], [2], [1], [1], [0, 0, 0, 1, 1, 1], [0], [0]>} : vector<16x16x16xbf16>, vector<16x16x16xbf16>, vector<16x16x16xf32> -> vector<16x16x16xf32>
    "tpu.trace_stop"() : () -> ()
    %cst_4 = arith.constant 2.500000e-01 : f32
    %9 = vector.broadcast %cst_4 : f32 to vector<16x16x16xf32>
    %10 = arith.mulf %8, %9 : vector<16x16x16xf32>
    %11 = vector.shape_cast %10 : vector<16x16x16xf32> to vector<4x4x16x16xf32>
    %c0_5 = arith.constant 0 : index
    %c0_6 = arith.constant 0 : index
    %c0_7 = arith.constant 0 : index
    %12 = vector.load %arg3[%c0_5, %c0_6, %c0_7] : memref<4x16x16xf32, #tpu.memory_space<vmem>>, vector<4x16x16xf32>
    %13 = vector.shape_cast %12 : vector<4x16x16xf32> to vector<1x4x16x16xf32>
    %14 = vector.broadcast %13 : vector<1x4x16x16xf32> to vector<4x4x16x16xf32>
    %15 = arith.addf %11, %14 : vector<4x4x16x16xf32>
    %c0_8 = arith.constant 0 : index
    %c0_9 = arith.constant 0 : index
    %c0_10 = arith.constant 0 : index
    %16 = vector.load %arg4[%c0_8, %c0_9, %c0_10] : memref<4x16x16xf32, #tpu.memory_space<vmem>>, vector<4x16x16xf32>
    %17 = vector.shape_cast %16 : vector<4x16x16xf32> to vector<4x1x16x16xf32>
    %18 = vector.broadcast %17 : vector<4x1x16x16xf32> to vector<4x4x16x16xf32>
    %19 = arith.addf %15, %18 : vector<4x4x16x16xf32>
    %cst_11 = arith.constant dense<0xFF800000> : vector<4x4x16xf32>
    %20 = vector.multi_reduction <maximumf>, %19, %cst_11 [3] : vector<4x4x16x16xf32> to vector<4x4x16xf32>
    %21 = vector.shape_cast %20 : vector<4x4x16xf32> to vector<4x4x16x1xf32>
    %22 = vector.broadcast %21 : vector<4x4x16x1xf32> to vector<4x4x16x16xf32>
    %23 = arith.subf %19, %22 : vector<4x4x16x16xf32>
    %24 = math.exp %23 : vector<4x4x16x16xf32>
    %cst_12 = arith.constant dense<0.000000e+00> : vector<4x4x16xf32>
    %25 = vector.multi_reduction <add>, %24, %cst_12 [3] : vector<4x4x16x16xf32> to vector<4x4x16xf32>
    %26 = vector.shape_cast %25 : vector<4x4x16xf32> to vector<4x4x16x1xf32>
    %27 = tpu.reciprocal %26 {approx = true} : vector<4x4x16x1xf32> -> vector<4x4x16x1xf32>
    %28 = vector.broadcast %27 : vector<4x4x16x1xf32> to vector<4x4x16x16xf32>
    %29 = arith.mulf %24, %28 : vector<4x4x16x16xf32>
    %30 = vector.shape_cast %29 : vector<4x4x16x16xf32> to vector<16x16x16xf32>
    %31 = arith.truncf %30 : vector<16x16x16xf32> to vector<16x16x16xbf16>
    "tpu.trace_start"() <{level = 10 : i32, message = "bqk,bkd->bqd"}> : () -> ()
    %cst_13 = arith.constant dense<0.000000e+00> : vector<16x16x16xf32>
    %32 = tpu.matmul %31, %7, %cst_13 {dimension_numbers = #tpu.dot_dimension_numbers<[2], [1], [1], [2], [0, 0, 0, 1, 1, 2], [0], [0]>} : vector<16x16x16xbf16>, vector<16x16x16xbf16>, vector<16x16x16xf32> -> vector<16x16x16xf32>
    "tpu.trace_stop"() : () -> ()
    %33 = vector.shape_cast %32 : vector<16x16x16xf32> to vector<4x4x16x16xf32>
    %34 = arith.truncf %33 : vector<4x4x16x16xf32> to vector<4x4x16x16xbf16>
    %c0_14 = arith.constant 0 : index
    %c0_15 = arith.constant 0 : index
    %c0_16 = arith.constant 0 : index
    %c0_17 = arith.constant 0 : index
    %c0_18 = arith.constant 0 : index
    %35 = vector.load %arg5[%c0_14, %c0_15, %c0_16, %c0_17, %c0_18] : memref<1x4x4x16x16xbf16, #tpu.memory_space<vmem>>, vector<1x4x4x16x16xbf16>
    %36 = vector.shape_cast %35 : vector<1x4x4x16x16xbf16> to vector<4x4x16x16xbf16>
    %37 = vector.shape_cast %34 : vector<4x4x16x16xbf16> to vector<1x4x4x16x16xbf16>
    tpu.vector_store %arg5[%c0_14, %c0_15, %c0_16, %c0_17, %c0_18], %37 {strides = array<i32>} : memref<1x4x4x16x16xbf16, #tpu.memory_space<vmem>>, vector<1x4x4x16x16xbf16>,
    return
  }
  func.func @transform_0(%arg0: i32, %arg1: i32) -> (i32, i32, i32, i32, i32) {
    %c0_i32 = arith.constant 0 : i32
    %c0_i32_0 = arith.constant 0 : i32
    %c0_i32_1 = arith.constant 0 : i32
    %c0_i32_2 = arith.constant 0 : i32
    return %arg0, %arg1, %c0_i32, %c0_i32_0, %c0_i32_1 : i32, i32, i32, i32, i32
  }
  func.func @transform_1(%arg0: i32, %arg1: i32) -> (i32, i32, i32) {
    %c0_i32 = arith.constant 0 : i32
    %c0_i32_0 = arith.constant 0 : i32
    %c0_i32_1 = arith.constant 0 : i32
    %c0_i32_2 = arith.constant 0 : i32
    return %c0_i32, %c0_i32_0, %c0_i32_1 : i32, i32, i32
  }
  func.func @transform_2(%arg0: i32, %arg1: i32) -> (i32, i32, i32) {
    %c0_i32 = arith.constant 0 : i32
    %c0_i32_0 = arith.constant 0 : i32
    %c0_i32_1 = arith.constant 0 : i32
    return %arg1, %c0_i32, %c0_i32_0 : i32, i32, i32
  }
  func.func @transform_3(%arg0: i32, %arg1: i32) -> (i32, i32, i32, i32, i32) {
    %c0_i32 = arith.constant 0 : i32
    %c0_i32_0 = arith.constant 0 : i32
    %c0_i32_1 = arith.constant 0 : i32
    %c0_i32_2 = arith.constant 0 : i32
    return %arg0, %arg1, %c0_i32, %c0_i32_0, %c0_i32_1 : i32, i32, i32, i32, i32
  }
}

module attributes {stable_mosaic.version = 11 : i64} {
  func.func @_conv3x3_residual_kernel(%arg0: i32, %arg1: memref<1x10x10x64xbf16, #tpu.memory_space<vmem>>, %arg2: memref<9x64x64xbf16, #tpu.memory_space<vmem>>, %arg3: memref<1x64xf32, #tpu.memory_space<vmem>>, %arg4: memref<1x8x8x64xf32, #tpu.memory_space<vmem>>, %arg5: memref<1x8x8x64xf32, #tpu.memory_space<vmem>>) attributes {dimension_semantics = [#tpu.dimension_semantics<parallel>], iteration_bounds = array<i64: 2>, scalar_prefetch = 0 : i64, scratch_operands = 0 : i64, tpu.core_type = #tpu.core_type<tc>, window_params = [{transform_indices = @transform_0, window_bounds = array<i64: 1, 10, 10, 64>}, {pipeline_mode = #tpu.pipeline_mode<synchronous>, transform_indices = @transform_1, window_bounds = array<i64: 9, 64, 64>}, {pipeline_mode = #tpu.pipeline_mode<synchronous>, transform_indices = @transform_2, window_bounds = array<i64: 1, 64>}, {transform_indices = @transform_3, window_bounds = array<i64: 1, 8, 8, 64>}, {transform_indices = @transform_4, window_bounds = array<i64: 1, 8, 8, 64>}]} {
    %c0 = arith.constant 0 : index
    %c0_0 = arith.constant 0 : index
    %c0_1 = arith.constant 0 : index
    %c0_2 = arith.constant 0 : index
    %0 = vector.load %arg1[%c0, %c0_0, %c0_1, %c0_2] : memref<1x10x10x64xbf16, #tpu.memory_space<vmem>>, vector<1x10x10x64xbf16>
    %1 = vector.shape_cast %0 : vector<1x10x10x64xbf16> to vector<10x10x64xbf16>
    %cst = arith.constant 0.000000e+00 : f32
    %2 = vector.broadcast %cst : f32 to vector<64x64xf32>
    %3 = vector.extract_strided_slice %1 {offsets = [0, 0, 0], sizes = [8, 8, 64], strides = [1, 1, 1]} : vector<10x10x64xbf16> to vector<8x8x64xbf16>
    %4 = vector.shape_cast %3 : vector<8x8x64xbf16> to vector<64x64xbf16>
    %c0_3 = arith.constant 0 : index
    %c0_4 = arith.constant 0 : index
    %c0_5 = arith.constant 0 : index
    %5 = vector.load %arg2[%c0_3, %c0_4, %c0_5] : memref<9x64x64xbf16, #tpu.memory_space<vmem>>, vector<1x64x64xbf16>
    %6 = vector.shape_cast %5 : vector<1x64x64xbf16> to vector<64x64xbf16>
    %cst_6 = arith.constant dense<0.000000e+00> : vector<64x64xf32>
    %7 = tpu.matmul %4, %6, %cst_6 {dimension_numbers = #tpu.dot_dimension_numbers<[1], [0], [0], [1], [0, 0, 1, 1], [], []>} : vector<64x64xbf16>, vector<64x64xbf16>, vector<64x64xf32> -> vector<64x64xf32>
    %8 = arith.addf %2, %7 : vector<64x64xf32>
    %9 = vector.extract_strided_slice %1 {offsets = [0, 1, 0], sizes = [8, 8, 64], strides = [1, 1, 1]} : vector<10x10x64xbf16> to vector<8x8x64xbf16>
    %10 = vector.shape_cast %9 : vector<8x8x64xbf16> to vector<64x64xbf16>
    %c1 = arith.constant 1 : index
    %c0_7 = arith.constant 0 : index
    %c0_8 = arith.constant 0 : index
    %11 = vector.load %arg2[%c1, %c0_7, %c0_8] : memref<9x64x64xbf16, #tpu.memory_space<vmem>>, vector<1x64x64xbf16>
    %12 = vector.shape_cast %11 : vector<1x64x64xbf16> to vector<64x64xbf16>
    %cst_9 = arith.constant dense<0.000000e+00> : vector<64x64xf32>
    %13 = tpu.matmul %10, %12, %cst_9 {dimension_numbers = #tpu.dot_dimension_numbers<[1], [0], [0], [1], [0, 0, 1, 1], [], []>} : vector<64x64xbf16>, vector<64x64xbf16>, vector<64x64xf32> -> vector<64x64xf32>
    %14 = arith.addf %8, %13 : vector<64x64xf32>
    %15 = vector.extract_strided_slice %1 {offsets = [0, 2, 0], sizes = [8, 8, 64], strides = [1, 1, 1]} : vector<10x10x64xbf16> to vector<8x8x64xbf16>
    %16 = vector.shape_cast %15 : vector<8x8x64xbf16> to vector<64x64xbf16>
    %c2 = arith.constant 2 : index
    %c0_10 = arith.constant 0 : index
    %c0_11 = arith.constant 0 : index
    %17 = vector.load %arg2[%c2, %c0_10, %c0_11] : memref<9x64x64xbf16, #tpu.memory_space<vmem>>, vector<1x64x64xbf16>
    %18 = vector.shape_cast %17 : vector<1x64x64xbf16> to vector<64x64xbf16>
    %cst_12 = arith.constant dense<0.000000e+00> : vector<64x64xf32>
    %19 = tpu.matmul %16, %18, %cst_12 {dimension_numbers = #tpu.dot_dimension_numbers<[1], [0], [0], [1], [0, 0, 1, 1], [], []>} : vector<64x64xbf16>, vector<64x64xbf16>, vector<64x64xf32> -> vector<64x64xf32>
    %20 = arith.addf %14, %19 : vector<64x64xf32>
    %21 = vector.extract_strided_slice %1 {offsets = [1, 0, 0], sizes = [8, 8, 64], strides = [1, 1, 1]} : vector<10x10x64xbf16> to vector<8x8x64xbf16>
    %22 = vector.shape_cast %21 : vector<8x8x64xbf16> to vector<64x64xbf16>
    %c3 = arith.constant 3 : index
    %c0_13 = arith.constant 0 : index
    %c0_14 = arith.constant 0 : index
    %23 = vector.load %arg2[%c3, %c0_13, %c0_14] : memref<9x64x64xbf16, #tpu.memory_space<vmem>>, vector<1x64x64xbf16>
    %24 = vector.shape_cast %23 : vector<1x64x64xbf16> to vector<64x64xbf16>
    %cst_15 = arith.constant dense<0.000000e+00> : vector<64x64xf32>
    %25 = tpu.matmul %22, %24, %cst_15 {dimension_numbers = #tpu.dot_dimension_numbers<[1], [0], [0], [1], [0, 0, 1, 1], [], []>} : vector<64x64xbf16>, vector<64x64xbf16>, vector<64x64xf32> -> vector<64x64xf32>
    %26 = arith.addf %20, %25 : vector<64x64xf32>
    %27 = vector.extract_strided_slice %1 {offsets = [1, 1, 0], sizes = [8, 8, 64], strides = [1, 1, 1]} : vector<10x10x64xbf16> to vector<8x8x64xbf16>
    %28 = vector.shape_cast %27 : vector<8x8x64xbf16> to vector<64x64xbf16>
    %c4 = arith.constant 4 : index
    %c0_16 = arith.constant 0 : index
    %c0_17 = arith.constant 0 : index
    %29 = vector.load %arg2[%c4, %c0_16, %c0_17] : memref<9x64x64xbf16, #tpu.memory_space<vmem>>, vector<1x64x64xbf16>
    %30 = vector.shape_cast %29 : vector<1x64x64xbf16> to vector<64x64xbf16>
    %cst_18 = arith.constant dense<0.000000e+00> : vector<64x64xf32>
    %31 = tpu.matmul %28, %30, %cst_18 {dimension_numbers = #tpu.dot_dimension_numbers<[1], [0], [0], [1], [0, 0, 1, 1], [], []>} : vector<64x64xbf16>, vector<64x64xbf16>, vector<64x64xf32> -> vector<64x64xf32>
    %32 = arith.addf %26, %31 : vector<64x64xf32>
    %33 = vector.extract_strided_slice %1 {offsets = [1, 2, 0], sizes = [8, 8, 64], strides = [1, 1, 1]} : vector<10x10x64xbf16> to vector<8x8x64xbf16>
    %34 = vector.shape_cast %33 : vector<8x8x64xbf16> to vector<64x64xbf16>
    %c5 = arith.constant 5 : index
    %c0_19 = arith.constant 0 : index
    %c0_20 = arith.constant 0 : index
    %35 = vector.load %arg2[%c5, %c0_19, %c0_20] : memref<9x64x64xbf16, #tpu.memory_space<vmem>>, vector<1x64x64xbf16>
    %36 = vector.shape_cast %35 : vector<1x64x64xbf16> to vector<64x64xbf16>
    %cst_21 = arith.constant dense<0.000000e+00> : vector<64x64xf32>
    %37 = tpu.matmul %34, %36, %cst_21 {dimension_numbers = #tpu.dot_dimension_numbers<[1], [0], [0], [1], [0, 0, 1, 1], [], []>} : vector<64x64xbf16>, vector<64x64xbf16>, vector<64x64xf32> -> vector<64x64xf32>
    %38 = arith.addf %32, %37 : vector<64x64xf32>
    %39 = vector.extract_strided_slice %1 {offsets = [2, 0, 0], sizes = [8, 8, 64], strides = [1, 1, 1]} : vector<10x10x64xbf16> to vector<8x8x64xbf16>
    %40 = vector.shape_cast %39 : vector<8x8x64xbf16> to vector<64x64xbf16>
    %c6 = arith.constant 6 : index
    %c0_22 = arith.constant 0 : index
    %c0_23 = arith.constant 0 : index
    %41 = vector.load %arg2[%c6, %c0_22, %c0_23] : memref<9x64x64xbf16, #tpu.memory_space<vmem>>, vector<1x64x64xbf16>
    %42 = vector.shape_cast %41 : vector<1x64x64xbf16> to vector<64x64xbf16>
    %cst_24 = arith.constant dense<0.000000e+00> : vector<64x64xf32>
    %43 = tpu.matmul %40, %42, %cst_24 {dimension_numbers = #tpu.dot_dimension_numbers<[1], [0], [0], [1], [0, 0, 1, 1], [], []>} : vector<64x64xbf16>, vector<64x64xbf16>, vector<64x64xf32> -> vector<64x64xf32>
    %44 = arith.addf %38, %43 : vector<64x64xf32>
    %45 = vector.extract_strided_slice %1 {offsets = [2, 1, 0], sizes = [8, 8, 64], strides = [1, 1, 1]} : vector<10x10x64xbf16> to vector<8x8x64xbf16>
    %46 = vector.shape_cast %45 : vector<8x8x64xbf16> to vector<64x64xbf16>
    %c7 = arith.constant 7 : index
    %c0_25 = arith.constant 0 : index
    %c0_26 = arith.constant 0 : index
    %47 = vector.load %arg2[%c7, %c0_25, %c0_26] : memref<9x64x64xbf16, #tpu.memory_space<vmem>>, vector<1x64x64xbf16>
    %48 = vector.shape_cast %47 : vector<1x64x64xbf16> to vector<64x64xbf16>
    %cst_27 = arith.constant dense<0.000000e+00> : vector<64x64xf32>
    %49 = tpu.matmul %46, %48, %cst_27 {dimension_numbers = #tpu.dot_dimension_numbers<[1], [0], [0], [1], [0, 0, 1, 1], [], []>} : vector<64x64xbf16>, vector<64x64xbf16>, vector<64x64xf32> -> vector<64x64xf32>
    %50 = arith.addf %44, %49 : vector<64x64xf32>
    %51 = vector.extract_strided_slice %1 {offsets = [2, 2, 0], sizes = [8, 8, 64], strides = [1, 1, 1]} : vector<10x10x64xbf16> to vector<8x8x64xbf16>
    %52 = vector.shape_cast %51 : vector<8x8x64xbf16> to vector<64x64xbf16>
    %c8 = arith.constant 8 : index
    %c0_28 = arith.constant 0 : index
    %c0_29 = arith.constant 0 : index
    %53 = vector.load %arg2[%c8, %c0_28, %c0_29] : memref<9x64x64xbf16, #tpu.memory_space<vmem>>, vector<1x64x64xbf16>
    %54 = vector.shape_cast %53 : vector<1x64x64xbf16> to vector<64x64xbf16>
    %cst_30 = arith.constant dense<0.000000e+00> : vector<64x64xf32>
    %55 = tpu.matmul %52, %54, %cst_30 {dimension_numbers = #tpu.dot_dimension_numbers<[1], [0], [0], [1], [0, 0, 1, 1], [], []>} : vector<64x64xbf16>, vector<64x64xbf16>, vector<64x64xf32> -> vector<64x64xf32>
    %56 = arith.addf %50, %55 : vector<64x64xf32>
    %c0_31 = arith.constant 0 : index
    %c0_32 = arith.constant 0 : index
    %57 = vector.load %arg3[%c0_31, %c0_32] : memref<1x64xf32, #tpu.memory_space<vmem>>, vector<1x64xf32>
    %58 = vector.broadcast %57 : vector<1x64xf32> to vector<64x64xf32>
    %59 = arith.addf %56, %58 : vector<64x64xf32>
    %c0_33 = arith.constant 0 : index
    %c0_34 = arith.constant 0 : index
    %c0_35 = arith.constant 0 : index
    %c0_36 = arith.constant 0 : index
    %60 = vector.load %arg4[%c0_33, %c0_34, %c0_35, %c0_36] : memref<1x8x8x64xf32, #tpu.memory_space<vmem>>, vector<1x8x8x64xf32>
    %61 = vector.shape_cast %60 : vector<1x8x8x64xf32> to vector<8x8x64xf32>
    %62 = vector.shape_cast %61 : vector<8x8x64xf32> to vector<64x64xf32>
    %63 = arith.addf %59, %62 : vector<64x64xf32>
    %64 = vector.shape_cast %63 : vector<64x64xf32> to vector<8x8x64xf32>
    %c0_37 = arith.constant 0 : index
    %c0_38 = arith.constant 0 : index
    %c0_39 = arith.constant 0 : index
    %c0_40 = arith.constant 0 : index
    %65 = vector.load %arg5[%c0_37, %c0_38, %c0_39, %c0_40] : memref<1x8x8x64xf32, #tpu.memory_space<vmem>>, vector<1x8x8x64xf32>
    %66 = vector.shape_cast %65 : vector<1x8x8x64xf32> to vector<8x8x64xf32>
    %67 = vector.shape_cast %64 : vector<8x8x64xf32> to vector<1x8x8x64xf32>
    tpu.vector_store %arg5[%c0_37, %c0_38, %c0_39, %c0_40], %67 {strides = array<i32>} : memref<1x8x8x64xf32, #tpu.memory_space<vmem>>, vector<1x8x8x64xf32>,
    return
  }
  func.func @transform_0(%arg0: i32) -> (i32, i32, i32, i32) {
    %c0_i32 = arith.constant 0 : i32
    %c0_i32_0 = arith.constant 0 : i32
    %c0_i32_1 = arith.constant 0 : i32
    %c0_i32_2 = arith.constant 0 : i32
    return %arg0, %c0_i32, %c0_i32_0, %c0_i32_1 : i32, i32, i32, i32
  }
  func.func @transform_1(%arg0: i32) -> (i32, i32, i32) {
    %c0_i32 = arith.constant 0 : i32
    %c0_i32_0 = arith.constant 0 : i32
    %c0_i32_1 = arith.constant 0 : i32
    %c0_i32_2 = arith.constant 0 : i32
    return %c0_i32, %c0_i32_0, %c0_i32_1 : i32, i32, i32
  }
  func.func @transform_2(%arg0: i32) -> (i32, i32) {
    %c0_i32 = arith.constant 0 : i32
    %c0_i32_0 = arith.constant 0 : i32
    %c0_i32_1 = arith.constant 0 : i32
    return %c0_i32, %c0_i32_0 : i32, i32
  }
  func.func @transform_3(%arg0: i32) -> (i32, i32, i32, i32) {
    %c0_i32 = arith.constant 0 : i32
    %c0_i32_0 = arith.constant 0 : i32
    %c0_i32_1 = arith.constant 0 : i32
    %c0_i32_2 = arith.constant 0 : i32
    return %arg0, %c0_i32, %c0_i32_0, %c0_i32_1 : i32, i32, i32, i32
  }
  func.func @transform_4(%arg0: i32) -> (i32, i32, i32, i32) {
    %c0_i32 = arith.constant 0 : i32
    %c0_i32_0 = arith.constant 0 : i32
    %c0_i32_1 = arith.constant 0 : i32
    %c0_i32_2 = arith.constant 0 : i32
    return %arg0, %c0_i32, %c0_i32_0, %c0_i32_1 : i32, i32, i32, i32
  }
}

</mosaic_0001>

<llo_original>
// kernel: residual_swin_block.21
$region0: #{residual_swin_block.21}
  #allocation0 [shape = 'u32[]', space=smem, size = 0x4, offset = 0x4, fixed_abs, tag = 'smem constant byte address 0x4 - core index']
  #allocation1 [shape = 'u32[144,128]{1,0:T(1,128)}', space=vmem, size = 0x12000, scoped, tag = 'internal scratch']
  %s0 = inlined_call_operand.vmem [shape: f32[128,64], index: 0, kind: input, shape index: {}]
  %s1 = inlined_call_operand.vmem [shape: f32[1,64], index: 1, kind: input, shape index: {}]
  %s2 = inlined_call_operand.vmem [shape: f32[1,64], index: 2, kind: input, shape index: {}]
  %s3 = inlined_call_operand.vmem [shape: bf16[64,192], index: 3, kind: input, shape index: {}]
  %s4 = inlined_call_operand.vmem [shape: f32[1,192], index: 4, kind: input, shape index: {}]
  %s5 = inlined_call_operand.vmem [shape: bf16[128,192], index: 5, kind: output, shape index: {}]
  %s6 = sld [smem:[#allocation0]]
  $region53: #{residual_swin_block.21} parent=0
    _
  %s8 = ssub.s32 1, %s6
  %s9 = scalar_select 0, %s8, %s6
  loop: start=0, step=1, limit=4
  $region2: #{residual_swin_block.21} parent=0 // loop_pre_header
    _
  $region3: #{residual_swin_block.21} parent=0 // loop_header
    %s11 = sphi 0, %s15
    %p12 = scmp.ge.s32.totalorder %s11, 4
    %s21 = sphi 0, %s23
    %s24 = sphi 0, %s21
    %s25 = sphi 0, %s24
    %s41 = sphi 0, %s25
    %s45 = sphi 0, %s45
    %s47 = sphi 0, %s45
    %s48 = sphi 0, %s47
    %s62 = sphi 0, %s48
    %s66 = sphi 0, %s66
    %s68 = sphi 0, %s66
    %s69 = sphi 0, %s68
    %s83 = sphi 0, %s69
    %s87 = sphi 0, %s87
    %s89 = sphi 0, %s87
    %s90 = sphi 0, %s89
    %s104 = sphi 0, %s90
    %s108 = sphi 0, %s108
    %s110 = sphi 0, %s108
    %s111 = sphi 0, %s110
    %s125 = sphi 0, %s111
    %s131 = sphi 0, %s133
    %s134 = sphi 0, %s131
    %s135 = sphi 0, %s134
    %s151 = sphi 0, %s135
  $region4: #{residual_swin_block.21} parent=0 // loop_header_branch
    %14 = sbr.rel (%p12) target = $region8
  $region5: #{residual_swin_block.21} parent=0 // loop_body
    %s16 = ssub.s32 %s11, 1
    %s17 = ssub.s32 %s11, 2
    %s18 = sadd.s32 %s11, 1
    %s19 = ssub.s32 %s11, %s18
    %p20 = scmp.eq.s32.totalorder %s19, 0
    %s22 = sadd.s32 %s21, 1
    %s23 = scalar_select %p20, %s21, %s22
    %p26 = pneg %p20
    %p27 = scmp.eq.s32.totalorder %s11, 1
    %p28 = por %p26, %p27
    %p29 = scmp.ne.s32.totalorder %s21, %s24
    %p30 = scmp.eq.s32.totalorder %s11, 0
    %p31 = por %p29, %p30
    %p32 = scmp.ne.s32.totalorder %s21, %s24
    %p33 = scmp.eq.s32.totalorder %s16, 1
    %p34 = por %p32, %p33
    %p35 = scmp.ne.s32.totalorder %s24, %s25
    %p36 = scmp.eq.s32.totalorder %s16, 0
    %p37 = por %p35, %p36
    %p38 = scmp.ne.s32.totalorder %s24, %s25
    %p39 = scmp.eq.s32.totalorder %s17, 1
    %p40 = por %p38, %p39
    %p42 = scmp.ne.s32.totalorder %s25, %s41
    %p43 = scmp.eq.s32.totalorder %s17, 0
    %p44 = por %p42, %p43
    %s46 = sadd.s32 %s45, 1
    %p49 = scmp.eq.s32.totalorder %s11, 1
    %p50 = scmp.ne.s32.totalorder %s45, %s47
    %p51 = scmp.eq.s32.totalorder %s11, 0
    %p52 = por %p50, %p51
    %p53 = scmp.ne.s32.totalorder %s45, %s47
    %p54 = scmp.eq.s32.totalorder %s16, 1
    %p55 = por %p53, %p54
    %p56 = scmp.ne.s32.totalorder %s47, %s48
    %p57 = scmp.eq.s32.totalorder %s16, 0
    %p58 = por %p56, %p57
    %p59 = scmp.ne.s32.totalorder %s47, %s48
    %p60 = scmp.eq.s32.totalorder %s17, 1
    %p61 = por %p59, %p60
    %p63 = scmp.ne.s32.totalorder %s48, %s62
    %p64 = scmp.eq.s32.totalorder %s17, 0
    %p65 = por %p63, %p64
    %s67 = sadd.s32 %s66, 1
    %p70 = scmp.eq.s32.totalorder %s11, 1
    %p71 = scmp.ne.s32.totalorder %s66, %s68
    %p72 = scmp.eq.s32.totalorder %s11, 0
    %p73 = por %p71, %p72
    %p74 = scmp.ne.s32.totalorder %s66, %s68
    %p75 = scmp.eq.s32.totalorder %s16, 1
    %p76 = por %p74, %p75
    %p77 = scmp.ne.s32.totalorder %s68, %s69
    %p78 = scmp.eq.s32.totalorder %s16, 0
    %p79 = por %p77, %p78
    %p80 = scmp.ne.s32.totalorder %s68, %s69
    %p81 = scmp.eq.s32.totalorder %s17, 1
    %p82 = por %p80, %p81
    %p84 = scmp.ne.s32.totalorder %s69, %s83
    %p85 = scmp.eq.s32.totalorder %s17, 0
    %p86 = por %p84, %p85
    %s88 = sadd.s32 %s87, 1
    %p91 = scmp.eq.s32.totalorder %s11, 1
    %p92 = scmp.ne.s32.totalorder %s87, %s89
    %p93 = scmp.eq.s32.totalorder %s11, 0
    %p94 = por %p92, %p93
    %p95 = scmp.ne.s32.totalorder %s87, %s89
    %p96 = scmp.eq.s32.totalorder %s16, 1
    %p97 = por %p95, %p96
    %p98 = scmp.ne.s32.totalorder %s89, %s90
    %p99 = scmp.eq.s32.totalorder %s16, 0
    %p100 = por %p98, %p99
    %p101 = scmp.ne.s32.totalorder %s89, %s90
    %p102 = scmp.eq.s32.totalorder %s17, 1
    %p103 = por %p101, %p102
    %p105 = scmp.ne.s32.totalorder %s90, %s104
    %p106 = scmp.eq.s32.totalorder %s17, 0
    %p107 = por %p105, %p106
    %s109 = sadd.s32 %s108, 1
    %p112 = scmp.eq.s32.totalorder %s11, 1
    %p113 = scmp.ne.s32.totalorder %s108, %s110
    %p114 = scmp.eq.s32.totalorder %s11, 0
    %p115 = por %p113, %p114
    %p116 = scmp.ne.s32.totalorder %s108, %s110
    %p117 = scmp.eq.s32.totalorder %s16, 1
    %p118 = por %p116, %p117
    %p119 = scmp.ne.s32.totalorder %s110, %s111
    %p120 = scmp.eq.s32.totalorder %s16, 0
    %p121 = por %p119, %p120
    %p122 = scmp.ne.s32.totalorder %s110, %s111
    %p123 = scmp.eq.s32.totalorder %s17, 1
    %p124 = por %p122, %p123
    %p126 = scmp.ne.s32.totalorder %s111, %s125
    %p127 = scmp.eq.s32.totalorder %s17, 0
    %p128 = por %p126, %p127
    %s129 = ssub.s32 %s11, %s18
    %p130 = scmp.eq.s32.totalorder %s129, 0
    %s132 = sadd.s32 %s131, 1
    %s133 = scalar_select %p130, %s131, %s132
    %p136 = pneg %p130
    %p137 = scmp.eq.s32.totalorder %s11, 1
    %p138 = por %p136, %p137
    %p139 = scmp.ne.s32.totalorder %s131, %s134
    %p140 = scmp.eq.s32.totalorder %s11, 0
    %p141 = por %p139, %p140
    %p142 = scmp.ne.s32.totalorder %s131, %s134
    %p143 = scmp.eq.s32.totalorder %s16, 1
    %p144 = por %p142, %p143
    %p145 = scmp.ne.s32.totalorder %s134, %s135
    %p146 = scmp.eq.s32.totalorder %s16, 0
    %p147 = por %p145, %p146
    %p148 = scmp.ne.s32.totalorder %s134, %s135
    %p149 = scmp.eq.s32.totalorder %s17, 1
    %p150 = por %p148, %p149
    %p152 = scmp.ne.s32.totalorder %s135, %s151
    %p153 = scmp.eq.s32.totalorder %s17, 0
    %p154 = por %p152, %p153
    %p155 = scmp.le.s32.totalorder 1, %s11
    %p156 = scmp.lt.s32.totalorder %s11, 3
    %p157 = pnand %p155, %p156
    %p158 = pneg %p157
    // Predicated region
    $region9: #{residual_swin_block.21} parent=5 // pred_check
      _
    $region10: #{residual_swin_block.21} parent=5 // pred_check_branch
      %160 = sbr.rel (%p157) target = $region12
    $region11: #{residual_swin_block.21} parent=5 // pred_region
      %s161 = ssub.s32 %s11, 1
      // Predicated region
      $region13: #{residual_swin_block.21} parent=11 // pred_check
        %p162 = pneg %p58
      $region14: #{residual_swin_block.21} parent=11 // pred_check_branch
        %164 = sbr.rel (%p162) target = $region16
      $region15: #{residual_swin_block.21} parent=11 // pred_region
        _
      $region16: #{residual_swin_block.21} parent=11 // pred_fallthru
        _
      // Predicated region
      $region17: #{residual_swin_block.21} parent=11 // pred_check
        %p165 = pneg %p79
      $region18: #{residual_swin_block.21} parent=11 // pred_check_branch
        %167 = sbr.rel (%p165) target = $region20
      $region19: #{residual_swin_block.21} parent=11 // pred_region
        _
      $region20: #{residual_swin_block.21} parent=11 // pred_fallthru
        _
      // Predicated region
      $region21: #{residual_swin_block.21} parent=11 // pred_check
        %p168 = pneg %p100
      $region22: #{residual_swin_block.21} parent=11 // pred_check_branch
        %170 = sbr.rel (%p168) target = $region24
      $region23: #{residual_swin_block.21} parent=11 // pred_region
        _
      $region24: #{residual_swin_block.21} parent=11 // pred_fallthru
        _
      // Predicated region
      $region25: #{residual_swin_block.21} parent=11 // pred_check
        %p171 = pneg %p121
      $region26: #{residual_swin_block.21} parent=11 // pred_check_branch
        %173 = sbr.rel (%p171) target = $region28
      $region27: #{residual_swin_block.21} parent=11 // pred_region
        _
      $region28: #{residual_swin_block.21} parent=11 // pred_fallthru
        _
    $region12: #{residual_swin_block.21} parent=5 // pred_fallthru
      _
    %p174 = scmp.lt.s32.totalorder %s11, 2
    // Predicated region
    $region29: #{residual_swin_block.21} parent=5 // pred_check
      %p175 = pneg %p174
    $region30: #{residual_swin_block.21} parent=5 // pred_check_branch
      %177 = sbr.rel (%p175) target = $region32
    $region31: #{residual_swin_block.21} parent=5 // pred_region
      // Predicated region
      $region33: #{residual_swin_block.21} parent=31 // pred_check
        %p178 = pneg %p31
      $region34: #{residual_swin_block.21} parent=31 // pred_check_branch
        %180 = sbr.rel (%p178) target = $region36
      $region35: #{residual_swin_block.21} parent=31 // pred_region
        %s181 = smul.u32 8, %s11
        %p182 = scmp.lt.s32.totalorder %s181, 15
        %s183 = scalar_select %p182, %s181, 15
        %s184 = smul.addr %s183, 8
        %s185 = scalar_lea.vmem %s0, %s184
        %s186 = smul.u32 8, %s11
      $region36: #{residual_swin_block.21} parent=31 // pred_fallthru
        _
    $region32: #{residual_swin_block.21} parent=5 // pred_fallthru
      _
    %p187 = scmp.le.s32.totalorder 1, %s11
    %p188 = scmp.lt.s32.totalorder %s11, 3
    %p189 = pnand %p187, %p188
    %p190 = pneg %p189
    // Predicated region
    $region37: #{residual_swin_block.21} parent=5 // pred_check
      _
    $region38: #{residual_swin_block.21} parent=5 // pred_check_branch
      %192 = sbr.rel (%p189) target = $region40
    $region39: #{residual_swin_block.21} parent=5 // pred_region
      %s193 = ssub.s32 %s11, 1
      %s194 = smul.u32 8, %s16
      %p195 = scmp.lt.s32.totalorder %s194, 15
      %s196 = scalar_select %p195, %s194, 15
      %s197 = smul.addr %s196, 8
      %s198 = scalar_lea.vmem %s0, %s197
      %p199 = pneg %p37
      %p200 = pneg %p34
      %p201 = pneg %p58
      %p202 = pneg %p55
      %p203 = pneg %p79
      %p204 = pneg %p76
      %p205 = pneg %p100
      %p206 = pneg %p97
      %p207 = pneg %p121
      %p208 = pneg %p118
      %p209 = pneg %p147
      %p210 = pneg %p144
      %s211 = smul.u32 8, %s16
      %p212 = scmp.lt.s32.totalorder %s211, 15
      %s213 = scalar_select %p212, %s211, 15
      %s214 = smul.addr %s213, 2
      %s215 = smul.addr %s214, 4
      %s216 = scalar_lea.vmem %s5, %s215
      %s217 = smul.u32 8, %s16
      %p218 = scmp.lt.s32.totalorder %s217, 15
      %s219 = scalar_select %p218, %s217, 15
      %s220 = smul.addr %s219, 8
      %s221 = scalar_lea.vmem %s0, %s220
      %s222 = smul.u32 8, %s16
      %s223 = smul.u32 8, %s16
      %p224 = scmp.lt.s32.totalorder %s223, 15
      %s225 = scalar_select %p224, %s223, 15
      %s226 = smul.addr %s225, 2
      %s227 = smul.addr %s226, 4
      %s228 = scalar_lea.vmem %s5, %s227
      %s229 = smul.u32 8, %s16
      %v231 = vld [vmem:[%s221] sm:$0xff]
      %v232 = vld [vmem:[%s221 + $0x8] sm:$0xff]
      %v233 = vld [vmem:[%s221 + $0x10] sm:$0xff]
      %v234 = vld [vmem:[%s221 + $0x18] sm:$0xff]
      %v235 = vld [vmem:[%s221 + $0x20] sm:$0xff]
      %v236 = vld [vmem:[%s221 + $0x28] sm:$0xff]
      %v237 = vld [vmem:[%s221 + $0x30] sm:$0xff]
      %v238 = vld [vmem:[%s221 + $0x38] sm:$0xff]
      %vm239 = vcmask 523264
      %v240 = vsel %vm239, %v231, 0.0
      %241 = vadd.xlane.f32.xlu0 %v240
      %v242 = vpop.xlane.xlu0 %241
      %v243 = vsel %vm239, %v232, 0.0
      %244 = vadd.xlane.f32.xlu0 %v243
      %v245 = vpop.xlane.xlu0 %244
      %v246 = vsel %vm239, %v233, 0.0
      %247 = vadd.xlane.f32.xlu0 %v246
      %v248 = vpop.xlane.xlu0 %247
      %v249 = vsel %vm239, %v234, 0.0
      %250 = vadd.xlane.f32.xlu0 %v249
      %v251 = vpop.xlane.xlu0 %250
      %v252 = vsel %vm239, %v235, 0.0
      %253 = vadd.xlane.f32.xlu0 %v252
      %v254 = vpop.xlane.xlu0 %253
      %v255 = vsel %vm239, %v236, 0.0
      %256 = vadd.xlane.f32.xlu0 %v255
      %v257 = vpop.xlane.xlu0 %256
      %v258 = vsel %vm239, %v237, 0.0
      %259 = vadd.xlane.f32.xlu0 %v258
      %v260 = vpop.xlane.xlu0 %259
      %v261 = vsel %vm239, %v238, 0.0
      %262 = vadd.xlane.f32.xlu0 %v261
      %v263 = vpop.xlane.xlu0 %262
      %v264 = vrcp.pop 64.0
      %v265 = vmul.f32 %v242, %v264
      %v266 = vmul.f32 %v245, %v264
      %v267 = vmul.f32 %v248, %v264
      %v268 = vmul.f32 %v251, %v264
      %v269 = vmul.f32 %v254, %v264
      %v270 = vmul.f32 %v257, %v264
      %v271 = vmul.f32 %v260, %v264
      %v272 = vmul.f32 %v263, %v264
      %v273 = vsub.f32 %v231, %v265
      %v274 = vsub.f32 %v232, %v266
      %v275 = vsub.f32 %v233, %v267
      %v276 = vsub.f32 %v234, %v268
      %v277 = vsub.f32 %v235, %v269
      %v278 = vsub.f32 %v236, %v270
      %v279 = vsub.f32 %v237, %v271
      %v280 = vsub.f32 %v238, %v272
      %v281 = vmul.f32 %v273, %v273
      %v282 = vmul.f32 %v274, %v274
      %v283 = vmul.f32 %v275, %v275
      %v284 = vmul.f32 %v276, %v276
      %v285 = vmul.f32 %v277, %v277
      %v286 = vmul.f32 %v278, %v278
      %v287 = vmul.f32 %v279, %v279
      %v288 = vmul.f32 %v280, %v280
      %v289 = vsel %vm239, %v281, 0.0
      %290 = vadd.xlane.f32.xlu0 %v289
      %v291 = vpop.xlane.xlu0 %290
      %v292 = vsel %vm239, %v282, 0.0
      %293 = vadd.xlane.f32.xlu0 %v292
      %v294 = vpop.xlane.xlu0 %293
      %v295 = vsel %vm239, %v283, 0.0
      %296 = vadd.xlane.f32.xlu0 %v295
      %v297 = vpop.xlane.xlu0 %296
      %v298 = vsel %vm239, %v284, 0.0
      %299 = vadd.xlane.f32.xlu0 %v298
      %v300 = vpop.xlane.xlu0 %299
      %v301 = vsel %vm239, %v285, 0.0
      %302 = vadd.xlane.f32.xlu0 %v301
      %v303 = vpop.xlane.xlu0 %302
      %v304 = vsel %vm239, %v286, 0.0
      %305 = vadd.xlane.f32.xlu0 %v304
      %v306 = vpop.xlane.xlu0 %305
      %v307 = vsel %vm239, %v287, 0.0
      %308 = vadd.xlane.f32.xlu0 %v307
      %v309 = vpop.xlane.xlu0 %308
      %v310 = vsel %vm239, %v288, 0.0
      %311 = vadd.xlane.f32.xlu0 %v310
      %v312 = vpop.xlane.xlu0 %311
      %v313 = vmul.f32 %v291, %v264
      %v314 = vmul.f32 %v294, %v264
      %v315 = vmul.f32 %v297, %v264
      %v316 = vmul.f32 %v300, %v264
      %v317 = vmul.f32 %v303, %v264
      %v318 = vmul.f32 %v306, %v264
      %v319 = vmul.f32 %v309, %v264
      %v320 = vmul.f32 %v312, %v264
      %v321 = vadd.f32 %v313, 1e-05
      %v322 = vadd.f32 %v314, 1e-05
      %v323 = vadd.f32 %v315, 1e-05
      %v324 = vadd.f32 %v316, 1e-05
      %v325 = vadd.f32 %v317, 1e-05
      %v326 = vadd.f32 %v318, 1e-05
      %v327 = vadd.f32 %v319, 1e-05
      %v328 = vadd.f32 %v320, 1e-05
      %v329 = vrsqrt.pop %v321
      %v330 = vrsqrt.pop %v322
      %v331 = vrsqrt.pop %v323
      %v332 = vrsqrt.pop %v324
      %v333 = vrsqrt.pop %v325
      %v334 = vrsqrt.pop %v326
      %v335 = vrsqrt.pop %v327
      %v336 = vrsqrt.pop %v328
      %v337 = vmul.f32 %v273, %v329
      %v338 = vmul.f32 %v274, %v330
      %v339 = vmul.f32 %v275, %v331
      %v340 = vmul.f32 %v276, %v332
      %v341 = vmul.f32 %v277, %v333
      %v342 = vmul.f32 %v278, %v334
      %v343 = vmul.f32 %v279, %v335
      %v344 = vmul.f32 %v280, %v336
      %v345 = vld [vmem:[%s1] sm:$0x1]
      %v347 = vlaneseq
      %v348 = vshrl.u32 %v347, 7
      %v349 = vsub.s32 0, %v348
      %v350 = vrot.slane %v345, %v349
      %v352 = vmul.f32 %v337, %v350
      %v353 = vmul.f32 %v338, %v350
      %v354 = vmul.f32 %v339, %v350
      %v355 = vmul.f32 %v340, %v350
      %v356 = vmul.f32 %v341, %v350
      %v357 = vmul.f32 %v342, %v350
      %v358 = vmul.f32 %v343, %v350
      %v359 = vmul.f32 %v344, %v350
      %v360 = vld [vmem:[%s2] sm:$0x1]
      %v362 = vlaneseq
      %v363 = vshrl.u32 %v362, 7
      %v364 = vsub.s32 0, %v363
      %v365 = vrot.slane %v360, %v364
      %v367 = vadd.f32 %v352, %v365
      %v368 = vadd.f32 %v353, %v365
      %v369 = vadd.f32 %v354, %v365
      %v370 = vadd.f32 %v355, %v365
      %v371 = vadd.f32 %v356, %v365
      %v372 = vadd.f32 %v357, %v365
      %v373 = vadd.f32 %v358, %v365
      %v374 = vadd.f32 %v359, %v365
      %v375 = vpack.c.bf16 %v368, %v367
      %v376 = vpack.c.bf16 %v370, %v369
      %v377 = vpack.c.bf16 %v372, %v371
      %v378 = vpack.c.bf16 %v374, %v373
      %v379 = vld [vmem:[%s3] sm:$0xff]
      %v380 = vld [vmem:[%s3 + $0x8] sm:$0xff]
      %v381 = vld [vmem:[%s3 + $0x10] sm:$0xff]
      %v382 = vld [vmem:[%s3 + $0x18] sm:$0xff]
      %v383 = vld [vmem:[%s3 + $0x20] sm:$0xff]
      %v384 = vld [vmem:[%s3 + $0x28] sm:$0xff]
      %v385 = vld [vmem:[%s3 + $0x30] sm:$0xff]
      %v386 = vld [vmem:[%s3 + $0x38] sm:$0xff]
      %v387 = vld [vmem:[%s4] sm:$0x3]
      %v389 = vlaneseq
      %v390 = vshrl.u32 %v389, 7
      %v391 = vsub.s32 0, %v390
      %v392 = vrot.slane %v387, %v391
      %v393 = vlaneseq
      %v394 = vshrl.u32 %v393, 7
      %v395 = vsub.s32 1, %v394
      %v396 = vrot.slane %v387, %v395
      %v407 = vunpack.c.l.b16 %v379
      %v408 = vunpack.c.h.b16 %v379
      %v409 = vunpack.c.l.b16 %v380
      %v410 = vunpack.c.h.b16 %v380
      %v411 = vunpack.c.l.b16 %v381
      %v412 = vunpack.c.h.b16 %v381
      %v413 = vunpack.c.l.b16 %v382
      %v414 = vunpack.c.h.b16 %v382
      %v415 = vunpack.c.l.b16 %v383
      %v416 = vunpack.c.h.b16 %v383
      %v417 = vunpack.c.l.b16 %v384
      %v418 = vunpack.c.h.b16 %v384
      %v419 = vunpack.c.l.b16 %v385
      %v420 = vunpack.c.h.b16 %v385
      %v421 = vunpack.c.l.b16 %v386
      %v422 = vunpack.c.h.b16 %v386
      %v423 = vpack.c.b16 %v409, %v407
      %v424 = vpack.c.b16 %v410, %v408
      %v425 = vpack.c.b16 %v413, %v411
      %v426 = vpack.c.b16 %v414, %v412
      %v427 = vpack.c.b16 %v417, %v415
      %v428 = vpack.c.b16 %v418, %v416
      %v429 = vpack.c.b16 %v421, %v419
      %v430 = vpack.c.b16 %v422, %v420
      %v440 = vsel %vm239, %v375, 0
      %v443 = vsel %vm239, %v376, 0
      %v446 = vsel %vm239, %v377, 0
      %v449 = vsel %vm239, %v378, 0
      %451 = vmatprep.subr.bf16.mxu0 %v424
      %452 = vmatpush1.bf16.msra.mxu0 %v423
      %453 = vmatprep.subr.bf16.mxu0 %v426
      %454 = vmatpush1.bf16.msra.mxu0 %v425
      %455 = vmatprep.subr.bf16.mxu0 %v428
      %456 = vmatpush1.bf16.msra.mxu0 %v427
      %457 = vmatprep.subr.bf16.mxu0 %v430
      %458 = vmatpush1.bf16.msra.mxu0 %v429
      %459 = vmatprep.subr.bf16.mxu0 0
      %460 = vmatpush1.bf16.msra.mxu0 0
      %461 = vmatprep.subr.bf16.mxu0 0
      %462 = vmatpush1.bf16.msra.mxu0 0
      %463 = vmatprep.subr.bf16.mxu0 0
      %464 = vmatpush1.bf16.msra.mxu0 0
      %465 = vmatprep.subr.bf16.mxu0 0
      %466 = vmatpush1.bf16.msra.mxu0 0
      %467 = vmatprep.subr.bf16.mxu0 0
      %468 = vmatpush1.bf16.msra.mxu0 0
      %469 = vmatprep.subr.bf16.mxu0 0
      %470 = vmatpush1.bf16.msra.mxu0 0
      %471 = vmatprep.subr.bf16.mxu0 0
      %472 = vmatpush1.bf16.msra.mxu0 0
      %473 = vmatprep.subr.bf16.mxu0 0
      %474 = vmatpush1.bf16.msra.mxu0 0
      %475 = vmatprep.subr.bf16.mxu0 0
      %476 = vmatpush1.bf16.msra.mxu0 0
      %477 = vmatprep.subr.bf16.mxu0 0
      %478 = vmatpush1.bf16.msra.mxu0 0
      %479 = vmatprep.subr.bf16.mxu0 0
      %480 = vmatpush1.bf16.msra.mxu0 0
      %481 = vmatprep.subr.bf16.mxu0 0
      %482 = vmatpush1.bf16.msra.mxu0 0
      %483 = vmatprep.mubr.bf16.mxu0 0
      %484 = vmatmul.mubr.bf16.gmra.mrb[0].mxu0 %v440
      %v485 = vpop.f32.mrb[0].mxu0
      %v486 = vadd.f32 %v392, %v485
      %v487 = vpop.f32.mrb[0].mxu0
      %v488 = vadd.f32 %v396, %v487
      %v489 = vpop.f32.mrb[0].mxu0
      %v490 = vadd.f32 %v392, %v489
      %v491 = vpop.f32.mrb[0].mxu0
      %v492 = vadd.f32 %v396, %v491
      %493 = vmatprep.mubr.bf16.mxu0 0
      %494 = vmatmul.mubr.bf16.gmra.mrb[0].mxu0 %v443
      %v495 = vpop.f32.mrb[0].mxu0
      %v496 = vadd.f32 %v392, %v495
      %v497 = vpop.f32.mrb[0].mxu0
      %v498 = vadd.f32 %v396, %v497
      %v499 = vpop.f32.mrb[0].mxu0
      %v500 = vadd.f32 %v392, %v499
      %v501 = vpop.f32.mrb[0].mxu0
      %v502 = vadd.f32 %v396, %v501
      %503 = vmatprep.mubr.bf16.mxu0 0
      %504 = vmatmul.mubr.bf16.gmra.mrb[0].mxu0 %v446
      %v505 = vpop.f32.mrb[0].mxu0
      %v506 = vadd.f32 %v392, %v505
      %v507 = vpop.f32.mrb[0].mxu0
      %v508 = vadd.f32 %v396, %v507
      %v509 = vpop.f32.mrb[0].mxu0
      %v510 = vadd.f32 %v392, %v509
      %v511 = vpop.f32.mrb[0].mxu0
      %v512 = vadd.f32 %v396, %v511
      %513 = vmatprep.mubr.bf16.mxu0 0
      %514 = vmatmul.mubr.bf16.gmra.mrb[0].mxu0 %v449
      %v515 = vpop.f32.mrb[0].mxu0
      %v516 = vadd.f32 %v392, %v515
      %v517 = vpop.f32.mrb[0].mxu0
      %v518 = vadd.f32 %v396, %v517
      %v519 = vpop.f32.mrb[0].mxu0
      %v520 = vadd.f32 %v392, %v519
      %v521 = vpop.f32.mrb[0].mxu0
      %v522 = vadd.f32 %v396, %v521
      %523 = vdwg.mxu0
      %v524 = vpack.c.bf16 %v490, %v486
      %v525 = vpack.c.bf16 %v492, %v488
      %v526 = vpack.c.bf16 %v500, %v496
      %v527 = vpack.c.bf16 %v502, %v498
      %v528 = vpack.c.bf16 %v510, %v506
      %v529 = vpack.c.bf16 %v512, %v508
      %v530 = vpack.c.bf16 %v520, %v516
      %v531 = vpack.c.bf16 %v522, %v518
      %v540 = vunpack.c.l.b16 %v524
      %v541 = vunpack.c.l.b16 %v525
      %v542 = vunpack.c.h.b16 %v524
      %v543 = vunpack.c.h.b16 %v525
      %v544 = vunpack.c.l.b16 %v526
      %v545 = vunpack.c.l.b16 %v527
      %v546 = vunpack.c.h.b16 %v526
      %v547 = vunpack.c.h.b16 %v527
      %v548 = vunpack.c.l.b16 %v528
      %v549 = vunpack.c.l.b16 %v529
      %v550 = vunpack.c.h.b16 %v528
      %v551 = vunpack.c.h.b16 %v529
      %v552 = vunpack.c.l.b16 %v530
      %v553 = vunpack.c.l.b16 %v531
      %v554 = vunpack.c.h.b16 %v530
      %v555 = vunpack.c.h.b16 %v531
      %v556 = vpack.c.b16 %v541, %v540
      %v557 = vpack.c.b16 %v543, %v542
      %v558 = vpack.c.b16 %v545, %v544
      %v559 = vpack.c.b16 %v547, %v546
      %v560 = vpack.c.b16 %v549, %v548
      %v561 = vpack.c.b16 %v551, %v550
      %v562 = vpack.c.b16 %v553, %v552
      %v563 = vpack.c.b16 %v555, %v554
      %vm572 = vcmask 1043456
      %vm573 = vcmask 523268
      %vm574 = vmor %vm573, %vm572
      %575 = vst.msk [vmem:[%s228] sm:$0xff] %vm574, %v556
      %576 = vst.msk [vmem:[%s228 + $0x8] sm:$0xff] %vm574, %v557
      %577 = vst.msk [vmem:[%s228 + $0x10] sm:$0xff] %vm574, %v558
      %578 = vst.msk [vmem:[%s228 + $0x18] sm:$0xff] %vm574, %v559
      %579 = vst.msk [vmem:[%s228 + $0x20] sm:$0xff] %vm574, %v560
      %580 = vst.msk [vmem:[%s228 + $0x28] sm:$0xff] %vm574, %v561
      %581 = vst.msk [vmem:[%s228 + $0x30] sm:$0xff] %vm574, %v562
      %582 = vst.msk [vmem:[%s228 + $0x38] sm:$0xff] %vm574, %v563
      %s583 = smul.u32 8, %s16
      %p584 = scmp.lt.s32.totalorder %s583, 15
      %s585 = scalar_select %p584, %s583, 15
      %s586 = smul.addr %s585, 2
      %s587 = smul.addr %s586, 4
      %s588 = scalar_lea.vmem %s5, %s587
      // Predicated region
      $region41: #{residual_swin_block.21} parent=39 // pred_check
        %p589 = pneg %p144
      $region42: #{residual_swin_block.21} parent=39 // pred_check_branch
        %591 = sbr.rel (%p589) target = $region44
      $region43: #{residual_swin_block.21} parent=39 // pred_region
        %s592 = smul.u32 8, %s16
      $region44: #{residual_swin_block.21} parent=39 // pred_fallthru
        _
    $region40: #{residual_swin_block.21} parent=5 // pred_fallthru
      _
    %p593 = scmp.le.s32.totalorder 2, %s11
    // Predicated region
    $region45: #{residual_swin_block.21} parent=5 // pred_check
      %p594 = pneg %p593
    $region46: #{residual_swin_block.21} parent=5 // pred_check_branch
      %596 = sbr.rel (%p594) target = $region48
    $region47: #{residual_swin_block.21} parent=5 // pred_region
      %s597 = ssub.s32 %s11, 2
      // Predicated region
      $region49: #{residual_swin_block.21} parent=47 // pred_check
        %p598 = pneg %p150
      $region50: #{residual_swin_block.21} parent=47 // pred_check_branch
        %600 = sbr.rel (%p598) target = $region52
      $region51: #{residual_swin_block.21} parent=47 // pred_region
        %s601 = smul.u32 8, %s17
        %p602 = scmp.lt.s32.totalorder %s601, 15
        %s603 = scalar_select %p602, %s601, 15
        %s604 = smul.addr %s603, 2
        %s605 = smul.addr %s604, 4
        %s606 = scalar_lea.vmem %s5, %s605
      $region52: #{residual_swin_block.21} parent=47 // pred_fallthru
        _
    $region48: #{residual_swin_block.21} parent=5 // pred_fallthru
      _
  $region6: #{residual_swin_block.21} parent=0 // loop_footer
    %s15 = sadd.s32 1, %s11
  $region7: #{residual_swin_block.21} parent=0 // loop_footer_branch
    %10 = sbr.rel target = $region3
  $region8: #{residual_swin_block.21} parent=0 // loop_exit
    _

// kernel: residual_swin_block.23
$region0: #{residual_swin_block.23}
  #allocation0 [shape = 'u32[]', space=smem, size = 0x4, offset = 0x4, fixed_abs, tag = 'smem constant byte address 0x4 - core index']
  #allocation1 [shape = 'u32[144,128]{1,0:T(1,128)}', space=vmem, size = 0x12000, scoped, tag = 'internal scratch']
  %s0 = inlined_call_operand.vmem [shape: bf16[128,64], index: 0, kind: input, shape index: {}]
  %s1 = inlined_call_operand.vmem [shape: bf16[64,64], index: 1, kind: input, shape index: {}]
  %s2 = inlined_call_operand.vmem [shape: f32[1,64], index: 2, kind: input, shape index: {}]
  %s3 = inlined_call_operand.vmem [shape: f32[128,64], index: 3, kind: input, shape index: {}]
  %s4 = inlined_call_operand.vmem [shape: f32[128,64], index: 4, kind: output, shape index: {}]
  %s5 = sld [smem:[#allocation0]]
  $region49: #{residual_swin_block.23} parent=0
    _
  %s7 = ssub.s32 1, %s5
  %s8 = scalar_select 0, %s7, %s5
  loop: start=0, step=1, limit=4
  $region2: #{residual_swin_block.23} parent=0 // loop_pre_header
    _
  $region3: #{residual_swin_block.23} parent=0 // loop_header
    %s10 = sphi 0, %s14
    %p11 = scmp.ge.s32.totalorder %s10, 4
    %s20 = sphi 0, %s22
    %s23 = sphi 0, %s20
    %s24 = sphi 0, %s23
    %s40 = sphi 0, %s24
    %s44 = sphi 0, %s44
    %s46 = sphi 0, %s44
    %s47 = sphi 0, %s46
    %s61 = sphi 0, %s47
    %s65 = sphi 0, %s65
    %s67 = sphi 0, %s65
    %s68 = sphi 0, %s67
    %s82 = sphi 0, %s68
    %s88 = sphi 0, %s90
    %s91 = sphi 0, %s88
    %s92 = sphi 0, %s91
    %s108 = sphi 0, %s92
    %s114 = sphi 0, %s116
    %s117 = sphi 0, %s114
    %s118 = sphi 0, %s117
    %s134 = sphi 0, %s118
  $region4: #{residual_swin_block.23} parent=0 // loop_header_branch
    %13 = sbr.rel (%p11) target = $region8
  $region5: #{residual_swin_block.23} parent=0 // loop_body
    %s15 = ssub.s32 %s10, 1
    %s16 = ssub.s32 %s10, 2
    %s17 = sadd.s32 %s10, 1
    %s18 = ssub.s32 %s10, %s17
    %p19 = scmp.eq.s32.totalorder %s18, 0
    %s21 = sadd.s32 %s20, 1
    %s22 = scalar_select %p19, %s20, %s21
    %p25 = pneg %p19
    %p26 = scmp.eq.s32.totalorder %s10, 1
    %p27 = por %p25, %p26
    %p28 = scmp.ne.s32.totalorder %s20, %s23
    %p29 = scmp.eq.s32.totalorder %s10, 0
    %p30 = por %p28, %p29
    %p31 = scmp.ne.s32.totalorder %s20, %s23
    %p32 = scmp.eq.s32.totalorder %s15, 1
    %p33 = por %p31, %p32
    %p34 = scmp.ne.s32.totalorder %s23, %s24
    %p35 = scmp.eq.s32.totalorder %s15, 0
    %p36 = por %p34, %p35
    %p37 = scmp.ne.s32.totalorder %s23, %s24
    %p38 = scmp.eq.s32.totalorder %s16, 1
    %p39 = por %p37, %p38
    %p41 = scmp.ne.s32.totalorder %s24, %s40
    %p42 = scmp.eq.s32.totalorder %s16, 0
    %p43 = por %p41, %p42
    %s45 = sadd.s32 %s44, 1
    %p48 = scmp.eq.s32.totalorder %s10, 1
    %p49 = scmp.ne.s32.totalorder %s44, %s46
    %p50 = scmp.eq.s32.totalorder %s10, 0
    %p51 = por %p49, %p50
    %p52 = scmp.ne.s32.totalorder %s44, %s46
    %p53 = scmp.eq.s32.totalorder %s15, 1
    %p54 = por %p52, %p53
    %p55 = scmp.ne.s32.totalorder %s46, %s47
    %p56 = scmp.eq.s32.totalorder %s15, 0
    %p57 = por %p55, %p56
    %p58 = scmp.ne.s32.totalorder %s46, %s47
    %p59 = scmp.eq.s32.totalorder %s16, 1
    %p60 = por %p58, %p59
    %p62 = scmp.ne.s32.totalorder %s47, %s61
    %p63 = scmp.eq.s32.totalorder %s16, 0
    %p64 = por %p62, %p63
    %s66 = sadd.s32 %s65, 1
    %p69 = scmp.eq.s32.totalorder %s10, 1
    %p70 = scmp.ne.s32.totalorder %s65, %s67
    %p71 = scmp.eq.s32.totalorder %s10, 0
    %p72 = por %p70, %p71
    %p73 = scmp.ne.s32.totalorder %s65, %s67
    %p74 = scmp.eq.s32.totalorder %s15, 1
    %p75 = por %p73, %p74
    %p76 = scmp.ne.s32.totalorder %s67, %s68
    %p77 = scmp.eq.s32.totalorder %s15, 0
    %p78 = por %p76, %p77
    %p79 = scmp.ne.s32.totalorder %s67, %s68
    %p80 = scmp.eq.s32.totalorder %s16, 1
    %p81 = por %p79, %p80
    %p83 = scmp.ne.s32.totalorder %s68, %s82
    %p84 = scmp.eq.s32.totalorder %s16, 0
    %p85 = por %p83, %p84
    %s86 = ssub.s32 %s10, %s17
    %p87 = scmp.eq.s32.totalorder %s86, 0
    %s89 = sadd.s32 %s88, 1
    %s90 = scalar_select %p87, %s88, %s89
    %p93 = pneg %p87
    %p94 = scmp.eq.s32.totalorder %s10, 1
    %p95 = por %p93, %p94
    %p96 = scmp.ne.s32.totalorder %s88, %s91
    %p97 = scmp.eq.s32.totalorder %s10, 0
    %p98 = por %p96, %p97
    %p99 = scmp.ne.s32.totalorder %s88, %s91
    %p100 = scmp.eq.s32.totalorder %s15, 1
    %p101 = por %p99, %p100
    %p102 = scmp.ne.s32.totalorder %s91, %s92
    %p103 = scmp.eq.s32.totalorder %s15, 0
    %p104 = por %p102, %p103
    %p105 = scmp.ne.s32.totalorder %s91, %s92
    %p106 = scmp.eq.s32.totalorder %s16, 1
    %p107 = por %p105, %p106
    %p109 = scmp.ne.s32.totalorder %s92, %s108
    %p110 = scmp.eq.s32.totalorder %s16, 0
    %p111 = por %p109, %p110
    %s112 = ssub.s32 %s10, %s17
    %p113 = scmp.eq.s32.totalorder %s112, 0
    %s115 = sadd.s32 %s114, 1
    %s116 = scalar_select %p113, %s114, %s115
    %p119 = pneg %p113
    %p120 = scmp.eq.s32.totalorder %s10, 1
    %p121 = por %p119, %p120
    %p122 = scmp.ne.s32.totalorder %s114, %s117
    %p123 = scmp.eq.s32.totalorder %s10, 0
    %p124 = por %p122, %p123
    %p125 = scmp.ne.s32.totalorder %s114, %s117
    %p126 = scmp.eq.s32.totalorder %s15, 1
    %p127 = por %p125, %p126
    %p128 = scmp.ne.s32.totalorder %s117, %s118
    %p129 = scmp.eq.s32.totalorder %s15, 0
    %p130 = por %p128, %p129
    %p131 = scmp.ne.s32.totalorder %s117, %s118
    %p132 = scmp.eq.s32.totalorder %s16, 1
    %p133 = por %p131, %p132
    %p135 = scmp.ne.s32.totalorder %s118, %s134
    %p136 = scmp.eq.s32.totalorder %s16, 0
    %p137 = por %p135, %p136
    %p138 = scmp.le.s32.totalorder 1, %s10
    %p139 = scmp.lt.s32.totalorder %s10, 3
    %p140 = pnand %p138, %p139
    %p141 = pneg %p140
    // Predicated region
    $region9: #{residual_swin_block.23} parent=5 // pred_check
      _
    $region10: #{residual_swin_block.23} parent=5 // pred_check_branch
      %143 = sbr.rel (%p140) target = $region12
    $region11: #{residual_swin_block.23} parent=5 // pred_region
      %s144 = ssub.s32 %s10, 1
      // Predicated region
      $region13: #{residual_swin_block.23} parent=11 // pred_check
        %p145 = pneg %p57
      $region14: #{residual_swin_block.23} parent=11 // pred_check_branch
        %147 = sbr.rel (%p145) target = $region16
      $region15: #{residual_swin_block.23} parent=11 // pred_region
        _
      $region16: #{residual_swin_block.23} parent=11 // pred_fallthru
        _
      // Predicated region
      $region17: #{residual_swin_block.23} parent=11 // pred_check
        %p148 = pneg %p78
      $region18: #{residual_swin_block.23} parent=11 // pred_check_branch
        %150 = sbr.rel (%p148) target = $region20
      $region19: #{residual_swin_block.23} parent=11 // pred_region
        _
      $region20: #{residual_swin_block.23} parent=11 // pred_fallthru
        _
    $region12: #{residual_swin_block.23} parent=5 // pred_fallthru
      _
    %p151 = scmp.lt.s32.totalorder %s10, 2
    // Predicated region
    $region21: #{residual_swin_block.23} parent=5 // pred_check
      %p152 = pneg %p151
    $region22: #{residual_swin_block.23} parent=5 // pred_check_branch
      %154 = sbr.rel (%p152) target = $region24
    $region23: #{residual_swin_block.23} parent=5 // pred_region
      // Predicated region
      $region25: #{residual_swin_block.23} parent=23 // pred_check
        %p155 = pneg %p30
      $region26: #{residual_swin_block.23} parent=23 // pred_check_branch
        %157 = sbr.rel (%p155) target = $region28
      $region27: #{residual_swin_block.23} parent=23 // pred_region
        %s158 = smul.u32 8, %s10
        %p159 = scmp.lt.s32.totalorder %s158, 15
        %s160 = scalar_select %p159, %s158, 15
        %s161 = smul.addr %s160, 4
        %s162 = scalar_lea.vmem %s0, %s161
        %s163 = smul.u32 8, %s10
      $region28: #{residual_swin_block.23} parent=23 // pred_fallthru
        _
      // Predicated region
      $region29: #{residual_swin_block.23} parent=23 // pred_check
        %p164 = pneg %p98
      $region30: #{residual_swin_block.23} parent=23 // pred_check_branch
        %166 = sbr.rel (%p164) target = $region32
      $region31: #{residual_swin_block.23} parent=23 // pred_region
        %s167 = smul.u32 8, %s10
        %p168 = scmp.lt.s32.totalorder %s167, 15
        %s169 = scalar_select %p168, %s167, 15
        %s170 = smul.addr %s169, 8
        %s171 = scalar_lea.vmem %s3, %s170
        %s172 = smul.u32 8, %s10
      $region32: #{residual_swin_block.23} parent=23 // pred_fallthru
        _
    $region24: #{residual_swin_block.23} parent=5 // pred_fallthru
      _
    %p173 = scmp.le.s32.totalorder 1, %s10
    %p174 = scmp.lt.s32.totalorder %s10, 3
    %p175 = pnand %p173, %p174
    %p176 = pneg %p175
    // Predicated region
    $region33: #{residual_swin_block.23} parent=5 // pred_check
      _
    $region34: #{residual_swin_block.23} parent=5 // pred_check_branch
      %178 = sbr.rel (%p175) target = $region36
    $region35: #{residual_swin_block.23} parent=5 // pred_region
      %s179 = ssub.s32 %s10, 1
      %s180 = smul.u32 8, %s15
      %p181 = scmp.lt.s32.totalorder %s180, 15
      %s182 = scalar_select %p181, %s180, 15
      %s183 = smul.addr %s182, 4
      %s184 = scalar_lea.vmem %s0, %s183
      %p185 = pneg %p36
      %p186 = pneg %p33
      %p187 = pneg %p57
      %p188 = pneg %p54
      %p189 = pneg %p78
      %p190 = pneg %p75
      %s191 = smul.u32 8, %s15
      %p192 = scmp.lt.s32.totalorder %s191, 15
      %s193 = scalar_select %p192, %s191, 15
      %s194 = smul.addr %s193, 8
      %s195 = scalar_lea.vmem %s3, %s194
      %p196 = pneg %p104
      %p197 = pneg %p101
      %p198 = pneg %p130
      %p199 = pneg %p127
      %s200 = smul.u32 8, %s15
      %p201 = scmp.lt.s32.totalorder %s200, 15
      %s202 = scalar_select %p201, %s200, 15
      %s203 = smul.addr %s202, 8
      %s204 = scalar_lea.vmem %s4, %s203
      %s205 = smul.u32 8, %s15
      %p206 = scmp.lt.s32.totalorder %s205, 15
      %s207 = scalar_select %p206, %s205, 15
      %s208 = smul.addr %s207, 4
      %s209 = scalar_lea.vmem %s0, %s208
      %s210 = smul.u32 8, %s15
      %s211 = smul.u32 8, %s15
      %p212 = scmp.lt.s32.totalorder %s211, 15
      %s213 = scalar_select %p212, %s211, 15
      %s214 = smul.addr %s213, 8
      %s215 = scalar_lea.vmem %s3, %s214
      %s216 = smul.u32 8, %s15
      %s217 = smul.u32 8, %s15
      %p218 = scmp.lt.s32.totalorder %s217, 15
      %s219 = scalar_select %p218, %s217, 15
      %s220 = smul.addr %s219, 8
      %s221 = scalar_lea.vmem %s4, %s220
      %s222 = smul.u32 8, %s15
      %v224 = vld [vmem:[%s209] sm:$0xf]
      %v225 = vld [vmem:[%s209 + $0x4] sm:$0xf]
      %v226 = vld [vmem:[%s209 + $0x8] sm:$0xf]
      %v227 = vld [vmem:[%s209 + $0xc] sm:$0xf]
      %v228 = vld [vmem:[%s209 + $0x10] sm:$0xf]
      %v229 = vld [vmem:[%s209 + $0x14] sm:$0xf]
      %v230 = vld [vmem:[%s209 + $0x18] sm:$0xf]
      %v231 = vld [vmem:[%s209 + $0x1c] sm:$0xf]
      %v232 = vld [vmem:[%s1] sm:$0xf]
      %v233 = vld [vmem:[%s1 + $0x4] sm:$0xf]
      %v234 = vld [vmem:[%s1 + $0x8] sm:$0xf]
      %v235 = vld [vmem:[%s1 + $0xc] sm:$0xf]
      %v236 = vld [vmem:[%s1 + $0x10] sm:$0xf]
      %v237 = vld [vmem:[%s1 + $0x14] sm:$0xf]
      %v238 = vld [vmem:[%s1 + $0x18] sm:$0xf]
      %v239 = vld [vmem:[%s1 + $0x1c] sm:$0xf]
      %v240 = vld [vmem:[%s2] sm:$0x1]
      %v242 = vlaneseq
      %v243 = vshrl.u32 %v242, 7
      %v244 = vsub.s32 0, %v243
      %v245 = vrot.slane %v240, %v244
      %v255 = vunpack.c.l.b16 %v224
      %v256 = vunpack.c.l.b16 %v225
      %v257 = vunpack.c.l.b16 %v226
      %v258 = vunpack.c.l.b16 %v227
      %v259 = vunpack.c.l.b16 %v228
      %v260 = vunpack.c.l.b16 %v229
      %v261 = vunpack.c.l.b16 %v230
      %v262 = vunpack.c.l.b16 %v231
      %v263 = vpack.c.b16 %v256, %v255
      %v264 = vpack.c.b16 %v258, %v257
      %v265 = vpack.c.b16 %v260, %v259
      %v266 = vpack.c.b16 %v262, %v261
      %v275 = vunpack.c.l.b16 %v232
      %v276 = vunpack.c.l.b16 %v233
      %v277 = vunpack.c.l.b16 %v234
      %v278 = vunpack.c.l.b16 %v235
      %v279 = vunpack.c.l.b16 %v236
      %v280 = vunpack.c.l.b16 %v237
      %v281 = vunpack.c.l.b16 %v238
      %v282 = vunpack.c.l.b16 %v239
      %v283 = vpack.c.b16 %v276, %v275
      %v284 = vpack.c.b16 %v278, %v277
      %v285 = vpack.c.b16 %v280, %v279
      %v286 = vpack.c.b16 %v282, %v281
      %vm291 = vcmask 523264
      %v293 = vsel %vm291, %v263, 0
      %v296 = vsel %vm291, %v264, 0
      %v299 = vsel %vm291, %v265, 0
      %v302 = vsel %vm291, %v266, 0
      %304 = vmatprep.subr.bf16.mxu0 0
      %305 = vmatpush1.bf16.msra.mxu0 %v283
      %306 = vmatprep.subr.bf16.mxu0 0
      %307 = vmatpush1.bf16.msra.mxu0 %v284
      %308 = vmatprep.subr.bf16.mxu0 0
      %309 = vmatpush1.bf16.msra.mxu0 %v285
      %310 = vmatprep.subr.bf16.mxu0 0
      %311 = vmatpush1.bf16.msra.mxu0 %v286
      %312 = vmatprep.subr.bf16.mxu0 0
      %313 = vmatpush1.bf16.msra.mxu0 0
      %314 = vmatprep.subr.bf16.mxu0 0
      %315 = vmatpush1.bf16.msra.mxu0 0
      %316 = vmatprep.subr.bf16.mxu0 0
      %317 = vmatpush1.bf16.msra.mxu0 0
      %318 = vmatprep.subr.bf16.mxu0 0
      %319 = vmatpush1.bf16.msra.mxu0 0
      %320 = vmatprep.subr.bf16.mxu0 0
      %321 = vmatpush1.bf16.msra.mxu0 0
      %322 = vmatprep.subr.bf16.mxu0 0
      %323 = vmatpush1.bf16.msra.mxu0 0
      %324 = vmatprep.subr.bf16.mxu0 0
      %325 = vmatpush1.bf16.msra.mxu0 0
      %326 = vmatprep.subr.bf16.mxu0 0
      %327 = vmatpush1.bf16.msra.mxu0 0
      %328 = vmatprep.subr.bf16.mxu0 0
      %329 = vmatpush1.bf16.msra.mxu0 0
      %330 = vmatprep.subr.bf16.mxu0 0
      %331 = vmatpush1.bf16.msra.mxu0 0
      %332 = vmatprep.subr.bf16.mxu0 0
      %333 = vmatpush1.bf16.msra.mxu0 0
      %334 = vmatprep.subr.bf16.mxu0 0
      %335 = vmatpush1.bf16.msra.mxu0 0
      %336 = vmatprep.mubr.bf16.mxu0 0
      %337 = vmatmul.mubr.bf16.gmra.mrb[0].mxu0 %v293
      %v338 = vpop.f32.mrb[0].mxu0
      %v339 = vadd.f32 %v245, %v338
      %v340 = vpop.f32.mrb[0].mxu0
      %v341 = vpop.f32.mrb[0].mxu0
      %v342 = vadd.f32 %v245, %v341
      %v343 = vpop.f32.mrb[0].mxu0
      %344 = vmatprep.mubr.bf16.mxu0 0
      %345 = vmatmul.mubr.bf16.gmra.mrb[0].mxu0 %v296
      %v346 = vpop.f32.mrb[0].mxu0
      %v347 = vadd.f32 %v245, %v346
      %v348 = vpop.f32.mrb[0].mxu0
      %v349 = vpop.f32.mrb[0].mxu0
      %v350 = vadd.f32 %v245, %v349
      %v351 = vpop.f32.mrb[0].mxu0
      %352 = vmatprep.mubr.bf16.mxu0 0
      %353 = vmatmul.mubr.bf16.gmra.mrb[0].mxu0 %v299
      %v354 = vpop.f32.mrb[0].mxu0
      %v355 = vadd.f32 %v245, %v354
      %v356 = vpop.f32.mrb[0].mxu0
      %v357 = vpop.f32.mrb[0].mxu0
      %v358 = vadd.f32 %v245, %v357
      %v359 = vpop.f32.mrb[0].mxu0
      %360 = vmatprep.mubr.bf16.mxu0 0
      %361 = vmatmul.mubr.bf16.gmra.mrb[0].mxu0 %v302
      %v362 = vpop.f32.mrb[0].mxu0
      %v363 = vadd.f32 %v245, %v362
      %v364 = vpop.f32.mrb[0].mxu0
      %v365 = vpop.f32.mrb[0].mxu0
      %v366 = vadd.f32 %v245, %v365
      %v367 = vpop.f32.mrb[0].mxu0
      %368 = vdwg.mxu0
      %v369 = vld [vmem:[%s215] sm:$0xff]
      %v370 = vld [vmem:[%s215 + $0x8] sm:$0xff]
      %v371 = vld [vmem:[%s215 + $0x10] sm:$0xff]
      %v372 = vld [vmem:[%s215 + $0x18] sm:$0xff]
      %v373 = vld [vmem:[%s215 + $0x20] sm:$0xff]
      %v374 = vld [vmem:[%s215 + $0x28] sm:$0xff]
      %v375 = vld [vmem:[%s215 + $0x30] sm:$0xff]
      %v376 = vld [vmem:[%s215 + $0x38] sm:$0xff]
      %v377 = vadd.f32 %v339, %v369
      %v378 = vadd.f32 %v342, %v370
      %v379 = vadd.f32 %v347, %v371
      %v380 = vadd.f32 %v350, %v372
      %v381 = vadd.f32 %v355, %v373
      %v382 = vadd.f32 %v358, %v374
      %v383 = vadd.f32 %v363, %v375
      %v384 = vadd.f32 %v366, %v376
      %385 = vst.msk [vmem:[%s221] sm:$0xff] %vm291, %v377
      %386 = vst.msk [vmem:[%s221 + $0x8] sm:$0xff] %vm291, %v378
      %387 = vst.msk [vmem:[%s221 + $0x10] sm:$0xff] %vm291, %v379
      %388 = vst.msk [vmem:[%s221 + $0x18] sm:$0xff] %vm291, %v380
      %389 = vst.msk [vmem:[%s221 + $0x20] sm:$0xff] %vm291, %v381
      %390 = vst.msk [vmem:[%s221 + $0x28] sm:$0xff] %vm291, %v382
      %391 = vst.msk [vmem:[%s221 + $0x30] sm:$0xff] %vm291, %v383
      %392 = vst.msk [vmem:[%s221 + $0x38] sm:$0xff] %vm291, %v384
      %s393 = smul.u32 8, %s15
      %p394 = scmp.lt.s32.totalorder %s393, 15
      %s395 = scalar_select %p394, %s393, 15
      %s396 = smul.addr %s395, 8
      %s397 = scalar_lea.vmem %s4, %s396
      // Predicated region
      $region37: #{residual_swin_block.23} parent=35 // pred_check
        %p398 = pneg %p127
      $region38: #{residual_swin_block.23} parent=35 // pred_check_branch
        %400 = sbr.rel (%p398) target = $region40
      $region39: #{residual_swin_block.23} parent=35 // pred_region
        %s401 = smul.u32 8, %s15
      $region40: #{residual_swin_block.23} parent=35 // pred_fallthru
        _
    $region36: #{residual_swin_block.23} parent=5 // pred_fallthru
      _
    %p402 = scmp.le.s32.totalorder 2, %s10
    // Predicated region
    $region41: #{residual_swin_block.23} parent=5 // pred_check
      %p403 = pneg %p402
    $region42: #{residual_swin_block.23} parent=5 // pred_check_branch
      %405 = sbr.rel (%p403) target = $region44
    $region43: #{residual_swin_block.23} parent=5 // pred_region
      %s406 = ssub.s32 %s10, 2
      // Predicated region
      $region45: #{residual_swin_block.23} parent=43 // pred_check
        %p407 = pneg %p133
      $region46: #{residual_swin_block.23} parent=43 // pred_check_branch
        %409 = sbr.rel (%p407) target = $region48
      $region47: #{residual_swin_block.23} parent=43 // pred_region
        %s410 = smul.u32 8, %s16
        %p411 = scmp.lt.s32.totalorder %s410, 15
        %s412 = scalar_select %p411, %s410, 15
        %s413 = smul.addr %s412, 8
        %s414 = scalar_lea.vmem %s4, %s413
      $region48: #{residual_swin_block.23} parent=43 // pred_fallthru
        _
    $region44: #{residual_swin_block.23} parent=5 // pred_fallthru
      _
  $region6: #{residual_swin_block.23} parent=0 // loop_footer
    %s14 = sadd.s32 1, %s10
  $region7: #{residual_swin_block.23} parent=0 // loop_footer_branch
    %9 = sbr.rel target = $region3
  $region8: #{residual_swin_block.23} parent=0 // loop_exit
    _

// kernel: residual_swin_block.24
$region0: #{residual_swin_block.24}
  #allocation0 [shape = 'u32[]', space=smem, size = 0x4, offset = 0x4, fixed_abs, tag = 'smem constant byte address 0x4 - core index']
  #allocation1 [shape = 'u32[144,128]{1,0:T(1,128)}', space=vmem, size = 0x12000, scoped, tag = 'internal scratch']
  %s0 = inlined_call_operand.vmem [shape: f32[128,64], index: 0, kind: input, shape index: {}]
  %s1 = inlined_call_operand.vmem [shape: f32[1,64], index: 1, kind: input, shape index: {}]
  %s2 = inlined_call_operand.vmem [shape: f32[1,64], index: 2, kind: input, shape index: {}]
  %s3 = inlined_call_operand.vmem [shape: bf16[64,64], index: 3, kind: input, shape index: {}]
  %s4 = inlined_call_operand.vmem [shape: f32[1,64], index: 4, kind: input, shape index: {}]
  %s5 = inlined_call_operand.vmem [shape: bf16[128,64], index: 5, kind: output, shape index: {}]
  %s6 = sld [smem:[#allocation0]]
  $region53: #{residual_swin_block.24} parent=0
    _
  %s8 = ssub.s32 1, %s6
  %s9 = scalar_select 0, %s8, %s6
  loop: start=0, step=1, limit=4
  $region2: #{residual_swin_block.24} parent=0 // loop_pre_header
    _
  $region3: #{residual_swin_block.24} parent=0 // loop_header
    %s11 = sphi 0, %s15
    %p12 = scmp.ge.s32.totalorder %s11, 4
    %s21 = sphi 0, %s23
    %s24 = sphi 0, %s21
    %s25 = sphi 0, %s24
    %s41 = sphi 0, %s25
    %s45 = sphi 0, %s45
    %s47 = sphi 0, %s45
    %s48 = sphi 0, %s47
    %s62 = sphi 0, %s48
    %s66 = sphi 0, %s66
    %s68 = sphi 0, %s66
    %s69 = sphi 0, %s68
    %s83 = sphi 0, %s69
    %s87 = sphi 0, %s87
    %s89 = sphi 0, %s87
    %s90 = sphi 0, %s89
    %s104 = sphi 0, %s90
    %s108 = sphi 0, %s108
    %s110 = sphi 0, %s108
    %s111 = sphi 0, %s110
    %s125 = sphi 0, %s111
    %s131 = sphi 0, %s133
    %s134 = sphi 0, %s131
    %s135 = sphi 0, %s134
    %s151 = sphi 0, %s135
  $region4: #{residual_swin_block.24} parent=0 // loop_header_branch
    %14 = sbr.rel (%p12) target = $region8
  $region5: #{residual_swin_block.24} parent=0 // loop_body
    %s16 = ssub.s32 %s11, 1
    %s17 = ssub.s32 %s11, 2
    %s18 = sadd.s32 %s11, 1
    %s19 = ssub.s32 %s11, %s18
    %p20 = scmp.eq.s32.totalorder %s19, 0
    %s22 = sadd.s32 %s21, 1
    %s23 = scalar_select %p20, %s21, %s22
    %p26 = pneg %p20
    %p27 = scmp.eq.s32.totalorder %s11, 1
    %p28 = por %p26, %p27
    %p29 = scmp.ne.s32.totalorder %s21, %s24
    %p30 = scmp.eq.s32.totalorder %s11, 0
    %p31 = por %p29, %p30
    %p32 = scmp.ne.s32.totalorder %s21, %s24
    %p33 = scmp.eq.s32.totalorder %s16, 1
    %p34 = por %p32, %p33
    %p35 = scmp.ne.s32.totalorder %s24, %s25
    %p36 = scmp.eq.s32.totalorder %s16, 0
    %p37 = por %p35, %p36
    %p38 = scmp.ne.s32.totalorder %s24, %s25
    %p39 = scmp.eq.s32.totalorder %s17, 1
    %p40 = por %p38, %p39
    %p42 = scmp.ne.s32.totalorder %s25, %s41
    %p43 = scmp.eq.s32.totalorder %s17, 0
    %p44 = por %p42, %p43
    %s46 = sadd.s32 %s45, 1
    %p49 = scmp.eq.s32.totalorder %s11, 1
    %p50 = scmp.ne.s32.totalorder %s45, %s47
    %p51 = scmp.eq.s32.totalorder %s11, 0
    %p52 = por %p50, %p51
    %p53 = scmp.ne.s32.totalorder %s45, %s47
    %p54 = scmp.eq.s32.totalorder %s16, 1
    %p55 = por %p53, %p54
    %p56 = scmp.ne.s32.totalorder %s47, %s48
    %p57 = scmp.eq.s32.totalorder %s16, 0
    %p58 = por %p56, %p57
    %p59 = scmp.ne.s32.totalorder %s47, %s48
    %p60 = scmp.eq.s32.totalorder %s17, 1
    %p61 = por %p59, %p60
    %p63 = scmp.ne.s32.totalorder %s48, %s62
    %p64 = scmp.eq.s32.totalorder %s17, 0
    %p65 = por %p63, %p64
    %s67 = sadd.s32 %s66, 1
    %p70 = scmp.eq.s32.totalorder %s11, 1
    %p71 = scmp.ne.s32.totalorder %s66, %s68
    %p72 = scmp.eq.s32.totalorder %s11, 0
    %p73 = por %p71, %p72
    %p74 = scmp.ne.s32.totalorder %s66, %s68
    %p75 = scmp.eq.s32.totalorder %s16, 1
    %p76 = por %p74, %p75
    %p77 = scmp.ne.s32.totalorder %s68, %s69
    %p78 = scmp.eq.s32.totalorder %s16, 0
    %p79 = por %p77, %p78
    %p80 = scmp.ne.s32.totalorder %s68, %s69
    %p81 = scmp.eq.s32.totalorder %s17, 1
    %p82 = por %p80, %p81
    %p84 = scmp.ne.s32.totalorder %s69, %s83
    %p85 = scmp.eq.s32.totalorder %s17, 0
    %p86 = por %p84, %p85
    %s88 = sadd.s32 %s87, 1
    %p91 = scmp.eq.s32.totalorder %s11, 1
    %p92 = scmp.ne.s32.totalorder %s87, %s89
    %p93 = scmp.eq.s32.totalorder %s11, 0
    %p94 = por %p92, %p93
    %p95 = scmp.ne.s32.totalorder %s87, %s89
    %p96 = scmp.eq.s32.totalorder %s16, 1
    %p97 = por %p95, %p96
    %p98 = scmp.ne.s32.totalorder %s89, %s90
    %p99 = scmp.eq.s32.totalorder %s16, 0
    %p100 = por %p98, %p99
    %p101 = scmp.ne.s32.totalorder %s89, %s90
    %p102 = scmp.eq.s32.totalorder %s17, 1
    %p103 = por %p101, %p102
    %p105 = scmp.ne.s32.totalorder %s90, %s104
    %p106 = scmp.eq.s32.totalorder %s17, 0
    %p107 = por %p105, %p106
    %s109 = sadd.s32 %s108, 1
    %p112 = scmp.eq.s32.totalorder %s11, 1
    %p113 = scmp.ne.s32.totalorder %s108, %s110
    %p114 = scmp.eq.s32.totalorder %s11, 0
    %p115 = por %p113, %p114
    %p116 = scmp.ne.s32.totalorder %s108, %s110
    %p117 = scmp.eq.s32.totalorder %s16, 1
    %p118 = por %p116, %p117
    %p119 = scmp.ne.s32.totalorder %s110, %s111
    %p120 = scmp.eq.s32.totalorder %s16, 0
    %p121 = por %p119, %p120
    %p122 = scmp.ne.s32.totalorder %s110, %s111
    %p123 = scmp.eq.s32.totalorder %s17, 1
    %p124 = por %p122, %p123
    %p126 = scmp.ne.s32.totalorder %s111, %s125
    %p127 = scmp.eq.s32.totalorder %s17, 0
    %p128 = por %p126, %p127
    %s129 = ssub.s32 %s11, %s18
    %p130 = scmp.eq.s32.totalorder %s129, 0
    %s132 = sadd.s32 %s131, 1
    %s133 = scalar_select %p130, %s131, %s132
    %p136 = pneg %p130
    %p137 = scmp.eq.s32.totalorder %s11, 1
    %p138 = por %p136, %p137
    %p139 = scmp.ne.s32.totalorder %s131, %s134
    %p140 = scmp.eq.s32.totalorder %s11, 0
    %p141 = por %p139, %p140
    %p142 = scmp.ne.s32.totalorder %s131, %s134
    %p143 = scmp.eq.s32.totalorder %s16, 1
    %p144 = por %p142, %p143
    %p145 = scmp.ne.s32.totalorder %s134, %s135
    %p146 = scmp.eq.s32.totalorder %s16, 0
    %p147 = por %p145, %p146
    %p148 = scmp.ne.s32.totalorder %s134, %s135
    %p149 = scmp.eq.s32.totalorder %s17, 1
    %p150 = por %p148, %p149
    %p152 = scmp.ne.s32.totalorder %s135, %s151
    %p153 = scmp.eq.s32.totalorder %s17, 0
    %p154 = por %p152, %p153
    %p155 = scmp.le.s32.totalorder 1, %s11
    %p156 = scmp.lt.s32.totalorder %s11, 3
    %p157 = pnand %p155, %p156
    %p158 = pneg %p157
    // Predicated region
    $region9: #{residual_swin_block.24} parent=5 // pred_check
      _
    $region10: #{residual_swin_block.24} parent=5 // pred_check_branch
      %160 = sbr.rel (%p157) target = $region12
    $region11: #{residual_swin_block.24} parent=5 // pred_region
      %s161 = ssub.s32 %s11, 1
      // Predicated region
      $region13: #{residual_swin_block.24} parent=11 // pred_check
        %p162 = pneg %p58
      $region14: #{residual_swin_block.24} parent=11 // pred_check_branch
        %164 = sbr.rel (%p162) target = $region16
      $region15: #{residual_swin_block.24} parent=11 // pred_region
        _
      $region16: #{residual_swin_block.24} parent=11 // pred_fallthru
        _
      // Predicated region
      $region17: #{residual_swin_block.24} parent=11 // pred_check
        %p165 = pneg %p79
      $region18: #{residual_swin_block.24} parent=11 // pred_check_branch
        %167 = sbr.rel (%p165) target = $region20
      $region19: #{residual_swin_block.24} parent=11 // pred_region
        _
      $region20: #{residual_swin_block.24} parent=11 // pred_fallthru
        _
      // Predicated region
      $region21: #{residual_swin_block.24} parent=11 // pred_check
        %p168 = pneg %p100
      $region22: #{residual_swin_block.24} parent=11 // pred_check_branch
        %170 = sbr.rel (%p168) target = $region24
      $region23: #{residual_swin_block.24} parent=11 // pred_region
        _
      $region24: #{residual_swin_block.24} parent=11 // pred_fallthru
        _
      // Predicated region
      $region25: #{residual_swin_block.24} parent=11 // pred_check
        %p171 = pneg %p121
      $region26: #{residual_swin_block.24} parent=11 // pred_check_branch
        %173 = sbr.rel (%p171) target = $region28
      $region27: #{residual_swin_block.24} parent=11 // pred_region
        _
      $region28: #{residual_swin_block.24} parent=11 // pred_fallthru
        _
    $region12: #{residual_swin_block.24} parent=5 // pred_fallthru
      _
    %p174 = scmp.lt.s32.totalorder %s11, 2
    // Predicated region
    $region29: #{residual_swin_block.24} parent=5 // pred_check
      %p175 = pneg %p174
    $region30: #{residual_swin_block.24} parent=5 // pred_check_branch
      %177 = sbr.rel (%p175) target = $region32
    $region31: #{residual_swin_block.24} parent=5 // pred_region
      // Predicated region
      $region33: #{residual_swin_block.24} parent=31 // pred_check
        %p178 = pneg %p31
      $region34: #{residual_swin_block.24} parent=31 // pred_check_branch
        %180 = sbr.rel (%p178) target = $region36
      $region35: #{residual_swin_block.24} parent=31 // pred_region
        %s181 = smul.u32 8, %s11
        %p182 = scmp.lt.s32.totalorder %s181, 15
        %s183 = scalar_select %p182, %s181, 15
        %s184 = smul.addr %s183, 8
        %s185 = scalar_lea.vmem %s0, %s184
        %s186 = smul.u32 8, %s11
      $region36: #{residual_swin_block.24} parent=31 // pred_fallthru
        _
    $region32: #{residual_swin_block.24} parent=5 // pred_fallthru
      _
    %p187 = scmp.le.s32.totalorder 1, %s11
    %p188 = scmp.lt.s32.totalorder %s11, 3
    %p189 = pnand %p187, %p188
    %p190 = pneg %p189
    // Predicated region
    $region37: #{residual_swin_block.24} parent=5 // pred_check
      _
    $region38: #{residual_swin_block.24} parent=5 // pred_check_branch
      %192 = sbr.rel (%p189) target = $region40
    $region39: #{residual_swin_block.24} parent=5 // pred_region
      %s193 = ssub.s32 %s11, 1
      %s194 = smul.u32 8, %s16
      %p195 = scmp.lt.s32.totalorder %s194, 15
      %s196 = scalar_select %p195, %s194, 15
      %s197 = smul.addr %s196, 8
      %s198 = scalar_lea.vmem %s0, %s197
      %p199 = pneg %p37
      %p200 = pneg %p34
      %p201 = pneg %p58
      %p202 = pneg %p55
      %p203 = pneg %p79
      %p204 = pneg %p76
      %p205 = pneg %p100
      %p206 = pneg %p97
      %p207 = pneg %p121
      %p208 = pneg %p118
      %p209 = pneg %p147
      %p210 = pneg %p144
      %s211 = smul.u32 8, %s16
      %p212 = scmp.lt.s32.totalorder %s211, 15
      %s213 = scalar_select %p212, %s211, 15
      %s214 = smul.addr %s213, 4
      %s215 = scalar_lea.vmem %s5, %s214
      %s216 = smul.u32 8, %s16
      %p217 = scmp.lt.s32.totalorder %s216, 15
      %s218 = scalar_select %p217, %s216, 15
      %s219 = smul.addr %s218, 8
      %s220 = scalar_lea.vmem %s0, %s219
      %s221 = smul.u32 8, %s16
      %s222 = smul.u32 8, %s16
      %p223 = scmp.lt.s32.totalorder %s222, 15
      %s224 = scalar_select %p223, %s222, 15
      %s225 = smul.addr %s224, 4
      %s226 = scalar_lea.vmem %s5, %s225
      %s227 = smul.u32 8, %s16
      %v229 = vld [vmem:[%s220] sm:$0xff]
      %v230 = vld [vmem:[%s220 + $0x8] sm:$0xff]
      %v231 = vld [vmem:[%s220 + $0x10] sm:$0xff]
      %v232 = vld [vmem:[%s220 + $0x18] sm:$0xff]
      %v233 = vld [vmem:[%s220 + $0x20] sm:$0xff]
      %v234 = vld [vmem:[%s220 + $0x28] sm:$0xff]
      %v235 = vld [vmem:[%s220 + $0x30] sm:$0xff]
      %v236 = vld [vmem:[%s220 + $0x38] sm:$0xff]
      %vm237 = vcmask 523264
      %v238 = vsel %vm237, %v229, 0.0
      %239 = vadd.xlane.f32.xlu0 %v238
      %v240 = vpop.xlane.xlu0 %239
      %v241 = vsel %vm237, %v230, 0.0
      %242 = vadd.xlane.f32.xlu0 %v241
      %v243 = vpop.xlane.xlu0 %242
      %v244 = vsel %vm237, %v231, 0.0
      %245 = vadd.xlane.f32.xlu0 %v244
      %v246 = vpop.xlane.xlu0 %245
      %v247 = vsel %vm237, %v232, 0.0
      %248 = vadd.xlane.f32.xlu0 %v247
      %v249 = vpop.xlane.xlu0 %248
      %v250 = vsel %vm237, %v233, 0.0
      %251 = vadd.xlane.f32.xlu0 %v250
      %v252 = vpop.xlane.xlu0 %251
      %v253 = vsel %vm237, %v234, 0.0
      %254 = vadd.xlane.f32.xlu0 %v253
      %v255 = vpop.xlane.xlu0 %254
      %v256 = vsel %vm237, %v235, 0.0
      %257 = vadd.xlane.f32.xlu0 %v256
      %v258 = vpop.xlane.xlu0 %257
      %v259 = vsel %vm237, %v236, 0.0
      %260 = vadd.xlane.f32.xlu0 %v259
      %v261 = vpop.xlane.xlu0 %260
      %v262 = vrcp.pop 64.0
      %v263 = vmul.f32 %v240, %v262
      %v264 = vmul.f32 %v243, %v262
      %v265 = vmul.f32 %v246, %v262
      %v266 = vmul.f32 %v249, %v262
      %v267 = vmul.f32 %v252, %v262
      %v268 = vmul.f32 %v255, %v262
      %v269 = vmul.f32 %v258, %v262
      %v270 = vmul.f32 %v261, %v262
      %v271 = vsub.f32 %v229, %v263
      %v272 = vsub.f32 %v230, %v264
      %v273 = vsub.f32 %v231, %v265
      %v274 = vsub.f32 %v232, %v266
      %v275 = vsub.f32 %v233, %v267
      %v276 = vsub.f32 %v234, %v268
      %v277 = vsub.f32 %v235, %v269
      %v278 = vsub.f32 %v236, %v270
      %v279 = vmul.f32 %v271, %v271
      %v280 = vmul.f32 %v272, %v272
      %v281 = vmul.f32 %v273, %v273
      %v282 = vmul.f32 %v274, %v274
      %v283 = vmul.f32 %v275, %v275
      %v284 = vmul.f32 %v276, %v276
      %v285 = vmul.f32 %v277, %v277
      %v286 = vmul.f32 %v278, %v278
      %v287 = vsel %vm237, %v279, 0.0
      %288 = vadd.xlane.f32.xlu0 %v287
      %v289 = vpop.xlane.xlu0 %288
      %v290 = vsel %vm237, %v280, 0.0
      %291 = vadd.xlane.f32.xlu0 %v290
      %v292 = vpop.xlane.xlu0 %291
      %v293 = vsel %vm237, %v281, 0.0
      %294 = vadd.xlane.f32.xlu0 %v293
      %v295 = vpop.xlane.xlu0 %294
      %v296 = vsel %vm237, %v282, 0.0
      %297 = vadd.xlane.f32.xlu0 %v296
      %v298 = vpop.xlane.xlu0 %297
      %v299 = vsel %vm237, %v283, 0.0
      %300 = vadd.xlane.f32.xlu0 %v299
      %v301 = vpop.xlane.xlu0 %300
      %v302 = vsel %vm237, %v284, 0.0
      %303 = vadd.xlane.f32.xlu0 %v302
      %v304 = vpop.xlane.xlu0 %303
      %v305 = vsel %vm237, %v285, 0.0
      %306 = vadd.xlane.f32.xlu0 %v305
      %v307 = vpop.xlane.xlu0 %306
      %v308 = vsel %vm237, %v286, 0.0
      %309 = vadd.xlane.f32.xlu0 %v308
      %v310 = vpop.xlane.xlu0 %309
      %v311 = vmul.f32 %v289, %v262
      %v312 = vmul.f32 %v292, %v262
      %v313 = vmul.f32 %v295, %v262
      %v314 = vmul.f32 %v298, %v262
      %v315 = vmul.f32 %v301, %v262
      %v316 = vmul.f32 %v304, %v262
      %v317 = vmul.f32 %v307, %v262
      %v318 = vmul.f32 %v310, %v262
      %v319 = vadd.f32 %v311, 1e-05
      %v320 = vadd.f32 %v312, 1e-05
      %v321 = vadd.f32 %v313, 1e-05
      %v322 = vadd.f32 %v314, 1e-05
      %v323 = vadd.f32 %v315, 1e-05
      %v324 = vadd.f32 %v316, 1e-05
      %v325 = vadd.f32 %v317, 1e-05
      %v326 = vadd.f32 %v318, 1e-05
      %v327 = vrsqrt.pop %v319
      %v328 = vrsqrt.pop %v320
      %v329 = vrsqrt.pop %v321
      %v330 = vrsqrt.pop %v322
      %v331 = vrsqrt.pop %v323
      %v332 = vrsqrt.pop %v324
      %v333 = vrsqrt.pop %v325
      %v334 = vrsqrt.pop %v326
      %v335 = vmul.f32 %v271, %v327
      %v336 = vmul.f32 %v272, %v328
      %v337 = vmul.f32 %v273, %v329
      %v338 = vmul.f32 %v274, %v330
      %v339 = vmul.f32 %v275, %v331
      %v340 = vmul.f32 %v276, %v332
      %v341 = vmul.f32 %v277, %v333
      %v342 = vmul.f32 %v278, %v334
      %v343 = vld [vmem:[%s1] sm:$0x1]
      %v345 = vlaneseq
      %v346 = vshrl.u32 %v345, 7
      %v347 = vsub.s32 0, %v346
      %v348 = vrot.slane %v343, %v347
      %v350 = vmul.f32 %v335, %v348
      %v351 = vmul.f32 %v336, %v348
      %v352 = vmul.f32 %v337, %v348
      %v353 = vmul.f32 %v338, %v348
      %v354 = vmul.f32 %v339, %v348
      %v355 = vmul.f32 %v340, %v348
      %v356 = vmul.f32 %v341, %v348
      %v357 = vmul.f32 %v342, %v348
      %v358 = vld [vmem:[%s2] sm:$0x1]
      %v360 = vlaneseq
      %v361 = vshrl.u32 %v360, 7
      %v362 = vsub.s32 0, %v361
      %v363 = vrot.slane %v358, %v362
      %v365 = vadd.f32 %v350, %v363
      %v366 = vadd.f32 %v351, %v363
      %v367 = vadd.f32 %v352, %v363
      %v368 = vadd.f32 %v353, %v363
      %v369 = vadd.f32 %v354, %v363
      %v370 = vadd.f32 %v355, %v363
      %v371 = vadd.f32 %v356, %v363
      %v372 = vadd.f32 %v357, %v363
      %v373 = vpack.c.bf16 %v366, %v365
      %v374 = vpack.c.bf16 %v368, %v367
      %v375 = vpack.c.bf16 %v370, %v369
      %v376 = vpack.c.bf16 %v372, %v371
      %v377 = vld [vmem:[%s3] sm:$0xf]
      %v378 = vld [vmem:[%s3 + $0x4] sm:$0xf]
      %v379 = vld [vmem:[%s3 + $0x8] sm:$0xf]
      %v380 = vld [vmem:[%s3 + $0xc] sm:$0xf]
      %v381 = vld [vmem:[%s3 + $0x10] sm:$0xf]
      %v382 = vld [vmem:[%s3 + $0x14] sm:$0xf]
      %v383 = vld [vmem:[%s3 + $0x18] sm:$0xf]
      %v384 = vld [vmem:[%s3 + $0x1c] sm:$0xf]
      %v385 = vld [vmem:[%s4] sm:$0x1]
      %v387 = vlaneseq
      %v388 = vshrl.u32 %v387, 7
      %v389 = vsub.s32 0, %v388
      %v390 = vrot.slane %v385, %v389
      %v400 = vunpack.c.l.b16 %v377
      %v401 = vunpack.c.l.b16 %v378
      %v402 = vunpack.c.l.b16 %v379
      %v403 = vunpack.c.l.b16 %v380
      %v404 = vunpack.c.l.b16 %v381
      %v405 = vunpack.c.l.b16 %v382
      %v406 = vunpack.c.l.b16 %v383
      %v407 = vunpack.c.l.b16 %v384
      %v408 = vpack.c.b16 %v401, %v400
      %v409 = vpack.c.b16 %v403, %v402
      %v410 = vpack.c.b16 %v405, %v404
      %v411 = vpack.c.b16 %v407, %v406
      %v417 = vsel %vm237, %v373, 0
      %v420 = vsel %vm237, %v374, 0
      %v423 = vsel %vm237, %v375, 0
      %v426 = vsel %vm237, %v376, 0
      %428 = vmatprep.subr.bf16.mxu0 0
      %429 = vmatpush1.bf16.msra.mxu0 %v408
      %430 = vmatprep.subr.bf16.mxu0 0
      %431 = vmatpush1.bf16.msra.mxu0 %v409
      %432 = vmatprep.subr.bf16.mxu0 0
      %433 = vmatpush1.bf16.msra.mxu0 %v410
      %434 = vmatprep.subr.bf16.mxu0 0
      %435 = vmatpush1.bf16.msra.mxu0 %v411
      %436 = vmatprep.subr.bf16.mxu0 0
      %437 = vmatpush1.bf16.msra.mxu0 0
      %438 = vmatprep.subr.bf16.mxu0 0
      %439 = vmatpush1.bf16.msra.mxu0 0
      %440 = vmatprep.subr.bf16.mxu0 0
      %441 = vmatpush1.bf16.msra.mxu0 0
      %442 = vmatprep.subr.bf16.mxu0 0
      %443 = vmatpush1.bf16.msra.mxu0 0
      %444 = vmatprep.subr.bf16.mxu0 0
      %445 = vmatpush1.bf16.msra.mxu0 0
      %446 = vmatprep.subr.bf16.mxu0 0
      %447 = vmatpush1.bf16.msra.mxu0 0
      %448 = vmatprep.subr.bf16.mxu0 0
      %449 = vmatpush1.bf16.msra.mxu0 0
      %450 = vmatprep.subr.bf16.mxu0 0
      %451 = vmatpush1.bf16.msra.mxu0 0
      %452 = vmatprep.subr.bf16.mxu0 0
      %453 = vmatpush1.bf16.msra.mxu0 0
      %454 = vmatprep.subr.bf16.mxu0 0
      %455 = vmatpush1.bf16.msra.mxu0 0
      %456 = vmatprep.subr.bf16.mxu0 0
      %457 = vmatpush1.bf16.msra.mxu0 0
      %458 = vmatprep.subr.bf16.mxu0 0
      %459 = vmatpush1.bf16.msra.mxu0 0
      %460 = vmatprep.mubr.bf16.mxu0 0
      %461 = vmatmul.mubr.bf16.gmra.mrb[0].mxu0 %v417
      %v462 = vpop.f32.mrb[0].mxu0
      %v463 = vadd.f32 %v390, %v462
      %v464 = vpop.f32.mrb[0].mxu0
      %v465 = vpop.f32.mrb[0].mxu0
      %v466 = vadd.f32 %v390, %v465
      %v467 = vpop.f32.mrb[0].mxu0
      %468 = vmatprep.mubr.bf16.mxu0 0
      %469 = vmatmul.mubr.bf16.gmra.mrb[0].mxu0 %v420
      %v470 = vpop.f32.mrb[0].mxu0
      %v471 = vadd.f32 %v390, %v470
      %v472 = vpop.f32.mrb[0].mxu0
      %v473 = vpop.f32.mrb[0].mxu0
      %v474 = vadd.f32 %v390, %v473
      %v475 = vpop.f32.mrb[0].mxu0
      %476 = vmatprep.mubr.bf16.mxu0 0
      %477 = vmatmul.mubr.bf16.gmra.mrb[0].mxu0 %v423
      %v478 = vpop.f32.mrb[0].mxu0
      %v479 = vadd.f32 %v390, %v478
      %v480 = vpop.f32.mrb[0].mxu0
      %v481 = vpop.f32.mrb[0].mxu0
      %v482 = vadd.f32 %v390, %v481
      %v483 = vpop.f32.mrb[0].mxu0
      %484 = vmatprep.mubr.bf16.mxu0 0
      %485 = vmatmul.mubr.bf16.gmra.mrb[0].mxu0 %v426
      %v486 = vpop.f32.mrb[0].mxu0
      %v487 = vadd.f32 %v390, %v486
      %v488 = vpop.f32.mrb[0].mxu0
      %v489 = vpop.f32.mrb[0].mxu0
      %v490 = vadd.f32 %v390, %v489
      %v491 = vpop.f32.mrb[0].mxu0
      %492 = vdwg.mxu0
      %v493 = vmul.f32 %v463, 0.5
      %v494 = vmul.f32 %v466, 0.5
      %v495 = vmul.f32 %v471, 0.5
      %v496 = vmul.f32 %v474, 0.5
      %v497 = vmul.f32 %v479, 0.5
      %v498 = vmul.f32 %v482, 0.5
      %v499 = vmul.f32 %v487, 0.5
      %v500 = vmul.f32 %v490, 0.5
      %v501 = vmul.f32 %v463, 0.044715
      %v502 = vmul.f32 %v466, 0.044715
      %v503 = vmul.f32 %v471, 0.044715
      %v504 = vmul.f32 %v474, 0.044715
      %v505 = vmul.f32 %v479, 0.044715
      %v506 = vmul.f32 %v482, 0.044715
      %v507 = vmul.f32 %v487, 0.044715
      %v508 = vmul.f32 %v490, 0.044715
      %v509 = vmul.f32 %v501, %v463
      %v510 = vmul.f32 %v502, %v466
      %v511 = vmul.f32 %v503, %v471
      %v512 = vmul.f32 %v504, %v474
      %v513 = vmul.f32 %v505, %v479
      %v514 = vmul.f32 %v506, %v482
      %v515 = vmul.f32 %v507, %v487
      %v516 = vmul.f32 %v508, %v490
      %v517 = vmul.f32 %v509, %v463
      %v518 = vmul.f32 %v510, %v466
      %v519 = vmul.f32 %v511, %v471
      %v520 = vmul.f32 %v512, %v474
      %v521 = vmul.f32 %v513, %v479
      %v522 = vmul.f32 %v514, %v482
      %v523 = vmul.f32 %v515, %v487
      %v524 = vmul.f32 %v516, %v490
      %v525 = vadd.f32 %v463, %v517
      %v526 = vadd.f32 %v466, %v518
      %v527 = vadd.f32 %v471, %v519
      %v528 = vadd.f32 %v474, %v520
      %v529 = vadd.f32 %v479, %v521
      %v530 = vadd.f32 %v482, %v522
      %v531 = vadd.f32 %v487, %v523
      %v532 = vadd.f32 %v490, %v524
      %v533 = vmul.f32 %v525, 0.7978846
      %v534 = vmul.f32 %v526, 0.7978846
      %v535 = vmul.f32 %v527, 0.7978846
      %v536 = vmul.f32 %v528, 0.7978846
      %v537 = vmul.f32 %v529, 0.7978846
      %v538 = vmul.f32 %v530, 0.7978846
      %v539 = vmul.f32 %v531, 0.7978846
      %v540 = vmul.f32 %v532, 0.7978846
      %v541 = vtanh.pop %v533
      %v542 = vtanh.pop %v534
      %v543 = vtanh.pop %v535
      %v544 = vtanh.pop %v536
      %v545 = vtanh.pop %v537
      %v546 = vtanh.pop %v538
      %v547 = vtanh.pop %v539
      %v548 = vtanh.pop %v540
      %v549 = vadd.f32 %v541, 1.0
      %v550 = vadd.f32 %v542, 1.0
      %v551 = vadd.f32 %v543, 1.0
      %v552 = vadd.f32 %v544, 1.0
      %v553 = vadd.f32 %v545, 1.0
      %v554 = vadd.f32 %v546, 1.0
      %v555 = vadd.f32 %v547, 1.0
      %v556 = vadd.f32 %v548, 1.0
      %v557 = vmul.f32 %v493, %v549
      %v558 = vmul.f32 %v494, %v550
      %v559 = vmul.f32 %v495, %v551
      %v560 = vmul.f32 %v496, %v552
      %v561 = vmul.f32 %v497, %v553
      %v562 = vmul.f32 %v498, %v554
      %v563 = vmul.f32 %v499, %v555
      %v564 = vmul.f32 %v500, %v556
      %v565 = vpack.c.bf16 %v558, %v557
      %v566 = vpack.c.bf16 %v560, %v559
      %v567 = vpack.c.bf16 %v562, %v561
      %v568 = vpack.c.bf16 %v564, %v563
      %v573 = vunpack.c.l.b16 %v565
      %v574 = vunpack.c.h.b16 %v565
      %v575 = vunpack.c.l.b16 %v566
      %v576 = vunpack.c.h.b16 %v566
      %v577 = vunpack.c.l.b16 %v567
      %v578 = vunpack.c.h.b16 %v567
      %v579 = vunpack.c.l.b16 %v568
      %v580 = vunpack.c.h.b16 %v568
      %v581 = vpack.c.b16 %v573, %v573
      %v582 = vpack.c.b16 %v574, %v574
      %v583 = vpack.c.b16 %v575, %v575
      %v584 = vpack.c.b16 %v576, %v576
      %v585 = vpack.c.b16 %v577, %v577
      %v586 = vpack.c.b16 %v578, %v578
      %v587 = vpack.c.b16 %v579, %v579
      %v588 = vpack.c.b16 %v580, %v580
      %vm597 = vcmask 519168
      %598 = vst.msk [vmem:[%s226] sm:$0xf] %vm597, %v581
      %599 = vst.msk [vmem:[%s226 + $0x4] sm:$0xf] %vm597, %v582
      %600 = vst.msk [vmem:[%s226 + $0x8] sm:$0xf] %vm597, %v583
      %601 = vst.msk [vmem:[%s226 + $0xc] sm:$0xf] %vm597, %v584
      %602 = vst.msk [vmem:[%s226 + $0x10] sm:$0xf] %vm597, %v585
      %603 = vst.msk [vmem:[%s226 + $0x14] sm:$0xf] %vm597, %v586
      %604 = vst.msk [vmem:[%s226 + $0x18] sm:$0xf] %vm597, %v587
      %605 = vst.msk [vmem:[%s226 + $0x1c] sm:$0xf] %vm597, %v588
      %s606 = smul.u32 8, %s16
      %p607 = scmp.lt.s32.totalorder %s606, 15
      %s608 = scalar_select %p607, %s606, 15
      %s609 = smul.addr %s608, 4
      %s610 = scalar_lea.vmem %s5, %s609
      // Predicated region
      $region41: #{residual_swin_block.24} parent=39 // pred_check
        %p611 = pneg %p144
      $region42: #{residual_swin_block.24} parent=39 // pred_check_branch
        %613 = sbr.rel (%p611) target = $region44
      $region43: #{residual_swin_block.24} parent=39 // pred_region
        %s614 = smul.u32 8, %s16
      $region44: #{residual_swin_block.24} parent=39 // pred_fallthru
        _
    $region40: #{residual_swin_block.24} parent=5 // pred_fallthru
      _
    %p615 = scmp.le.s32.totalorder 2, %s11
    // Predicated region
    $region45: #{residual_swin_block.24} parent=5 // pred_check
      %p616 = pneg %p615
    $region46: #{residual_swin_block.24} parent=5 // pred_check_branch
      %618 = sbr.rel (%p616) target = $region48
    $region47: #{residual_swin_block.24} parent=5 // pred_region
      %s619 = ssub.s32 %s11, 2
      // Predicated region
      $region49: #{residual_swin_block.24} parent=47 // pred_check
        %p620 = pneg %p150
      $region50: #{residual_swin_block.24} parent=47 // pred_check_branch
        %622 = sbr.rel (%p620) target = $region52
      $region51: #{residual_swin_block.24} parent=47 // pred_region
        %s623 = smul.u32 8, %s17
        %p624 = scmp.lt.s32.totalorder %s623, 15
        %s625 = scalar_select %p624, %s623, 15
        %s626 = smul.addr %s625, 4
        %s627 = scalar_lea.vmem %s5, %s626
      $region52: #{residual_swin_block.24} parent=47 // pred_fallthru
        _
    $region48: #{residual_swin_block.24} parent=5 // pred_fallthru
      _
  $region6: #{residual_swin_block.24} parent=0 // loop_footer
    %s15 = sadd.s32 1, %s11
  $region7: #{residual_swin_block.24} parent=0 // loop_footer_branch
    %10 = sbr.rel target = $region3
  $region8: #{residual_swin_block.24} parent=0 // loop_exit
    _

// kernel: residual_swin_block.22
$region0: #{residual_swin_block.22}
  #allocation0 [shape = 'u32[]', space=smem, size = 0x4, offset = 0x4, fixed_abs, tag = 'smem constant byte address 0x4 - core index']
  #allocation1 [shape = 'u32[144,128]{1,0:T(1,128)}', space=vmem, size = 0x12000, scoped, tag = 'internal scratch']
  %s0 = inlined_call_operand.vmem [shape: bf16[2,4,12,16,16], index: 0, kind: input, shape index: {}]
  %s1 = inlined_call_operand.vmem [shape: f32[4,16,16], index: 1, kind: input, shape index: {}]
  %s2 = inlined_call_operand.vmem [shape: bf16[2,4,4,16,16], index: 2, kind: output, shape index: {}]
  %s3 = sld [smem:[#allocation0]]
  $region41: #{residual_swin_block.22} parent=0
    _
  %s5 = ssub.s32 1, %s3
  %s6 = scalar_select 0, %s5, %s3
  loop: start=0, step=1, limit=4
  $region2: #{residual_swin_block.22} parent=0 // loop_pre_header
    _
  $region3: #{residual_swin_block.22} parent=0 // loop_header
    %s8 = sphi 0, %s12
    %p9 = scmp.ge.s32.totalorder %s8, 4
    %s15 = sphi 0, %s27
    %s16 = sphi 0, %s23
    %s17 = sphi 0, %s15
    %s18 = sphi 0, %s16
    %s19 = sphi 0, %s17
    %s20 = sphi 0, %s18
    %s32 = sphi 0, %s34
    %s35 = sphi 0, %s32
    %s36 = sphi 0, %s35
    %s52 = sphi 0, %s36
    %s56 = sphi 0, %s56
    %s58 = sphi 0, %s56
    %s59 = sphi 0, %s58
    %s73 = sphi 0, %s59
    %s81 = sphi 0, %s83
    %s84 = sphi 0, %s81
    %s85 = sphi 0, %s84
    %s101 = sphi 0, %s85
  $region4: #{residual_swin_block.22} parent=0 // loop_header_branch
    %11 = sbr.rel (%p9) target = $region8
  $region5: #{residual_swin_block.22} parent=0 // loop_body
    %s13 = ssub.s32 %s8, 1
    %s14 = ssub.s32 %s8, 2
    %s21 = sadd.s32 1, %s16
    %p22 = scmp.ge.s32.totalorder %s21, 1
    %s23 = scalar_select %p22, 0, %s21
    %s24 = sadd.s32 1, %s15
    %s25 = scalar_select %p22, %s24, %s15
    %p26 = scmp.ge.s32.totalorder %s25, 2
    %s27 = scalar_select %p26, 0, %s25
    %s28 = ssub.s32 %s15, %s27
    %s29 = ssub.s32 %s16, %s23
    %s30 = sor.u32 %s28, %s29
    %p31 = scmp.eq.s32.totalorder %s30, 0
    %s33 = sadd.s32 %s32, 1
    %s34 = scalar_select %p31, %s32, %s33
    %p37 = pneg %p31
    %p38 = scmp.eq.s32.totalorder %s8, 1
    %p39 = por %p37, %p38
    %p40 = scmp.ne.s32.totalorder %s32, %s35
    %p41 = scmp.eq.s32.totalorder %s8, 0
    %p42 = por %p40, %p41
    %p43 = scmp.ne.s32.totalorder %s32, %s35
    %p44 = scmp.eq.s32.totalorder %s13, 1
    %p45 = por %p43, %p44
    %p46 = scmp.ne.s32.totalorder %s35, %s36
    %p47 = scmp.eq.s32.totalorder %s13, 0
    %p48 = por %p46, %p47
    %p49 = scmp.ne.s32.totalorder %s35, %s36
    %p50 = scmp.eq.s32.totalorder %s14, 1
    %p51 = por %p49, %p50
    %p53 = scmp.ne.s32.totalorder %s36, %s52
    %p54 = scmp.eq.s32.totalorder %s14, 0
    %p55 = por %p53, %p54
    %s57 = sadd.s32 %s56, 1
    %p60 = scmp.eq.s32.totalorder %s8, 1
    %p61 = scmp.ne.s32.totalorder %s56, %s58
    %p62 = scmp.eq.s32.totalorder %s8, 0
    %p63 = por %p61, %p62
    %p64 = scmp.ne.s32.totalorder %s56, %s58
    %p65 = scmp.eq.s32.totalorder %s13, 1
    %p66 = por %p64, %p65
    %p67 = scmp.ne.s32.totalorder %s58, %s59
    %p68 = scmp.eq.s32.totalorder %s13, 0
    %p69 = por %p67, %p68
    %p70 = scmp.ne.s32.totalorder %s58, %s59
    %p71 = scmp.eq.s32.totalorder %s14, 1
    %p72 = por %p70, %p71
    %p74 = scmp.ne.s32.totalorder %s59, %s73
    %p75 = scmp.eq.s32.totalorder %s14, 0
    %p76 = por %p74, %p75
    %s77 = ssub.s32 %s15, %s27
    %s78 = ssub.s32 %s16, %s23
    %s79 = sor.u32 %s77, %s78
    %p80 = scmp.eq.s32.totalorder %s79, 0
    %s82 = sadd.s32 %s81, 1
    %s83 = scalar_select %p80, %s81, %s82
    %p86 = pneg %p80
    %p87 = scmp.eq.s32.totalorder %s8, 1
    %p88 = por %p86, %p87
    %p89 = scmp.ne.s32.totalorder %s81, %s84
    %p90 = scmp.eq.s32.totalorder %s8, 0
    %p91 = por %p89, %p90
    %p92 = scmp.ne.s32.totalorder %s81, %s84
    %p93 = scmp.eq.s32.totalorder %s13, 1
    %p94 = por %p92, %p93
    %p95 = scmp.ne.s32.totalorder %s84, %s85
    %p96 = scmp.eq.s32.totalorder %s13, 0
    %p97 = por %p95, %p96
    %p98 = scmp.ne.s32.totalorder %s84, %s85
    %p99 = scmp.eq.s32.totalorder %s14, 1
    %p100 = por %p98, %p99
    %p102 = scmp.ne.s32.totalorder %s85, %s101
    %p103 = scmp.eq.s32.totalorder %s14, 0
    %p104 = por %p102, %p103
    %p105 = scmp.le.s32.totalorder 1, %s8
    %p106 = scmp.lt.s32.totalorder %s8, 3
    %p107 = pnand %p105, %p106
    %p108 = pneg %p107
    // Predicated region
    $region9: #{residual_swin_block.22} parent=5 // pred_check
      _
    $region10: #{residual_swin_block.22} parent=5 // pred_check_branch
      %110 = sbr.rel (%p107) target = $region12
    $region11: #{residual_swin_block.22} parent=5 // pred_region
      %s111 = ssub.s32 %s8, 1
      // Predicated region
      $region13: #{residual_swin_block.22} parent=11 // pred_check
        %p112 = pneg %p69
      $region14: #{residual_swin_block.22} parent=11 // pred_check_branch
        %114 = sbr.rel (%p112) target = $region16
      $region15: #{residual_swin_block.22} parent=11 // pred_region
        _
      $region16: #{residual_swin_block.22} parent=11 // pred_fallthru
        _
    $region12: #{residual_swin_block.22} parent=5 // pred_fallthru
      _
    %p115 = scmp.lt.s32.totalorder %s8, 2
    // Predicated region
    $region17: #{residual_swin_block.22} parent=5 // pred_check
      %p116 = pneg %p115
    $region18: #{residual_swin_block.22} parent=5 // pred_check_branch
      %118 = sbr.rel (%p116) target = $region20
    $region19: #{residual_swin_block.22} parent=5 // pred_region
      // Predicated region
      $region21: #{residual_swin_block.22} parent=19 // pred_check
        %p119 = pneg %p42
      $region22: #{residual_swin_block.22} parent=19 // pred_check_branch
        %121 = sbr.rel (%p119) target = $region24
      $region23: #{residual_swin_block.22} parent=19 // pred_region
        %s122 = smul.u32 4, %s16
        %p123 = scmp.lt.s32.totalorder %s15, 1
        %s124 = scalar_select %p123, %s15, 1
        %p125 = scmp.lt.s32.totalorder %s122, 3
        %s126 = scalar_select %p125, %s122, 3
        %s127 = smul.addr %s126, 24
        %s128 = smul.addr %s124, 96
        %s129 = sadd.s32 %s127, %s128
        %s130 = smul.addr %s129, 4
        %s131 = scalar_lea.vmem %s0, %s130
        %s132 = smul.u32 4, %s16
      $region24: #{residual_swin_block.22} parent=19 // pred_fallthru
        _
    $region20: #{residual_swin_block.22} parent=5 // pred_fallthru
      _
    %p133 = scmp.le.s32.totalorder 1, %s8
    %p134 = scmp.lt.s32.totalorder %s8, 3
    %p135 = pnand %p133, %p134
    %p136 = pneg %p135
    // Predicated region
    $region25: #{residual_swin_block.22} parent=5 // pred_check
      _
    $region26: #{residual_swin_block.22} parent=5 // pred_check_branch
      %138 = sbr.rel (%p135) target = $region28
    $region27: #{residual_swin_block.22} parent=5 // pred_region
      %s139 = ssub.s32 %s8, 1
      %s140 = smul.u32 4, %s18
      %p141 = scmp.lt.s32.totalorder %s17, 1
      %s142 = scalar_select %p141, %s17, 1
      %p143 = scmp.lt.s32.totalorder %s140, 3
      %s144 = scalar_select %p143, %s140, 3
      %s145 = smul.addr %s144, 24
      %s146 = smul.addr %s142, 96
      %s147 = sadd.s32 %s145, %s146
      %s148 = smul.addr %s147, 4
      %s149 = scalar_lea.vmem %s0, %s148
      %p150 = pneg %p48
      %p151 = pneg %p45
      %p152 = pneg %p69
      %p153 = pneg %p66
      %p154 = pneg %p97
      %p155 = pneg %p94
      %s156 = smul.u32 4, %s18
      %p157 = scmp.lt.s32.totalorder %s17, 1
      %s158 = scalar_select %p157, %s17, 1
      %p159 = scmp.lt.s32.totalorder %s156, 3
      %s160 = scalar_select %p159, %s156, 3
      %s161 = smul.addr %s160, 8
      %s162 = smul.addr %s158, 32
      %s163 = sadd.s32 %s161, %s162
      %s164 = smul.addr %s163, 4
      %s165 = scalar_lea.vmem %s2, %s164
      %s166 = smul.u32 4, %s18
      %p167 = scmp.lt.s32.totalorder %s17, 1
      %s168 = scalar_select %p167, %s17, 1
      %p169 = scmp.lt.s32.totalorder %s166, 3
      %s170 = scalar_select %p169, %s166, 3
      %s171 = smul.addr %s170, 24
      %s172 = smul.addr %s168, 96
      %s173 = sadd.s32 %s171, %s172
      %s174 = smul.addr %s173, 4
      %s175 = scalar_lea.vmem %s0, %s174
      %s176 = smul.u32 4, %s18
      %s177 = smul.u32 4, %s18
      %p178 = scmp.lt.s32.totalorder %s17, 1
      %s179 = scalar_select %p178, %s17, 1
      %p180 = scmp.lt.s32.totalorder %s177, 3
      %s181 = scalar_select %p180, %s177, 3
      %s182 = smul.addr %s181, 8
      %s183 = smul.addr %s179, 32
      %s184 = sadd.s32 %s182, %s183
      %s185 = smul.addr %s184, 4
      %s186 = scalar_lea.vmem %s2, %s185
      %s187 = smul.u32 4, %s18
      %v189 = vld [vmem:[%s175] sm:$0xf]
      %v190 = vld [vmem:[%s175 + $0x4] sm:$0xf]
      %v191 = vld [vmem:[%s175 + $0x8] sm:$0xf]
      %v192 = vld [vmem:[%s175 + $0xc] sm:$0xf]
      %v193 = vld [vmem:[%s175 + $0x10] sm:$0xf]
      %v194 = vld [vmem:[%s175 + $0x14] sm:$0xf]
      %v195 = vld [vmem:[%s175 + $0x18] sm:$0xf]
      %v196 = vld [vmem:[%s175 + $0x1c] sm:$0xf]
      %v197 = vld [vmem:[%s175 + $0x20] sm:$0xf]
      %v198 = vld [vmem:[%s175 + $0x24] sm:$0xf]
      %v199 = vld [vmem:[%s175 + $0x28] sm:$0xf]
      %v200 = vld [vmem:[%s175 + $0x2c] sm:$0xf]
      %v201 = vld [vmem:[%s175 + $0x30] sm:$0xf]
      %v202 = vld [vmem:[%s175 + $0x34] sm:$0xf]
      %v203 = vld [vmem:[%s175 + $0x38] sm:$0xf]
      %v204 = vld [vmem:[%s175 + $0x3c] sm:$0xf]
      %v205 = vld [vmem:[%s175 + $0x40] sm:$0xf]
      %v206 = vld [vmem:[%s175 + $0x44] sm:$0xf]
      %v207 = vld [vmem:[%s175 + $0x48] sm:$0xf]
      %v208 = vld [vmem:[%s175 + $0x4c] sm:$0xf]
      %v209 = vld [vmem:[%s175 + $0x50] sm:$0xf]
      %v210 = vld [vmem:[%s175 + $0x54] sm:$0xf]
      %v211 = vld [vmem:[%s175 + $0x58] sm:$0xf]
      %v212 = vld [vmem:[%s175 + $0x5c] sm:$0xf]
      %v213 = vld [vmem:[%s175 + $0x60] sm:$0xf]
      %v214 = vld [vmem:[%s175 + $0x64] sm:$0xf]
      %v215 = vld [vmem:[%s175 + $0x68] sm:$0xf]
      %v216 = vld [vmem:[%s175 + $0x6c] sm:$0xf]
      %v217 = vld [vmem:[%s175 + $0x70] sm:$0xf]
      %v218 = vld [vmem:[%s175 + $0x74] sm:$0xf]
      %v219 = vld [vmem:[%s175 + $0x78] sm:$0xf]
      %v220 = vld [vmem:[%s175 + $0x7c] sm:$0xf]
      %v221 = vld [vmem:[%s175 + $0x80] sm:$0xf]
      %v222 = vld [vmem:[%s175 + $0x84] sm:$0xf]
      %v223 = vld [vmem:[%s175 + $0x88] sm:$0xf]
      %v224 = vld [vmem:[%s175 + $0x8c] sm:$0xf]
      %v225 = vld [vmem:[%s175 + $0x90] sm:$0xf]
      %v226 = vld [vmem:[%s175 + $0x94] sm:$0xf]
      %v227 = vld [vmem:[%s175 + $0x98] sm:$0xf]
      %v228 = vld [vmem:[%s175 + $0x9c] sm:$0xf]
      %v229 = vld [vmem:[%s175 + $0xa0] sm:$0xf]
      %v230 = vld [vmem:[%s175 + $0xa4] sm:$0xf]
      %v231 = vld [vmem:[%s175 + $0xa8] sm:$0xf]
      %v232 = vld [vmem:[%s175 + $0xac] sm:$0xf]
      %v233 = vld [vmem:[%s175 + $0xb0] sm:$0xf]
      %v234 = vld [vmem:[%s175 + $0xb4] sm:$0xf]
      %v235 = vld [vmem:[%s175 + $0xb8] sm:$0xf]
      %v236 = vld [vmem:[%s175 + $0xbc] sm:$0xf]
      %v237 = vld [vmem:[%s175 + $0xc0] sm:$0xf]
      %v238 = vld [vmem:[%s175 + $0xc4] sm:$0xf]
      %v239 = vld [vmem:[%s175 + $0xc8] sm:$0xf]
      %v240 = vld [vmem:[%s175 + $0xcc] sm:$0xf]
      %v241 = vld [vmem:[%s175 + $0xd0] sm:$0xf]
      %v242 = vld [vmem:[%s175 + $0xd4] sm:$0xf]
      %v243 = vld [vmem:[%s175 + $0xd8] sm:$0xf]
      %v244 = vld [vmem:[%s175 + $0xdc] sm:$0xf]
      %v245 = vld [vmem:[%s175 + $0xe0] sm:$0xf]
      %v246 = vld [vmem:[%s175 + $0xe4] sm:$0xf]
      %v247 = vld [vmem:[%s175 + $0xe8] sm:$0xf]
      %v248 = vld [vmem:[%s175 + $0xec] sm:$0xf]
      %v249 = vld [vmem:[%s175 + $0xf0] sm:$0xf]
      %v250 = vld [vmem:[%s175 + $0xf4] sm:$0xf]
      %v251 = vld [vmem:[%s175 + $0xf8] sm:$0xf]
      %v252 = vld [vmem:[%s175 + $0xfc] sm:$0xf]
      %v253 = vld [vmem:[%s175 + $0x100] sm:$0xf]
      %v254 = vld [vmem:[%s175 + $0x104] sm:$0xf]
      %v255 = vld [vmem:[%s175 + $0x108] sm:$0xf]
      %v256 = vld [vmem:[%s175 + $0x10c] sm:$0xf]
      %v257 = vld [vmem:[%s175 + $0x110] sm:$0xf]
      %v258 = vld [vmem:[%s175 + $0x114] sm:$0xf]
      %v259 = vld [vmem:[%s175 + $0x118] sm:$0xf]
      %v260 = vld [vmem:[%s175 + $0x11c] sm:$0xf]
      %v261 = vld [vmem:[%s175 + $0x120] sm:$0xf]
      %v262 = vld [vmem:[%s175 + $0x124] sm:$0xf]
      %v263 = vld [vmem:[%s175 + $0x128] sm:$0xf]
      %v264 = vld [vmem:[%s175 + $0x12c] sm:$0xf]
      %v265 = vld [vmem:[%s175 + $0x130] sm:$0xf]
      %v266 = vld [vmem:[%s175 + $0x134] sm:$0xf]
      %v267 = vld [vmem:[%s175 + $0x138] sm:$0xf]
      %v268 = vld [vmem:[%s175 + $0x13c] sm:$0xf]
      %v269 = vld [vmem:[%s175 + $0x140] sm:$0xf]
      %v270 = vld [vmem:[%s175 + $0x144] sm:$0xf]
      %v271 = vld [vmem:[%s175 + $0x148] sm:$0xf]
      %v272 = vld [vmem:[%s175 + $0x14c] sm:$0xf]
      %v273 = vld [vmem:[%s175 + $0x150] sm:$0xf]
      %v274 = vld [vmem:[%s175 + $0x154] sm:$0xf]
      %v275 = vld [vmem:[%s175 + $0x158] sm:$0xf]
      %v276 = vld [vmem:[%s175 + $0x15c] sm:$0xf]
      %v277 = vld [vmem:[%s175 + $0x160] sm:$0xf]
      %v278 = vld [vmem:[%s175 + $0x164] sm:$0xf]
      %v279 = vld [vmem:[%s175 + $0x168] sm:$0xf]
      %v280 = vld [vmem:[%s175 + $0x16c] sm:$0xf]
      %v281 = vld [vmem:[%s175 + $0x170] sm:$0xf]
      %v282 = vld [vmem:[%s175 + $0x174] sm:$0xf]
      %v283 = vld [vmem:[%s175 + $0x178] sm:$0xf]
      %v284 = vld [vmem:[%s175 + $0x17c] sm:$0xf]
      %v287 = vunpack.c.l.b16 %v189
      %v288 = vunpack.c.l.b16 %v190
      %v289 = vpack.c.b16 %v288, %v287
      %v292 = vunpack.c.l.b16 %v197
      %v293 = vunpack.c.l.b16 %v198
      %v294 = vpack.c.b16 %v293, %v292
      %vm295 = vcmask 130048
      %v297 = vsel %vm295, %v289, 0
      %v300 = vsel %vm295, %v294, 0
      %302 = vmatprep.subr.bf16.mxu0 0
      %303 = vmatpush1.bf16.xpose.msra.mxu0 %v300
      %304 = vmatprep.subr.bf16.mxu0 0
      %305 = vmatpush1.bf16.xpose.msra.mxu0 0
      %306 = vmatprep.subr.bf16.mxu0 0
      %307 = vmatpush1.bf16.xpose.msra.mxu0 0
      %308 = vmatprep.subr.bf16.mxu0 0
      %309 = vmatpush1.bf16.xpose.msra.mxu0 0
      %310 = vmatprep.subr.bf16.mxu0 0
      %311 = vmatpush1.bf16.xpose.msra.mxu0 0
      %312 = vmatprep.subr.bf16.mxu0 0
      %313 = vmatpush1.bf16.xpose.msra.mxu0 0
      %314 = vmatprep.subr.bf16.mxu0 0
      %315 = vmatpush1.bf16.xpose.msra.mxu0 0
      %316 = vmatprep.subr.bf16.mxu0 0
      %317 = vmatpush1.bf16.xpose.msra.mxu0 0
      %318 = vmatprep.subr.bf16.mxu0 0
      %319 = vmatpush1.bf16.xpose.msra.mxu0 0
      %320 = vmatprep.subr.bf16.mxu0 0
      %321 = vmatpush1.bf16.xpose.msra.mxu0 0
      %322 = vmatprep.subr.bf16.mxu0 0
      %323 = vmatpush1.bf16.xpose.msra.mxu0 0
      %324 = vmatprep.subr.bf16.mxu0 0
      %325 = vmatpush1.bf16.xpose.msra.mxu0 0
      %326 = vmatprep.subr.bf16.mxu0 0
      %327 = vmatpush1.bf16.xpose.msra.mxu0 0
      %328 = vmatprep.subr.bf16.mxu0 0
      %329 = vmatpush1.bf16.xpose.msra.mxu0 0
      %330 = vmatprep.subr.bf16.mxu0 0
      %331 = vmatpush1.bf16.xpose.msra.mxu0 0
      %332 = vmatprep.subr.bf16.mxu0 0
      %333 = vmatpush1.bf16.xpose.msra.mxu0 0
      %334 = vmatprep.mubr.bf16.mxu0 0
      %335 = vmatmul.mubr.bf16.gmra.mrb[0].mxu0 %v297
      %v336 = vpop.f32.mrb[0].mxu0
      %v337 = vadd.f32 0.0, %v336
      %v338 = vpop.f32.mrb[0].mxu0
      %v339 = vpop.f32.mrb[0].mxu0
      %v340 = vadd.f32 0.0, %v339
      %v341 = vpop.f32.mrb[0].mxu0
      %342 = vdwg.mxu0
      %v345 = vunpack.c.l.b16 %v191
      %v346 = vunpack.c.l.b16 %v192
      %v347 = vpack.c.b16 %v346, %v345
      %v350 = vunpack.c.l.b16 %v199
      %v351 = vunpack.c.l.b16 %v200
      %v352 = vpack.c.b16 %v351, %v350
      %v354 = vsel %vm295, %v347, 0
      %v357 = vsel %vm295, %v352, 0
      %359 = vmatprep.subr.bf16.mxu0 0
      %360 = vmatpush1.bf16.xpose.msra.mxu0 %v357
      %361 = vmatprep.subr.bf16.mxu0 0
      %362 = vmatpush1.bf16.xpose.msra.mxu0 0
      %363 = vmatprep.subr.bf16.mxu0 0
      %364 = vmatpush1.bf16.xpose.msra.mxu0 0
      %365 = vmatprep.subr.bf16.mxu0 0
      %366 = vmatpush1.bf16.xpose.msra.mxu0 0
      %367 = vmatprep.subr.bf16.mxu0 0
      %368 = vmatpush1.bf16.xpose.msra.mxu0 0
      %369 = vmatprep.subr.bf16.mxu0 0
      %370 = vmatpush1.bf16.xpose.msra.mxu0 0
      %371 = vmatprep.subr.bf16.mxu0 0
      %372 = vmatpush1.bf16.xpose.msra.mxu0 0
      %373 = vmatprep.subr.bf16.mxu0 0
      %374 = vmatpush1.bf16.xpose.msra.mxu0 0
      %375 = vmatprep.subr.bf16.mxu0 0
      %376 = vmatpush1.bf16.xpose.msra.mxu0 0
      %377 = vmatprep.subr.bf16.mxu0 0
      %378 = vmatpush1.bf16.xpose.msra.mxu0 0
      %379 = vmatprep.subr.bf16.mxu0 0
      %380 = vmatpush1.bf16.xpose.msra.mxu0 0
      %381 = vmatprep.subr.bf16.mxu0 0
      %382 = vmatpush1.bf16.xpose.msra.mxu0 0
      %383 = vmatprep.subr.bf16.mxu0 0
      %384 = vmatpush1.bf16.xpose.msra.mxu0 0
      %385 = vmatprep.subr.bf16.mxu0 0
      %386 = vmatpush1.bf16.xpose.msra.mxu0 0
      %387 = vmatprep.subr.bf16.mxu0 0
      %388 = vmatpush1.bf16.xpose.msra.mxu0 0
      %389 = vmatprep.subr.bf16.mxu0 0
      %390 = vmatpush1.bf16.xpose.msra.mxu0 0
      %391 = vmatprep.mubr.bf16.mxu0 0
      %392 = vmatmul.mubr.bf16.gmra.mrb[0].mxu0 %v354
      %v393 = vpop.f32.mrb[0].mxu0
      %v394 = vadd.f32 0.0, %v393
      %v395 = vpop.f32.mrb[0].mxu0
      %v396 = vpop.f32.mrb[0].mxu0
      %v397 = vadd.f32 0.0, %v396
      %v398 = vpop.f32.mrb[0].mxu0
      %399 = vdwg.mxu0
      %v402 = vunpack.c.l.b16 %v193
      %v403 = vunpack.c.l.b16 %v194
      %v404 = vpack.c.b16 %v403, %v402
      %v407 = vunpack.c.l.b16 %v201
      %v408 = vunpack.c.l.b16 %v202
      %v409 = vpack.c.b16 %v408, %v407
      %v411 = vsel %vm295, %v404, 0
      %v414 = vsel %vm295, %v409, 0
      %416 = vmatprep.subr.bf16.mxu0 0
      %417 = vmatpush1.bf16.xpose.msra.mxu0 %v414
      %418 = vmatprep.subr.bf16.mxu0 0
      %419 = vmatpush1.bf16.xpose.msra.mxu0 0
      %420 = vmatprep.subr.bf16.mxu0 0
      %421 = vmatpush1.bf16.xpose.msra.mxu0 0
      %422 = vmatprep.subr.bf16.mxu0 0
      %423 = vmatpush1.bf16.xpose.msra.mxu0 0
      %424 = vmatprep.subr.bf16.mxu0 0
      %425 = vmatpush1.bf16.xpose.msra.mxu0 0
      %426 = vmatprep.subr.bf16.mxu0 0
      %427 = vmatpush1.bf16.xpose.msra.mxu0 0
      %428 = vmatprep.subr.bf16.mxu0 0
      %429 = vmatpush1.bf16.xpose.msra.mxu0 0
      %430 = vmatprep.subr.bf16.mxu0 0
      %431 = vmatpush1.bf16.xpose.msra.mxu0 0
      %432 = vmatprep.subr.bf16.mxu0 0
      %433 = vmatpush1.bf16.xpose.msra.mxu0 0
      %434 = vmatprep.subr.bf16.mxu0 0
      %435 = vmatpush1.bf16.xpose.msra.mxu0 0
      %436 = vmatprep.subr.bf16.mxu0 0
      %437 = vmatpush1.bf16.xpose.msra.mxu0 0
      %438 = vmatprep.subr.bf16.mxu0 0
      %439 = vmatpush1.bf16.xpose.msra.mxu0 0
      %440 = vmatprep.subr.bf16.mxu0 0
      %441 = vmatpush1.bf16.xpose.msra.mxu0 0
      %442 = vmatprep.subr.bf16.mxu0 0
      %443 = vmatpush1.bf16.xpose.msra.mxu0 0
      %444 = vmatprep.subr.bf16.mxu0 0
      %445 = vmatpush1.bf16.xpose.msra.mxu0 0
      %446 = vmatprep.subr.bf16.mxu0 0
      %447 = vmatpush1.bf16.xpose.msra.mxu0 0
      %448 = vmatprep.mubr.bf16.mxu0 0
      %449 = vmatmul.mubr.bf16.gmra.mrb[0].mxu0 %v411
      %v450 = vpop.f32.mrb[0].mxu0
      %v451 = vadd.f32 0.0, %v450
      %v452 = vpop.f32.mrb[0].mxu0
      %v453 = vpop.f32.mrb[0].mxu0
      %v454 = vadd.f32 0.0, %v453
      %v455 = vpop.f32.mrb[0].mxu0
      %456 = vdwg.mxu0
      %v459 = vunpack.c.l.b16 %v195
      %v460 = vunpack.c.l.b16 %v196
      %v461 = vpack.c.b16 %v460, %v459
      %v464 = vunpack.c.l.b16 %v203
      %v465 = vunpack.c.l.b16 %v204
      %v466 = vpack.c.b16 %v465, %v464
      %v468 = vsel %vm295, %v461, 0
      %v471 = vsel %vm295, %v466, 0
      %473 = vmatprep.subr.bf16.mxu0 0
      %474 = vmatpush1.bf16.xpose.msra.mxu0 %v471
      %475 = vmatprep.subr.bf16.mxu0 0
      %476 = vmatpush1.bf16.xpose.msra.mxu0 0
      %477 = vmatprep.subr.bf16.mxu0 0
      %478 = vmatpush1.bf16.xpose.msra.mxu0 0
      %479 = vmatprep.subr.bf16.mxu0 0
      %480 = vmatpush1.bf16.xpose.msra.mxu0 0
      %481 = vmatprep.subr.bf16.mxu0 0
      %482 = vmatpush1.bf16.xpose.msra.mxu0 0
      %483 = vmatprep.subr.bf16.mxu0 0
      %484 = vmatpush1.bf16.xpose.msra.mxu0 0
      %485 = vmatprep.subr.bf16.mxu0 0
      %486 = vmatpush1.bf16.xpose.msra.mxu0 0
      %487 = vmatprep.subr.bf16.mxu0 0
      %488 = vmatpush1.bf16.xpose.msra.mxu0 0
      %489 = vmatprep.subr.bf16.mxu0 0
      %490 = vmatpush1.bf16.xpose.msra.mxu0 0
      %491 = vmatprep.subr.bf16.mxu0 0
      %492 = vmatpush1.bf16.xpose.msra.mxu0 0
      %493 = vmatprep.subr.bf16.mxu0 0
      %494 = vmatpush1.bf16.xpose.msra.mxu0 0
      %495 = vmatprep.subr.bf16.mxu0 0
      %496 = vmatpush1.bf16.xpose.msra.mxu0 0
      %497 = vmatprep.subr.bf16.mxu0 0
      %498 = vmatpush1.bf16.xpose.msra.mxu0 0
      %499 = vmatprep.subr.bf16.mxu0 0
      %500 = vmatpush1.bf16.xpose.msra.mxu0 0
      %501 = vmatprep.subr.bf16.mxu0 0
      %502 = vmatpush1.bf16.xpose.msra.mxu0 0
      %503 = vmatprep.subr.bf16.mxu0 0
      %504 = vmatpush1.bf16.xpose.msra.mxu0 0
      %505 = vmatprep.mubr.bf16.mxu0 0
      %506 = vmatmul.mubr.bf16.gmra.mrb[0].mxu0 %v468
      %v507 = vpop.f32.mrb[0].mxu0
      %v508 = vadd.f32 0.0, %v507
      %v509 = vpop.f32.mrb[0].mxu0
      %v510 = vpop.f32.mrb[0].mxu0
      %v511 = vadd.f32 0.0, %v510
      %v512 = vpop.f32.mrb[0].mxu0
      %513 = vdwg.mxu0
      %v516 = vunpack.c.l.b16 %v213
      %v517 = vunpack.c.l.b16 %v214
      %v518 = vpack.c.b16 %v517, %v516
      %v521 = vunpack.c.l.b16 %v221
      %v522 = vunpack.c.l.b16 %v222
      %v523 = vpack.c.b16 %v522, %v521
      %v525 = vsel %vm295, %v518, 0
      %v528 = vsel %vm295, %v523, 0
      %530 = vmatprep.subr.bf16.mxu0 0
      %531 = vmatpush1.bf16.xpose.msra.mxu0 %v528
      %532 = vmatprep.subr.bf16.mxu0 0
      %533 = vmatpush1.bf16.xpose.msra.mxu0 0
      %534 = vmatprep.subr.bf16.mxu0 0
      %535 = vmatpush1.bf16.xpose.msra.mxu0 0
      %536 = vmatprep.subr.bf16.mxu0 0
      %537 = vmatpush1.bf16.xpose.msra.mxu0 0
      %538 = vmatprep.subr.bf16.mxu0 0
      %539 = vmatpush1.bf16.xpose.msra.mxu0 0
      %540 = vmatprep.subr.bf16.mxu0 0
      %541 = vmatpush1.bf16.xpose.msra.mxu0 0
      %542 = vmatprep.subr.bf16.mxu0 0
      %543 = vmatpush1.bf16.xpose.msra.mxu0 0
      %544 = vmatprep.subr.bf16.mxu0 0
      %545 = vmatpush1.bf16.xpose.msra.mxu0 0
      %546 = vmatprep.subr.bf16.mxu0 0
      %547 = vmatpush1.bf16.xpose.msra.mxu0 0
      %548 = vmatprep.subr.bf16.mxu0 0
      %549 = vmatpush1.bf16.xpose.msra.mxu0 0
      %550 = vmatprep.subr.bf16.mxu0 0
      %551 = vmatpush1.bf16.xpose.msra.mxu0 0
      %552 = vmatprep.subr.bf16.mxu0 0
      %553 = vmatpush1.bf16.xpose.msra.mxu0 0
      %554 = vmatprep.subr.bf16.mxu0 0
      %555 = vmatpush1.bf16.xpose.msra.mxu0 0
      %556 = vmatprep.subr.bf16.mxu0 0
      %557 = vmatpush1.bf16.xpose.msra.mxu0 0
      %558 = vmatprep.subr.bf16.mxu0 0
      %559 = vmatpush1.bf16.xpose.msra.mxu0 0
      %560 = vmatprep.subr.bf16.mxu0 0
      %561 = vmatpush1.bf16.xpose.msra.mxu0 0
      %562 = vmatprep.mubr.bf16.mxu0 0
      %563 = vmatmul.mubr.bf16.gmra.mrb[0].mxu0 %v525
      %v564 = vpop.f32.mrb[0].mxu0
      %v565 = vadd.f32 0.0, %v564
      %v566 = vpop.f32.mrb[0].mxu0
      %v567 = vpop.f32.mrb[0].mxu0
      %v568 = vadd.f32 0.0, %v567
      %v569 = vpop.f32.mrb[0].mxu0
      %570 = vdwg.mxu0
      %v573 = vunpack.c.l.b16 %v215
      %v574 = vunpack.c.l.b16 %v216
      %v575 = vpack.c.b16 %v574, %v573
      %v578 = vunpack.c.l.b16 %v223
      %v579 = vunpack.c.l.b16 %v224
      %v580 = vpack.c.b16 %v579, %v578
      %v582 = vsel %vm295, %v575, 0
      %v585 = vsel %vm295, %v580, 0
      %587 = vmatprep.subr.bf16.mxu0 0
      %588 = vmatpush1.bf16.xpose.msra.mxu0 %v585
      %589 = vmatprep.subr.bf16.mxu0 0
      %590 = vmatpush1.bf16.xpose.msra.mxu0 0
      %591 = vmatprep.subr.bf16.mxu0 0
      %592 = vmatpush1.bf16.xpose.msra.mxu0 0
      %593 = vmatprep.subr.bf16.mxu0 0
      %594 = vmatpush1.bf16.xpose.msra.mxu0 0
      %595 = vmatprep.subr.bf16.mxu0 0
      %596 = vmatpush1.bf16.xpose.msra.mxu0 0
      %597 = vmatprep.subr.bf16.mxu0 0
      %598 = vmatpush1.bf16.xpose.msra.mxu0 0
      %599 = vmatprep.subr.bf16.mxu0 0
      %600 = vmatpush1.bf16.xpose.msra.mxu0 0
      %601 = vmatprep.subr.bf16.mxu0 0
      %602 = vmatpush1.bf16.xpose.msra.mxu0 0
      %603 = vmatprep.subr.bf16.mxu0 0
      %604 = vmatpush1.bf16.xpose.msra.mxu0 0
      %605 = vmatprep.subr.bf16.mxu0 0
      %606 = vmatpush1.bf16.xpose.msra.mxu0 0
      %607 = vmatprep.subr.bf16.mxu0 0
      %608 = vmatpush1.bf16.xpose.msra.mxu0 0
      %609 = vmatprep.subr.bf16.mxu0 0
      %610 = vmatpush1.bf16.xpose.msra.mxu0 0
      %611 = vmatprep.subr.bf16.mxu0 0
      %612 = vmatpush1.bf16.xpose.msra.mxu0 0
      %613 = vmatprep.subr.bf16.mxu0 0
      %614 = vmatpush1.bf16.xpose.msra.mxu0 0
      %615 = vmatprep.subr.bf16.mxu0 0
      %616 = vmatpush1.bf16.xpose.msra.mxu0 0
      %617 = vmatprep.subr.bf16.mxu0 0
      %618 = vmatpush1.bf16.xpose.msra.mxu0 0
      %619 = vmatprep.mubr.bf16.mxu0 0
      %620 = vmatmul.mubr.bf16.gmra.mrb[0].mxu0 %v582
      %v621 = vpop.f32.mrb[0].mxu0
      %v622 = vadd.f32 0.0, %v621
      %v623 = vpop.f32.mrb[0].mxu0
      %v624 = vpop.f32.mrb[0].mxu0
      %v625 = vadd.f32 0.0, %v624
      %v626 = vpop.f32.mrb[0].mxu0
      %627 = vdwg.mxu0
      %v630 = vunpack.c.l.b16 %v217
      %v631 = vunpack.c.l.b16 %v218
      %v632 = vpack.c.b16 %v631, %v630
      %v635 = vunpack.c.l.b16 %v225
      %v636 = vunpack.c.l.b16 %v226
      %v637 = vpack.c.b16 %v636, %v635
      %v639 = vsel %vm295, %v632, 0
      %v642 = vsel %vm295, %v637, 0
      %644 = vmatprep.subr.bf16.mxu0 0
      %645 = vmatpush1.bf16.xpose.msra.mxu0 %v642
      %646 = vmatprep.subr.bf16.mxu0 0
      %647 = vmatpush1.bf16.xpose.msra.mxu0 0
      %648 = vmatprep.subr.bf16.mxu0 0
      %649 = vmatpush1.bf16.xpose.msra.mxu0 0
      %650 = vmatprep.subr.bf16.mxu0 0
      %651 = vmatpush1.bf16.xpose.msra.mxu0 0
      %652 = vmatprep.subr.bf16.mxu0 0
      %653 = vmatpush1.bf16.xpose.msra.mxu0 0
      %654 = vmatprep.subr.bf16.mxu0 0
      %655 = vmatpush1.bf16.xpose.msra.mxu0 0
      %656 = vmatprep.subr.bf16.mxu0 0
      %657 = vmatpush1.bf16.xpose.msra.mxu0 0
      %658 = vmatprep.subr.bf16.mxu0 0
      %659 = vmatpush1.bf16.xpose.msra.mxu0 0
      %660 = vmatprep.subr.bf16.mxu0 0
      %661 = vmatpush1.bf16.xpose.msra.mxu0 0
      %662 = vmatprep.subr.bf16.mxu0 0
      %663 = vmatpush1.bf16.xpose.msra.mxu0 0
      %664 = vmatprep.subr.bf16.mxu0 0
      %665 = vmatpush1.bf16.xpose.msra.mxu0 0
      %666 = vmatprep.subr.bf16.mxu0 0
      %667 = vmatpush1.bf16.xpose.msra.mxu0 0
      %668 = vmatprep.subr.bf16.mxu0 0
      %669 = vmatpush1.bf16.xpose.msra.mxu0 0
      %670 = vmatprep.subr.bf16.mxu0 0
      %671 = vmatpush1.bf16.xpose.msra.mxu0 0
      %672 = vmatprep.subr.bf16.mxu0 0
      %673 = vmatpush1.bf16.xpose.msra.mxu0 0
      %674 = vmatprep.subr.bf16.mxu0 0
      %675 = vmatpush1.bf16.xpose.msra.mxu0 0
      %676 = vmatprep.mubr.bf16.mxu0 0
      %677 = vmatmul.mubr.bf16.gmra.mrb[0].mxu0 %v639
      %v678 = vpop.f32.mrb[0].mxu0
      %v679 = vadd.f32 0.0, %v678
      %v680 = vpop.f32.mrb[0].mxu0
      %v681 = vpop.f32.mrb[0].mxu0
      %v682 = vadd.f32 0.0, %v681
      %v683 = vpop.f32.mrb[0].mxu0
      %684 = vdwg.mxu0
      %v687 = vunpack.c.l.b16 %v219
      %v688 = vunpack.c.l.b16 %v220
      %v689 = vpack.c.b16 %v688, %v687
      %v692 = vunpack.c.l.b16 %v227
      %v693 = vunpack.c.l.b16 %v228
      %v694 = vpack.c.b16 %v693, %v692
      %v696 = vsel %vm295, %v689, 0
      %v699 = vsel %vm295, %v694, 0
      %701 = vmatprep.subr.bf16.mxu0 0
      %702 = vmatpush1.bf16.xpose.msra.mxu0 %v699
      %703 = vmatprep.subr.bf16.mxu0 0
      %704 = vmatpush1.bf16.xpose.msra.mxu0 0
      %705 = vmatprep.subr.bf16.mxu0 0
      %706 = vmatpush1.bf16.xpose.msra.mxu0 0
      %707 = vmatprep.subr.bf16.mxu0 0
      %708 = vmatpush1.bf16.xpose.msra.mxu0 0
      %709 = vmatprep.subr.bf16.mxu0 0
      %710 = vmatpush1.bf16.xpose.msra.mxu0 0
      %711 = vmatprep.subr.bf16.mxu0 0
      %712 = vmatpush1.bf16.xpose.msra.mxu0 0
      %713 = vmatprep.subr.bf16.mxu0 0
      %714 = vmatpush1.bf16.xpose.msra.mxu0 0
      %715 = vmatprep.subr.bf16.mxu0 0
      %716 = vmatpush1.bf16.xpose.msra.mxu0 0
      %717 = vmatprep.subr.bf16.mxu0 0
      %718 = vmatpush1.bf16.xpose.msra.mxu0 0
      %719 = vmatprep.subr.bf16.mxu0 0
      %720 = vmatpush1.bf16.xpose.msra.mxu0 0
      %721 = vmatprep.subr.bf16.mxu0 0
      %722 = vmatpush1.bf16.xpose.msra.mxu0 0
      %723 = vmatprep.subr.bf16.mxu0 0
      %724 = vmatpush1.bf16.xpose.msra.mxu0 0
      %725 = vmatprep.subr.bf16.mxu0 0
      %726 = vmatpush1.bf16.xpose.msra.mxu0 0
      %727 = vmatprep.subr.bf16.mxu0 0
      %728 = vmatpush1.bf16.xpose.msra.mxu0 0
      %729 = vmatprep.subr.bf16.mxu0 0
      %730 = vmatpush1.bf16.xpose.msra.mxu0 0
      %731 = vmatprep.subr.bf16.mxu0 0
      %732 = vmatpush1.bf16.xpose.msra.mxu0 0
      %733 = vmatprep.mubr.bf16.mxu0 0
      %734 = vmatmul.mubr.bf16.gmra.mrb[0].mxu0 %v696
      %v735 = vpop.f32.mrb[0].mxu0
      %v736 = vadd.f32 0.0, %v735
      %v737 = vpop.f32.mrb[0].mxu0
      %v738 = vpop.f32.mrb[0].mxu0
      %v739 = vadd.f32 0.0, %v738
      %v740 = vpop.f32.mrb[0].mxu0
      %741 = vdwg.mxu0
      %v744 = vunpack.c.l.b16 %v237
      %v745 = vunpack.c.l.b16 %v238
      %v746 = vpack.c.b16 %v745, %v744
      %v749 = vunpack.c.l.b16 %v245
      %v750 = vunpack.c.l.b16 %v246
      %v751 = vpack.c.b16 %v750, %v749
      %v753 = vsel %vm295, %v746, 0
      %v756 = vsel %vm295, %v751, 0
      %758 = vmatprep.subr.bf16.mxu0 0
      %759 = vmatpush1.bf16.xpose.msra.mxu0 %v756
      %760 = vmatprep.subr.bf16.mxu0 0
      %761 = vmatpush1.bf16.xpose.msra.mxu0 0
      %762 = vmatprep.subr.bf16.mxu0 0
      %763 = vmatpush1.bf16.xpose.msra.mxu0 0
      %764 = vmatprep.subr.bf16.mxu0 0
      %765 = vmatpush1.bf16.xpose.msra.mxu0 0
      %766 = vmatprep.subr.bf16.mxu0 0
      %767 = vmatpush1.bf16.xpose.msra.mxu0 0
      %768 = vmatprep.subr.bf16.mxu0 0
      %769 = vmatpush1.bf16.xpose.msra.mxu0 0
      %770 = vmatprep.subr.bf16.mxu0 0
      %771 = vmatpush1.bf16.xpose.msra.mxu0 0
      %772 = vmatprep.subr.bf16.mxu0 0
      %773 = vmatpush1.bf16.xpose.msra.mxu0 0
      %774 = vmatprep.subr.bf16.mxu0 0
      %775 = vmatpush1.bf16.xpose.msra.mxu0 0
      %776 = vmatprep.subr.bf16.mxu0 0
      %777 = vmatpush1.bf16.xpose.msra.mxu0 0
      %778 = vmatprep.subr.bf16.mxu0 0
      %779 = vmatpush1.bf16.xpose.msra.mxu0 0
      %780 = vmatprep.subr.bf16.mxu0 0
      %781 = vmatpush1.bf16.xpose.msra.mxu0 0
      %782 = vmatprep.subr.bf16.mxu0 0
      %783 = vmatpush1.bf16.xpose.msra.mxu0 0
      %784 = vmatprep.subr.bf16.mxu0 0
      %785 = vmatpush1.bf16.xpose.msra.mxu0 0
      %786 = vmatprep.subr.bf16.mxu0 0
      %787 = vmatpush1.bf16.xpose.msra.mxu0 0
      %788 = vmatprep.subr.bf16.mxu0 0
      %789 = vmatpush1.bf16.xpose.msra.mxu0 0
      %790 = vmatprep.mubr.bf16.mxu0 0
      %791 = vmatmul.mubr.bf16.gmra.mrb[0].mxu0 %v753
      %v792 = vpop.f32.mrb[0].mxu0
      %v793 = vadd.f32 0.0, %v792
      %v794 = vpop.f32.mrb[0].mxu0
      %v795 = vpop.f32.mrb[0].mxu0
      %v796 = vadd.f32 0.0, %v795
      %v797 = vpop.f32.mrb[0].mxu0
      %798 = vdwg.mxu0
      %v801 = vunpack.c.l.b16 %v239
      %v802 = vunpack.c.l.b16 %v240
      %v803 = vpack.c.b16 %v802, %v801
      %v806 = vunpack.c.l.b16 %v247
      %v807 = vunpack.c.l.b16 %v248
      %v808 = vpack.c.b16 %v807, %v806
      %v810 = vsel %vm295, %v803, 0
      %v813 = vsel %vm295, %v808, 0
      %815 = vmatprep.subr.bf16.mxu0 0
      %816 = vmatpush1.bf16.xpose.msra.mxu0 %v813
      %817 = vmatprep.subr.bf16.mxu0 0
      %818 = vmatpush1.bf16.xpose.msra.mxu0 0
      %819 = vmatprep.subr.bf16.mxu0 0
      %820 = vmatpush1.bf16.xpose.msra.mxu0 0
      %821 = vmatprep.subr.bf16.mxu0 0
      %822 = vmatpush1.bf16.xpose.msra.mxu0 0
      %823 = vmatprep.subr.bf16.mxu0 0
      %824 = vmatpush1.bf16.xpose.msra.mxu0 0
      %825 = vmatprep.subr.bf16.mxu0 0
      %826 = vmatpush1.bf16.xpose.msra.mxu0 0
      %827 = vmatprep.subr.bf16.mxu0 0
      %828 = vmatpush1.bf16.xpose.msra.mxu0 0
      %829 = vmatprep.subr.bf16.mxu0 0
      %830 = vmatpush1.bf16.xpose.msra.mxu0 0
      %831 = vmatprep.subr.bf16.mxu0 0
      %832 = vmatpush1.bf16.xpose.msra.mxu0 0
      %833 = vmatprep.subr.bf16.mxu0 0
      %834 = vmatpush1.bf16.xpose.msra.mxu0 0
      %835 = vmatprep.subr.bf16.mxu0 0
      %836 = vmatpush1.bf16.xpose.msra.mxu0 0
      %837 = vmatprep.subr.bf16.mxu0 0
      %838 = vmatpush1.bf16.xpose.msra.mxu0 0
      %839 = vmatprep.subr.bf16.mxu0 0
      %840 = vmatpush1.bf16.xpose.msra.mxu0 0
      %841 = vmatprep.subr.bf16.mxu0 0
      %842 = vmatpush1.bf16.xpose.msra.mxu0 0
      %843 = vmatprep.subr.bf16.mxu0 0
      %844 = vmatpush1.bf16.xpose.msra.mxu0 0
      %845 = vmatprep.subr.bf16.mxu0 0
      %846 = vmatpush1.bf16.xpose.msra.mxu0 0
      %847 = vmatprep.mubr.bf16.mxu0 0
      %848 = vmatmul.mubr.bf16.gmra.mrb[0].mxu0 %v810
      %v849 = vpop.f32.mrb[0].mxu0
      %v850 = vadd.f32 0.0, %v849
      %v851 = vpop.f32.mrb[0].mxu0
      %v852 = vpop.f32.mrb[0].mxu0
      %v853 = vadd.f32 0.0, %v852
      %v854 = vpop.f32.mrb[0].mxu0
      %855 = vdwg.mxu0
      %v858 = vunpack.c.l.b16 %v241
      %v859 = vunpack.c.l.b16 %v242
      %v860 = vpack.c.b16 %v859, %v858
      %v863 = vunpack.c.l.b16 %v249
      %v864 = vunpack.c.l.b16 %v250
      %v865 = vpack.c.b16 %v864, %v863
      %v867 = vsel %vm295, %v860, 0
      %v870 = vsel %vm295, %v865, 0
      %872 = vmatprep.subr.bf16.mxu0 0
      %873 = vmatpush1.bf16.xpose.msra.mxu0 %v870
      %874 = vmatprep.subr.bf16.mxu0 0
      %875 = vmatpush1.bf16.xpose.msra.mxu0 0
      %876 = vmatprep.subr.bf16.mxu0 0
      %877 = vmatpush1.bf16.xpose.msra.mxu0 0
      %878 = vmatprep.subr.bf16.mxu0 0
      %879 = vmatpush1.bf16.xpose.msra.mxu0 0
      %880 = vmatprep.subr.bf16.mxu0 0
      %881 = vmatpush1.bf16.xpose.msra.mxu0 0
      %882 = vmatprep.subr.bf16.mxu0 0
      %883 = vmatpush1.bf16.xpose.msra.mxu0 0
      %884 = vmatprep.subr.bf16.mxu0 0
      %885 = vmatpush1.bf16.xpose.msra.mxu0 0
      %886 = vmatprep.subr.bf16.mxu0 0
      %887 = vmatpush1.bf16.xpose.msra.mxu0 0
      %888 = vmatprep.subr.bf16.mxu0 0
      %889 = vmatpush1.bf16.xpose.msra.mxu0 0
      %890 = vmatprep.subr.bf16.mxu0 0
      %891 = vmatpush1.bf16.xpose.msra.mxu0 0
      %892 = vmatprep.subr.bf16.mxu0 0
      %893 = vmatpush1.bf16.xpose.msra.mxu0 0
      %894 = vmatprep.subr.bf16.mxu0 0
      %895 = vmatpush1.bf16.xpose.msra.mxu0 0
      %896 = vmatprep.subr.bf16.mxu0 0
      %897 = vmatpush1.bf16.xpose.msra.mxu0 0
      %898 = vmatprep.subr.bf16.mxu0 0
      %899 = vmatpush1.bf16.xpose.msra.mxu0 0
      %900 = vmatprep.subr.bf16.mxu0 0
      %901 = vmatpush1.bf16.xpose.msra.mxu0 0
      %902 = vmatprep.subr.bf16.mxu0 0
      %903 = vmatpush1.bf16.xpose.msra.mxu0 0
      %904 = vmatprep.mubr.bf16.mxu0 0
      %905 = vmatmul.mubr.bf16.gmra.mrb[0].mxu0 %v867
      %v906 = vpop.f32.mrb[0].mxu0
      %v907 = vadd.f32 0.0, %v906
      %v908 = vpop.f32.mrb[0].mxu0
      %v909 = vpop.f32.mrb[0].mxu0
      %v910 = vadd.f32 0.0, %v909
      %v911 = vpop.f32.mrb[0].mxu0
      %912 = vdwg.mxu0
      %v915 = vunpack.c.l.b16 %v243
      %v916 = vunpack.c.l.b16 %v244
      %v917 = vpack.c.b16 %v916, %v915
      %v920 = vunpack.c.l.b16 %v251
      %v921 = vunpack.c.l.b16 %v252
      %v922 = vpack.c.b16 %v921, %v920
      %v924 = vsel %vm295, %v917, 0
      %v927 = vsel %vm295, %v922, 0
      %929 = vmatprep.subr.bf16.mxu0 0
      %930 = vmatpush1.bf16.xpose.msra.mxu0 %v927
      %931 = vmatprep.subr.bf16.mxu0 0
      %932 = vmatpush1.bf16.xpose.msra.mxu0 0
      %933 = vmatprep.subr.bf16.mxu0 0
      %934 = vmatpush1.bf16.xpose.msra.mxu0 0
      %935 = vmatprep.subr.bf16.mxu0 0
      %936 = vmatpush1.bf16.xpose.msra.mxu0 0
      %937 = vmatprep.subr.bf16.mxu0 0
      %938 = vmatpush1.bf16.xpose.msra.mxu0 0
      %939 = vmatprep.subr.bf16.mxu0 0
      %940 = vmatpush1.bf16.xpose.msra.mxu0 0
      %941 = vmatprep.subr.bf16.mxu0 0
      %942 = vmatpush1.bf16.xpose.msra.mxu0 0
      %943 = vmatprep.subr.bf16.mxu0 0
      %944 = vmatpush1.bf16.xpose.msra.mxu0 0
      %945 = vmatprep.subr.bf16.mxu0 0
      %946 = vmatpush1.bf16.xpose.msra.mxu0 0
      %947 = vmatprep.subr.bf16.mxu0 0
      %948 = vmatpush1.bf16.xpose.msra.mxu0 0
      %949 = vmatprep.subr.bf16.mxu0 0
      %950 = vmatpush1.bf16.xpose.msra.mxu0 0
      %951 = vmatprep.subr.bf16.mxu0 0
      %952 = vmatpush1.bf16.xpose.msra.mxu0 0
      %953 = vmatprep.subr.bf16.mxu0 0
      %954 = vmatpush1.bf16.xpose.msra.mxu0 0
      %955 = vmatprep.subr.bf16.mxu0 0
      %956 = vmatpush1.bf16.xpose.msra.mxu0 0
      %957 = vmatprep.subr.bf16.mxu0 0
      %958 = vmatpush1.bf16.xpose.msra.mxu0 0
      %959 = vmatprep.subr.bf16.mxu0 0
      %960 = vmatpush1.bf16.xpose.msra.mxu0 0
      %961 = vmatprep.mubr.bf16.mxu0 0
      %962 = vmatmul.mubr.bf16.gmra.mrb[0].mxu0 %v924
      %v963 = vpop.f32.mrb[0].mxu0
      %v964 = vadd.f32 0.0, %v963
      %v965 = vpop.f32.mrb[0].mxu0
      %v966 = vpop.f32.mrb[0].mxu0
      %v967 = vadd.f32 0.0, %v966
      %v968 = vpop.f32.mrb[0].mxu0
      %969 = vdwg.mxu0
      %v972 = vunpack.c.l.b16 %v261
      %v973 = vunpack.c.l.b16 %v262
      %v974 = vpack.c.b16 %v973, %v972
      %v977 = vunpack.c.l.b16 %v269
      %v978 = vunpack.c.l.b16 %v270
      %v979 = vpack.c.b16 %v978, %v977
      %v981 = vsel %vm295, %v974, 0
      %v984 = vsel %vm295, %v979, 0
      %986 = vmatprep.subr.bf16.mxu0 0
      %987 = vmatpush1.bf16.xpose.msra.mxu0 %v984
      %988 = vmatprep.subr.bf16.mxu0 0
      %989 = vmatpush1.bf16.xpose.msra.mxu0 0
      %990 = vmatprep.subr.bf16.mxu0 0
      %991 = vmatpush1.bf16.xpose.msra.mxu0 0
      %992 = vmatprep.subr.bf16.mxu0 0
      %993 = vmatpush1.bf16.xpose.msra.mxu0 0
      %994 = vmatprep.subr.bf16.mxu0 0
      %995 = vmatpush1.bf16.xpose.msra.mxu0 0
      %996 = vmatprep.subr.bf16.mxu0 0
      %997 = vmatpush1.bf16.xpose.msra.mxu0 0
      %998 = vmatprep.subr.bf16.mxu0 0
      %999 = vmatpush1.bf16.xpose.msra.mxu0 0
      %1000 = vmatprep.subr.bf16.mxu0 0
      %1001 = vmatpush1.bf16.xpose.msra.mxu0 0
      %1002 = vmatprep.subr.bf16.mxu0 0
      %1003 = vmatpush1.bf16.xpose.msra.mxu0 0
      %1004 = vmatprep.subr.bf16.mxu0 0
      %1005 = vmatpush1.bf16.xpose.msra.mxu0 0
      %1006 = vmatprep.subr.bf16.mxu0 0
      %1007 = vmatpush1.bf16.xpose.msra.mxu0 0
      %1008 = vmatprep.subr.bf16.mxu0 0
      %1009 = vmatpush1.bf16.xpose.msra.mxu0 0
      %1010 = vmatprep.subr.bf16.mxu0 0
      %1011 = vmatpush1.bf16.xpose.msra.mxu0 0
      %1012 = vmatprep.subr.bf16.mxu0 0
      %1013 = vmatpush1.bf16.xpose.msra.mxu0 0
      %1014 = vmatprep.subr.bf16.mxu0 0
      %1015 = vmatpush1.bf16.xpose.msra.mxu0 0
      %1016 = vmatprep.subr.bf16.mxu0 0
      %1017 = vmatpush1.bf16.xpose.msra.mxu0 0
      %1018 = vmatprep.mubr.bf16.mxu0 0
      %1019 = vmatmul.mubr.bf16.gmra.mrb[0].mxu0 %v981
      %v1020 = vpop.f32.mrb[0].mxu0
      %v1021 = vadd.f32 0.0, %v1020
      %v1022 = vpop.f32.mrb[0].mxu0
      %v1023 = vpop.f32.mrb[0].mxu0
      %v1024 = vadd.f32 0.0, %v1023
      %v1025 = vpop.f32.mrb[0].mxu0
      %1026 = vdwg.mxu0
      %v1029 = vunpack.c.l.b16 %v263
      %v1030 = vunpack.c.l.b16 %v264
      %v1031 = vpack.c.b16 %v1030, %v1029
      %v1034 = vunpack.c.l.b16 %v271
      %v1035 = vunpack.c.l.b16 %v272
      %v1036 = vpack.c.b16 %v1035, %v1034
      %v1038 = vsel %vm295, %v1031, 0
      %v1041 = vsel %vm295, %v1036, 0
      %1043 = vmatprep.subr.bf16.mxu0 0
      %1044 = vmatpush1.bf16.xpose.msra.mxu0 %v1041
      %1045 = vmatprep.subr.bf16.mxu0 0
      %1046 = vmatpush1.bf16.xpose.msra.mxu0 0
      %1047 = vmatprep.subr.bf16.mxu0 0
      %1048 = vmatpush1.bf16.xpose.msra.mxu0 0
      %1049 = vmatprep.subr.bf16.mxu0 0
      %1050 = vmatpush1.bf16.xpose.msra.mxu0 0
      %1051 = vmatprep.subr.bf16.mxu0 0
      %1052 = vmatpush1.bf16.xpose.msra.mxu0 0
      %1053 = vmatprep.subr.bf16.mxu0 0
      %1054 = vmatpush1.bf16.xpose.msra.mxu0 0
      %1055 = vmatprep.subr.bf16.mxu0 0
      %1056 = vmatpush1.bf16.xpose.msra.mxu0 0
      %1057 = vmatprep.subr.bf16.mxu0 0
      %1058 = vmatpush1.bf16.xpose.msra.mxu0 0
      %1059 = vmatprep.subr.bf16.mxu0 0
      %1060 = vmatpush1.bf16.xpose.msra.mxu0 0
      %1061 = vmatprep.subr.bf16.mxu0 0
      %1062 = vmatpush1.bf16.xpose.msra.mxu0 0
      %1063 = vmatprep.subr.bf16.mxu0 0
      %1064 = vmatpush1.bf16.xpose.msra.mxu0 0
      %1065 = vmatprep.subr.bf16.mxu0 0
      %1066 = vmatpush1.bf16.xpose.msra.mxu0 0
      %1067 = vmatprep.subr.bf16.mxu0 0
      %1068 = vmatpush1.bf16.xpose.msra.mxu0 0
      %1069 = vmatprep.subr.bf16.mxu0 0
      %1070 = vmatpush1.bf16.xpose.msra.mxu0 0
      %1071 = vmatprep.subr.bf16.mxu0 0
      %1072 = vmatpush1.bf16.xpose.msra.mxu0 0
      %1073 = vmatprep.subr.bf16.mxu0 0
      %1074 = vmatpush1.bf16.xpose.msra.mxu0 0
      %1075 = vmatprep.mubr.bf16.mxu0 0
      %1076 = vmatmul.mubr.bf16.gmra.mrb[0].mxu0 %v1038
      %v1077 = vpop.f32.mrb[0].mxu0
      %v1078 = vadd.f32 0.0, %v1077
      %v1079 = vpop.f32.mrb[0].mxu0
      %v1080 = vpop.f32.mrb[0].mxu0
      %v1081 = vadd.f32 0.0, %v1080
      %v1082 = vpop.f32.mrb[0].mxu0
      %1083 = vdwg.mxu0
      %v1086 = vunpack.c.l.b16 %v265
      %v1087 = vunpack.c.l.b16 %v266
      %v1088 = vpack.c.b16 %v1087, %v1086
      %v1091 = vunpack.c.l.b16 %v273
      %v1092 = vunpack.c.l.b16 %v274
      %v1093 = vpack.c.b16 %v1092, %v1091
      %v1095 = vsel %vm295, %v1088, 0
      %v1098 = vsel %vm295, %v1093, 0
      %1100 = vmatprep.subr.bf16.mxu0 0
      %1101 = vmatpush1.bf16.xpose.msra.mxu0 %v1098
      %1102 = vmatprep.subr.bf16.mxu0 0
      %1103 = vmatpush1.bf16.xpose.msra.mxu0 0
      %1104 = vmatprep.subr.bf16.mxu0 0
      %1105 = vmatpush1.bf16.xpose.msra.mxu0 0
      %1106 = vmatprep.subr.bf16.mxu0 0
      %1107 = vmatpush1.bf16.xpose.msra.mxu0 0
      %1108 = vmatprep.subr.bf16.mxu0 0
      %1109 = vmatpush1.bf16.xpose.msra.mxu0 0
      %1110 = vmatprep.subr.bf16.mxu0 0
      %1111 = vmatpush1.bf16.xpose.msra.mxu0 0
      %1112 = vmatprep.subr.bf16.mxu0 0
      %1113 = vmatpush1.bf16.xpose.msra.mxu0 0
      %1114 = vmatprep.subr.bf16.mxu0 0
      %1115 = vmatpush1.bf16.xpose.msra.mxu0 0
      %1116 = vmatprep.subr.bf16.mxu0 0
      %1117 = vmatpush1.bf16.xpose.msra.mxu0 0
      %1118 = vmatprep.subr.bf16.mxu0 0
      %1119 = vmatpush1.bf16.xpose.msra.mxu0 0
      %1120 = vmatprep.subr.bf16.mxu0 0
      %1121 = vmatpush1.bf16.xpose.msra.mxu0 0
      %1122 = vmatprep.subr.bf16.mxu0 0
      %1123 = vmatpush1.bf16.xpose.msra.mxu0 0
      %1124 = vmatprep.subr.bf16.mxu0 0
      %1125 = vmatpush1.bf16.xpose.msra.mxu0 0
      %1126 = vmatprep.subr.bf16.mxu0 0
      %1127 = vmatpush1.bf16.xpose.msra.mxu0 0
      %1128 = vmatprep.subr.bf16.mxu0 0
      %1129 = vmatpush1.bf16.xpose.msra.mxu0 0
      %1130 = vmatprep.subr.bf16.mxu0 0
      %1131 = vmatpush1.bf16.xpose.msra.mxu0 0
      %1132 = vmatprep.mubr.bf16.mxu0 0
      %1133 = vmatmul.mubr.bf16.gmra.mrb[0].mxu0 %v1095
      %v1134 = vpop.f32.mrb[0].mxu0
      %v1135 = vadd.f32 0.0, %v1134
      %v1136 = vpop.f32.mrb[0].mxu0
      %v1137 = vpop.f32.mrb[0].mxu0
      %v1138 = vadd.f32 0.0, %v1137
      %v1139 = vpop.f32.mrb[0].mxu0
      %1140 = vdwg.mxu0
      %v1143 = vunpack.c.l.b16 %v267
      %v1144 = vunpack.c.l.b16 %v268
      %v1145 = vpack.c.b16 %v1144, %v1143
      %v1148 = vunpack.c.l.b16 %v275
      %v1149 = vunpack.c.l.b16 %v276
      %v1150 = vpack.c.b16 %v1149, %v1148
      %v1152 = vsel %vm295, %v1145, 0
      %v1155 = vsel %vm295, %v1150, 0
      %1157 = vmatprep.subr.bf16.mxu0 0
      %1158 = vmatpush1.bf16.xpose.msra.mxu0 %v1155
      %1159 = vmatprep.subr.bf16.mxu0 0
      %1160 = vmatpush1.bf16.xpose.msra.mxu0 0
      %1161 = vmatprep.subr.bf16.mxu0 0
      %1162 = vmatpush1.bf16.xpose.msra.mxu0 0
      %1163 = vmatprep.subr.bf16.mxu0 0
      %1164 = vmatpush1.bf16.xpose.msra.mxu0 0
      %1165 = vmatprep.subr.bf16.mxu0 0
      %1166 = vmatpush1.bf16.xpose.msra.mxu0 0
      %1167 = vmatprep.subr.bf16.mxu0 0
      %1168 = vmatpush1.bf16.xpose.msra.mxu0 0
      %1169 = vmatprep.subr.bf16.mxu0 0
      %1170 = vmatpush1.bf16.xpose.msra.mxu0 0
      %1171 = vmatprep.subr.bf16.mxu0 0
      %1172 = vmatpush1.bf16.xpose.msra.mxu0 0
      %1173 = vmatprep.subr.bf16.mxu0 0
      %1174 = vmatpush1.bf16.xpose.msra.mxu0 0
      %1175 = vmatprep.subr.bf16.mxu0 0
      %1176 = vmatpush1.bf16.xpose.msra.mxu0 0
      %1177 = vmatprep.subr.bf16.mxu0 0
      %1178 = vmatpush1.bf16.xpose.msra.mxu0 0
      %1179 = vmatprep.subr.bf16.mxu0 0
      %1180 = vmatpush1.bf16.xpose.msra.mxu0 0
      %1181 = vmatprep.subr.bf16.mxu0 0
      %1182 = vmatpush1.bf16.xpose.msra.mxu0 0
      %1183 = vmatprep.subr.bf16.mxu0 0
      %1184 = vmatpush1.bf16.xpose.msra.mxu0 0
      %1185 = vmatprep.subr.bf16.mxu0 0
      %1186 = vmatpush1.bf16.xpose.msra.mxu0 0
      %1187 = vmatprep.subr.bf16.mxu0 0
      %1188 = vmatpush1.bf16.xpose.msra.mxu0 0
      %1189 = vmatprep.mubr.bf16.mxu0 0
      %1190 = vmatmul.mubr.bf16.gmra.mrb[0].mxu0 %v1152
      %v1191 = vpop.f32.mrb[0].mxu0
      %v1192 = vadd.f32 0.0, %v1191
      %v1193 = vpop.f32.mrb[0].mxu0
      %v1194 = vpop.f32.mrb[0].mxu0
      %v1195 = vadd.f32 0.0, %v1194
      %v1196 = vpop.f32.mrb[0].mxu0
      %1197 = vdwg.mxu0
      %v1198 = vmul.f32 %v337, 0.25
      %v1199 = vmul.f32 %v340, 0.25
      %v1200 = vmul.f32 %v394, 0.25
      %v1201 = vmul.f32 %v397, 0.25
      %v1202 = vmul.f32 %v451, 0.25
      %v1203 = vmul.f32 %v454, 0.25
      %v1204 = vmul.f32 %v508, 0.25
      %v1205 = vmul.f32 %v511, 0.25
      %v1206 = vmul.f32 %v565, 0.25
      %v1207 = vmul.f32 %v568, 0.25
      %v1208 = vmul.f32 %v622, 0.25
      %v1209 = vmul.f32 %v625, 0.25
      %v1210 = vmul.f32 %v679, 0.25
      %v1211 = vmul.f32 %v682, 0.25
      %v1212 = vmul.f32 %v736, 0.25
      %v1213 = vmul.f32 %v739, 0.25
      %v1214 = vmul.f32 %v793, 0.25
      %v1215 = vmul.f32 %v796, 0.25
      %v1216 = vmul.f32 %v850, 0.25
      %v1217 = vmul.f32 %v853, 0.25
      %v1218 = vmul.f32 %v907, 0.25
      %v1219 = vmul.f32 %v910, 0.25
      %v1220 = vmul.f32 %v964, 0.25
      %v1221 = vmul.f32 %v967, 0.25
      %v1222 = vmul.f32 %v1021, 0.25
      %v1223 = vmul.f32 %v1024, 0.25
      %v1224 = vmul.f32 %v1078, 0.25
      %v1225 = vmul.f32 %v1081, 0.25
      %v1226 = vmul.f32 %v1135, 0.25
      %v1227 = vmul.f32 %v1138, 0.25
      %v1228 = vmul.f32 %v1192, 0.25
      %v1229 = vmul.f32 %v1195, 0.25
      %v1230 = vld [vmem:[%s1] sm:$0xff]
      %v1231 = vld [vmem:[%s1 + $0x8] sm:$0xff]
      %v1232 = vld [vmem:[%s1 + $0x10] sm:$0xff]
      %v1233 = vld [vmem:[%s1 + $0x18] sm:$0xff]
      %v1234 = vld [vmem:[%s1 + $0x20] sm:$0xff]
      %v1235 = vld [vmem:[%s1 + $0x28] sm:$0xff]
      %v1236 = vld [vmem:[%s1 + $0x30] sm:$0xff]
      %v1237 = vld [vmem:[%s1 + $0x38] sm:$0xff]
      %v1238 = vadd.f32 %v1198, %v1230
      %v1239 = vadd.f32 %v1199, %v1231
      %v1240 = vadd.f32 %v1200, %v1232
      %v1241 = vadd.f32 %v1201, %v1233
      %v1242 = vadd.f32 %v1202, %v1234
      %v1243 = vadd.f32 %v1203, %v1235
      %v1244 = vadd.f32 %v1204, %v1236
      %v1245 = vadd.f32 %v1205, %v1237
      %v1246 = vadd.f32 %v1206, %v1230
      %v1247 = vadd.f32 %v1207, %v1231
      %v1248 = vadd.f32 %v1208, %v1232
      %v1249 = vadd.f32 %v1209, %v1233
      %v1250 = vadd.f32 %v1210, %v1234
      %v1251 = vadd.f32 %v1211, %v1235
      %v1252 = vadd.f32 %v1212, %v1236
      %v1253 = vadd.f32 %v1213, %v1237
      %v1254 = vadd.f32 %v1214, %v1230
      %v1255 = vadd.f32 %v1215, %v1231
      %v1256 = vadd.f32 %v1216, %v1232
      %v1257 = vadd.f32 %v1217, %v1233
      %v1258 = vadd.f32 %v1218, %v1234
      %v1259 = vadd.f32 %v1219, %v1235
      %v1260 = vadd.f32 %v1220, %v1236
      %v1261 = vadd.f32 %v1221, %v1237
      %v1262 = vadd.f32 %v1222, %v1230
      %v1263 = vadd.f32 %v1223, %v1231
      %v1264 = vadd.f32 %v1224, %v1232
      %v1265 = vadd.f32 %v1225, %v1233
      %v1266 = vadd.f32 %v1226, %v1234
      %v1267 = vadd.f32 %v1227, %v1235
      %v1268 = vadd.f32 %v1228, %v1236
      %v1269 = vadd.f32 %v1229, %v1237
      %v1270 = vsel %vm295, %v1238, -inf
      %1271 = vmax.xlane.f32.xlu0 %v1270
      %v1272 = vpop.xlane.xlu0 %1271
      %v1273 = vsel %vm295, %v1239, -inf
      %1274 = vmax.xlane.f32.xlu0 %v1273
      %v1275 = vpop.xlane.xlu0 %1274
      %v1276 = vsel %vm295, %v1240, -inf
      %1277 = vmax.xlane.f32.xlu0 %v1276
      %v1278 = vpop.xlane.xlu0 %1277
      %v1279 = vsel %vm295, %v1241, -inf
      %1280 = vmax.xlane.f32.xlu0 %v1279
      %v1281 = vpop.xlane.xlu0 %1280
      %v1282 = vsel %vm295, %v1242, -inf
      %1283 = vmax.xlane.f32.xlu0 %v1282
      %v1284 = vpop.xlane.xlu0 %1283
      %v1285 = vsel %vm295, %v1243, -inf
      %1286 = vmax.xlane.f32.xlu0 %v1285
      %v1287 = vpop.xlane.xlu0 %1286
      %v1288 = vsel %vm295, %v1244, -inf
      %1289 = vmax.xlane.f32.xlu0 %v1288
      %v1290 = vpop.xlane.xlu0 %1289
      %v1291 = vsel %vm295, %v1245, -inf
      %1292 = vmax.xlane.f32.xlu0 %v1291
      %v1293 = vpop.xlane.xlu0 %1292
      %v1294 = vsel %vm295, %v1246, -inf
      %1295 = vmax.xlane.f32.xlu0 %v1294
      %v1296 = vpop.xlane.xlu0 %1295
      %v1297 = vsel %vm295, %v1247, -inf
      %1298 = vmax.xlane.f32.xlu0 %v1297
      %v1299 = vpop.xlane.xlu0 %1298
      %v1300 = vsel %vm295, %v1248, -inf
      %1301 = vmax.xlane.f32.xlu0 %v1300
      %v1302 = vpop.xlane.xlu0 %1301
      %v1303 = vsel %vm295, %v1249, -inf
      %1304 = vmax.xlane.f32.xlu0 %v1303
      %v1305 = vpop.xlane.xlu0 %1304
      %v1306 = vsel %vm295, %v1250, -inf
      %1307 = vmax.xlane.f32.xlu0 %v1306
      %v1308 = vpop.xlane.xlu0 %1307
      %v1309 = vsel %vm295, %v1251, -inf
      %1310 = vmax.xlane.f32.xlu0 %v1309
      %v1311 = vpop.xlane.xlu0 %1310
      %v1312 = vsel %vm295, %v1252, -inf
      %1313 = vmax.xlane.f32.xlu0 %v1312
      %v1314 = vpop.xlane.xlu0 %1313
      %v1315 = vsel %vm295, %v1253, -inf
      %1316 = vmax.xlane.f32.xlu0 %v1315
      %v1317 = vpop.xlane.xlu0 %1316
      %v1318 = vsel %vm295, %v1254, -inf
      %1319 = vmax.xlane.f32.xlu0 %v1318
      %v1320 = vpop.xlane.xlu0 %1319
      %v1321 = vsel %vm295, %v1255, -inf
      %1322 = vmax.xlane.f32.xlu0 %v1321
      %v1323 = vpop.xlane.xlu0 %1322
      %v1324 = vsel %vm295, %v1256, -inf
      %1325 = vmax.xlane.f32.xlu0 %v1324
      %v1326 = vpop.xlane.xlu0 %1325
      %v1327 = vsel %vm295, %v1257, -inf
      %1328 = vmax.xlane.f32.xlu0 %v1327
      %v1329 = vpop.xlane.xlu0 %1328
      %v1330 = vsel %vm295, %v1258, -inf
      %1331 = vmax.xlane.f32.xlu0 %v1330
      %v1332 = vpop.xlane.xlu0 %1331
      %v1333 = vsel %vm295, %v1259, -inf
      %1334 = vmax.xlane.f32.xlu0 %v1333
      %v1335 = vpop.xlane.xlu0 %1334
      %v1336 = vsel %vm295, %v1260, -inf
      %1337 = vmax.xlane.f32.xlu0 %v1336
      %v1338 = vpop.xlane.xlu0 %1337
      %v1339 = vsel %vm295, %v1261, -inf
      %1340 = vmax.xlane.f32.xlu0 %v1339
      %v1341 = vpop.xlane.xlu0 %1340
      %v1342 = vsel %vm295, %v1262, -inf
      %1343 = vmax.xlane.f32.xlu0 %v1342
      %v1344 = vpop.xlane.xlu0 %1343
      %v1345 = vsel %vm295, %v1263, -inf
      %1346 = vmax.xlane.f32.xlu0 %v1345
      %v1347 = vpop.xlane.xlu0 %1346
      %v1348 = vsel %vm295, %v1264, -inf
      %1349 = vmax.xlane.f32.xlu0 %v1348
      %v1350 = vpop.xlane.xlu0 %1349
      %v1351 = vsel %vm295, %v1265, -inf
      %1352 = vmax.xlane.f32.xlu0 %v1351
      %v1353 = vpop.xlane.xlu0 %1352
      %v1354 = vsel %vm295, %v1266, -inf
      %1355 = vmax.xlane.f32.xlu0 %v1354
      %v1356 = vpop.xlane.xlu0 %1355
      %v1357 = vsel %vm295, %v1267, -inf
      %1358 = vmax.xlane.f32.xlu0 %v1357
      %v1359 = vpop.xlane.xlu0 %1358
      %v1360 = vsel %vm295, %v1268, -inf
      %1361 = vmax.xlane.f32.xlu0 %v1360
      %v1362 = vpop.xlane.xlu0 %1361
      %v1363 = vsel %vm295, %v1269, -inf
      %1364 = vmax.xlane.f32.xlu0 %v1363
      %v1365 = vpop.xlane.xlu0 %1364
      %v1366 = vsub.f32 %v1238, %v1272
      %v1367 = vsub.f32 %v1239, %v1275
      %v1368 = vsub.f32 %v1240, %v1278
      %v1369 = vsub.f32 %v1241, %v1281
      %v1370 = vsub.f32 %v1242, %v1284
      %v1371 = vsub.f32 %v1243, %v1287
      %v1372 = vsub.f32 %v1244, %v1290
      %v1373 = vsub.f32 %v1245, %v1293
      %v1374 = vsub.f32 %v1246, %v1296
      %v1375 = vsub.f32 %v1247, %v1299
      %v1376 = vsub.f32 %v1248, %v1302
      %v1377 = vsub.f32 %v1249, %v1305
      %v1378 = vsub.f32 %v1250, %v1308
      %v1379 = vsub.f32 %v1251, %v1311
      %v1380 = vsub.f32 %v1252, %v1314
      %v1381 = vsub.f32 %v1253, %v1317
      %v1382 = vsub.f32 %v1254, %v1320
      %v1383 = vsub.f32 %v1255, %v1323
      %v1384 = vsub.f32 %v1256, %v1326
      %v1385 = vsub.f32 %v1257, %v1329
      %v1386 = vsub.f32 %v1258, %v1332
      %v1387 = vsub.f32 %v1259, %v1335
      %v1388 = vsub.f32 %v1260, %v1338
      %v1389 = vsub.f32 %v1261, %v1341
      %v1390 = vsub.f32 %v1262, %v1344
      %v1391 = vsub.f32 %v1263, %v1347
      %v1392 = vsub.f32 %v1264, %v1350
      %v1393 = vsub.f32 %v1265, %v1353
      %v1394 = vsub.f32 %v1266, %v1356
      %v1395 = vsub.f32 %v1267, %v1359
      %v1396 = vsub.f32 %v1268, %v1362
      %v1397 = vsub.f32 %v1269, %v1365
      %v1398 = vmul.f32 %v1366, 1.442695
      %v1399 = vpow.pop %v1398
      %v1400 = vmul.f32 %v1367, 1.442695
      %v1401 = vpow.pop %v1400
      %v1402 = vmul.f32 %v1368, 1.442695
      %v1403 = vpow.pop %v1402
      %v1404 = vmul.f32 %v1369, 1.442695
      %v1405 = vpow.pop %v1404
      %v1406 = vmul.f32 %v1370, 1.442695
      %v1407 = vpow.pop %v1406
      %v1408 = vmul.f32 %v1371, 1.442695
      %v1409 = vpow.pop %v1408
      %v1410 = vmul.f32 %v1372, 1.442695
      %v1411 = vpow.pop %v1410
      %v1412 = vmul.f32 %v1373, 1.442695
      %v1413 = vpow.pop %v1412
      %v1414 = vmul.f32 %v1374, 1.442695
      %v1415 = vpow.pop %v1414
      %v1416 = vmul.f32 %v1375, 1.442695
      %v1417 = vpow.pop %v1416
      %v1418 = vmul.f32 %v1376, 1.442695
      %v1419 = vpow.pop %v1418
      %v1420 = vmul.f32 %v1377, 1.442695
      %v1421 = vpow.pop %v1420
      %v1422 = vmul.f32 %v1378, 1.442695
      %v1423 = vpow.pop %v1422
      %v1424 = vmul.f32 %v1379, 1.442695
      %v1425 = vpow.pop %v1424
      %v1426 = vmul.f32 %v1380, 1.442695
      %v1427 = vpow.pop %v1426
      %v1428 = vmul.f32 %v1381, 1.442695
      %v1429 = vpow.pop %v1428
      %v1430 = vmul.f32 %v1382, 1.442695
      %v1431 = vpow.pop %v1430
      %v1432 = vmul.f32 %v1383, 1.442695
      %v1433 = vpow.pop %v1432
      %v1434 = vmul.f32 %v1384, 1.442695
      %v1435 = vpow.pop %v1434
      %v1436 = vmul.f32 %v1385, 1.442695
      %v1437 = vpow.pop %v1436
      %v1438 = vmul.f32 %v1386, 1.442695
      %v1439 = vpow.pop %v1438
      %v1440 = vmul.f32 %v1387, 1.442695
      %v1441 = vpow.pop %v1440
      %v1442 = vmul.f32 %v1388, 1.442695
      %v1443 = vpow.pop %v1442
      %v1444 = vmul.f32 %v1389, 1.442695
      %v1445 = vpow.pop %v1444
      %v1446 = vmul.f32 %v1390, 1.442695
      %v1447 = vpow.pop %v1446
      %v1448 = vmul.f32 %v1391, 1.442695
      %v1449 = vpow.pop %v1448
      %v1450 = vmul.f32 %v1392, 1.442695
      %v1451 = vpow.pop %v1450
      %v1452 = vmul.f32 %v1393, 1.442695
      %v1453 = vpow.pop %v1452
      %v1454 = vmul.f32 %v1394, 1.442695
      %v1455 = vpow.pop %v1454
      %v1456 = vmul.f32 %v1395, 1.442695
      %v1457 = vpow.pop %v1456
      %v1458 = vmul.f32 %v1396, 1.442695
      %v1459 = vpow.pop %v1458
      %v1460 = vmul.f32 %v1397, 1.442695
      %v1461 = vpow.pop %v1460
      %v1462 = vsel %vm295, %v1399, 0.0
      %1463 = vadd.xlane.f32.xlu0 %v1462
      %v1464 = vpop.xlane.xlu0 %1463
      %v1465 = vsel %vm295, %v1401, 0.0
      %1466 = vadd.xlane.f32.xlu0 %v1465
      %v1467 = vpop.xlane.xlu0 %1466
      %v1468 = vsel %vm295, %v1403, 0.0
      %1469 = vadd.xlane.f32.xlu0 %v1468
      %v1470 = vpop.xlane.xlu0 %1469
      %v1471 = vsel %vm295, %v1405, 0.0
      %1472 = vadd.xlane.f32.xlu0 %v1471
      %v1473 = vpop.xlane.xlu0 %1472
      %v1474 = vsel %vm295, %v1407, 0.0
      %1475 = vadd.xlane.f32.xlu0 %v1474
      %v1476 = vpop.xlane.xlu0 %1475
      %v1477 = vsel %vm295, %v1409, 0.0
      %1478 = vadd.xlane.f32.xlu0 %v1477
      %v1479 = vpop.xlane.xlu0 %1478
      %v1480 = vsel %vm295, %v1411, 0.0
      %1481 = vadd.xlane.f32.xlu0 %v1480
      %v1482 = vpop.xlane.xlu0 %1481
      %v1483 = vsel %vm295, %v1413, 0.0
      %1484 = vadd.xlane.f32.xlu0 %v1483
      %v1485 = vpop.xlane.xlu0 %1484
      %v1486 = vsel %vm295, %v1415, 0.0
      %1487 = vadd.xlane.f32.xlu0 %v1486
      %v1488 = vpop.xlane.xlu0 %1487
      %v1489 = vsel %vm295, %v1417, 0.0
      %1490 = vadd.xlane.f32.xlu0 %v1489
      %v1491 = vpop.xlane.xlu0 %1490
      %v1492 = vsel %vm295, %v1419, 0.0
      %1493 = vadd.xlane.f32.xlu0 %v1492
      %v1494 = vpop.xlane.xlu0 %1493
      %v1495 = vsel %vm295, %v1421, 0.0
      %1496 = vadd.xlane.f32.xlu0 %v1495
      %v1497 = vpop.xlane.xlu0 %1496
      %v1498 = vsel %vm295, %v1423, 0.0
      %1499 = vadd.xlane.f32.xlu0 %v1498
      %v1500 = vpop.xlane.xlu0 %1499
      %v1501 = vsel %vm295, %v1425, 0.0
      %1502 = vadd.xlane.f32.xlu0 %v1501
      %v1503 = vpop.xlane.xlu0 %1502
      %v1504 = vsel %vm295, %v1427, 0.0
      %1505 = vadd.xlane.f32.xlu0 %v1504
      %v1506 = vpop.xlane.xlu0 %1505
      %v1507 = vsel %vm295, %v1429, 0.0
      %1508 = vadd.xlane.f32.xlu0 %v1507
      %v1509 = vpop.xlane.xlu0 %1508
      %v1510 = vsel %vm295, %v1431, 0.0
      %1511 = vadd.xlane.f32.xlu0 %v1510
      %v1512 = vpop.xlane.xlu0 %1511
      %v1513 = vsel %vm295, %v1433, 0.0
      %1514 = vadd.xlane.f32.xlu0 %v1513
      %v1515 = vpop.xlane.xlu0 %1514
      %v1516 = vsel %vm295, %v1435, 0.0
      %1517 = vadd.xlane.f32.xlu0 %v1516
      %v1518 = vpop.xlane.xlu0 %1517
      %v1519 = vsel %vm295, %v1437, 0.0
      %1520 = vadd.xlane.f32.xlu0 %v1519
      %v1521 = vpop.xlane.xlu0 %1520
      %v1522 = vsel %vm295, %v1439, 0.0
      %1523 = vadd.xlane.f32.xlu0 %v1522
      %v1524 = vpop.xlane.xlu0 %1523
      %v1525 = vsel %vm295, %v1441, 0.0
      %1526 = vadd.xlane.f32.xlu0 %v1525
      %v1527 = vpop.xlane.xlu0 %1526
      %v1528 = vsel %vm295, %v1443, 0.0
      %1529 = vadd.xlane.f32.xlu0 %v1528
      %v1530 = vpop.xlane.xlu0 %1529
      %v1531 = vsel %vm295, %v1445, 0.0
      %1532 = vadd.xlane.f32.xlu0 %v1531
      %v1533 = vpop.xlane.xlu0 %1532
      %v1534 = vsel %vm295, %v1447, 0.0
      %1535 = vadd.xlane.f32.xlu0 %v1534
      %v1536 = vpop.xlane.xlu0 %1535
      %v1537 = vsel %vm295, %v1449, 0.0
      %1538 = vadd.xlane.f32.xlu0 %v1537
      %v1539 = vpop.xlane.xlu0 %1538
      %v1540 = vsel %vm295, %v1451, 0.0
      %1541 = vadd.xlane.f32.xlu0 %v1540
      %v1542 = vpop.xlane.xlu0 %1541
      %v1543 = vsel %vm295, %v1453, 0.0
      %1544 = vadd.xlane.f32.xlu0 %v1543
      %v1545 = vpop.xlane.xlu0 %1544
      %v1546 = vsel %vm295, %v1455, 0.0
      %1547 = vadd.xlane.f32.xlu0 %v1546
      %v1548 = vpop.xlane.xlu0 %1547
      %v1549 = vsel %vm295, %v1457, 0.0
      %1550 = vadd.xlane.f32.xlu0 %v1549
      %v1551 = vpop.xlane.xlu0 %1550
      %v1552 = vsel %vm295, %v1459, 0.0
      %1553 = vadd.xlane.f32.xlu0 %v1552
      %v1554 = vpop.xlane.xlu0 %1553
      %v1555 = vsel %vm295, %v1461, 0.0
      %1556 = vadd.xlane.f32.xlu0 %v1555
      %v1557 = vpop.xlane.xlu0 %1556
      %v1558 = vrcp.pop %v1464
      %v1559 = vrcp.pop %v1467
      %v1560 = vrcp.pop %v1470
      %v1561 = vrcp.pop %v1473
      %v1562 = vrcp.pop %v1476
      %v1563 = vrcp.pop %v1479
      %v1564 = vrcp.pop %v1482
      %v1565 = vrcp.pop %v1485
      %v1566 = vrcp.pop %v1488
      %v1567 = vrcp.pop %v1491
      %v1568 = vrcp.pop %v1494
      %v1569 = vrcp.pop %v1497
      %v1570 = vrcp.pop %v1500
      %v1571 = vrcp.pop %v1503
      %v1572 = vrcp.pop %v1506
      %v1573 = vrcp.pop %v1509
      %v1574 = vrcp.pop %v1512
      %v1575 = vrcp.pop %v1515
      %v1576 = vrcp.pop %v1518
      %v1577 = vrcp.pop %v1521
      %v1578 = vrcp.pop %v1524
      %v1579 = vrcp.pop %v1527
      %v1580 = vrcp.pop %v1530
      %v1581 = vrcp.pop %v1533
      %v1582 = vrcp.pop %v1536
      %v1583 = vrcp.pop %v1539
      %v1584 = vrcp.pop %v1542
      %v1585 = vrcp.pop %v1545
      %v1586 = vrcp.pop %v1548
      %v1587 = vrcp.pop %v1551
      %v1588 = vrcp.pop %v1554
      %v1589 = vrcp.pop %v1557
      %v1590 = vmul.f32 %v1399, %v1558
      %v1591 = vmul.f32 %v1401, %v1559
      %v1592 = vmul.f32 %v1403, %v1560
      %v1593 = vmul.f32 %v1405, %v1561
      %v1594 = vmul.f32 %v1407, %v1562
      %v1595 = vmul.f32 %v1409, %v1563
      %v1596 = vmul.f32 %v1411, %v1564
      %v1597 = vmul.f32 %v1413, %v1565
      %v1598 = vmul.f32 %v1415, %v1566
      %v1599 = vmul.f32 %v1417, %v1567
      %v1600 = vmul.f32 %v1419, %v1568
      %v1601 = vmul.f32 %v1421, %v1569
      %v1602 = vmul.f32 %v1423, %v1570
      %v1603 = vmul.f32 %v1425, %v1571
      %v1604 = vmul.f32 %v1427, %v1572
      %v1605 = vmul.f32 %v1429, %v1573
      %v1606 = vmul.f32 %v1431, %v1574
      %v1607 = vmul.f32 %v1433, %v1575
      %v1608 = vmul.f32 %v1435, %v1576
      %v1609 = vmul.f32 %v1437, %v1577
      %v1610 = vmul.f32 %v1439, %v1578
      %v1611 = vmul.f32 %v1441, %v1579
      %v1612 = vmul.f32 %v1443, %v1580
      %v1613 = vmul.f32 %v1445, %v1581
      %v1614 = vmul.f32 %v1447, %v1582
      %v1615 = vmul.f32 %v1449, %v1583
      %v1616 = vmul.f32 %v1451, %v1584
      %v1617 = vmul.f32 %v1453, %v1585
      %v1618 = vmul.f32 %v1455, %v1586
      %v1619 = vmul.f32 %v1457, %v1587
      %v1620 = vmul.f32 %v1459, %v1588
      %v1621 = vmul.f32 %v1461, %v1589
      %v1622 = vpack.c.bf16 %v1591, %v1590
      %v1623 = vpack.c.bf16 %v1593, %v1592
      %v1624 = vpack.c.bf16 %v1595, %v1594
      %v1625 = vpack.c.bf16 %v1597, %v1596
      %v1626 = vpack.c.bf16 %v1599, %v1598
      %v1627 = vpack.c.bf16 %v1601, %v1600
      %v1628 = vpack.c.bf16 %v1603, %v1602
      %v1629 = vpack.c.bf16 %v1605, %v1604
      %v1630 = vpack.c.bf16 %v1607, %v1606
      %v1631 = vpack.c.bf16 %v1609, %v1608
      %v1632 = vpack.c.bf16 %v1611, %v1610
      %v1633 = vpack.c.bf16 %v1613, %v1612
      %v1634 = vpack.c.bf16 %v1615, %v1614
      %v1635 = vpack.c.bf16 %v1617, %v1616
      %v1636 = vpack.c.bf16 %v1619, %v1618
      %v1637 = vpack.c.bf16 %v1621, %v1620
      %v1640 = vunpack.c.l.b16 %v205
      %v1641 = vunpack.c.l.b16 %v206
      %v1642 = vpack.c.b16 %v1641, %v1640
      %v1645 = vsel %vm295, %v1622, 0
      %1647 = vmatprep.subr.bf16.mxu0 0
      %1648 = vmatpush1.bf16.msra.mxu0 %v1642
      %1649 = vmatprep.subr.bf16.mxu0 0
      %1650 = vmatpush1.bf16.msra.mxu0 0
      %1651 = vmatprep.subr.bf16.mxu0 0
      %1652 = vmatpush1.bf16.msra.mxu0 0
      %1653 = vmatprep.subr.bf16.mxu0 0
      %1654 = vmatpush1.bf16.msra.mxu0 0
      %1655 = vmatprep.subr.bf16.mxu0 0
      %1656 = vmatpush1.bf16.msra.mxu0 0
      %1657 = vmatprep.subr.bf16.mxu0 0
      %1658 = vmatpush1.bf16.msra.mxu0 0
      %1659 = vmatprep.subr.bf16.mxu0 0
      %1660 = vmatpush1.bf16.msra.mxu0 0
      %1661 = vmatprep.subr.bf16.mxu0 0
      %1662 = vmatpush1.bf16.msra.mxu0 0
      %1663 = vmatprep.subr.bf16.mxu0 0
      %1664 = vmatpush1.bf16.msra.mxu0 0
      %1665 = vmatprep.subr.bf16.mxu0 0
      %1666 = vmatpush1.bf16.msra.mxu0 0
      %1667 = vmatprep.subr.bf16.mxu0 0
      %1668 = vmatpush1.bf16.msra.mxu0 0
      %1669 = vmatprep.subr.bf16.mxu0 0
      %1670 = vmatpush1.bf16.msra.mxu0 0
      %1671 = vmatprep.subr.bf16.mxu0 0
      %1672 = vmatpush1.bf16.msra.mxu0 0
      %1673 = vmatprep.subr.bf16.mxu0 0
      %1674 = vmatpush1.bf16.msra.mxu0 0
      %1675 = vmatprep.subr.bf16.mxu0 0
      %1676 = vmatpush1.bf16.msra.mxu0 0
      %1677 = vmatprep.subr.bf16.mxu0 0
      %1678 = vmatpush1.bf16.msra.mxu0 0
      %1679 = vmatprep.mubr.bf16.mxu0 0
      %1680 = vmatmul.mubr.bf16.gmra.mrb[0].mxu0 %v1645
      %v1681 = vpop.f32.mrb[0].mxu0
      %v1682 = vadd.f32 0.0, %v1681
      %v1683 = vpop.f32.mrb[0].mxu0
      %v1684 = vpop.f32.mrb[0].mxu0
      %v1685 = vadd.f32 0.0, %v1684
      %v1686 = vpop.f32.mrb[0].mxu0
      %1687 = vdwg.mxu0
      %v1690 = vunpack.c.l.b16 %v207
      %v1691 = vunpack.c.l.b16 %v208
      %v1692 = vpack.c.b16 %v1691, %v1690
      %v1695 = vsel %vm295, %v1623, 0
      %1697 = vmatprep.subr.bf16.mxu0 0
      %1698 = vmatpush1.bf16.msra.mxu0 %v1692
      %1699 = vmatprep.subr.bf16.mxu0 0
      %1700 = vmatpush1.bf16.msra.mxu0 0
      %1701 = vmatprep.subr.bf16.mxu0 0
      %1702 = vmatpush1.bf16.msra.mxu0 0
      %1703 = vmatprep.subr.bf16.mxu0 0
      %1704 = vmatpush1.bf16.msra.mxu0 0
      %1705 = vmatprep.subr.bf16.mxu0 0
      %1706 = vmatpush1.bf16.msra.mxu0 0
      %1707 = vmatprep.subr.bf16.mxu0 0
      %1708 = vmatpush1.bf16.msra.mxu0 0
      %1709 = vmatprep.subr.bf16.mxu0 0
      %1710 = vmatpush1.bf16.msra.mxu0 0
      %1711 = vmatprep.subr.bf16.mxu0 0
      %1712 = vmatpush1.bf16.msra.mxu0 0
      %1713 = vmatprep.subr.bf16.mxu0 0
      %1714 = vmatpush1.bf16.msra.mxu0 0
      %1715 = vmatprep.subr.bf16.mxu0 0
      %1716 = vmatpush1.bf16.msra.mxu0 0
      %1717 = vmatprep.subr.bf16.mxu0 0
      %1718 = vmatpush1.bf16.msra.mxu0 0
      %1719 = vmatprep.subr.bf16.mxu0 0
      %1720 = vmatpush1.bf16.msra.mxu0 0
      %1721 = vmatprep.subr.bf16.mxu0 0
      %1722 = vmatpush1.bf16.msra.mxu0 0
      %1723 = vmatprep.subr.bf16.mxu0 0
      %1724 = vmatpush1.bf16.msra.mxu0 0
      %1725 = vmatprep.subr.bf16.mxu0 0
      %1726 = vmatpush1.bf16.msra.mxu0 0
      %1727 = vmatprep.subr.bf16.mxu0 0
      %1728 = vmatpush1.bf16.msra.mxu0 0
      %1729 = vmatprep.mubr.bf16.mxu0 0
      %1730 = vmatmul.mubr.bf16.gmra.mrb[0].mxu0 %v1695
      %v1731 = vpop.f32.mrb[0].mxu0
      %v1732 = vadd.f32 0.0, %v1731
      %v1733 = vpop.f32.mrb[0].mxu0
      %v1734 = vpop.f32.mrb[0].mxu0
      %v1735 = vadd.f32 0.0, %v1734
      %v1736 = vpop.f32.mrb[0].mxu0
      %1737 = vdwg.mxu0
      %v1740 = vunpack.c.l.b16 %v209
      %v1741 = vunpack.c.l.b16 %v210
      %v1742 = vpack.c.b16 %v1741, %v1740
      %v1745 = vsel %vm295, %v1624, 0
      %1747 = vmatprep.subr.bf16.mxu0 0
      %1748 = vmatpush1.bf16.msra.mxu0 %v1742
      %1749 = vmatprep.subr.bf16.mxu0 0
      %1750 = vmatpush1.bf16.msra.mxu0 0
      %1751 = vmatprep.subr.bf16.mxu0 0
      %1752 = vmatpush1.bf16.msra.mxu0 0
      %1753 = vmatprep.subr.bf16.mxu0 0
      %1754 = vmatpush1.bf16.msra.mxu0 0
      %1755 = vmatprep.subr.bf16.mxu0 0
      %1756 = vmatpush1.bf16.msra.mxu0 0
      %1757 = vmatprep.subr.bf16.mxu0 0
      %1758 = vmatpush1.bf16.msra.mxu0 0
      %1759 = vmatprep.subr.bf16.mxu0 0
      %1760 = vmatpush1.bf16.msra.mxu0 0
      %1761 = vmatprep.subr.bf16.mxu0 0
      %1762 = vmatpush1.bf16.msra.mxu0 0
      %1763 = vmatprep.subr.bf16.mxu0 0
      %1764 = vmatpush1.bf16.msra.mxu0 0
      %1765 = vmatprep.subr.bf16.mxu0 0
      %1766 = vmatpush1.bf16.msra.mxu0 0
      %1767 = vmatprep.subr.bf16.mxu0 0
      %1768 = vmatpush1.bf16.msra.mxu0 0
      %1769 = vmatprep.subr.bf16.mxu0 0
      %1770 = vmatpush1.bf16.msra.mxu0 0
      %1771 = vmatprep.subr.bf16.mxu0 0
      %1772 = vmatpush1.bf16.msra.mxu0 0
      %1773 = vmatprep.subr.bf16.mxu0 0
      %1774 = vmatpush1.bf16.msra.mxu0 0
      %1775 = vmatprep.subr.bf16.mxu0 0
      %1776 = vmatpush1.bf16.msra.mxu0 0
      %1777 = vmatprep.subr.bf16.mxu0 0
      %1778 = vmatpush1.bf16.msra.mxu0 0
      %1779 = vmatprep.mubr.bf16.mxu0 0
      %1780 = vmatmul.mubr.bf16.gmra.mrb[0].mxu0 %v1745
      %v1781 = vpop.f32.mrb[0].mxu0
      %v1782 = vadd.f32 0.0, %v1781
      %v1783 = vpop.f32.mrb[0].mxu0
      %v1784 = vpop.f32.mrb[0].mxu0
      %v1785 = vadd.f32 0.0, %v1784
      %v1786 = vpop.f32.mrb[0].mxu0
      %1787 = vdwg.mxu0
      %v1790 = vunpack.c.l.b16 %v211
      %v1791 = vunpack.c.l.b16 %v212
      %v1792 = vpack.c.b16 %v1791, %v1790
      %v1795 = vsel %vm295, %v1625, 0
      %1797 = vmatprep.subr.bf16.mxu0 0
      %1798 = vmatpush1.bf16.msra.mxu0 %v1792
      %1799 = vmatprep.subr.bf16.mxu0 0
      %1800 = vmatpush1.bf16.msra.mxu0 0
      %1801 = vmatprep.subr.bf16.mxu0 0
      %1802 = vmatpush1.bf16.msra.mxu0 0
      %1803 = vmatprep.subr.bf16.mxu0 0
      %1804 = vmatpush1.bf16.msra.mxu0 0
      %1805 = vmatprep.subr.bf16.mxu0 0
      %1806 = vmatpush1.bf16.msra.mxu0 0
      %1807 = vmatprep.subr.bf16.mxu0 0
      %1808 = vmatpush1.bf16.msra.mxu0 0
      %1809 = vmatprep.subr.bf16.mxu0 0
      %1810 = vmatpush1.bf16.msra.mxu0 0
      %1811 = vmatprep.subr.bf16.mxu0 0
      %1812 = vmatpush1.bf16.msra.mxu0 0
      %1813 = vmatprep.subr.bf16.mxu0 0
      %1814 = vmatpush1.bf16.msra.mxu0 0
      %1815 = vmatprep.subr.bf16.mxu0 0
      %1816 = vmatpush1.bf16.msra.mxu0 0
      %1817 = vmatprep.subr.bf16.mxu0 0
      %1818 = vmatpush1.bf16.msra.mxu0 0
      %1819 = vmatprep.subr.bf16.mxu0 0
      %1820 = vmatpush1.bf16.msra.mxu0 0
      %1821 = vmatprep.subr.bf16.mxu0 0
      %1822 = vmatpush1.bf16.msra.mxu0 0
      %1823 = vmatprep.subr.bf16.mxu0 0
      %1824 = vmatpush1.bf16.msra.mxu0 0
      %1825 = vmatprep.subr.bf16.mxu0 0
      %1826 = vmatpush1.bf16.msra.mxu0 0
      %1827 = vmatprep.subr.bf16.mxu0 0
      %1828 = vmatpush1.bf16.msra.mxu0 0
      %1829 = vmatprep.mubr.bf16.mxu0 0
      %1830 = vmatmul.mubr.bf16.gmra.mrb[0].mxu0 %v1795
      %v1831 = vpop.f32.mrb[0].mxu0
      %v1832 = vadd.f32 0.0, %v1831
      %v1833 = vpop.f32.mrb[0].mxu0
      %v1834 = vpop.f32.mrb[0].mxu0
      %v1835 = vadd.f32 0.0, %v1834
      %v1836 = vpop.f32.mrb[0].mxu0
      %1837 = vdwg.mxu0
      %v1840 = vunpack.c.l.b16 %v229
      %v1841 = vunpack.c.l.b16 %v230
      %v1842 = vpack.c.b16 %v1841, %v1840
      %v1845 = vsel %vm295, %v1626, 0
      %1847 = vmatprep.subr.bf16.mxu0 0
      %1848 = vmatpush1.bf16.msra.mxu0 %v1842
      %1849 = vmatprep.subr.bf16.mxu0 0
      %1850 = vmatpush1.bf16.msra.mxu0 0
      %1851 = vmatprep.subr.bf16.mxu0 0
      %1852 = vmatpush1.bf16.msra.mxu0 0
      %1853 = vmatprep.subr.bf16.mxu0 0
      %1854 = vmatpush1.bf16.msra.mxu0 0
      %1855 = vmatprep.subr.bf16.mxu0 0
      %1856 = vmatpush1.bf16.msra.mxu0 0
      %1857 = vmatprep.subr.bf16.mxu0 0
      %1858 = vmatpush1.bf16.msra.mxu0 0
      %1859 = vmatprep.subr.bf16.mxu0 0
      %1860 = vmatpush1.bf16.msra.mxu0 0
      %1861 = vmatprep.subr.bf16.mxu0 0
      %1862 = vmatpush1.bf16.msra.mxu0 0
      %1863 = vmatprep.subr.bf16.mxu0 0
      %1864 = vmatpush1.bf16.msra.mxu0 0
      %1865 = vmatprep.subr.bf16.mxu0 0
      %1866 = vmatpush1.bf16.msra.mxu0 0
      %1867 = vmatprep.subr.bf16.mxu0 0
      %1868 = vmatpush1.bf16.msra.mxu0 0
      %1869 = vmatprep.subr.bf16.mxu0 0
      %1870 = vmatpush1.bf16.msra.mxu0 0
      %1871 = vmatprep.subr.bf16.mxu0 0
      %1872 = vmatpush1.bf16.msra.mxu0 0
      %1873 = vmatprep.subr.bf16.mxu0 0
      %1874 = vmatpush1.bf16.msra.mxu0 0
      %1875 = vmatprep.subr.bf16.mxu0 0
      %1876 = vmatpush1.bf16.msra.mxu0 0
      %1877 = vmatprep.subr.bf16.mxu0 0
      %1878 = vmatpush1.bf16.msra.mxu0 0
      %1879 = vmatprep.mubr.bf16.mxu0 0
      %1880 = vmatmul.mubr.bf16.gmra.mrb[0].mxu0 %v1845
      %v1881 = vpop.f32.mrb[0].mxu0
      %v1882 = vadd.f32 0.0, %v1881
      %v1883 = vpop.f32.mrb[0].mxu0
      %v1884 = vpop.f32.mrb[0].mxu0
      %v1885 = vadd.f32 0.0, %v1884
      %v1886 = vpop.f32.mrb[0].mxu0
      %1887 = vdwg.mxu0
      %v1890 = vunpack.c.l.b16 %v231
      %v1891 = vunpack.c.l.b16 %v232
      %v1892 = vpack.c.b16 %v1891, %v1890
      %v1895 = vsel %vm295, %v1627, 0
      %1897 = vmatprep.subr.bf16.mxu0 0
      %1898 = vmatpush1.bf16.msra.mxu0 %v1892
      %1899 = vmatprep.subr.bf16.mxu0 0
      %1900 = vmatpush1.bf16.msra.mxu0 0
      %1901 = vmatprep.subr.bf16.mxu0 0
      %1902 = vmatpush1.bf16.msra.mxu0 0
      %1903 = vmatprep.subr.bf16.mxu0 0
      %1904 = vmatpush1.bf16.msra.mxu0 0
      %1905 = vmatprep.subr.bf16.mxu0 0
      %1906 = vmatpush1.bf16.msra.mxu0 0
      %1907 = vmatprep.subr.bf16.mxu0 0
      %1908 = vmatpush1.bf16.msra.mxu0 0
      %1909 = vmatprep.subr.bf16.mxu0 0
      %1910 = vmatpush1.bf16.msra.mxu0 0
      %1911 = vmatprep.subr.bf16.mxu0 0
      %1912 = vmatpush1.bf16.msra.mxu0 0
      %1913 = vmatprep.subr.bf16.mxu0 0
      %1914 = vmatpush1.bf16.msra.mxu0 0
      %1915 = vmatprep.subr.bf16.mxu0 0
      %1916 = vmatpush1.bf16.msra.mxu0 0
      %1917 = vmatprep.subr.bf16.mxu0 0
      %1918 = vmatpush1.bf16.msra.mxu0 0
      %1919 = vmatprep.subr.bf16.mxu0 0
      %1920 = vmatpush1.bf16.msra.mxu0 0
      %1921 = vmatprep.subr.bf16.mxu0 0
      %1922 = vmatpush1.bf16.msra.mxu0 0
      %1923 = vmatprep.subr.bf16.mxu0 0
      %1924 = vmatpush1.bf16.msra.mxu0 0
      %1925 = vmatprep.subr.bf16.mxu0 0
      %1926 = vmatpush1.bf16.msra.mxu0 0
      %1927 = vmatprep.subr.bf16.mxu0 0
      %1928 = vmatpush1.bf16.msra.mxu0 0
      %1929 = vmatprep.mubr.bf16.mxu0 0
      %1930 = vmatmul.mubr.bf16.gmra.mrb[0].mxu0 %v1895
      %v1931 = vpop.f32.mrb[0].mxu0
      %v1932 = vadd.f32 0.0, %v1931
      %v1933 = vpop.f32.mrb[0].mxu0
      %v1934 = vpop.f32.mrb[0].mxu0
      %v1935 = vadd.f32 0.0, %v1934
      %v1936 = vpop.f32.mrb[0].mxu0
      %1937 = vdwg.mxu0
      %v1940 = vunpack.c.l.b16 %v233
      %v1941 = vunpack.c.l.b16 %v234
      %v1942 = vpack.c.b16 %v1941, %v1940
      %v1945 = vsel %vm295, %v1628, 0
      %1947 = vmatprep.subr.bf16.mxu0 0
      %1948 = vmatpush1.bf16.msra.mxu0 %v1942
      %1949 = vmatprep.subr.bf16.mxu0 0
      %1950 = vmatpush1.bf16.msra.mxu0 0
      %1951 = vmatprep.subr.bf16.mxu0 0
      %1952 = vmatpush1.bf16.msra.mxu0 0
      %1953 = vmatprep.subr.bf16.mxu0 0
      %1954 = vmatpush1.bf16.msra.mxu0 0
      %1955 = vmatprep.subr.bf16.mxu0 0
      %1956 = vmatpush1.bf16.msra.mxu0 0
      %1957 = vmatprep.subr.bf16.mxu0 0
      %1958 = vmatpush1.bf16.msra.mxu0 0
      %1959 = vmatprep.subr.bf16.mxu0 0
      %1960 = vmatpush1.bf16.msra.mxu0 0
      %1961 = vmatprep.subr.bf16.mxu0 0
      %1962 = vmatpush1.bf16.msra.mxu0 0
      %1963 = vmatprep.subr.bf16.mxu0 0
      %1964 = vmatpush1.bf16.msra.mxu0 0
      %1965 = vmatprep.subr.bf16.mxu0 0
      %1966 = vmatpush1.bf16.msra.mxu0 0
      %1967 = vmatprep.subr.bf16.mxu0 0
      %1968 = vmatpush1.bf16.msra.mxu0 0
      %1969 = vmatprep.subr.bf16.mxu0 0
      %1970 = vmatpush1.bf16.msra.mxu0 0
      %1971 = vmatprep.subr.bf16.mxu0 0
      %1972 = vmatpush1.bf16.msra.mxu0 0
      %1973 = vmatprep.subr.bf16.mxu0 0
      %1974 = vmatpush1.bf16.msra.mxu0 0
      %1975 = vmatprep.subr.bf16.mxu0 0
      %1976 = vmatpush1.bf16.msra.mxu0 0
      %1977 = vmatprep.subr.bf16.mxu0 0
      %1978 = vmatpush1.bf16.msra.mxu0 0
      %1979 = vmatprep.mubr.bf16.mxu0 0
      %1980 = vmatmul.mubr.bf16.gmra.mrb[0].mxu0 %v1945
      %v1981 = vpop.f32.mrb[0].mxu0
      %v1982 = vadd.f32 0.0, %v1981
      %v1983 = vpop.f32.mrb[0].mxu0
      %v1984 = vpop.f32.mrb[0].mxu0
      %v1985 = vadd.f32 0.0, %v1984
      %v1986 = vpop.f32.mrb[0].mxu0
      %1987 = vdwg.mxu0
      %v1990 = vunpack.c.l.b16 %v235
      %v1991 = vunpack.c.l.b16 %v236
      %v1992 = vpack.c.b16 %v1991, %v1990
      %v1995 = vsel %vm295, %v1629, 0
      %1997 = vmatprep.subr.bf16.mxu0 0
      %1998 = vmatpush1.bf16.msra.mxu0 %v1992
      %1999 = vmatprep.subr.bf16.mxu0 0
      %2000 = vmatpush1.bf16.msra.mxu0 0
      %2001 = vmatprep.subr.bf16.mxu0 0
      %2002 = vmatpush1.bf16.msra.mxu0 0
      %2003 = vmatprep.subr.bf16.mxu0 0
      %2004 = vmatpush1.bf16.msra.mxu0 0
      %2005 = vmatprep.subr.bf16.mxu0 0
      %2006 = vmatpush1.bf16.msra.mxu0 0
      %2007 = vmatprep.subr.bf16.mxu0 0
      %2008 = vmatpush1.bf16.msra.mxu0 0
      %2009 = vmatprep.subr.bf16.mxu0 0
      %2010 = vmatpush1.bf16.msra.mxu0 0
      %2011 = vmatprep.subr.bf16.mxu0 0
      %2012 = vmatpush1.bf16.msra.mxu0 0
      %2013 = vmatprep.subr.bf16.mxu0 0
      %2014 = vmatpush1.bf16.msra.mxu0 0
      %2015 = vmatprep.subr.bf16.mxu0 0
      %2016 = vmatpush1.bf16.msra.mxu0 0
      %2017 = vmatprep.subr.bf16.mxu0 0
      %2018 = vmatpush1.bf16.msra.mxu0 0
      %2019 = vmatprep.subr.bf16.mxu0 0
      %2020 = vmatpush1.bf16.msra.mxu0 0
      %2021 = vmatprep.subr.bf16.mxu0 0
      %2022 = vmatpush1.bf16.msra.mxu0 0
      %2023 = vmatprep.subr.bf16.mxu0 0
      %2024 = vmatpush1.bf16.msra.mxu0 0
      %2025 = vmatprep.subr.bf16.mxu0 0
      %2026 = vmatpush1.bf16.msra.mxu0 0
      %2027 = vmatprep.subr.bf16.mxu0 0
      %2028 = vmatpush1.bf16.msra.mxu0 0
      %2029 = vmatprep.mubr.bf16.mxu0 0
      %2030 = vmatmul.mubr.bf16.gmra.mrb[0].mxu0 %v1995
      %v2031 = vpop.f32.mrb[0].mxu0
      %v2032 = vadd.f32 0.0, %v2031
      %v2033 = vpop.f32.mrb[0].mxu0
      %v2034 = vpop.f32.mrb[0].mxu0
      %v2035 = vadd.f32 0.0, %v2034
      %v2036 = vpop.f32.mrb[0].mxu0
      %2037 = vdwg.mxu0
      %v2040 = vunpack.c.l.b16 %v253
      %v2041 = vunpack.c.l.b16 %v254
      %v2042 = vpack.c.b16 %v2041, %v2040
      %v2045 = vsel %vm295, %v1630, 0
      %2047 = vmatprep.subr.bf16.mxu0 0
      %2048 = vmatpush1.bf16.msra.mxu0 %v2042
      %2049 = vmatprep.subr.bf16.mxu0 0
      %2050 = vmatpush1.bf16.msra.mxu0 0
      %2051 = vmatprep.subr.bf16.mxu0 0
      %2052 = vmatpush1.bf16.msra.mxu0 0
      %2053 = vmatprep.subr.bf16.mxu0 0
      %2054 = vmatpush1.bf16.msra.mxu0 0
      %2055 = vmatprep.subr.bf16.mxu0 0
      %2056 = vmatpush1.bf16.msra.mxu0 0
      %2057 = vmatprep.subr.bf16.mxu0 0
      %2058 = vmatpush1.bf16.msra.mxu0 0
      %2059 = vmatprep.subr.bf16.mxu0 0
      %2060 = vmatpush1.bf16.msra.mxu0 0
      %2061 = vmatprep.subr.bf16.mxu0 0
      %2062 = vmatpush1.bf16.msra.mxu0 0
      %2063 = vmatprep.subr.bf16.mxu0 0
      %2064 = vmatpush1.bf16.msra.mxu0 0
      %2065 = vmatprep.subr.bf16.mxu0 0
      %2066 = vmatpush1.bf16.msra.mxu0 0
      %2067 = vmatprep.subr.bf16.mxu0 0
      %2068 = vmatpush1.bf16.msra.mxu0 0
      %2069 = vmatprep.subr.bf16.mxu0 0
      %2070 = vmatpush1.bf16.msra.mxu0 0
      %2071 = vmatprep.subr.bf16.mxu0 0
      %2072 = vmatpush1.bf16.msra.mxu0 0
      %2073 = vmatprep.subr.bf16.mxu0 0
      %2074 = vmatpush1.bf16.msra.mxu0 0
      %2075 = vmatprep.subr.bf16.mxu0 0
      %2076 = vmatpush1.bf16.msra.mxu0 0
      %2077 = vmatprep.subr.bf16.mxu0 0
      %2078 = vmatpush1.bf16.msra.mxu0 0
      %2079 = vmatprep.mubr.bf16.mxu0 0
      %2080 = vmatmul.mubr.bf16.gmra.mrb[0].mxu0 %v2045
      %v2081 = vpop.f32.mrb[0].mxu0
      %v2082 = vadd.f32 0.0, %v2081
      %v2083 = vpop.f32.mrb[0].mxu0
      %v2084 = vpop.f32.mrb[0].mxu0
      %v2085 = vadd.f32 0.0, %v2084
      %v2086 = vpop.f32.mrb[0].mxu0
      %2087 = vdwg.mxu0
      %v2090 = vunpack.c.l.b16 %v255
      %v2091 = vunpack.c.l.b16 %v256
      %v2092 = vpack.c.b16 %v2091, %v2090
      %v2095 = vsel %vm295, %v1631, 0
      %2097 = vmatprep.subr.bf16.mxu0 0
      %2098 = vmatpush1.bf16.msra.mxu0 %v2092
      %2099 = vmatprep.subr.bf16.mxu0 0
      %2100 = vmatpush1.bf16.msra.mxu0 0
      %2101 = vmatprep.subr.bf16.mxu0 0
      %2102 = vmatpush1.bf16.msra.mxu0 0
      %2103 = vmatprep.subr.bf16.mxu0 0
      %2104 = vmatpush1.bf16.msra.mxu0 0
      %2105 = vmatprep.subr.bf16.mxu0 0
      %2106 = vmatpush1.bf16.msra.mxu0 0
      %2107 = vmatprep.subr.bf16.mxu0 0
      %2108 = vmatpush1.bf16.msra.mxu0 0
      %2109 = vmatprep.subr.bf16.mxu0 0
      %2110 = vmatpush1.bf16.msra.mxu0 0
      %2111 = vmatprep.subr.bf16.mxu0 0
      %2112 = vmatpush1.bf16.msra.mxu0 0
      %2113 = vmatprep.subr.bf16.mxu0 0
      %2114 = vmatpush1.bf16.msra.mxu0 0
      %2115 = vmatprep.subr.bf16.mxu0 0
      %2116 = vmatpush1.bf16.msra.mxu0 0
      %2117 = vmatprep.subr.bf16.mxu0 0
      %2118 = vmatpush1.bf16.msra.mxu0 0
      %2119 = vmatprep.subr.bf16.mxu0 0
      %2120 = vmatpush1.bf16.msra.mxu0 0
      %2121 = vmatprep.subr.bf16.mxu0 0
      %2122 = vmatpush1.bf16.msra.mxu0 0
      %2123 = vmatprep.subr.bf16.mxu0 0
      %2124 = vmatpush1.bf16.msra.mxu0 0
      %2125 = vmatprep.subr.bf16.mxu0 0
      %2126 = vmatpush1.bf16.msra.mxu0 0
      %2127 = vmatprep.subr.bf16.mxu0 0
      %2128 = vmatpush1.bf16.msra.mxu0 0
      %2129 = vmatprep.mubr.bf16.mxu0 0
      %2130 = vmatmul.mubr.bf16.gmra.mrb[0].mxu0 %v2095
      %v2131 = vpop.f32.mrb[0].mxu0
      %v2132 = vadd.f32 0.0, %v2131
      %v2133 = vpop.f32.mrb[0].mxu0
      %v2134 = vpop.f32.mrb[0].mxu0
      %v2135 = vadd.f32 0.0, %v2134
      %v2136 = vpop.f32.mrb[0].mxu0
      %2137 = vdwg.mxu0
      %v2140 = vunpack.c.l.b16 %v257
      %v2141 = vunpack.c.l.b16 %v258
      %v2142 = vpack.c.b16 %v2141, %v2140
      %v2145 = vsel %vm295, %v1632, 0
      %2147 = vmatprep.subr.bf16.mxu0 0
      %2148 = vmatpush1.bf16.msra.mxu0 %v2142
      %2149 = vmatprep.subr.bf16.mxu0 0
      %2150 = vmatpush1.bf16.msra.mxu0 0
      %2151 = vmatprep.subr.bf16.mxu0 0
      %2152 = vmatpush1.bf16.msra.mxu0 0
      %2153 = vmatprep.subr.bf16.mxu0 0
      %2154 = vmatpush1.bf16.msra.mxu0 0
      %2155 = vmatprep.subr.bf16.mxu0 0
      %2156 = vmatpush1.bf16.msra.mxu0 0
      %2157 = vmatprep.subr.bf16.mxu0 0
      %2158 = vmatpush1.bf16.msra.mxu0 0
      %2159 = vmatprep.subr.bf16.mxu0 0
      %2160 = vmatpush1.bf16.msra.mxu0 0
      %2161 = vmatprep.subr.bf16.mxu0 0
      %2162 = vmatpush1.bf16.msra.mxu0 0
      %2163 = vmatprep.subr.bf16.mxu0 0
      %2164 = vmatpush1.bf16.msra.mxu0 0
      %2165 = vmatprep.subr.bf16.mxu0 0
      %2166 = vmatpush1.bf16.msra.mxu0 0
      %2167 = vmatprep.subr.bf16.mxu0 0
      %2168 = vmatpush1.bf16.msra.mxu0 0
      %2169 = vmatprep.subr.bf16.mxu0 0
      %2170 = vmatpush1.bf16.msra.mxu0 0
      %2171 = vmatprep.subr.bf16.mxu0 0
      %2172 = vmatpush1.bf16.msra.mxu0 0
      %2173 = vmatprep.subr.bf16.mxu0 0
      %2174 = vmatpush1.bf16.msra.mxu0 0
      %2175 = vmatprep.subr.bf16.mxu0 0
      %2176 = vmatpush1.bf16.msra.mxu0 0
      %2177 = vmatprep.subr.bf16.mxu0 0
      %2178 = vmatpush1.bf16.msra.mxu0 0
      %2179 = vmatprep.mubr.bf16.mxu0 0
      %2180 = vmatmul.mubr.bf16.gmra.mrb[0].mxu0 %v2145
      %v2181 = vpop.f32.mrb[0].mxu0
      %v2182 = vadd.f32 0.0, %v2181
      %v2183 = vpop.f32.mrb[0].mxu0
      %v2184 = vpop.f32.mrb[0].mxu0
      %v2185 = vadd.f32 0.0, %v2184
      %v2186 = vpop.f32.mrb[0].mxu0
      %2187 = vdwg.mxu0
      %v2190 = vunpack.c.l.b16 %v259
      %v2191 = vunpack.c.l.b16 %v260
      %v2192 = vpack.c.b16 %v2191, %v2190
      %v2195 = vsel %vm295, %v1633, 0
      %2197 = vmatprep.subr.bf16.mxu0 0
      %2198 = vmatpush1.bf16.msra.mxu0 %v2192
      %2199 = vmatprep.subr.bf16.mxu0 0
      %2200 = vmatpush1.bf16.msra.mxu0 0
      %2201 = vmatprep.subr.bf16.mxu0 0
      %2202 = vmatpush1.bf16.msra.mxu0 0
      %2203 = vmatprep.subr.bf16.mxu0 0
      %2204 = vmatpush1.bf16.msra.mxu0 0
      %2205 = vmatprep.subr.bf16.mxu0 0
      %2206 = vmatpush1.bf16.msra.mxu0 0
      %2207 = vmatprep.subr.bf16.mxu0 0
      %2208 = vmatpush1.bf16.msra.mxu0 0
      %2209 = vmatprep.subr.bf16.mxu0 0
      %2210 = vmatpush1.bf16.msra.mxu0 0
      %2211 = vmatprep.subr.bf16.mxu0 0
      %2212 = vmatpush1.bf16.msra.mxu0 0
      %2213 = vmatprep.subr.bf16.mxu0 0
      %2214 = vmatpush1.bf16.msra.mxu0 0
      %2215 = vmatprep.subr.bf16.mxu0 0
      %2216 = vmatpush1.bf16.msra.mxu0 0
      %2217 = vmatprep.subr.bf16.mxu0 0
      %2218 = vmatpush1.bf16.msra.mxu0 0
      %2219 = vmatprep.subr.bf16.mxu0 0
      %2220 = vmatpush1.bf16.msra.mxu0 0
      %2221 = vmatprep.subr.bf16.mxu0 0
      %2222 = vmatpush1.bf16.msra.mxu0 0
      %2223 = vmatprep.subr.bf16.mxu0 0
      %2224 = vmatpush1.bf16.msra.mxu0 0
      %2225 = vmatprep.subr.bf16.mxu0 0
      %2226 = vmatpush1.bf16.msra.mxu0 0
      %2227 = vmatprep.subr.bf16.mxu0 0
      %2228 = vmatpush1.bf16.msra.mxu0 0
      %2229 = vmatprep.mubr.bf16.mxu0 0
      %2230 = vmatmul.mubr.bf16.gmra.mrb[0].mxu0 %v2195
      %v2231 = vpop.f32.mrb[0].mxu0
      %v2232 = vadd.f32 0.0, %v2231
      %v2233 = vpop.f32.mrb[0].mxu0
      %v2234 = vpop.f32.mrb[0].mxu0
      %v2235 = vadd.f32 0.0, %v2234
      %v2236 = vpop.f32.mrb[0].mxu0
      %2237 = vdwg.mxu0
      %v2240 = vunpack.c.l.b16 %v277
      %v2241 = vunpack.c.l.b16 %v278
      %v2242 = vpack.c.b16 %v2241, %v2240
      %v2245 = vsel %vm295, %v1634, 0
      %2247 = vmatprep.subr.bf16.mxu0 0
      %2248 = vmatpush1.bf16.msra.mxu0 %v2242
      %2249 = vmatprep.subr.bf16.mxu0 0
      %2250 = vmatpush1.bf16.msra.mxu0 0
      %2251 = vmatprep.subr.bf16.mxu0 0
      %2252 = vmatpush1.bf16.msra.mxu0 0
      %2253 = vmatprep.subr.bf16.mxu0 0
      %2254 = vmatpush1.bf16.msra.mxu0 0
      %2255 = vmatprep.subr.bf16.mxu0 0
      %2256 = vmatpush1.bf16.msra.mxu0 0
      %2257 = vmatprep.subr.bf16.mxu0 0
      %2258 = vmatpush1.bf16.msra.mxu0 0
      %2259 = vmatprep.subr.bf16.mxu0 0
      %2260 = vmatpush1.bf16.msra.mxu0 0
      %2261 = vmatprep.subr.bf16.mxu0 0
      %2262 = vmatpush1.bf16.msra.mxu0 0
      %2263 = vmatprep.subr.bf16.mxu0 0
      %2264 = vmatpush1.bf16.msra.mxu0 0
      %2265 = vmatprep.subr.bf16.mxu0 0
      %2266 = vmatpush1.bf16.msra.mxu0 0
      %2267 = vmatprep.subr.bf16.mxu0 0
      %2268 = vmatpush1.bf16.msra.mxu0 0
      %2269 = vmatprep.subr.bf16.mxu0 0
      %2270 = vmatpush1.bf16.msra.mxu0 0
      %2271 = vmatprep.subr.bf16.mxu0 0
      %2272 = vmatpush1.bf16.msra.mxu0 0
      %2273 = vmatprep.subr.bf16.mxu0 0
      %2274 = vmatpush1.bf16.msra.mxu0 0
      %2275 = vmatprep.subr.bf16.mxu0 0
      %2276 = vmatpush1.bf16.msra.mxu0 0
      %2277 = vmatprep.subr.bf16.mxu0 0
      %2278 = vmatpush1.bf16.msra.mxu0 0
      %2279 = vmatprep.mubr.bf16.mxu0 0
      %2280 = vmatmul.mubr.bf16.gmra.mrb[0].mxu0 %v2245
      %v2281 = vpop.f32.mrb[0].mxu0
      %v2282 = vadd.f32 0.0, %v2281
      %v2283 = vpop.f32.mrb[0].mxu0
      %v2284 = vpop.f32.mrb[0].mxu0
      %v2285 = vadd.f32 0.0, %v2284
      %v2286 = vpop.f32.mrb[0].mxu0
      %2287 = vdwg.mxu0
      %v2290 = vunpack.c.l.b16 %v279
      %v2291 = vunpack.c.l.b16 %v280
      %v2292 = vpack.c.b16 %v2291, %v2290
      %v2295 = vsel %vm295, %v1635, 0
      %2297 = vmatprep.subr.bf16.mxu0 0
      %2298 = vmatpush1.bf16.msra.mxu0 %v2292
      %2299 = vmatprep.subr.bf16.mxu0 0
      %2300 = vmatpush1.bf16.msra.mxu0 0
      %2301 = vmatprep.subr.bf16.mxu0 0
      %2302 = vmatpush1.bf16.msra.mxu0 0
      %2303 = vmatprep.subr.bf16.mxu0 0
      %2304 = vmatpush1.bf16.msra.mxu0 0
      %2305 = vmatprep.subr.bf16.mxu0 0
      %2306 = vmatpush1.bf16.msra.mxu0 0
      %2307 = vmatprep.subr.bf16.mxu0 0
      %2308 = vmatpush1.bf16.msra.mxu0 0
      %2309 = vmatprep.subr.bf16.mxu0 0
      %2310 = vmatpush1.bf16.msra.mxu0 0
      %2311 = vmatprep.subr.bf16.mxu0 0
      %2312 = vmatpush1.bf16.msra.mxu0 0
      %2313 = vmatprep.subr.bf16.mxu0 0
      %2314 = vmatpush1.bf16.msra.mxu0 0
      %2315 = vmatprep.subr.bf16.mxu0 0
      %2316 = vmatpush1.bf16.msra.mxu0 0
      %2317 = vmatprep.subr.bf16.mxu0 0
      %2318 = vmatpush1.bf16.msra.mxu0 0
      %2319 = vmatprep.subr.bf16.mxu0 0
      %2320 = vmatpush1.bf16.msra.mxu0 0
      %2321 = vmatprep.subr.bf16.mxu0 0
      %2322 = vmatpush1.bf16.msra.mxu0 0
      %2323 = vmatprep.subr.bf16.mxu0 0
      %2324 = vmatpush1.bf16.msra.mxu0 0
      %2325 = vmatprep.subr.bf16.mxu0 0
      %2326 = vmatpush1.bf16.msra.mxu0 0
      %2327 = vmatprep.subr.bf16.mxu0 0
      %2328 = vmatpush1.bf16.msra.mxu0 0
      %2329 = vmatprep.mubr.bf16.mxu0 0
      %2330 = vmatmul.mubr.bf16.gmra.mrb[0].mxu0 %v2295
      %v2331 = vpop.f32.mrb[0].mxu0
      %v2332 = vadd.f32 0.0, %v2331
      %v2333 = vpop.f32.mrb[0].mxu0
      %v2334 = vpop.f32.mrb[0].mxu0
      %v2335 = vadd.f32 0.0, %v2334
      %v2336 = vpop.f32.mrb[0].mxu0
      %2337 = vdwg.mxu0
      %v2340 = vunpack.c.l.b16 %v281
      %v2341 = vunpack.c.l.b16 %v282
      %v2342 = vpack.c.b16 %v2341, %v2340
      %v2345 = vsel %vm295, %v1636, 0
      %2347 = vmatprep.subr.bf16.mxu0 0
      %2348 = vmatpush1.bf16.msra.mxu0 %v2342
      %2349 = vmatprep.subr.bf16.mxu0 0
      %2350 = vmatpush1.bf16.msra.mxu0 0
      %2351 = vmatprep.subr.bf16.mxu0 0
      %2352 = vmatpush1.bf16.msra.mxu0 0
      %2353 = vmatprep.subr.bf16.mxu0 0
      %2354 = vmatpush1.bf16.msra.mxu0 0
      %2355 = vmatprep.subr.bf16.mxu0 0
      %2356 = vmatpush1.bf16.msra.mxu0 0
      %2357 = vmatprep.subr.bf16.mxu0 0
      %2358 = vmatpush1.bf16.msra.mxu0 0
      %2359 = vmatprep.subr.bf16.mxu0 0
      %2360 = vmatpush1.bf16.msra.mxu0 0
      %2361 = vmatprep.subr.bf16.mxu0 0
      %2362 = vmatpush1.bf16.msra.mxu0 0
      %2363 = vmatprep.subr.bf16.mxu0 0
      %2364 = vmatpush1.bf16.msra.mxu0 0
      %2365 = vmatprep.subr.bf16.mxu0 0
      %2366 = vmatpush1.bf16.msra.mxu0 0
      %2367 = vmatprep.subr.bf16.mxu0 0
      %2368 = vmatpush1.bf16.msra.mxu0 0
      %2369 = vmatprep.subr.bf16.mxu0 0
      %2370 = vmatpush1.bf16.msra.mxu0 0
      %2371 = vmatprep.subr.bf16.mxu0 0
      %2372 = vmatpush1.bf16.msra.mxu0 0
      %2373 = vmatprep.subr.bf16.mxu0 0
      %2374 = vmatpush1.bf16.msra.mxu0 0
      %2375 = vmatprep.subr.bf16.mxu0 0
      %2376 = vmatpush1.bf16.msra.mxu0 0
      %2377 = vmatprep.subr.bf16.mxu0 0
      %2378 = vmatpush1.bf16.msra.mxu0 0
      %2379 = vmatprep.mubr.bf16.mxu0 0
      %2380 = vmatmul.mubr.bf16.gmra.mrb[0].mxu0 %v2345
      %v2381 = vpop.f32.mrb[0].mxu0
      %v2382 = vadd.f32 0.0, %v2381
      %v2383 = vpop.f32.mrb[0].mxu0
      %v2384 = vpop.f32.mrb[0].mxu0
      %v2385 = vadd.f32 0.0, %v2384
      %v2386 = vpop.f32.mrb[0].mxu0
      %2387 = vdwg.mxu0
      %v2390 = vunpack.c.l.b16 %v283
      %v2391 = vunpack.c.l.b16 %v284
      %v2392 = vpack.c.b16 %v2391, %v2390
      %v2395 = vsel %vm295, %v1637, 0
      %2397 = vmatprep.subr.bf16.mxu0 0
      %2398 = vmatpush1.bf16.msra.mxu0 %v2392
      %2399 = vmatprep.subr.bf16.mxu0 0
      %2400 = vmatpush1.bf16.msra.mxu0 0
      %2401 = vmatprep.subr.bf16.mxu0 0
      %2402 = vmatpush1.bf16.msra.mxu0 0
      %2403 = vmatprep.subr.bf16.mxu0 0
      %2404 = vmatpush1.bf16.msra.mxu0 0
      %2405 = vmatprep.subr.bf16.mxu0 0
      %2406 = vmatpush1.bf16.msra.mxu0 0
      %2407 = vmatprep.subr.bf16.mxu0 0
      %2408 = vmatpush1.bf16.msra.mxu0 0
      %2409 = vmatprep.subr.bf16.mxu0 0
      %2410 = vmatpush1.bf16.msra.mxu0 0
      %2411 = vmatprep.subr.bf16.mxu0 0
      %2412 = vmatpush1.bf16.msra.mxu0 0
      %2413 = vmatprep.subr.bf16.mxu0 0
      %2414 = vmatpush1.bf16.msra.mxu0 0
      %2415 = vmatprep.subr.bf16.mxu0 0
      %2416 = vmatpush1.bf16.msra.mxu0 0
      %2417 = vmatprep.subr.bf16.mxu0 0
      %2418 = vmatpush1.bf16.msra.mxu0 0
      %2419 = vmatprep.subr.bf16.mxu0 0
      %2420 = vmatpush1.bf16.msra.mxu0 0
      %2421 = vmatprep.subr.bf16.mxu0 0
      %2422 = vmatpush1.bf16.msra.mxu0 0
      %2423 = vmatprep.subr.bf16.mxu0 0
      %2424 = vmatpush1.bf16.msra.mxu0 0
      %2425 = vmatprep.subr.bf16.mxu0 0
      %2426 = vmatpush1.bf16.msra.mxu0 0
      %2427 = vmatprep.subr.bf16.mxu0 0
      %2428 = vmatpush1.bf16.msra.mxu0 0
      %2429 = vmatprep.mubr.bf16.mxu0 0
      %2430 = vmatmul.mubr.bf16.gmra.mrb[0].mxu0 %v2395
      %v2431 = vpop.f32.mrb[0].mxu0
      %v2432 = vadd.f32 0.0, %v2431
      %v2433 = vpop.f32.mrb[0].mxu0
      %v2434 = vpop.f32.mrb[0].mxu0
      %v2435 = vadd.f32 0.0, %v2434
      %v2436 = vpop.f32.mrb[0].mxu0
      %2437 = vdwg.mxu0
      %v2438 = vpack.c.bf16 %v1685, %v1682
      %v2439 = vpack.c.bf16 %v1735, %v1732
      %v2440 = vpack.c.bf16 %v1785, %v1782
      %v2441 = vpack.c.bf16 %v1835, %v1832
      %v2442 = vpack.c.bf16 %v1885, %v1882
      %v2443 = vpack.c.bf16 %v1935, %v1932
      %v2444 = vpack.c.bf16 %v1985, %v1982
      %v2445 = vpack.c.bf16 %v2035, %v2032
      %v2446 = vpack.c.bf16 %v2085, %v2082
      %v2447 = vpack.c.bf16 %v2135, %v2132
      %v2448 = vpack.c.bf16 %v2185, %v2182
      %v2449 = vpack.c.bf16 %v2235, %v2232
      %v2450 = vpack.c.bf16 %v2285, %v2282
      %v2451 = vpack.c.bf16 %v2335, %v2332
      %v2452 = vpack.c.bf16 %v2385, %v2382
      %v2453 = vpack.c.bf16 %v2435, %v2432
      %v2470 = vunpack.c.l.b16 %v2438
      %v2471 = vunpack.c.h.b16 %v2438
      %v2472 = vunpack.c.l.b16 %v2439
      %v2473 = vunpack.c.h.b16 %v2439
      %v2474 = vunpack.c.l.b16 %v2440
      %v2475 = vunpack.c.h.b16 %v2440
      %v2476 = vunpack.c.l.b16 %v2441
      %v2477 = vunpack.c.h.b16 %v2441
      %v2478 = vunpack.c.l.b16 %v2442
      %v2479 = vunpack.c.h.b16 %v2442
      %v2480 = vunpack.c.l.b16 %v2443
      %v2481 = vunpack.c.h.b16 %v2443
      %v2482 = vunpack.c.l.b16 %v2444
      %v2483 = vunpack.c.h.b16 %v2444
      %v2484 = vunpack.c.l.b16 %v2445
      %v2485 = vunpack.c.h.b16 %v2445
      %v2486 = vunpack.c.l.b16 %v2446
      %v2487 = vunpack.c.h.b16 %v2446
      %v2488 = vunpack.c.l.b16 %v2447
      %v2489 = vunpack.c.h.b16 %v2447
      %v2490 = vunpack.c.l.b16 %v2448
      %v2491 = vunpack.c.h.b16 %v2448
      %v2492 = vunpack.c.l.b16 %v2449
      %v2493 = vunpack.c.h.b16 %v2449
      %v2494 = vunpack.c.l.b16 %v2450
      %v2495 = vunpack.c.h.b16 %v2450
      %v2496 = vunpack.c.l.b16 %v2451
      %v2497 = vunpack.c.h.b16 %v2451
      %v2498 = vunpack.c.l.b16 %v2452
      %v2499 = vunpack.c.h.b16 %v2452
      %v2500 = vunpack.c.l.b16 %v2453
      %v2501 = vunpack.c.h.b16 %v2453
      %v2502 = vpack.c.b16 %v2470, %v2470
      %v2503 = vpack.c.b16 %v2471, %v2471
      %v2504 = vpack.c.b16 %v2472, %v2472
      %v2505 = vpack.c.b16 %v2473, %v2473
      %v2506 = vpack.c.b16 %v2474, %v2474
      %v2507 = vpack.c.b16 %v2475, %v2475
      %v2508 = vpack.c.b16 %v2476, %v2476
      %v2509 = vpack.c.b16 %v2477, %v2477
      %v2510 = vpack.c.b16 %v2478, %v2478
      %v2511 = vpack.c.b16 %v2479, %v2479
      %v2512 = vpack.c.b16 %v2480, %v2480
      %v2513 = vpack.c.b16 %v2481, %v2481
      %v2514 = vpack.c.b16 %v2482, %v2482
      %v2515 = vpack.c.b16 %v2483, %v2483
      %v2516 = vpack.c.b16 %v2484, %v2484
      %v2517 = vpack.c.b16 %v2485, %v2485
      %v2518 = vpack.c.b16 %v2486, %v2486
      %v2519 = vpack.c.b16 %v2487, %v2487
      %v2520 = vpack.c.b16 %v2488, %v2488
      %v2521 = vpack.c.b16 %v2489, %v2489
      %v2522 = vpack.c.b16 %v2490, %v2490
      %v2523 = vpack.c.b16 %v2491, %v2491
      %v2524 = vpack.c.b16 %v2492, %v2492
      %v2525 = vpack.c.b16 %v2493, %v2493
      %v2526 = vpack.c.b16 %v2494, %v2494
      %v2527 = vpack.c.b16 %v2495, %v2495
      %v2528 = vpack.c.b16 %v2496, %v2496
      %v2529 = vpack.c.b16 %v2497, %v2497
      %v2530 = vpack.c.b16 %v2498, %v2498
      %v2531 = vpack.c.b16 %v2499, %v2499
      %v2532 = vpack.c.b16 %v2500, %v2500
      %v2533 = vpack.c.b16 %v2501, %v2501
      %vm2566 = vcmask 125952
      %2567 = vst.msk [vmem:[%s186] sm:$0xf] %vm2566, %v2502
      %2568 = vst.msk [vmem:[%s186 + $0x4] sm:$0xf] %vm2566, %v2503
      %2569 = vst.msk [vmem:[%s186 + $0x8] sm:$0xf] %vm2566, %v2504
      %2570 = vst.msk [vmem:[%s186 + $0xc] sm:$0xf] %vm2566, %v2505
      %2571 = vst.msk [vmem:[%s186 + $0x10] sm:$0xf] %vm2566, %v2506
      %2572 = vst.msk [vmem:[%s186 + $0x14] sm:$0xf] %vm2566, %v2507
      %2573 = vst.msk [vmem:[%s186 + $0x18] sm:$0xf] %vm2566, %v2508
      %2574 = vst.msk [vmem:[%s186 + $0x1c] sm:$0xf] %vm2566, %v2509
      %2575 = vst.msk [vmem:[%s186 + $0x20] sm:$0xf] %vm2566, %v2510
      %2576 = vst.msk [vmem:[%s186 + $0x24] sm:$0xf] %vm2566, %v2511
      %2577 = vst.msk [vmem:[%s186 + $0x28] sm:$0xf] %vm2566, %v2512
      %2578 = vst.msk [vmem:[%s186 + $0x2c] sm:$0xf] %vm2566, %v2513
      %2579 = vst.msk [vmem:[%s186 + $0x30] sm:$0xf] %vm2566, %v2514
      %2580 = vst.msk [vmem:[%s186 + $0x34] sm:$0xf] %vm2566, %v2515
      %2581 = vst.msk [vmem:[%s186 + $0x38] sm:$0xf] %vm2566, %v2516
      %2582 = vst.msk [vmem:[%s186 + $0x3c] sm:$0xf] %vm2566, %v2517
      %2583 = vst.msk [vmem:[%s186 + $0x40] sm:$0xf] %vm2566, %v2518
      %2584 = vst.msk [vmem:[%s186 + $0x44] sm:$0xf] %vm2566, %v2519
      %2585 = vst.msk [vmem:[%s186 + $0x48] sm:$0xf] %vm2566, %v2520
      %2586 = vst.msk [vmem:[%s186 + $0x4c] sm:$0xf] %vm2566, %v2521
      %2587 = vst.msk [vmem:[%s186 + $0x50] sm:$0xf] %vm2566, %v2522
      %2588 = vst.msk [vmem:[%s186 + $0x54] sm:$0xf] %vm2566, %v2523
      %2589 = vst.msk [vmem:[%s186 + $0x58] sm:$0xf] %vm2566, %v2524
      %2590 = vst.msk [vmem:[%s186 + $0x5c] sm:$0xf] %vm2566, %v2525
      %2591 = vst.msk [vmem:[%s186 + $0x60] sm:$0xf] %vm2566, %v2526
      %2592 = vst.msk [vmem:[%s186 + $0x64] sm:$0xf] %vm2566, %v2527
      %2593 = vst.msk [vmem:[%s186 + $0x68] sm:$0xf] %vm2566, %v2528
      %2594 = vst.msk [vmem:[%s186 + $0x6c] sm:$0xf] %vm2566, %v2529
      %2595 = vst.msk [vmem:[%s186 + $0x70] sm:$0xf] %vm2566, %v2530
      %2596 = vst.msk [vmem:[%s186 + $0x74] sm:$0xf] %vm2566, %v2531
      %2597 = vst.msk [vmem:[%s186 + $0x78] sm:$0xf] %vm2566, %v2532
      %2598 = vst.msk [vmem:[%s186 + $0x7c] sm:$0xf] %vm2566, %v2533
      %s2599 = smul.u32 4, %s18
      %p2600 = scmp.lt.s32.totalorder %s17, 1
      %s2601 = scalar_select %p2600, %s17, 1
      %p2602 = scmp.lt.s32.totalorder %s2599, 3
      %s2603 = scalar_select %p2602, %s2599, 3
      %s2604 = smul.addr %s2603, 8
      %s2605 = smul.addr %s2601, 32
      %s2606 = sadd.s32 %s2604, %s2605
      %s2607 = smul.addr %s2606, 4
      %s2608 = scalar_lea.vmem %s2, %s2607
      // Predicated region
      $region29: #{residual_swin_block.22} parent=27 // pred_check
        %p2609 = pneg %p94
      $region30: #{residual_swin_block.22} parent=27 // pred_check_branch
        %2611 = sbr.rel (%p2609) target = $region32
      $region31: #{residual_swin_block.22} parent=27 // pred_region
        %s2612 = smul.u32 4, %s18
      $region32: #{residual_swin_block.22} parent=27 // pred_fallthru
        _
    $region28: #{residual_swin_block.22} parent=5 // pred_fallthru
      _
    %p2613 = scmp.le.s32.totalorder 2, %s8
    // Predicated region
    $region33: #{residual_swin_block.22} parent=5 // pred_check
      %p2614 = pneg %p2613
    $region34: #{residual_swin_block.22} parent=5 // pred_check_branch
      %2616 = sbr.rel (%p2614) target = $region36
    $region35: #{residual_swin_block.22} parent=5 // pred_region
      %s2617 = ssub.s32 %s8, 2
      // Predicated region
      $region37: #{residual_swin_block.22} parent=35 // pred_check
        %p2618 = pneg %p100
      $region38: #{residual_swin_block.22} parent=35 // pred_check_branch
        %2620 = sbr.rel (%p2618) target = $region40
      $region39: #{residual_swin_block.22} parent=35 // pred_region
        %s2621 = smul.u32 4, %s20
        %p2622 = scmp.lt.s32.totalorder %s19, 1
        %s2623 = scalar_select %p2622, %s19, 1
        %p2624 = scmp.lt.s32.totalorder %s2621, 3
        %s2625 = scalar_select %p2624, %s2621, 3
        %s2626 = smul.addr %s2625, 8
        %s2627 = smul.addr %s2623, 32
        %s2628 = sadd.s32 %s2626, %s2627
        %s2629 = smul.addr %s2628, 4
        %s2630 = scalar_lea.vmem %s2, %s2629
      $region40: #{residual_swin_block.22} parent=35 // pred_fallthru
        _
    $region36: #{residual_swin_block.22} parent=5 // pred_fallthru
      _
  $region6: #{residual_swin_block.22} parent=0 // loop_footer
    %s12 = sadd.s32 1, %s8
  $region7: #{residual_swin_block.22} parent=0 // loop_footer_branch
    %7 = sbr.rel target = $region3
  $region8: #{residual_swin_block.22} parent=0 // loop_exit
    _

// kernel: residual_swin_block.27
$region0: #{residual_swin_block.27}
  #allocation0 [shape = 'u32[]', space=smem, size = 0x4, offset = 0x4, fixed_abs, tag = 'smem constant byte address 0x4 - core index']
  #allocation1 [shape = 'u32[144,128]{1,0:T(1,128)}', space=vmem, size = 0x12000, scoped, tag = 'internal scratch']
  %s0 = inlined_call_operand.vmem [shape: bf16[2,4,12,16,16], index: 0, kind: input, shape index: {}]
  %s1 = inlined_call_operand.vmem [shape: f32[4,16,16], index: 1, kind: input, shape index: {}]
  %s2 = inlined_call_operand.vmem [shape: f32[4,16,16], index: 2, kind: input, shape index: {}]
  %s3 = inlined_call_operand.vmem [shape: bf16[2,4,4,16,16], index: 3, kind: output, shape index: {}]
  %s4 = sld [smem:[#allocation0]]
  $region45: #{residual_swin_block.27} parent=0
    _
  %s6 = ssub.s32 1, %s4
  %s7 = scalar_select 0, %s6, %s4
  loop: start=0, step=1, limit=4
  $region2: #{residual_swin_block.27} parent=0 // loop_pre_header
    _
  $region3: #{residual_swin_block.27} parent=0 // loop_header
    %s9 = sphi 0, %s13
    %p10 = scmp.ge.s32.totalorder %s9, 4
    %s16 = sphi 0, %s28
    %s17 = sphi 0, %s24
    %s18 = sphi 0, %s16
    %s19 = sphi 0, %s17
    %s20 = sphi 0, %s18
    %s21 = sphi 0, %s19
    %s33 = sphi 0, %s35
    %s36 = sphi 0, %s33
    %s37 = sphi 0, %s36
    %s53 = sphi 0, %s37
    %s57 = sphi 0, %s57
    %s59 = sphi 0, %s57
    %s60 = sphi 0, %s59
    %s74 = sphi 0, %s60
    %s80 = sphi 0, %s82
    %s83 = sphi 0, %s80
    %s84 = sphi 0, %s83
    %s100 = sphi 0, %s84
    %s108 = sphi 0, %s110
    %s111 = sphi 0, %s108
    %s112 = sphi 0, %s111
    %s128 = sphi 0, %s112
  $region4: #{residual_swin_block.27} parent=0 // loop_header_branch
    %12 = sbr.rel (%p10) target = $region8
  $region5: #{residual_swin_block.27} parent=0 // loop_body
    %s14 = ssub.s32 %s9, 1
    %s15 = ssub.s32 %s9, 2
    %s22 = sadd.s32 1, %s17
    %p23 = scmp.ge.s32.totalorder %s22, 1
    %s24 = scalar_select %p23, 0, %s22
    %s25 = sadd.s32 1, %s16
    %s26 = scalar_select %p23, %s25, %s16
    %p27 = scmp.ge.s32.totalorder %s26, 2
    %s28 = scalar_select %p27, 0, %s26
    %s29 = ssub.s32 %s16, %s28
    %s30 = ssub.s32 %s17, %s24
    %s31 = sor.u32 %s29, %s30
    %p32 = scmp.eq.s32.totalorder %s31, 0
    %s34 = sadd.s32 %s33, 1
    %s35 = scalar_select %p32, %s33, %s34
    %p38 = pneg %p32
    %p39 = scmp.eq.s32.totalorder %s9, 1
    %p40 = por %p38, %p39
    %p41 = scmp.ne.s32.totalorder %s33, %s36
    %p42 = scmp.eq.s32.totalorder %s9, 0
    %p43 = por %p41, %p42
    %p44 = scmp.ne.s32.totalorder %s33, %s36
    %p45 = scmp.eq.s32.totalorder %s14, 1
    %p46 = por %p44, %p45
    %p47 = scmp.ne.s32.totalorder %s36, %s37
    %p48 = scmp.eq.s32.totalorder %s14, 0
    %p49 = por %p47, %p48
    %p50 = scmp.ne.s32.totalorder %s36, %s37
    %p51 = scmp.eq.s32.totalorder %s15, 1
    %p52 = por %p50, %p51
    %p54 = scmp.ne.s32.totalorder %s37, %s53
    %p55 = scmp.eq.s32.totalorder %s15, 0
    %p56 = por %p54, %p55
    %s58 = sadd.s32 %s57, 1
    %p61 = scmp.eq.s32.totalorder %s9, 1
    %p62 = scmp.ne.s32.totalorder %s57, %s59
    %p63 = scmp.eq.s32.totalorder %s9, 0
    %p64 = por %p62, %p63
    %p65 = scmp.ne.s32.totalorder %s57, %s59
    %p66 = scmp.eq.s32.totalorder %s14, 1
    %p67 = por %p65, %p66
    %p68 = scmp.ne.s32.totalorder %s59, %s60
    %p69 = scmp.eq.s32.totalorder %s14, 0
    %p70 = por %p68, %p69
    %p71 = scmp.ne.s32.totalorder %s59, %s60
    %p72 = scmp.eq.s32.totalorder %s15, 1
    %p73 = por %p71, %p72
    %p75 = scmp.ne.s32.totalorder %s60, %s74
    %p76 = scmp.eq.s32.totalorder %s15, 0
    %p77 = por %p75, %p76
    %s78 = ssub.s32 %s17, %s24
    %p79 = scmp.eq.s32.totalorder %s78, 0
    %s81 = sadd.s32 %s80, 1
    %s82 = scalar_select %p79, %s80, %s81
    %p85 = pneg %p79
    %p86 = scmp.eq.s32.totalorder %s9, 1
    %p87 = por %p85, %p86
    %p88 = scmp.ne.s32.totalorder %s80, %s83
    %p89 = scmp.eq.s32.totalorder %s9, 0
    %p90 = por %p88, %p89
    %p91 = scmp.ne.s32.totalorder %s80, %s83
    %p92 = scmp.eq.s32.totalorder %s14, 1
    %p93 = por %p91, %p92
    %p94 = scmp.ne.s32.totalorder %s83, %s84
    %p95 = scmp.eq.s32.totalorder %s14, 0
    %p96 = por %p94, %p95
    %p97 = scmp.ne.s32.totalorder %s83, %s84
    %p98 = scmp.eq.s32.totalorder %s15, 1
    %p99 = por %p97, %p98
    %p101 = scmp.ne.s32.totalorder %s84, %s100
    %p102 = scmp.eq.s32.totalorder %s15, 0
    %p103 = por %p101, %p102
    %s104 = ssub.s32 %s16, %s28
    %s105 = ssub.s32 %s17, %s24
    %s106 = sor.u32 %s104, %s105
    %p107 = scmp.eq.s32.totalorder %s106, 0
    %s109 = sadd.s32 %s108, 1
    %s110 = scalar_select %p107, %s108, %s109
    %p113 = pneg %p107
    %p114 = scmp.eq.s32.totalorder %s9, 1
    %p115 = por %p113, %p114
    %p116 = scmp.ne.s32.totalorder %s108, %s111
    %p117 = scmp.eq.s32.totalorder %s9, 0
    %p118 = por %p116, %p117
    %p119 = scmp.ne.s32.totalorder %s108, %s111
    %p120 = scmp.eq.s32.totalorder %s14, 1
    %p121 = por %p119, %p120
    %p122 = scmp.ne.s32.totalorder %s111, %s112
    %p123 = scmp.eq.s32.totalorder %s14, 0
    %p124 = por %p122, %p123
    %p125 = scmp.ne.s32.totalorder %s111, %s112
    %p126 = scmp.eq.s32.totalorder %s15, 1
    %p127 = por %p125, %p126
    %p129 = scmp.ne.s32.totalorder %s112, %s128
    %p130 = scmp.eq.s32.totalorder %s15, 0
    %p131 = por %p129, %p130
    %p132 = scmp.le.s32.totalorder 1, %s9
    %p133 = scmp.lt.s32.totalorder %s9, 3
    %p134 = pnand %p132, %p133
    %p135 = pneg %p134
    // Predicated region
    $region9: #{residual_swin_block.27} parent=5 // pred_check
      _
    $region10: #{residual_swin_block.27} parent=5 // pred_check_branch
      %137 = sbr.rel (%p134) target = $region12
    $region11: #{residual_swin_block.27} parent=5 // pred_region
      %s138 = ssub.s32 %s9, 1
      // Predicated region
      $region13: #{residual_swin_block.27} parent=11 // pred_check
        %p139 = pneg %p70
      $region14: #{residual_swin_block.27} parent=11 // pred_check_branch
        %141 = sbr.rel (%p139) target = $region16
      $region15: #{residual_swin_block.27} parent=11 // pred_region
        _
      $region16: #{residual_swin_block.27} parent=11 // pred_fallthru
        _
      // Predicated region
      $region17: #{residual_swin_block.27} parent=11 // pred_check
        %p142 = pneg %p96
      $region18: #{residual_swin_block.27} parent=11 // pred_check_branch
        %144 = sbr.rel (%p142) target = $region20
      $region19: #{residual_swin_block.27} parent=11 // pred_region
        %s145 = smul.u32 4, %s19
        %p146 = scmp.lt.s32.totalorder %s145, 3
        %s147 = scalar_select %p146, %s145, 3
        %s148 = smul.addr %s147, 2
        %s149 = smul.addr %s148, 8
        %s150 = scalar_lea.vmem %s2, %s149
        %s151 = smul.u32 4, %s19
      $region20: #{residual_swin_block.27} parent=11 // pred_fallthru
        _
    $region12: #{residual_swin_block.27} parent=5 // pred_fallthru
      _
    %p152 = scmp.lt.s32.totalorder %s9, 2
    // Predicated region
    $region21: #{residual_swin_block.27} parent=5 // pred_check
      %p153 = pneg %p152
    $region22: #{residual_swin_block.27} parent=5 // pred_check_branch
      %155 = sbr.rel (%p153) target = $region24
    $region23: #{residual_swin_block.27} parent=5 // pred_region
      // Predicated region
      $region25: #{residual_swin_block.27} parent=23 // pred_check
        %p156 = pneg %p43
      $region26: #{residual_swin_block.27} parent=23 // pred_check_branch
        %158 = sbr.rel (%p156) target = $region28
      $region27: #{residual_swin_block.27} parent=23 // pred_region
        %s159 = smul.u32 4, %s17
        %p160 = scmp.lt.s32.totalorder %s16, 1
        %s161 = scalar_select %p160, %s16, 1
        %p162 = scmp.lt.s32.totalorder %s159, 3
        %s163 = scalar_select %p162, %s159, 3
        %s164 = smul.addr %s163, 24
        %s165 = smul.addr %s161, 96
        %s166 = sadd.s32 %s164, %s165
        %s167 = smul.addr %s166, 4
        %s168 = scalar_lea.vmem %s0, %s167
        %s169 = smul.u32 4, %s17
      $region28: #{residual_swin_block.27} parent=23 // pred_fallthru
        _
    $region24: #{residual_swin_block.27} parent=5 // pred_fallthru
      _
    %p170 = scmp.le.s32.totalorder 1, %s9
    %p171 = scmp.lt.s32.totalorder %s9, 3
    %p172 = pnand %p170, %p171
    %p173 = pneg %p172
    // Predicated region
    $region29: #{residual_swin_block.27} parent=5 // pred_check
      _
    $region30: #{residual_swin_block.27} parent=5 // pred_check_branch
      %175 = sbr.rel (%p172) target = $region32
    $region31: #{residual_swin_block.27} parent=5 // pred_region
      %s176 = ssub.s32 %s9, 1
      %s177 = smul.u32 4, %s19
      %p178 = scmp.lt.s32.totalorder %s18, 1
      %s179 = scalar_select %p178, %s18, 1
      %p180 = scmp.lt.s32.totalorder %s177, 3
      %s181 = scalar_select %p180, %s177, 3
      %s182 = smul.addr %s181, 24
      %s183 = smul.addr %s179, 96
      %s184 = sadd.s32 %s182, %s183
      %s185 = smul.addr %s184, 4
      %s186 = scalar_lea.vmem %s0, %s185
      %p187 = pneg %p49
      %p188 = pneg %p46
      %p189 = pneg %p70
      %p190 = pneg %p67
      %s191 = smul.u32 4, %s19
      %p192 = scmp.lt.s32.totalorder %s191, 3
      %s193 = scalar_select %p192, %s191, 3
      %s194 = smul.addr %s193, 2
      %s195 = smul.addr %s194, 8
      %s196 = scalar_lea.vmem %s2, %s195
      %p197 = pneg %p96
      %p198 = pneg %p93
      %p199 = pneg %p124
      %p200 = pneg %p121
      %s201 = smul.u32 4, %s19
      %p202 = scmp.lt.s32.totalorder %s18, 1
      %s203 = scalar_select %p202, %s18, 1
      %p204 = scmp.lt.s32.totalorder %s201, 3
      %s205 = scalar_select %p204, %s201, 3
      %s206 = smul.addr %s205, 8
      %s207 = smul.addr %s203, 32
      %s208 = sadd.s32 %s206, %s207
      %s209 = smul.addr %s208, 4
      %s210 = scalar_lea.vmem %s3, %s209
      %s211 = smul.u32 4, %s19
      %p212 = scmp.lt.s32.totalorder %s18, 1
      %s213 = scalar_select %p212, %s18, 1
      %p214 = scmp.lt.s32.totalorder %s211, 3
      %s215 = scalar_select %p214, %s211, 3
      %s216 = smul.addr %s215, 24
      %s217 = smul.addr %s213, 96
      %s218 = sadd.s32 %s216, %s217
      %s219 = smul.addr %s218, 4
      %s220 = scalar_lea.vmem %s0, %s219
      %s221 = smul.u32 4, %s19
      %s222 = smul.u32 4, %s19
      %p223 = scmp.lt.s32.totalorder %s222, 3
      %s224 = scalar_select %p223, %s222, 3
      %s225 = smul.addr %s224, 2
      %s226 = smul.addr %s225, 8
      %s227 = scalar_lea.vmem %s2, %s226
      %s228 = smul.u32 4, %s19
      %s229 = smul.u32 4, %s19
      %p230 = scmp.lt.s32.totalorder %s18, 1
      %s231 = scalar_select %p230, %s18, 1
      %p232 = scmp.lt.s32.totalorder %s229, 3
      %s233 = scalar_select %p232, %s229, 3
      %s234 = smul.addr %s233, 8
      %s235 = smul.addr %s231, 32
      %s236 = sadd.s32 %s234, %s235
      %s237 = smul.addr %s236, 4
      %s238 = scalar_lea.vmem %s3, %s237
      %s239 = smul.u32 4, %s19
      %v241 = vld [vmem:[%s220] sm:$0xf]
      %v242 = vld [vmem:[%s220 + $0x4] sm:$0xf]
      %v243 = vld [vmem:[%s220 + $0x8] sm:$0xf]
      %v244 = vld [vmem:[%s220 + $0xc] sm:$0xf]
      %v245 = vld [vmem:[%s220 + $0x10] sm:$0xf]
      %v246 = vld [vmem:[%s220 + $0x14] sm:$0xf]
      %v247 = vld [vmem:[%s220 + $0x18] sm:$0xf]
      %v248 = vld [vmem:[%s220 + $0x1c] sm:$0xf]
      %v249 = vld [vmem:[%s220 + $0x20] sm:$0xf]
      %v250 = vld [vmem:[%s220 + $0x24] sm:$0xf]
      %v251 = vld [vmem:[%s220 + $0x28] sm:$0xf]
      %v252 = vld [vmem:[%s220 + $0x2c] sm:$0xf]
      %v253 = vld [vmem:[%s220 + $0x30] sm:$0xf]
      %v254 = vld [vmem:[%s220 + $0x34] sm:$0xf]
      %v255 = vld [vmem:[%s220 + $0x38] sm:$0xf]
      %v256 = vld [vmem:[%s220 + $0x3c] sm:$0xf]
      %v257 = vld [vmem:[%s220 + $0x40] sm:$0xf]
      %v258 = vld [vmem:[%s220 + $0x44] sm:$0xf]
      %v259 = vld [vmem:[%s220 + $0x48] sm:$0xf]
      %v260 = vld [vmem:[%s220 + $0x4c] sm:$0xf]
      %v261 = vld [vmem:[%s220 + $0x50] sm:$0xf]
      %v262 = vld [vmem:[%s220 + $0x54] sm:$0xf]
      %v263 = vld [vmem:[%s220 + $0x58] sm:$0xf]
      %v264 = vld [vmem:[%s220 + $0x5c] sm:$0xf]
      %v265 = vld [vmem:[%s220 + $0x60] sm:$0xf]
      %v266 = vld [vmem:[%s220 + $0x64] sm:$0xf]
      %v267 = vld [vmem:[%s220 + $0x68] sm:$0xf]
      %v268 = vld [vmem:[%s220 + $0x6c] sm:$0xf]
      %v269 = vld [vmem:[%s220 + $0x70] sm:$0xf]
      %v270 = vld [vmem:[%s220 + $0x74] sm:$0xf]
      %v271 = vld [vmem:[%s220 + $0x78] sm:$0xf]
      %v272 = vld [vmem:[%s220 + $0x7c] sm:$0xf]
      %v273 = vld [vmem:[%s220 + $0x80] sm:$0xf]
      %v274 = vld [vmem:[%s220 + $0x84] sm:$0xf]
      %v275 = vld [vmem:[%s220 + $0x88] sm:$0xf]
      %v276 = vld [vmem:[%s220 + $0x8c] sm:$0xf]
      %v277 = vld [vmem:[%s220 + $0x90] sm:$0xf]
      %v278 = vld [vmem:[%s220 + $0x94] sm:$0xf]
      %v279 = vld [vmem:[%s220 + $0x98] sm:$0xf]
      %v280 = vld [vmem:[%s220 + $0x9c] sm:$0xf]
      %v281 = vld [vmem:[%s220 + $0xa0] sm:$0xf]
      %v282 = vld [vmem:[%s220 + $0xa4] sm:$0xf]
      %v283 = vld [vmem:[%s220 + $0xa8] sm:$0xf]
      %v284 = vld [vmem:[%s220 + $0xac] sm:$0xf]
      %v285 = vld [vmem:[%s220 + $0xb0] sm:$0xf]
      %v286 = vld [vmem:[%s220 + $0xb4] sm:$0xf]
      %v287 = vld [vmem:[%s220 + $0xb8] sm:$0xf]
      %v288 = vld [vmem:[%s220 + $0xbc] sm:$0xf]
      %v289 = vld [vmem:[%s220 + $0xc0] sm:$0xf]
      %v290 = vld [vmem:[%s220 + $0xc4] sm:$0xf]
      %v291 = vld [vmem:[%s220 + $0xc8] sm:$0xf]
      %v292 = vld [vmem:[%s220 + $0xcc] sm:$0xf]
      %v293 = vld [vmem:[%s220 + $0xd0] sm:$0xf]
      %v294 = vld [vmem:[%s220 + $0xd4] sm:$0xf]
      %v295 = vld [vmem:[%s220 + $0xd8] sm:$0xf]
      %v296 = vld [vmem:[%s220 + $0xdc] sm:$0xf]
      %v297 = vld [vmem:[%s220 + $0xe0] sm:$0xf]
      %v298 = vld [vmem:[%s220 + $0xe4] sm:$0xf]
      %v299 = vld [vmem:[%s220 + $0xe8] sm:$0xf]
      %v300 = vld [vmem:[%s220 + $0xec] sm:$0xf]
      %v301 = vld [vmem:[%s220 + $0xf0] sm:$0xf]
      %v302 = vld [vmem:[%s220 + $0xf4] sm:$0xf]
      %v303 = vld [vmem:[%s220 + $0xf8] sm:$0xf]
      %v304 = vld [vmem:[%s220 + $0xfc] sm:$0xf]
      %v305 = vld [vmem:[%s220 + $0x100] sm:$0xf]
      %v306 = vld [vmem:[%s220 + $0x104] sm:$0xf]
      %v307 = vld [vmem:[%s220 + $0x108] sm:$0xf]
      %v308 = vld [vmem:[%s220 + $0x10c] sm:$0xf]
      %v309 = vld [vmem:[%s220 + $0x110] sm:$0xf]
      %v310 = vld [vmem:[%s220 + $0x114] sm:$0xf]
      %v311 = vld [vmem:[%s220 + $0x118] sm:$0xf]
      %v312 = vld [vmem:[%s220 + $0x11c] sm:$0xf]
      %v313 = vld [vmem:[%s220 + $0x120] sm:$0xf]
      %v314 = vld [vmem:[%s220 + $0x124] sm:$0xf]
      %v315 = vld [vmem:[%s220 + $0x128] sm:$0xf]
      %v316 = vld [vmem:[%s220 + $0x12c] sm:$0xf]
      %v317 = vld [vmem:[%s220 + $0x130] sm:$0xf]
      %v318 = vld [vmem:[%s220 + $0x134] sm:$0xf]
      %v319 = vld [vmem:[%s220 + $0x138] sm:$0xf]
      %v320 = vld [vmem:[%s220 + $0x13c] sm:$0xf]
      %v321 = vld [vmem:[%s220 + $0x140] sm:$0xf]
      %v322 = vld [vmem:[%s220 + $0x144] sm:$0xf]
      %v323 = vld [vmem:[%s220 + $0x148] sm:$0xf]
      %v324 = vld [vmem:[%s220 + $0x14c] sm:$0xf]
      %v325 = vld [vmem:[%s220 + $0x150] sm:$0xf]
      %v326 = vld [vmem:[%s220 + $0x154] sm:$0xf]
      %v327 = vld [vmem:[%s220 + $0x158] sm:$0xf]
      %v328 = vld [vmem:[%s220 + $0x15c] sm:$0xf]
      %v329 = vld [vmem:[%s220 + $0x160] sm:$0xf]
      %v330 = vld [vmem:[%s220 + $0x164] sm:$0xf]
      %v331 = vld [vmem:[%s220 + $0x168] sm:$0xf]
      %v332 = vld [vmem:[%s220 + $0x16c] sm:$0xf]
      %v333 = vld [vmem:[%s220 + $0x170] sm:$0xf]
      %v334 = vld [vmem:[%s220 + $0x174] sm:$0xf]
      %v335 = vld [vmem:[%s220 + $0x178] sm:$0xf]
      %v336 = vld [vmem:[%s220 + $0x17c] sm:$0xf]
      %v339 = vunpack.c.l.b16 %v241
      %v340 = vunpack.c.l.b16 %v242
      %v341 = vpack.c.b16 %v340, %v339
      %v344 = vunpack.c.l.b16 %v249
      %v345 = vunpack.c.l.b16 %v250
      %v346 = vpack.c.b16 %v345, %v344
      %vm347 = vcmask 130048
      %v349 = vsel %vm347, %v341, 0
      %v352 = vsel %vm347, %v346, 0
      %354 = vmatprep.subr.bf16.mxu0 0
      %355 = vmatpush1.bf16.xpose.msra.mxu0 %v352
      %356 = vmatprep.subr.bf16.mxu0 0
      %357 = vmatpush1.bf16.xpose.msra.mxu0 0
      %358 = vmatprep.subr.bf16.mxu0 0
      %359 = vmatpush1.bf16.xpose.msra.mxu0 0
      %360 = vmatprep.subr.bf16.mxu0 0
      %361 = vmatpush1.bf16.xpose.msra.mxu0 0
      %362 = vmatprep.subr.bf16.mxu0 0
      %363 = vmatpush1.bf16.xpose.msra.mxu0 0
      %364 = vmatprep.subr.bf16.mxu0 0
      %365 = vmatpush1.bf16.xpose.msra.mxu0 0
      %366 = vmatprep.subr.bf16.mxu0 0
      %367 = vmatpush1.bf16.xpose.msra.mxu0 0
      %368 = vmatprep.subr.bf16.mxu0 0
      %369 = vmatpush1.bf16.xpose.msra.mxu0 0
      %370 = vmatprep.subr.bf16.mxu0 0
      %371 = vmatpush1.bf16.xpose.msra.mxu0 0
      %372 = vmatprep.subr.bf16.mxu0 0
      %373 = vmatpush1.bf16.xpose.msra.mxu0 0
      %374 = vmatprep.subr.bf16.mxu0 0
      %375 = vmatpush1.bf16.xpose.msra.mxu0 0
      %376 = vmatprep.subr.bf16.mxu0 0
      %377 = vmatpush1.bf16.xpose.msra.mxu0 0
      %378 = vmatprep.subr.bf16.mxu0 0
      %379 = vmatpush1.bf16.xpose.msra.mxu0 0
      %380 = vmatprep.subr.bf16.mxu0 0
      %381 = vmatpush1.bf16.xpose.msra.mxu0 0
      %382 = vmatprep.subr.bf16.mxu0 0
      %383 = vmatpush1.bf16.xpose.msra.mxu0 0
      %384 = vmatprep.subr.bf16.mxu0 0
      %385 = vmatpush1.bf16.xpose.msra.mxu0 0
      %386 = vmatprep.mubr.bf16.mxu0 0
      %387 = vmatmul.mubr.bf16.gmra.mrb[0].mxu0 %v349
      %v388 = vpop.f32.mrb[0].mxu0
      %v389 = vadd.f32 0.0, %v388
      %v390 = vpop.f32.mrb[0].mxu0
      %v391 = vpop.f32.mrb[0].mxu0
      %v392 = vadd.f32 0.0, %v391
      %v393 = vpop.f32.mrb[0].mxu0
      %394 = vdwg.mxu0
      %v397 = vunpack.c.l.b16 %v243
      %v398 = vunpack.c.l.b16 %v244
      %v399 = vpack.c.b16 %v398, %v397
      %v402 = vunpack.c.l.b16 %v251
      %v403 = vunpack.c.l.b16 %v252
      %v404 = vpack.c.b16 %v403, %v402
      %v406 = vsel %vm347, %v399, 0
      %v409 = vsel %vm347, %v404, 0
      %411 = vmatprep.subr.bf16.mxu0 0
      %412 = vmatpush1.bf16.xpose.msra.mxu0 %v409
      %413 = vmatprep.subr.bf16.mxu0 0
      %414 = vmatpush1.bf16.xpose.msra.mxu0 0
      %415 = vmatprep.subr.bf16.mxu0 0
      %416 = vmatpush1.bf16.xpose.msra.mxu0 0
      %417 = vmatprep.subr.bf16.mxu0 0
      %418 = vmatpush1.bf16.xpose.msra.mxu0 0
      %419 = vmatprep.subr.bf16.mxu0 0
      %420 = vmatpush1.bf16.xpose.msra.mxu0 0
      %421 = vmatprep.subr.bf16.mxu0 0
      %422 = vmatpush1.bf16.xpose.msra.mxu0 0
      %423 = vmatprep.subr.bf16.mxu0 0
      %424 = vmatpush1.bf16.xpose.msra.mxu0 0
      %425 = vmatprep.subr.bf16.mxu0 0
      %426 = vmatpush1.bf16.xpose.msra.mxu0 0
      %427 = vmatprep.subr.bf16.mxu0 0
      %428 = vmatpush1.bf16.xpose.msra.mxu0 0
      %429 = vmatprep.subr.bf16.mxu0 0
      %430 = vmatpush1.bf16.xpose.msra.mxu0 0
      %431 = vmatprep.subr.bf16.mxu0 0
      %432 = vmatpush1.bf16.xpose.msra.mxu0 0
      %433 = vmatprep.subr.bf16.mxu0 0
      %434 = vmatpush1.bf16.xpose.msra.mxu0 0
      %435 = vmatprep.subr.bf16.mxu0 0
      %436 = vmatpush1.bf16.xpose.msra.mxu0 0
      %437 = vmatprep.subr.bf16.mxu0 0
      %438 = vmatpush1.bf16.xpose.msra.mxu0 0
      %439 = vmatprep.subr.bf16.mxu0 0
      %440 = vmatpush1.bf16.xpose.msra.mxu0 0
      %441 = vmatprep.subr.bf16.mxu0 0
      %442 = vmatpush1.bf16.xpose.msra.mxu0 0
      %443 = vmatprep.mubr.bf16.mxu0 0
      %444 = vmatmul.mubr.bf16.gmra.mrb[0].mxu0 %v406
      %v445 = vpop.f32.mrb[0].mxu0
      %v446 = vadd.f32 0.0, %v445
      %v447 = vpop.f32.mrb[0].mxu0
      %v448 = vpop.f32.mrb[0].mxu0
      %v449 = vadd.f32 0.0, %v448
      %v450 = vpop.f32.mrb[0].mxu0
      %451 = vdwg.mxu0
      %v454 = vunpack.c.l.b16 %v245
      %v455 = vunpack.c.l.b16 %v246
      %v456 = vpack.c.b16 %v455, %v454
      %v459 = vunpack.c.l.b16 %v253
      %v460 = vunpack.c.l.b16 %v254
      %v461 = vpack.c.b16 %v460, %v459
      %v463 = vsel %vm347, %v456, 0
      %v466 = vsel %vm347, %v461, 0
      %468 = vmatprep.subr.bf16.mxu0 0
      %469 = vmatpush1.bf16.xpose.msra.mxu0 %v466
      %470 = vmatprep.subr.bf16.mxu0 0
      %471 = vmatpush1.bf16.xpose.msra.mxu0 0
      %472 = vmatprep.subr.bf16.mxu0 0
      %473 = vmatpush1.bf16.xpose.msra.mxu0 0
      %474 = vmatprep.subr.bf16.mxu0 0
      %475 = vmatpush1.bf16.xpose.msra.mxu0 0
      %476 = vmatprep.subr.bf16.mxu0 0
      %477 = vmatpush1.bf16.xpose.msra.mxu0 0
      %478 = vmatprep.subr.bf16.mxu0 0
      %479 = vmatpush1.bf16.xpose.msra.mxu0 0
      %480 = vmatprep.subr.bf16.mxu0 0
      %481 = vmatpush1.bf16.xpose.msra.mxu0 0
      %482 = vmatprep.subr.bf16.mxu0 0
      %483 = vmatpush1.bf16.xpose.msra.mxu0 0
      %484 = vmatprep.subr.bf16.mxu0 0
      %485 = vmatpush1.bf16.xpose.msra.mxu0 0
      %486 = vmatprep.subr.bf16.mxu0 0
      %487 = vmatpush1.bf16.xpose.msra.mxu0 0
      %488 = vmatprep.subr.bf16.mxu0 0
      %489 = vmatpush1.bf16.xpose.msra.mxu0 0
      %490 = vmatprep.subr.bf16.mxu0 0
      %491 = vmatpush1.bf16.xpose.msra.mxu0 0
      %492 = vmatprep.subr.bf16.mxu0 0
      %493 = vmatpush1.bf16.xpose.msra.mxu0 0
      %494 = vmatprep.subr.bf16.mxu0 0
      %495 = vmatpush1.bf16.xpose.msra.mxu0 0
      %496 = vmatprep.subr.bf16.mxu0 0
      %497 = vmatpush1.bf16.xpose.msra.mxu0 0
      %498 = vmatprep.subr.bf16.mxu0 0
      %499 = vmatpush1.bf16.xpose.msra.mxu0 0
      %500 = vmatprep.mubr.bf16.mxu0 0
      %501 = vmatmul.mubr.bf16.gmra.mrb[0].mxu0 %v463
      %v502 = vpop.f32.mrb[0].mxu0
      %v503 = vadd.f32 0.0, %v502
      %v504 = vpop.f32.mrb[0].mxu0
      %v505 = vpop.f32.mrb[0].mxu0
      %v506 = vadd.f32 0.0, %v505
      %v507 = vpop.f32.mrb[0].mxu0
      %508 = vdwg.mxu0
      %v511 = vunpack.c.l.b16 %v247
      %v512 = vunpack.c.l.b16 %v248
      %v513 = vpack.c.b16 %v512, %v511
      %v516 = vunpack.c.l.b16 %v255
      %v517 = vunpack.c.l.b16 %v256
      %v518 = vpack.c.b16 %v517, %v516
      %v520 = vsel %vm347, %v513, 0
      %v523 = vsel %vm347, %v518, 0
      %525 = vmatprep.subr.bf16.mxu0 0
      %526 = vmatpush1.bf16.xpose.msra.mxu0 %v523
      %527 = vmatprep.subr.bf16.mxu0 0
      %528 = vmatpush1.bf16.xpose.msra.mxu0 0
      %529 = vmatprep.subr.bf16.mxu0 0
      %530 = vmatpush1.bf16.xpose.msra.mxu0 0
      %531 = vmatprep.subr.bf16.mxu0 0
      %532 = vmatpush1.bf16.xpose.msra.mxu0 0
      %533 = vmatprep.subr.bf16.mxu0 0
      %534 = vmatpush1.bf16.xpose.msra.mxu0 0
      %535 = vmatprep.subr.bf16.mxu0 0
      %536 = vmatpush1.bf16.xpose.msra.mxu0 0
      %537 = vmatprep.subr.bf16.mxu0 0
      %538 = vmatpush1.bf16.xpose.msra.mxu0 0
      %539 = vmatprep.subr.bf16.mxu0 0
      %540 = vmatpush1.bf16.xpose.msra.mxu0 0
      %541 = vmatprep.subr.bf16.mxu0 0
      %542 = vmatpush1.bf16.xpose.msra.mxu0 0
      %543 = vmatprep.subr.bf16.mxu0 0
      %544 = vmatpush1.bf16.xpose.msra.mxu0 0
      %545 = vmatprep.subr.bf16.mxu0 0
      %546 = vmatpush1.bf16.xpose.msra.mxu0 0
      %547 = vmatprep.subr.bf16.mxu0 0
      %548 = vmatpush1.bf16.xpose.msra.mxu0 0
      %549 = vmatprep.subr.bf16.mxu0 0
      %550 = vmatpush1.bf16.xpose.msra.mxu0 0
      %551 = vmatprep.subr.bf16.mxu0 0
      %552 = vmatpush1.bf16.xpose.msra.mxu0 0
      %553 = vmatprep.subr.bf16.mxu0 0
      %554 = vmatpush1.bf16.xpose.msra.mxu0 0
      %555 = vmatprep.subr.bf16.mxu0 0
      %556 = vmatpush1.bf16.xpose.msra.mxu0 0
      %557 = vmatprep.mubr.bf16.mxu0 0
      %558 = vmatmul.mubr.bf16.gmra.mrb[0].mxu0 %v520
      %v559 = vpop.f32.mrb[0].mxu0
      %v560 = vadd.f32 0.0, %v559
      %v561 = vpop.f32.mrb[0].mxu0
      %v562 = vpop.f32.mrb[0].mxu0
      %v563 = vadd.f32 0.0, %v562
      %v564 = vpop.f32.mrb[0].mxu0
      %565 = vdwg.mxu0
      %v568 = vunpack.c.l.b16 %v265
      %v569 = vunpack.c.l.b16 %v266
      %v570 = vpack.c.b16 %v569, %v568
      %v573 = vunpack.c.l.b16 %v273
      %v574 = vunpack.c.l.b16 %v274
      %v575 = vpack.c.b16 %v574, %v573
      %v577 = vsel %vm347, %v570, 0
      %v580 = vsel %vm347, %v575, 0
      %582 = vmatprep.subr.bf16.mxu0 0
      %583 = vmatpush1.bf16.xpose.msra.mxu0 %v580
      %584 = vmatprep.subr.bf16.mxu0 0
      %585 = vmatpush1.bf16.xpose.msra.mxu0 0
      %586 = vmatprep.subr.bf16.mxu0 0
      %587 = vmatpush1.bf16.xpose.msra.mxu0 0
      %588 = vmatprep.subr.bf16.mxu0 0
      %589 = vmatpush1.bf16.xpose.msra.mxu0 0
      %590 = vmatprep.subr.bf16.mxu0 0
      %591 = vmatpush1.bf16.xpose.msra.mxu0 0
      %592 = vmatprep.subr.bf16.mxu0 0
      %593 = vmatpush1.bf16.xpose.msra.mxu0 0
      %594 = vmatprep.subr.bf16.mxu0 0
      %595 = vmatpush1.bf16.xpose.msra.mxu0 0
      %596 = vmatprep.subr.bf16.mxu0 0
      %597 = vmatpush1.bf16.xpose.msra.mxu0 0
      %598 = vmatprep.subr.bf16.mxu0 0
      %599 = vmatpush1.bf16.xpose.msra.mxu0 0
      %600 = vmatprep.subr.bf16.mxu0 0
      %601 = vmatpush1.bf16.xpose.msra.mxu0 0
      %602 = vmatprep.subr.bf16.mxu0 0
      %603 = vmatpush1.bf16.xpose.msra.mxu0 0
      %604 = vmatprep.subr.bf16.mxu0 0
      %605 = vmatpush1.bf16.xpose.msra.mxu0 0
      %606 = vmatprep.subr.bf16.mxu0 0
      %607 = vmatpush1.bf16.xpose.msra.mxu0 0
      %608 = vmatprep.subr.bf16.mxu0 0
      %609 = vmatpush1.bf16.xpose.msra.mxu0 0
      %610 = vmatprep.subr.bf16.mxu0 0
      %611 = vmatpush1.bf16.xpose.msra.mxu0 0
      %612 = vmatprep.subr.bf16.mxu0 0
      %613 = vmatpush1.bf16.xpose.msra.mxu0 0
      %614 = vmatprep.mubr.bf16.mxu0 0
      %615 = vmatmul.mubr.bf16.gmra.mrb[0].mxu0 %v577
      %v616 = vpop.f32.mrb[0].mxu0
      %v617 = vadd.f32 0.0, %v616
      %v618 = vpop.f32.mrb[0].mxu0
      %v619 = vpop.f32.mrb[0].mxu0
      %v620 = vadd.f32 0.0, %v619
      %v621 = vpop.f32.mrb[0].mxu0
      %622 = vdwg.mxu0
      %v625 = vunpack.c.l.b16 %v267
      %v626 = vunpack.c.l.b16 %v268
      %v627 = vpack.c.b16 %v626, %v625
      %v630 = vunpack.c.l.b16 %v275
      %v631 = vunpack.c.l.b16 %v276
      %v632 = vpack.c.b16 %v631, %v630
      %v634 = vsel %vm347, %v627, 0
      %v637 = vsel %vm347, %v632, 0
      %639 = vmatprep.subr.bf16.mxu0 0
      %640 = vmatpush1.bf16.xpose.msra.mxu0 %v637
      %641 = vmatprep.subr.bf16.mxu0 0
      %642 = vmatpush1.bf16.xpose.msra.mxu0 0
      %643 = vmatprep.subr.bf16.mxu0 0
      %644 = vmatpush1.bf16.xpose.msra.mxu0 0
      %645 = vmatprep.subr.bf16.mxu0 0
      %646 = vmatpush1.bf16.xpose.msra.mxu0 0
      %647 = vmatprep.subr.bf16.mxu0 0
      %648 = vmatpush1.bf16.xpose.msra.mxu0 0
      %649 = vmatprep.subr.bf16.mxu0 0
      %650 = vmatpush1.bf16.xpose.msra.mxu0 0
      %651 = vmatprep.subr.bf16.mxu0 0
      %652 = vmatpush1.bf16.xpose.msra.mxu0 0
      %653 = vmatprep.subr.bf16.mxu0 0
      %654 = vmatpush1.bf16.xpose.msra.mxu0 0
      %655 = vmatprep.subr.bf16.mxu0 0
      %656 = vmatpush1.bf16.xpose.msra.mxu0 0
      %657 = vmatprep.subr.bf16.mxu0 0
      %658 = vmatpush1.bf16.xpose.msra.mxu0 0
      %659 = vmatprep.subr.bf16.mxu0 0
      %660 = vmatpush1.bf16.xpose.msra.mxu0 0
      %661 = vmatprep.subr.bf16.mxu0 0
      %662 = vmatpush1.bf16.xpose.msra.mxu0 0
      %663 = vmatprep.subr.bf16.mxu0 0
      %664 = vmatpush1.bf16.xpose.msra.mxu0 0
      %665 = vmatprep.subr.bf16.mxu0 0
      %666 = vmatpush1.bf16.xpose.msra.mxu0 0
      %667 = vmatprep.subr.bf16.mxu0 0
      %668 = vmatpush1.bf16.xpose.msra.mxu0 0
      %669 = vmatprep.subr.bf16.mxu0 0
      %670 = vmatpush1.bf16.xpose.msra.mxu0 0
      %671 = vmatprep.mubr.bf16.mxu0 0
      %672 = vmatmul.mubr.bf16.gmra.mrb[0].mxu0 %v634
      %v673 = vpop.f32.mrb[0].mxu0
      %v674 = vadd.f32 0.0, %v673
      %v675 = vpop.f32.mrb[0].mxu0
      %v676 = vpop.f32.mrb[0].mxu0
      %v677 = vadd.f32 0.0, %v676
      %v678 = vpop.f32.mrb[0].mxu0
      %679 = vdwg.mxu0
      %v682 = vunpack.c.l.b16 %v269
      %v683 = vunpack.c.l.b16 %v270
      %v684 = vpack.c.b16 %v683, %v682
      %v687 = vunpack.c.l.b16 %v277
      %v688 = vunpack.c.l.b16 %v278
      %v689 = vpack.c.b16 %v688, %v687
      %v691 = vsel %vm347, %v684, 0
      %v694 = vsel %vm347, %v689, 0
      %696 = vmatprep.subr.bf16.mxu0 0
      %697 = vmatpush1.bf16.xpose.msra.mxu0 %v694
      %698 = vmatprep.subr.bf16.mxu0 0
      %699 = vmatpush1.bf16.xpose.msra.mxu0 0
      %700 = vmatprep.subr.bf16.mxu0 0
      %701 = vmatpush1.bf16.xpose.msra.mxu0 0
      %702 = vmatprep.subr.bf16.mxu0 0
      %703 = vmatpush1.bf16.xpose.msra.mxu0 0
      %704 = vmatprep.subr.bf16.mxu0 0
      %705 = vmatpush1.bf16.xpose.msra.mxu0 0
      %706 = vmatprep.subr.bf16.mxu0 0
      %707 = vmatpush1.bf16.xpose.msra.mxu0 0
      %708 = vmatprep.subr.bf16.mxu0 0
      %709 = vmatpush1.bf16.xpose.msra.mxu0 0
      %710 = vmatprep.subr.bf16.mxu0 0
      %711 = vmatpush1.bf16.xpose.msra.mxu0 0
      %712 = vmatprep.subr.bf16.mxu0 0
      %713 = vmatpush1.bf16.xpose.msra.mxu0 0
      %714 = vmatprep.subr.bf16.mxu0 0
      %715 = vmatpush1.bf16.xpose.msra.mxu0 0
      %716 = vmatprep.subr.bf16.mxu0 0
      %717 = vmatpush1.bf16.xpose.msra.mxu0 0
      %718 = vmatprep.subr.bf16.mxu0 0
      %719 = vmatpush1.bf16.xpose.msra.mxu0 0
      %720 = vmatprep.subr.bf16.mxu0 0
      %721 = vmatpush1.bf16.xpose.msra.mxu0 0
      %722 = vmatprep.subr.bf16.mxu0 0
      %723 = vmatpush1.bf16.xpose.msra.mxu0 0
      %724 = vmatprep.subr.bf16.mxu0 0
      %725 = vmatpush1.bf16.xpose.msra.mxu0 0
      %726 = vmatprep.subr.bf16.mxu0 0
      %727 = vmatpush1.bf16.xpose.msra.mxu0 0
      %728 = vmatprep.mubr.bf16.mxu0 0
      %729 = vmatmul.mubr.bf16.gmra.mrb[0].mxu0 %v691
      %v730 = vpop.f32.mrb[0].mxu0
      %v731 = vadd.f32 0.0, %v730
      %v732 = vpop.f32.mrb[0].mxu0
      %v733 = vpop.f32.mrb[0].mxu0
      %v734 = vadd.f32 0.0, %v733
      %v735 = vpop.f32.mrb[0].mxu0
      %736 = vdwg.mxu0
      %v739 = vunpack.c.l.b16 %v271
      %v740 = vunpack.c.l.b16 %v272
      %v741 = vpack.c.b16 %v740, %v739
      %v744 = vunpack.c.l.b16 %v279
      %v745 = vunpack.c.l.b16 %v280
      %v746 = vpack.c.b16 %v745, %v744
      %v748 = vsel %vm347, %v741, 0
      %v751 = vsel %vm347, %v746, 0
      %753 = vmatprep.subr.bf16.mxu0 0
      %754 = vmatpush1.bf16.xpose.msra.mxu0 %v751
      %755 = vmatprep.subr.bf16.mxu0 0
      %756 = vmatpush1.bf16.xpose.msra.mxu0 0
      %757 = vmatprep.subr.bf16.mxu0 0
      %758 = vmatpush1.bf16.xpose.msra.mxu0 0
      %759 = vmatprep.subr.bf16.mxu0 0
      %760 = vmatpush1.bf16.xpose.msra.mxu0 0
      %761 = vmatprep.subr.bf16.mxu0 0
      %762 = vmatpush1.bf16.xpose.msra.mxu0 0
      %763 = vmatprep.subr.bf16.mxu0 0
      %764 = vmatpush1.bf16.xpose.msra.mxu0 0
      %765 = vmatprep.subr.bf16.mxu0 0
      %766 = vmatpush1.bf16.xpose.msra.mxu0 0
      %767 = vmatprep.subr.bf16.mxu0 0
      %768 = vmatpush1.bf16.xpose.msra.mxu0 0
      %769 = vmatprep.subr.bf16.mxu0 0
      %770 = vmatpush1.bf16.xpose.msra.mxu0 0
      %771 = vmatprep.subr.bf16.mxu0 0
      %772 = vmatpush1.bf16.xpose.msra.mxu0 0
      %773 = vmatprep.subr.bf16.mxu0 0
      %774 = vmatpush1.bf16.xpose.msra.mxu0 0
      %775 = vmatprep.subr.bf16.mxu0 0
      %776 = vmatpush1.bf16.xpose.msra.mxu0 0
      %777 = vmatprep.subr.bf16.mxu0 0
      %778 = vmatpush1.bf16.xpose.msra.mxu0 0
      %779 = vmatprep.subr.bf16.mxu0 0
      %780 = vmatpush1.bf16.xpose.msra.mxu0 0
      %781 = vmatprep.subr.bf16.mxu0 0
      %782 = vmatpush1.bf16.xpose.msra.mxu0 0
      %783 = vmatprep.subr.bf16.mxu0 0
      %784 = vmatpush1.bf16.xpose.msra.mxu0 0
      %785 = vmatprep.mubr.bf16.mxu0 0
      %786 = vmatmul.mubr.bf16.gmra.mrb[0].mxu0 %v748
      %v787 = vpop.f32.mrb[0].mxu0
      %v788 = vadd.f32 0.0, %v787
      %v789 = vpop.f32.mrb[0].mxu0
      %v790 = vpop.f32.mrb[0].mxu0
      %v791 = vadd.f32 0.0, %v790
      %v792 = vpop.f32.mrb[0].mxu0
      %793 = vdwg.mxu0
      %v796 = vunpack.c.l.b16 %v289
      %v797 = vunpack.c.l.b16 %v290
      %v798 = vpack.c.b16 %v797, %v796
      %v801 = vunpack.c.l.b16 %v297
      %v802 = vunpack.c.l.b16 %v298
      %v803 = vpack.c.b16 %v802, %v801
      %v805 = vsel %vm347, %v798, 0
      %v808 = vsel %vm347, %v803, 0
      %810 = vmatprep.subr.bf16.mxu0 0
      %811 = vmatpush1.bf16.xpose.msra.mxu0 %v808
      %812 = vmatprep.subr.bf16.mxu0 0
      %813 = vmatpush1.bf16.xpose.msra.mxu0 0
      %814 = vmatprep.subr.bf16.mxu0 0
      %815 = vmatpush1.bf16.xpose.msra.mxu0 0
      %816 = vmatprep.subr.bf16.mxu0 0
      %817 = vmatpush1.bf16.xpose.msra.mxu0 0
      %818 = vmatprep.subr.bf16.mxu0 0
      %819 = vmatpush1.bf16.xpose.msra.mxu0 0
      %820 = vmatprep.subr.bf16.mxu0 0
      %821 = vmatpush1.bf16.xpose.msra.mxu0 0
      %822 = vmatprep.subr.bf16.mxu0 0
      %823 = vmatpush1.bf16.xpose.msra.mxu0 0
      %824 = vmatprep.subr.bf16.mxu0 0
      %825 = vmatpush1.bf16.xpose.msra.mxu0 0
      %826 = vmatprep.subr.bf16.mxu0 0
      %827 = vmatpush1.bf16.xpose.msra.mxu0 0
      %828 = vmatprep.subr.bf16.mxu0 0
      %829 = vmatpush1.bf16.xpose.msra.mxu0 0
      %830 = vmatprep.subr.bf16.mxu0 0
      %831 = vmatpush1.bf16.xpose.msra.mxu0 0
      %832 = vmatprep.subr.bf16.mxu0 0
      %833 = vmatpush1.bf16.xpose.msra.mxu0 0
      %834 = vmatprep.subr.bf16.mxu0 0
      %835 = vmatpush1.bf16.xpose.msra.mxu0 0
      %836 = vmatprep.subr.bf16.mxu0 0
      %837 = vmatpush1.bf16.xpose.msra.mxu0 0
      %838 = vmatprep.subr.bf16.mxu0 0
      %839 = vmatpush1.bf16.xpose.msra.mxu0 0
      %840 = vmatprep.subr.bf16.mxu0 0
      %841 = vmatpush1.bf16.xpose.msra.mxu0 0
      %842 = vmatprep.mubr.bf16.mxu0 0
      %843 = vmatmul.mubr.bf16.gmra.mrb[0].mxu0 %v805
      %v844 = vpop.f32.mrb[0].mxu0
      %v845 = vadd.f32 0.0, %v844
      %v846 = vpop.f32.mrb[0].mxu0
      %v847 = vpop.f32.mrb[0].mxu0
      %v848 = vadd.f32 0.0, %v847
      %v849 = vpop.f32.mrb[0].mxu0
      %850 = vdwg.mxu0
      %v853 = vunpack.c.l.b16 %v291
      %v854 = vunpack.c.l.b16 %v292
      %v855 = vpack.c.b16 %v854, %v853
      %v858 = vunpack.c.l.b16 %v299
      %v859 = vunpack.c.l.b16 %v300
      %v860 = vpack.c.b16 %v859, %v858
      %v862 = vsel %vm347, %v855, 0
      %v865 = vsel %vm347, %v860, 0
      %867 = vmatprep.subr.bf16.mxu0 0
      %868 = vmatpush1.bf16.xpose.msra.mxu0 %v865
      %869 = vmatprep.subr.bf16.mxu0 0
      %870 = vmatpush1.bf16.xpose.msra.mxu0 0
      %871 = vmatprep.subr.bf16.mxu0 0
      %872 = vmatpush1.bf16.xpose.msra.mxu0 0
      %873 = vmatprep.subr.bf16.mxu0 0
      %874 = vmatpush1.bf16.xpose.msra.mxu0 0
      %875 = vmatprep.subr.bf16.mxu0 0
      %876 = vmatpush1.bf16.xpose.msra.mxu0 0
      %877 = vmatprep.subr.bf16.mxu0 0
      %878 = vmatpush1.bf16.xpose.msra.mxu0 0
      %879 = vmatprep.subr.bf16.mxu0 0
      %880 = vmatpush1.bf16.xpose.msra.mxu0 0
      %881 = vmatprep.subr.bf16.mxu0 0
      %882 = vmatpush1.bf16.xpose.msra.mxu0 0
      %883 = vmatprep.subr.bf16.mxu0 0
      %884 = vmatpush1.bf16.xpose.msra.mxu0 0
      %885 = vmatprep.subr.bf16.mxu0 0
      %886 = vmatpush1.bf16.xpose.msra.mxu0 0
      %887 = vmatprep.subr.bf16.mxu0 0
      %888 = vmatpush1.bf16.xpose.msra.mxu0 0
      %889 = vmatprep.subr.bf16.mxu0 0
      %890 = vmatpush1.bf16.xpose.msra.mxu0 0
      %891 = vmatprep.subr.bf16.mxu0 0
      %892 = vmatpush1.bf16.xpose.msra.mxu0 0
      %893 = vmatprep.subr.bf16.mxu0 0
      %894 = vmatpush1.bf16.xpose.msra.mxu0 0
      %895 = vmatprep.subr.bf16.mxu0 0
      %896 = vmatpush1.bf16.xpose.msra.mxu0 0
      %897 = vmatprep.subr.bf16.mxu0 0
      %898 = vmatpush1.bf16.xpose.msra.mxu0 0
      %899 = vmatprep.mubr.bf16.mxu0 0
      %900 = vmatmul.mubr.bf16.gmra.mrb[0].mxu0 %v862
      %v901 = vpop.f32.mrb[0].mxu0
      %v902 = vadd.f32 0.0, %v901
      %v903 = vpop.f32.mrb[0].mxu0
      %v904 = vpop.f32.mrb[0].mxu0
      %v905 = vadd.f32 0.0, %v904
      %v906 = vpop.f32.mrb[0].mxu0
      %907 = vdwg.mxu0
      %v910 = vunpack.c.l.b16 %v293
      %v911 = vunpack.c.l.b16 %v294
      %v912 = vpack.c.b16 %v911, %v910
      %v915 = vunpack.c.l.b16 %v301
      %v916 = vunpack.c.l.b16 %v302
      %v917 = vpack.c.b16 %v916, %v915
      %v919 = vsel %vm347, %v912, 0
      %v922 = vsel %vm347, %v917, 0
      %924 = vmatprep.subr.bf16.mxu0 0
      %925 = vmatpush1.bf16.xpose.msra.mxu0 %v922
      %926 = vmatprep.subr.bf16.mxu0 0
      %927 = vmatpush1.bf16.xpose.msra.mxu0 0
      %928 = vmatprep.subr.bf16.mxu0 0
      %929 = vmatpush1.bf16.xpose.msra.mxu0 0
      %930 = vmatprep.subr.bf16.mxu0 0
      %931 = vmatpush1.bf16.xpose.msra.mxu0 0
      %932 = vmatprep.subr.bf16.mxu0 0
      %933 = vmatpush1.bf16.xpose.msra.mxu0 0
      %934 = vmatprep.subr.bf16.mxu0 0
      %935 = vmatpush1.bf16.xpose.msra.mxu0 0
      %936 = vmatprep.subr.bf16.mxu0 0
      %937 = vmatpush1.bf16.xpose.msra.mxu0 0
      %938 = vmatprep.subr.bf16.mxu0 0
      %939 = vmatpush1.bf16.xpose.msra.mxu0 0
      %940 = vmatprep.subr.bf16.mxu0 0
      %941 = vmatpush1.bf16.xpose.msra.mxu0 0
      %942 = vmatprep.subr.bf16.mxu0 0
      %943 = vmatpush1.bf16.xpose.msra.mxu0 0
      %944 = vmatprep.subr.bf16.mxu0 0
      %945 = vmatpush1.bf16.xpose.msra.mxu0 0
      %946 = vmatprep.subr.bf16.mxu0 0
      %947 = vmatpush1.bf16.xpose.msra.mxu0 0
      %948 = vmatprep.subr.bf16.mxu0 0
      %949 = vmatpush1.bf16.xpose.msra.mxu0 0
      %950 = vmatprep.subr.bf16.mxu0 0
      %951 = vmatpush1.bf16.xpose.msra.mxu0 0
      %952 = vmatprep.subr.bf16.mxu0 0
      %953 = vmatpush1.bf16.xpose.msra.mxu0 0
      %954 = vmatprep.subr.bf16.mxu0 0
      %955 = vmatpush1.bf16.xpose.msra.mxu0 0
      %956 = vmatprep.mubr.bf16.mxu0 0
      %957 = vmatmul.mubr.bf16.gmra.mrb[0].mxu0 %v919
      %v958 = vpop.f32.mrb[0].mxu0
      %v959 = vadd.f32 0.0, %v958
      %v960 = vpop.f32.mrb[0].mxu0
      %v961 = vpop.f32.mrb[0].mxu0
      %v962 = vadd.f32 0.0, %v961
      %v963 = vpop.f32.mrb[0].mxu0
      %964 = vdwg.mxu0
      %v967 = vunpack.c.l.b16 %v295
      %v968 = vunpack.c.l.b16 %v296
      %v969 = vpack.c.b16 %v968, %v967
      %v972 = vunpack.c.l.b16 %v303
      %v973 = vunpack.c.l.b16 %v304
      %v974 = vpack.c.b16 %v973, %v972
      %v976 = vsel %vm347, %v969, 0
      %v979 = vsel %vm347, %v974, 0
      %981 = vmatprep.subr.bf16.mxu0 0
      %982 = vmatpush1.bf16.xpose.msra.mxu0 %v979
      %983 = vmatprep.subr.bf16.mxu0 0
      %984 = vmatpush1.bf16.xpose.msra.mxu0 0
      %985 = vmatprep.subr.bf16.mxu0 0
      %986 = vmatpush1.bf16.xpose.msra.mxu0 0
      %987 = vmatprep.subr.bf16.mxu0 0
      %988 = vmatpush1.bf16.xpose.msra.mxu0 0
      %989 = vmatprep.subr.bf16.mxu0 0
      %990 = vmatpush1.bf16.xpose.msra.mxu0 0
      %991 = vmatprep.subr.bf16.mxu0 0
      %992 = vmatpush1.bf16.xpose.msra.mxu0 0
      %993 = vmatprep.subr.bf16.mxu0 0
      %994 = vmatpush1.bf16.xpose.msra.mxu0 0
      %995 = vmatprep.subr.bf16.mxu0 0
      %996 = vmatpush1.bf16.xpose.msra.mxu0 0
      %997 = vmatprep.subr.bf16.mxu0 0
      %998 = vmatpush1.bf16.xpose.msra.mxu0 0
      %999 = vmatprep.subr.bf16.mxu0 0
      %1000 = vmatpush1.bf16.xpose.msra.mxu0 0
      %1001 = vmatprep.subr.bf16.mxu0 0
      %1002 = vmatpush1.bf16.xpose.msra.mxu0 0
      %1003 = vmatprep.subr.bf16.mxu0 0
      %1004 = vmatpush1.bf16.xpose.msra.mxu0 0
      %1005 = vmatprep.subr.bf16.mxu0 0
      %1006 = vmatpush1.bf16.xpose.msra.mxu0 0
      %1007 = vmatprep.subr.bf16.mxu0 0
      %1008 = vmatpush1.bf16.xpose.msra.mxu0 0
      %1009 = vmatprep.subr.bf16.mxu0 0
      %1010 = vmatpush1.bf16.xpose.msra.mxu0 0
      %1011 = vmatprep.subr.bf16.mxu0 0
      %1012 = vmatpush1.bf16.xpose.msra.mxu0 0
      %1013 = vmatprep.mubr.bf16.mxu0 0
      %1014 = vmatmul.mubr.bf16.gmra.mrb[0].mxu0 %v976
      %v1015 = vpop.f32.mrb[0].mxu0
      %v1016 = vadd.f32 0.0, %v1015
      %v1017 = vpop.f32.mrb[0].mxu0
      %v1018 = vpop.f32.mrb[0].mxu0
      %v1019 = vadd.f32 0.0, %v1018
      %v1020 = vpop.f32.mrb[0].mxu0
      %1021 = vdwg.mxu0
      %v1024 = vunpack.c.l.b16 %v313
      %v1025 = vunpack.c.l.b16 %v314
      %v1026 = vpack.c.b16 %v1025, %v1024
      %v1029 = vunpack.c.l.b16 %v321
      %v1030 = vunpack.c.l.b16 %v322
      %v1031 = vpack.c.b16 %v1030, %v1029
      %v1033 = vsel %vm347, %v1026, 0
      %v1036 = vsel %vm347, %v1031, 0
      %1038 = vmatprep.subr.bf16.mxu0 0
      %1039 = vmatpush1.bf16.xpose.msra.mxu0 %v1036
      %1040 = vmatprep.subr.bf16.mxu0 0
      %1041 = vmatpush1.bf16.xpose.msra.mxu0 0
      %1042 = vmatprep.subr.bf16.mxu0 0
      %1043 = vmatpush1.bf16.xpose.msra.mxu0 0
      %1044 = vmatprep.subr.bf16.mxu0 0
      %1045 = vmatpush1.bf16.xpose.msra.mxu0 0
      %1046 = vmatprep.subr.bf16.mxu0 0
      %1047 = vmatpush1.bf16.xpose.msra.mxu0 0
      %1048 = vmatprep.subr.bf16.mxu0 0
      %1049 = vmatpush1.bf16.xpose.msra.mxu0 0
      %1050 = vmatprep.subr.bf16.mxu0 0
      %1051 = vmatpush1.bf16.xpose.msra.mxu0 0
      %1052 = vmatprep.subr.bf16.mxu0 0
      %1053 = vmatpush1.bf16.xpose.msra.mxu0 0
      %1054 = vmatprep.subr.bf16.mxu0 0
      %1055 = vmatpush1.bf16.xpose.msra.mxu0 0
      %1056 = vmatprep.subr.bf16.mxu0 0
      %1057 = vmatpush1.bf16.xpose.msra.mxu0 0
      %1058 = vmatprep.subr.bf16.mxu0 0
      %1059 = vmatpush1.bf16.xpose.msra.mxu0 0
      %1060 = vmatprep.subr.bf16.mxu0 0
      %1061 = vmatpush1.bf16.xpose.msra.mxu0 0
      %1062 = vmatprep.subr.bf16.mxu0 0
      %1063 = vmatpush1.bf16.xpose.msra.mxu0 0
      %1064 = vmatprep.subr.bf16.mxu0 0
      %1065 = vmatpush1.bf16.xpose.msra.mxu0 0
      %1066 = vmatprep.subr.bf16.mxu0 0
      %1067 = vmatpush1.bf16.xpose.msra.mxu0 0
      %1068 = vmatprep.subr.bf16.mxu0 0
      %1069 = vmatpush1.bf16.xpose.msra.mxu0 0
      %1070 = vmatprep.mubr.bf16.mxu0 0
      %1071 = vmatmul.mubr.bf16.gmra.mrb[0].mxu0 %v1033
      %v1072 = vpop.f32.mrb[0].mxu0
      %v1073 = vadd.f32 0.0, %v1072
      %v1074 = vpop.f32.mrb[0].mxu0
      %v1075 = vpop.f32.mrb[0].mxu0
      %v1076 = vadd.f32 0.0, %v1075
      %v1077 = vpop.f32.mrb[0].mxu0
      %1078 = vdwg.mxu0
      %v1081 = vunpack.c.l.b16 %v315
      %v1082 = vunpack.c.l.b16 %v316
      %v1083 = vpack.c.b16 %v1082, %v1081
      %v1086 = vunpack.c.l.b16 %v323
      %v1087 = vunpack.c.l.b16 %v324
      %v1088 = vpack.c.b16 %v1087, %v1086
      %v1090 = vsel %vm347, %v1083, 0
      %v1093 = vsel %vm347, %v1088, 0
      %1095 = vmatprep.subr.bf16.mxu0 0
      %1096 = vmatpush1.bf16.xpose.msra.mxu0 %v1093
      %1097 = vmatprep.subr.bf16.mxu0 0
      %1098 = vmatpush1.bf16.xpose.msra.mxu0 0
      %1099 = vmatprep.subr.bf16.mxu0 0
      %1100 = vmatpush1.bf16.xpose.msra.mxu0 0
      %1101 = vmatprep.subr.bf16.mxu0 0
      %1102 = vmatpush1.bf16.xpose.msra.mxu0 0
      %1103 = vmatprep.subr.bf16.mxu0 0
      %1104 = vmatpush1.bf16.xpose.msra.mxu0 0
      %1105 = vmatprep.subr.bf16.mxu0 0
      %1106 = vmatpush1.bf16.xpose.msra.mxu0 0
      %1107 = vmatprep.subr.bf16.mxu0 0
      %1108 = vmatpush1.bf16.xpose.msra.mxu0 0
      %1109 = vmatprep.subr.bf16.mxu0 0
      %1110 = vmatpush1.bf16.xpose.msra.mxu0 0
      %1111 = vmatprep.subr.bf16.mxu0 0
      %1112 = vmatpush1.bf16.xpose.msra.mxu0 0
      %1113 = vmatprep.subr.bf16.mxu0 0
      %1114 = vmatpush1.bf16.xpose.msra.mxu0 0
      %1115 = vmatprep.subr.bf16.mxu0 0
      %1116 = vmatpush1.bf16.xpose.msra.mxu0 0
      %1117 = vmatprep.subr.bf16.mxu0 0
      %1118 = vmatpush1.bf16.xpose.msra.mxu0 0
      %1119 = vmatprep.subr.bf16.mxu0 0
      %1120 = vmatpush1.bf16.xpose.msra.mxu0 0
      %1121 = vmatprep.subr.bf16.mxu0 0
      %1122 = vmatpush1.bf16.xpose.msra.mxu0 0
      %1123 = vmatprep.subr.bf16.mxu0 0
      %1124 = vmatpush1.bf16.xpose.msra.mxu0 0
      %1125 = vmatprep.subr.bf16.mxu0 0
      %1126 = vmatpush1.bf16.xpose.msra.mxu0 0
      %1127 = vmatprep.mubr.bf16.mxu0 0
      %1128 = vmatmul.mubr.bf16.gmra.mrb[0].mxu0 %v1090
      %v1129 = vpop.f32.mrb[0].mxu0
      %v1130 = vadd.f32 0.0, %v1129
      %v1131 = vpop.f32.mrb[0].mxu0
      %v1132 = vpop.f32.mrb[0].mxu0
      %v1133 = vadd.f32 0.0, %v1132
      %v1134 = vpop.f32.mrb[0].mxu0
      %1135 = vdwg.mxu0
      %v1138 = vunpack.c.l.b16 %v317
      %v1139 = vunpack.c.l.b16 %v318
      %v1140 = vpack.c.b16 %v1139, %v1138
      %v1143 = vunpack.c.l.b16 %v325
      %v1144 = vunpack.c.l.b16 %v326
      %v1145 = vpack.c.b16 %v1144, %v1143
      %v1147 = vsel %vm347, %v1140, 0
      %v1150 = vsel %vm347, %v1145, 0
      %1152 = vmatprep.subr.bf16.mxu0 0
      %1153 = vmatpush1.bf16.xpose.msra.mxu0 %v1150
      %1154 = vmatprep.subr.bf16.mxu0 0
      %1155 = vmatpush1.bf16.xpose.msra.mxu0 0
      %1156 = vmatprep.subr.bf16.mxu0 0
      %1157 = vmatpush1.bf16.xpose.msra.mxu0 0
      %1158 = vmatprep.subr.bf16.mxu0 0
      %1159 = vmatpush1.bf16.xpose.msra.mxu0 0
      %1160 = vmatprep.subr.bf16.mxu0 0
      %1161 = vmatpush1.bf16.xpose.msra.mxu0 0
      %1162 = vmatprep.subr.bf16.mxu0 0
      %1163 = vmatpush1.bf16.xpose.msra.mxu0 0
      %1164 = vmatprep.subr.bf16.mxu0 0
      %1165 = vmatpush1.bf16.xpose.msra.mxu0 0
      %1166 = vmatprep.subr.bf16.mxu0 0
      %1167 = vmatpush1.bf16.xpose.msra.mxu0 0
      %1168 = vmatprep.subr.bf16.mxu0 0
      %1169 = vmatpush1.bf16.xpose.msra.mxu0 0
      %1170 = vmatprep.subr.bf16.mxu0 0
      %1171 = vmatpush1.bf16.xpose.msra.mxu0 0
      %1172 = vmatprep.subr.bf16.mxu0 0
      %1173 = vmatpush1.bf16.xpose.msra.mxu0 0
      %1174 = vmatprep.subr.bf16.mxu0 0
      %1175 = vmatpush1.bf16.xpose.msra.mxu0 0
      %1176 = vmatprep.subr.bf16.mxu0 0
      %1177 = vmatpush1.bf16.xpose.msra.mxu0 0
      %1178 = vmatprep.subr.bf16.mxu0 0
      %1179 = vmatpush1.bf16.xpose.msra.mxu0 0
      %1180 = vmatprep.subr.bf16.mxu0 0
      %1181 = vmatpush1.bf16.xpose.msra.mxu0 0
      %1182 = vmatprep.subr.bf16.mxu0 0
      %1183 = vmatpush1.bf16.xpose.msra.mxu0 0
      %1184 = vmatprep.mubr.bf16.mxu0 0
      %1185 = vmatmul.mubr.bf16.gmra.mrb[0].mxu0 %v1147
      %v1186 = vpop.f32.mrb[0].mxu0
      %v1187 = vadd.f32 0.0, %v1186
      %v1188 = vpop.f32.mrb[0].mxu0
      %v1189 = vpop.f32.mrb[0].mxu0
      %v1190 = vadd.f32 0.0, %v1189
      %v1191 = vpop.f32.mrb[0].mxu0
      %1192 = vdwg.mxu0
      %v1195 = vunpack.c.l.b16 %v319
      %v1196 = vunpack.c.l.b16 %v320
      %v1197 = vpack.c.b16 %v1196, %v1195
      %v1200 = vunpack.c.l.b16 %v327
      %v1201 = vunpack.c.l.b16 %v328
      %v1202 = vpack.c.b16 %v1201, %v1200
      %v1204 = vsel %vm347, %v1197, 0
      %v1207 = vsel %vm347, %v1202, 0
      %1209 = vmatprep.subr.bf16.mxu0 0
      %1210 = vmatpush1.bf16.xpose.msra.mxu0 %v1207
      %1211 = vmatprep.subr.bf16.mxu0 0
      %1212 = vmatpush1.bf16.xpose.msra.mxu0 0
      %1213 = vmatprep.subr.bf16.mxu0 0
      %1214 = vmatpush1.bf16.xpose.msra.mxu0 0
      %1215 = vmatprep.subr.bf16.mxu0 0
      %1216 = vmatpush1.bf16.xpose.msra.mxu0 0
      %1217 = vmatprep.subr.bf16.mxu0 0
      %1218 = vmatpush1.bf16.xpose.msra.mxu0 0
      %1219 = vmatprep.subr.bf16.mxu0 0
      %1220 = vmatpush1.bf16.xpose.msra.mxu0 0
      %1221 = vmatprep.subr.bf16.mxu0 0
      %1222 = vmatpush1.bf16.xpose.msra.mxu0 0
      %1223 = vmatprep.subr.bf16.mxu0 0
      %1224 = vmatpush1.bf16.xpose.msra.mxu0 0
      %1225 = vmatprep.subr.bf16.mxu0 0
      %1226 = vmatpush1.bf16.xpose.msra.mxu0 0
      %1227 = vmatprep.subr.bf16.mxu0 0
      %1228 = vmatpush1.bf16.xpose.msra.mxu0 0
      %1229 = vmatprep.subr.bf16.mxu0 0
      %1230 = vmatpush1.bf16.xpose.msra.mxu0 0
      %1231 = vmatprep.subr.bf16.mxu0 0
      %1232 = vmatpush1.bf16.xpose.msra.mxu0 0
      %1233 = vmatprep.subr.bf16.mxu0 0
      %1234 = vmatpush1.bf16.xpose.msra.mxu0 0
      %1235 = vmatprep.subr.bf16.mxu0 0
      %1236 = vmatpush1.bf16.xpose.msra.mxu0 0
      %1237 = vmatprep.subr.bf16.mxu0 0
      %1238 = vmatpush1.bf16.xpose.msra.mxu0 0
      %1239 = vmatprep.subr.bf16.mxu0 0
      %1240 = vmatpush1.bf16.xpose.msra.mxu0 0
      %1241 = vmatprep.mubr.bf16.mxu0 0
      %1242 = vmatmul.mubr.bf16.gmra.mrb[0].mxu0 %v1204
      %v1243 = vpop.f32.mrb[0].mxu0
      %v1244 = vadd.f32 0.0, %v1243
      %v1245 = vpop.f32.mrb[0].mxu0
      %v1246 = vpop.f32.mrb[0].mxu0
      %v1247 = vadd.f32 0.0, %v1246
      %v1248 = vpop.f32.mrb[0].mxu0
      %1249 = vdwg.mxu0
      %v1250 = vmul.f32 %v389, 0.25
      %v1251 = vmul.f32 %v392, 0.25
      %v1252 = vmul.f32 %v446, 0.25
      %v1253 = vmul.f32 %v449, 0.25
      %v1254 = vmul.f32 %v503, 0.25
      %v1255 = vmul.f32 %v506, 0.25
      %v1256 = vmul.f32 %v560, 0.25
      %v1257 = vmul.f32 %v563, 0.25
      %v1258 = vmul.f32 %v617, 0.25
      %v1259 = vmul.f32 %v620, 0.25
      %v1260 = vmul.f32 %v674, 0.25
      %v1261 = vmul.f32 %v677, 0.25
      %v1262 = vmul.f32 %v731, 0.25
      %v1263 = vmul.f32 %v734, 0.25
      %v1264 = vmul.f32 %v788, 0.25
      %v1265 = vmul.f32 %v791, 0.25
      %v1266 = vmul.f32 %v845, 0.25
      %v1267 = vmul.f32 %v848, 0.25
      %v1268 = vmul.f32 %v902, 0.25
      %v1269 = vmul.f32 %v905, 0.25
      %v1270 = vmul.f32 %v959, 0.25
      %v1271 = vmul.f32 %v962, 0.25
      %v1272 = vmul.f32 %v1016, 0.25
      %v1273 = vmul.f32 %v1019, 0.25
      %v1274 = vmul.f32 %v1073, 0.25
      %v1275 = vmul.f32 %v1076, 0.25
      %v1276 = vmul.f32 %v1130, 0.25
      %v1277 = vmul.f32 %v1133, 0.25
      %v1278 = vmul.f32 %v1187, 0.25
      %v1279 = vmul.f32 %v1190, 0.25
      %v1280 = vmul.f32 %v1244, 0.25
      %v1281 = vmul.f32 %v1247, 0.25
      %v1282 = vld [vmem:[%s1] sm:$0xff]
      %v1283 = vld [vmem:[%s1 + $0x8] sm:$0xff]
      %v1284 = vld [vmem:[%s1 + $0x10] sm:$0xff]
      %v1285 = vld [vmem:[%s1 + $0x18] sm:$0xff]
      %v1286 = vld [vmem:[%s1 + $0x20] sm:$0xff]
      %v1287 = vld [vmem:[%s1 + $0x28] sm:$0xff]
      %v1288 = vld [vmem:[%s1 + $0x30] sm:$0xff]
      %v1289 = vld [vmem:[%s1 + $0x38] sm:$0xff]
      %v1290 = vadd.f32 %v1250, %v1282
      %v1291 = vadd.f32 %v1251, %v1283
      %v1292 = vadd.f32 %v1252, %v1284
      %v1293 = vadd.f32 %v1253, %v1285
      %v1294 = vadd.f32 %v1254, %v1286
      %v1295 = vadd.f32 %v1255, %v1287
      %v1296 = vadd.f32 %v1256, %v1288
      %v1297 = vadd.f32 %v1257, %v1289
      %v1298 = vadd.f32 %v1258, %v1282
      %v1299 = vadd.f32 %v1259, %v1283
      %v1300 = vadd.f32 %v1260, %v1284
      %v1301 = vadd.f32 %v1261, %v1285
      %v1302 = vadd.f32 %v1262, %v1286
      %v1303 = vadd.f32 %v1263, %v1287
      %v1304 = vadd.f32 %v1264, %v1288
      %v1305 = vadd.f32 %v1265, %v1289
      %v1306 = vadd.f32 %v1266, %v1282
      %v1307 = vadd.f32 %v1267, %v1283
      %v1308 = vadd.f32 %v1268, %v1284
      %v1309 = vadd.f32 %v1269, %v1285
      %v1310 = vadd.f32 %v1270, %v1286
      %v1311 = vadd.f32 %v1271, %v1287
      %v1312 = vadd.f32 %v1272, %v1288
      %v1313 = vadd.f32 %v1273, %v1289
      %v1314 = vadd.f32 %v1274, %v1282
      %v1315 = vadd.f32 %v1275, %v1283
      %v1316 = vadd.f32 %v1276, %v1284
      %v1317 = vadd.f32 %v1277, %v1285
      %v1318 = vadd.f32 %v1278, %v1286
      %v1319 = vadd.f32 %v1279, %v1287
      %v1320 = vadd.f32 %v1280, %v1288
      %v1321 = vadd.f32 %v1281, %v1289
      %v1322 = vld [vmem:[%s227] sm:$0xff]
      %v1323 = vld [vmem:[%s227 + $0x8] sm:$0xff]
      %v1324 = vld [vmem:[%s227 + $0x10] sm:$0xff]
      %v1325 = vld [vmem:[%s227 + $0x18] sm:$0xff]
      %v1326 = vld [vmem:[%s227 + $0x20] sm:$0xff]
      %v1327 = vld [vmem:[%s227 + $0x28] sm:$0xff]
      %v1328 = vld [vmem:[%s227 + $0x30] sm:$0xff]
      %v1329 = vld [vmem:[%s227 + $0x38] sm:$0xff]
      %v1330 = vadd.f32 %v1290, %v1322
      %v1331 = vadd.f32 %v1291, %v1323
      %v1332 = vadd.f32 %v1292, %v1322
      %v1333 = vadd.f32 %v1293, %v1323
      %v1334 = vadd.f32 %v1294, %v1322
      %v1335 = vadd.f32 %v1295, %v1323
      %v1336 = vadd.f32 %v1296, %v1322
      %v1337 = vadd.f32 %v1297, %v1323
      %v1338 = vadd.f32 %v1298, %v1324
      %v1339 = vadd.f32 %v1299, %v1325
      %v1340 = vadd.f32 %v1300, %v1324
      %v1341 = vadd.f32 %v1301, %v1325
      %v1342 = vadd.f32 %v1302, %v1324
      %v1343 = vadd.f32 %v1303, %v1325
      %v1344 = vadd.f32 %v1304, %v1324
      %v1345 = vadd.f32 %v1305, %v1325
      %v1346 = vadd.f32 %v1306, %v1326
      %v1347 = vadd.f32 %v1307, %v1327
      %v1348 = vadd.f32 %v1308, %v1326
      %v1349 = vadd.f32 %v1309, %v1327
      %v1350 = vadd.f32 %v1310, %v1326
      %v1351 = vadd.f32 %v1311, %v1327
      %v1352 = vadd.f32 %v1312, %v1326
      %v1353 = vadd.f32 %v1313, %v1327
      %v1354 = vadd.f32 %v1314, %v1328
      %v1355 = vadd.f32 %v1315, %v1329
      %v1356 = vadd.f32 %v1316, %v1328
      %v1357 = vadd.f32 %v1317, %v1329
      %v1358 = vadd.f32 %v1318, %v1328
      %v1359 = vadd.f32 %v1319, %v1329
      %v1360 = vadd.f32 %v1320, %v1328
      %v1361 = vadd.f32 %v1321, %v1329
      %v1362 = vsel %vm347, %v1330, -inf
      %1363 = vmax.xlane.f32.xlu0 %v1362
      %v1364 = vpop.xlane.xlu0 %1363
      %v1365 = vsel %vm347, %v1331, -inf
      %1366 = vmax.xlane.f32.xlu0 %v1365
      %v1367 = vpop.xlane.xlu0 %1366
      %v1368 = vsel %vm347, %v1332, -inf
      %1369 = vmax.xlane.f32.xlu0 %v1368
      %v1370 = vpop.xlane.xlu0 %1369
      %v1371 = vsel %vm347, %v1333, -inf
      %1372 = vmax.xlane.f32.xlu0 %v1371
      %v1373 = vpop.xlane.xlu0 %1372
      %v1374 = vsel %vm347, %v1334, -inf
      %1375 = vmax.xlane.f32.xlu0 %v1374
      %v1376 = vpop.xlane.xlu0 %1375
      %v1377 = vsel %vm347, %v1335, -inf
      %1378 = vmax.xlane.f32.xlu0 %v1377
      %v1379 = vpop.xlane.xlu0 %1378
      %v1380 = vsel %vm347, %v1336, -inf
      %1381 = vmax.xlane.f32.xlu0 %v1380
      %v1382 = vpop.xlane.xlu0 %1381
      %v1383 = vsel %vm347, %v1337, -inf
      %1384 = vmax.xlane.f32.xlu0 %v1383
      %v1385 = vpop.xlane.xlu0 %1384
      %v1386 = vsel %vm347, %v1338, -inf
      %1387 = vmax.xlane.f32.xlu0 %v1386
      %v1388 = vpop.xlane.xlu0 %1387
      %v1389 = vsel %vm347, %v1339, -inf
      %1390 = vmax.xlane.f32.xlu0 %v1389
      %v1391 = vpop.xlane.xlu0 %1390
      %v1392 = vsel %vm347, %v1340, -inf
      %1393 = vmax.xlane.f32.xlu0 %v1392
      %v1394 = vpop.xlane.xlu0 %1393
      %v1395 = vsel %vm347, %v1341, -inf
      %1396 = vmax.xlane.f32.xlu0 %v1395
      %v1397 = vpop.xlane.xlu0 %1396
      %v1398 = vsel %vm347, %v1342, -inf
      %1399 = vmax.xlane.f32.xlu0 %v1398
      %v1400 = vpop.xlane.xlu0 %1399
      %v1401 = vsel %vm347, %v1343, -inf
      %1402 = vmax.xlane.f32.xlu0 %v1401
      %v1403 = vpop.xlane.xlu0 %1402
      %v1404 = vsel %vm347, %v1344, -inf
      %1405 = vmax.xlane.f32.xlu0 %v1404
      %v1406 = vpop.xlane.xlu0 %1405
      %v1407 = vsel %vm347, %v1345, -inf
      %1408 = vmax.xlane.f32.xlu0 %v1407
      %v1409 = vpop.xlane.xlu0 %1408
      %v1410 = vsel %vm347, %v1346, -inf
      %1411 = vmax.xlane.f32.xlu0 %v1410
      %v1412 = vpop.xlane.xlu0 %1411
      %v1413 = vsel %vm347, %v1347, -inf
      %1414 = vmax.xlane.f32.xlu0 %v1413
      %v1415 = vpop.xlane.xlu0 %1414
      %v1416 = vsel %vm347, %v1348, -inf
      %1417 = vmax.xlane.f32.xlu0 %v1416
      %v1418 = vpop.xlane.xlu0 %1417
      %v1419 = vsel %vm347, %v1349, -inf
      %1420 = vmax.xlane.f32.xlu0 %v1419
      %v1421 = vpop.xlane.xlu0 %1420
      %v1422 = vsel %vm347, %v1350, -inf
      %1423 = vmax.xlane.f32.xlu0 %v1422
      %v1424 = vpop.xlane.xlu0 %1423
      %v1425 = vsel %vm347, %v1351, -inf
      %1426 = vmax.xlane.f32.xlu0 %v1425
      %v1427 = vpop.xlane.xlu0 %1426
      %v1428 = vsel %vm347, %v1352, -inf
      %1429 = vmax.xlane.f32.xlu0 %v1428
      %v1430 = vpop.xlane.xlu0 %1429
      %v1431 = vsel %vm347, %v1353, -inf
      %1432 = vmax.xlane.f32.xlu0 %v1431
      %v1433 = vpop.xlane.xlu0 %1432
      %v1434 = vsel %vm347, %v1354, -inf
      %1435 = vmax.xlane.f32.xlu0 %v1434
      %v1436 = vpop.xlane.xlu0 %1435
      %v1437 = vsel %vm347, %v1355, -inf
      %1438 = vmax.xlane.f32.xlu0 %v1437
      %v1439 = vpop.xlane.xlu0 %1438
      %v1440 = vsel %vm347, %v1356, -inf
      %1441 = vmax.xlane.f32.xlu0 %v1440
      %v1442 = vpop.xlane.xlu0 %1441
      %v1443 = vsel %vm347, %v1357, -inf
      %1444 = vmax.xlane.f32.xlu0 %v1443
      %v1445 = vpop.xlane.xlu0 %1444
      %v1446 = vsel %vm347, %v1358, -inf
      %1447 = vmax.xlane.f32.xlu0 %v1446
      %v1448 = vpop.xlane.xlu0 %1447
      %v1449 = vsel %vm347, %v1359, -inf
      %1450 = vmax.xlane.f32.xlu0 %v1449
      %v1451 = vpop.xlane.xlu0 %1450
      %v1452 = vsel %vm347, %v1360, -inf
      %1453 = vmax.xlane.f32.xlu0 %v1452
      %v1454 = vpop.xlane.xlu0 %1453
      %v1455 = vsel %vm347, %v1361, -inf
      %1456 = vmax.xlane.f32.xlu0 %v1455
      %v1457 = vpop.xlane.xlu0 %1456
      %v1458 = vsub.f32 %v1330, %v1364
      %v1459 = vsub.f32 %v1331, %v1367
      %v1460 = vsub.f32 %v1332, %v1370
      %v1461 = vsub.f32 %v1333, %v1373
      %v1462 = vsub.f32 %v1334, %v1376
      %v1463 = vsub.f32 %v1335, %v1379
      %v1464 = vsub.f32 %v1336, %v1382
      %v1465 = vsub.f32 %v1337, %v1385
      %v1466 = vsub.f32 %v1338, %v1388
      %v1467 = vsub.f32 %v1339, %v1391
      %v1468 = vsub.f32 %v1340, %v1394
      %v1469 = vsub.f32 %v1341, %v1397
      %v1470 = vsub.f32 %v1342, %v1400
      %v1471 = vsub.f32 %v1343, %v1403
      %v1472 = vsub.f32 %v1344, %v1406
      %v1473 = vsub.f32 %v1345, %v1409
      %v1474 = vsub.f32 %v1346, %v1412
      %v1475 = vsub.f32 %v1347, %v1415
      %v1476 = vsub.f32 %v1348, %v1418
      %v1477 = vsub.f32 %v1349, %v1421
      %v1478 = vsub.f32 %v1350, %v1424
      %v1479 = vsub.f32 %v1351, %v1427
      %v1480 = vsub.f32 %v1352, %v1430
      %v1481 = vsub.f32 %v1353, %v1433
      %v1482 = vsub.f32 %v1354, %v1436
      %v1483 = vsub.f32 %v1355, %v1439
      %v1484 = vsub.f32 %v1356, %v1442
      %v1485 = vsub.f32 %v1357, %v1445
      %v1486 = vsub.f32 %v1358, %v1448
      %v1487 = vsub.f32 %v1359, %v1451
      %v1488 = vsub.f32 %v1360, %v1454
      %v1489 = vsub.f32 %v1361, %v1457
      %v1490 = vmul.f32 %v1458, 1.442695
      %v1491 = vpow.pop %v1490
      %v1492 = vmul.f32 %v1459, 1.442695
      %v1493 = vpow.pop %v1492
      %v1494 = vmul.f32 %v1460, 1.442695
      %v1495 = vpow.pop %v1494
      %v1496 = vmul.f32 %v1461, 1.442695
      %v1497 = vpow.pop %v1496
      %v1498 = vmul.f32 %v1462, 1.442695
      %v1499 = vpow.pop %v1498
      %v1500 = vmul.f32 %v1463, 1.442695
      %v1501 = vpow.pop %v1500
      %v1502 = vmul.f32 %v1464, 1.442695
      %v1503 = vpow.pop %v1502
      %v1504 = vmul.f32 %v1465, 1.442695
      %v1505 = vpow.pop %v1504
      %v1506 = vmul.f32 %v1466, 1.442695
      %v1507 = vpow.pop %v1506
      %v1508 = vmul.f32 %v1467, 1.442695
      %v1509 = vpow.pop %v1508
      %v1510 = vmul.f32 %v1468, 1.442695
      %v1511 = vpow.pop %v1510
      %v1512 = vmul.f32 %v1469, 1.442695
      %v1513 = vpow.pop %v1512
      %v1514 = vmul.f32 %v1470, 1.442695
      %v1515 = vpow.pop %v1514
      %v1516 = vmul.f32 %v1471, 1.442695
      %v1517 = vpow.pop %v1516
      %v1518 = vmul.f32 %v1472, 1.442695
      %v1519 = vpow.pop %v1518
      %v1520 = vmul.f32 %v1473, 1.442695
      %v1521 = vpow.pop %v1520
      %v1522 = vmul.f32 %v1474, 1.442695
      %v1523 = vpow.pop %v1522
      %v1524 = vmul.f32 %v1475, 1.442695
      %v1525 = vpow.pop %v1524
      %v1526 = vmul.f32 %v1476, 1.442695
      %v1527 = vpow.pop %v1526
      %v1528 = vmul.f32 %v1477, 1.442695
      %v1529 = vpow.pop %v1528
      %v1530 = vmul.f32 %v1478, 1.442695
      %v1531 = vpow.pop %v1530
      %v1532 = vmul.f32 %v1479, 1.442695
      %v1533 = vpow.pop %v1532
      %v1534 = vmul.f32 %v1480, 1.442695
      %v1535 = vpow.pop %v1534
      %v1536 = vmul.f32 %v1481, 1.442695
      %v1537 = vpow.pop %v1536
      %v1538 = vmul.f32 %v1482, 1.442695
      %v1539 = vpow.pop %v1538
      %v1540 = vmul.f32 %v1483, 1.442695
      %v1541 = vpow.pop %v1540
      %v1542 = vmul.f32 %v1484, 1.442695
      %v1543 = vpow.pop %v1542
      %v1544 = vmul.f32 %v1485, 1.442695
      %v1545 = vpow.pop %v1544
      %v1546 = vmul.f32 %v1486, 1.442695
      %v1547 = vpow.pop %v1546
      %v1548 = vmul.f32 %v1487, 1.442695
      %v1549 = vpow.pop %v1548
      %v1550 = vmul.f32 %v1488, 1.442695
      %v1551 = vpow.pop %v1550
      %v1552 = vmul.f32 %v1489, 1.442695
      %v1553 = vpow.pop %v1552
      %v1554 = vsel %vm347, %v1491, 0.0
      %1555 = vadd.xlane.f32.xlu0 %v1554
      %v1556 = vpop.xlane.xlu0 %1555
      %v1557 = vsel %vm347, %v1493, 0.0
      %1558 = vadd.xlane.f32.xlu0 %v1557
      %v1559 = vpop.xlane.xlu0 %1558
      %v1560 = vsel %vm347, %v1495, 0.0
      %1561 = vadd.xlane.f32.xlu0 %v1560
      %v1562 = vpop.xlane.xlu0 %1561
      %v1563 = vsel %vm347, %v1497, 0.0
      %1564 = vadd.xlane.f32.xlu0 %v1563
      %v1565 = vpop.xlane.xlu0 %1564
      %v1566 = vsel %vm347, %v1499, 0.0
      %1567 = vadd.xlane.f32.xlu0 %v1566
      %v1568 = vpop.xlane.xlu0 %1567
      %v1569 = vsel %vm347, %v1501, 0.0
      %1570 = vadd.xlane.f32.xlu0 %v1569
      %v1571 = vpop.xlane.xlu0 %1570
      %v1572 = vsel %vm347, %v1503, 0.0
      %1573 = vadd.xlane.f32.xlu0 %v1572
      %v1574 = vpop.xlane.xlu0 %1573
      %v1575 = vsel %vm347, %v1505, 0.0
      %1576 = vadd.xlane.f32.xlu0 %v1575
      %v1577 = vpop.xlane.xlu0 %1576
      %v1578 = vsel %vm347, %v1507, 0.0
      %1579 = vadd.xlane.f32.xlu0 %v1578
      %v1580 = vpop.xlane.xlu0 %1579
      %v1581 = vsel %vm347, %v1509, 0.0
      %1582 = vadd.xlane.f32.xlu0 %v1581
      %v1583 = vpop.xlane.xlu0 %1582
      %v1584 = vsel %vm347, %v1511, 0.0
      %1585 = vadd.xlane.f32.xlu0 %v1584
      %v1586 = vpop.xlane.xlu0 %1585
      %v1587 = vsel %vm347, %v1513, 0.0
      %1588 = vadd.xlane.f32.xlu0 %v1587
      %v1589 = vpop.xlane.xlu0 %1588
      %v1590 = vsel %vm347, %v1515, 0.0
      %1591 = vadd.xlane.f32.xlu0 %v1590
      %v1592 = vpop.xlane.xlu0 %1591
      %v1593 = vsel %vm347, %v1517, 0.0
      %1594 = vadd.xlane.f32.xlu0 %v1593
      %v1595 = vpop.xlane.xlu0 %1594
      %v1596 = vsel %vm347, %v1519, 0.0
      %1597 = vadd.xlane.f32.xlu0 %v1596
      %v1598 = vpop.xlane.xlu0 %1597
      %v1599 = vsel %vm347, %v1521, 0.0
      %1600 = vadd.xlane.f32.xlu0 %v1599
      %v1601 = vpop.xlane.xlu0 %1600
      %v1602 = vsel %vm347, %v1523, 0.0
      %1603 = vadd.xlane.f32.xlu0 %v1602
      %v1604 = vpop.xlane.xlu0 %1603
      %v1605 = vsel %vm347, %v1525, 0.0
      %1606 = vadd.xlane.f32.xlu0 %v1605
      %v1607 = vpop.xlane.xlu0 %1606
      %v1608 = vsel %vm347, %v1527, 0.0
      %1609 = vadd.xlane.f32.xlu0 %v1608
      %v1610 = vpop.xlane.xlu0 %1609
      %v1611 = vsel %vm347, %v1529, 0.0
      %1612 = vadd.xlane.f32.xlu0 %v1611
      %v1613 = vpop.xlane.xlu0 %1612
      %v1614 = vsel %vm347, %v1531, 0.0
      %1615 = vadd.xlane.f32.xlu0 %v1614
      %v1616 = vpop.xlane.xlu0 %1615
      %v1617 = vsel %vm347, %v1533, 0.0
      %1618 = vadd.xlane.f32.xlu0 %v1617
      %v1619 = vpop.xlane.xlu0 %1618
      %v1620 = vsel %vm347, %v1535, 0.0
      %1621 = vadd.xlane.f32.xlu0 %v1620
      %v1622 = vpop.xlane.xlu0 %1621
      %v1623 = vsel %vm347, %v1537, 0.0
      %1624 = vadd.xlane.f32.xlu0 %v1623
      %v1625 = vpop.xlane.xlu0 %1624
      %v1626 = vsel %vm347, %v1539, 0.0
      %1627 = vadd.xlane.f32.xlu0 %v1626
      %v1628 = vpop.xlane.xlu0 %1627
      %v1629 = vsel %vm347, %v1541, 0.0
      %1630 = vadd.xlane.f32.xlu0 %v1629
      %v1631 = vpop.xlane.xlu0 %1630
      %v1632 = vsel %vm347, %v1543, 0.0
      %1633 = vadd.xlane.f32.xlu0 %v1632
      %v1634 = vpop.xlane.xlu0 %1633
      %v1635 = vsel %vm347, %v1545, 0.0
      %1636 = vadd.xlane.f32.xlu0 %v1635
      %v1637 = vpop.xlane.xlu0 %1636
      %v1638 = vsel %vm347, %v1547, 0.0
      %1639 = vadd.xlane.f32.xlu0 %v1638
      %v1640 = vpop.xlane.xlu0 %1639
      %v1641 = vsel %vm347, %v1549, 0.0
      %1642 = vadd.xlane.f32.xlu0 %v1641
      %v1643 = vpop.xlane.xlu0 %1642
      %v1644 = vsel %vm347, %v1551, 0.0
      %1645 = vadd.xlane.f32.xlu0 %v1644
      %v1646 = vpop.xlane.xlu0 %1645
      %v1647 = vsel %vm347, %v1553, 0.0
      %1648 = vadd.xlane.f32.xlu0 %v1647
      %v1649 = vpop.xlane.xlu0 %1648
      %v1650 = vrcp.pop %v1556
      %v1651 = vrcp.pop %v1559
      %v1652 = vrcp.pop %v1562
      %v1653 = vrcp.pop %v1565
      %v1654 = vrcp.pop %v1568
      %v1655 = vrcp.pop %v1571
      %v1656 = vrcp.pop %v1574
      %v1657 = vrcp.pop %v1577
      %v1658 = vrcp.pop %v1580
      %v1659 = vrcp.pop %v1583
      %v1660 = vrcp.pop %v1586
      %v1661 = vrcp.pop %v1589
      %v1662 = vrcp.pop %v1592
      %v1663 = vrcp.pop %v1595
      %v1664 = vrcp.pop %v1598
      %v1665 = vrcp.pop %v1601
      %v1666 = vrcp.pop %v1604
      %v1667 = vrcp.pop %v1607
      %v1668 = vrcp.pop %v1610
      %v1669 = vrcp.pop %v1613
      %v1670 = vrcp.pop %v1616
      %v1671 = vrcp.pop %v1619
      %v1672 = vrcp.pop %v1622
      %v1673 = vrcp.pop %v1625
      %v1674 = vrcp.pop %v1628
      %v1675 = vrcp.pop %v1631
      %v1676 = vrcp.pop %v1634
      %v1677 = vrcp.pop %v1637
      %v1678 = vrcp.pop %v1640
      %v1679 = vrcp.pop %v1643
      %v1680 = vrcp.pop %v1646
      %v1681 = vrcp.pop %v1649
      %v1682 = vmul.f32 %v1491, %v1650
      %v1683 = vmul.f32 %v1493, %v1651
      %v1684 = vmul.f32 %v1495, %v1652
      %v1685 = vmul.f32 %v1497, %v1653
      %v1686 = vmul.f32 %v1499, %v1654
      %v1687 = vmul.f32 %v1501, %v1655
      %v1688 = vmul.f32 %v1503, %v1656
      %v1689 = vmul.f32 %v1505, %v1657
      %v1690 = vmul.f32 %v1507, %v1658
      %v1691 = vmul.f32 %v1509, %v1659
      %v1692 = vmul.f32 %v1511, %v1660
      %v1693 = vmul.f32 %v1513, %v1661
      %v1694 = vmul.f32 %v1515, %v1662
      %v1695 = vmul.f32 %v1517, %v1663
      %v1696 = vmul.f32 %v1519, %v1664
      %v1697 = vmul.f32 %v1521, %v1665
      %v1698 = vmul.f32 %v1523, %v1666
      %v1699 = vmul.f32 %v1525, %v1667
      %v1700 = vmul.f32 %v1527, %v1668
      %v1701 = vmul.f32 %v1529, %v1669
      %v1702 = vmul.f32 %v1531, %v1670
      %v1703 = vmul.f32 %v1533, %v1671
      %v1704 = vmul.f32 %v1535, %v1672
      %v1705 = vmul.f32 %v1537, %v1673
      %v1706 = vmul.f32 %v1539, %v1674
      %v1707 = vmul.f32 %v1541, %v1675
      %v1708 = vmul.f32 %v1543, %v1676
      %v1709 = vmul.f32 %v1545, %v1677
      %v1710 = vmul.f32 %v1547, %v1678
      %v1711 = vmul.f32 %v1549, %v1679
      %v1712 = vmul.f32 %v1551, %v1680
      %v1713 = vmul.f32 %v1553, %v1681
      %v1714 = vpack.c.bf16 %v1683, %v1682
      %v1715 = vpack.c.bf16 %v1685, %v1684
      %v1716 = vpack.c.bf16 %v1687, %v1686
      %v1717 = vpack.c.bf16 %v1689, %v1688
      %v1718 = vpack.c.bf16 %v1691, %v1690
      %v1719 = vpack.c.bf16 %v1693, %v1692
      %v1720 = vpack.c.bf16 %v1695, %v1694
      %v1721 = vpack.c.bf16 %v1697, %v1696
      %v1722 = vpack.c.bf16 %v1699, %v1698
      %v1723 = vpack.c.bf16 %v1701, %v1700
      %v1724 = vpack.c.bf16 %v1703, %v1702
      %v1725 = vpack.c.bf16 %v1705, %v1704
      %v1726 = vpack.c.bf16 %v1707, %v1706
      %v1727 = vpack.c.bf16 %v1709, %v1708
      %v1728 = vpack.c.bf16 %v1711, %v1710
      %v1729 = vpack.c.bf16 %v1713, %v1712
      %v1732 = vunpack.c.l.b16 %v257
      %v1733 = vunpack.c.l.b16 %v258
      %v1734 = vpack.c.b16 %v1733, %v1732
      %v1737 = vsel %vm347, %v1714, 0
      %1739 = vmatprep.subr.bf16.mxu0 0
      %1740 = vmatpush1.bf16.msra.mxu0 %v1734
      %1741 = vmatprep.subr.bf16.mxu0 0
      %1742 = vmatpush1.bf16.msra.mxu0 0
      %1743 = vmatprep.subr.bf16.mxu0 0
      %1744 = vmatpush1.bf16.msra.mxu0 0
      %1745 = vmatprep.subr.bf16.mxu0 0
      %1746 = vmatpush1.bf16.msra.mxu0 0
      %1747 = vmatprep.subr.bf16.mxu0 0
      %1748 = vmatpush1.bf16.msra.mxu0 0
      %1749 = vmatprep.subr.bf16.mxu0 0
      %1750 = vmatpush1.bf16.msra.mxu0 0
      %1751 = vmatprep.subr.bf16.mxu0 0
      %1752 = vmatpush1.bf16.msra.mxu0 0
      %1753 = vmatprep.subr.bf16.mxu0 0
      %1754 = vmatpush1.bf16.msra.mxu0 0
      %1755 = vmatprep.subr.bf16.mxu0 0
      %1756 = vmatpush1.bf16.msra.mxu0 0
      %1757 = vmatprep.subr.bf16.mxu0 0
      %1758 = vmatpush1.bf16.msra.mxu0 0
      %1759 = vmatprep.subr.bf16.mxu0 0
      %1760 = vmatpush1.bf16.msra.mxu0 0
      %1761 = vmatprep.subr.bf16.mxu0 0
      %1762 = vmatpush1.bf16.msra.mxu0 0
      %1763 = vmatprep.subr.bf16.mxu0 0
      %1764 = vmatpush1.bf16.msra.mxu0 0
      %1765 = vmatprep.subr.bf16.mxu0 0
      %1766 = vmatpush1.bf16.msra.mxu0 0
      %1767 = vmatprep.subr.bf16.mxu0 0
      %1768 = vmatpush1.bf16.msra.mxu0 0
      %1769 = vmatprep.subr.bf16.mxu0 0
      %1770 = vmatpush1.bf16.msra.mxu0 0
      %1771 = vmatprep.mubr.bf16.mxu0 0
      %1772 = vmatmul.mubr.bf16.gmra.mrb[0].mxu0 %v1737
      %v1773 = vpop.f32.mrb[0].mxu0
      %v1774 = vadd.f32 0.0, %v1773
      %v1775 = vpop.f32.mrb[0].mxu0
      %v1776 = vpop.f32.mrb[0].mxu0
      %v1777 = vadd.f32 0.0, %v1776
      %v1778 = vpop.f32.mrb[0].mxu0
      %1779 = vdwg.mxu0
      %v1782 = vunpack.c.l.b16 %v259
      %v1783 = vunpack.c.l.b16 %v260
      %v1784 = vpack.c.b16 %v1783, %v1782
      %v1787 = vsel %vm347, %v1715, 0
      %1789 = vmatprep.subr.bf16.mxu0 0
      %1790 = vmatpush1.bf16.msra.mxu0 %v1784
      %1791 = vmatprep.subr.bf16.mxu0 0
      %1792 = vmatpush1.bf16.msra.mxu0 0
      %1793 = vmatprep.subr.bf16.mxu0 0
      %1794 = vmatpush1.bf16.msra.mxu0 0
      %1795 = vmatprep.subr.bf16.mxu0 0
      %1796 = vmatpush1.bf16.msra.mxu0 0
      %1797 = vmatprep.subr.bf16.mxu0 0
      %1798 = vmatpush1.bf16.msra.mxu0 0
      %1799 = vmatprep.subr.bf16.mxu0 0
      %1800 = vmatpush1.bf16.msra.mxu0 0
      %1801 = vmatprep.subr.bf16.mxu0 0
      %1802 = vmatpush1.bf16.msra.mxu0 0
      %1803 = vmatprep.subr.bf16.mxu0 0
      %1804 = vmatpush1.bf16.msra.mxu0 0
      %1805 = vmatprep.subr.bf16.mxu0 0
      %1806 = vmatpush1.bf16.msra.mxu0 0
      %1807 = vmatprep.subr.bf16.mxu0 0
      %1808 = vmatpush1.bf16.msra.mxu0 0
      %1809 = vmatprep.subr.bf16.mxu0 0
      %1810 = vmatpush1.bf16.msra.mxu0 0
      %1811 = vmatprep.subr.bf16.mxu0 0
      %1812 = vmatpush1.bf16.msra.mxu0 0
      %1813 = vmatprep.subr.bf16.mxu0 0
      %1814 = vmatpush1.bf16.msra.mxu0 0
      %1815 = vmatprep.subr.bf16.mxu0 0
      %1816 = vmatpush1.bf16.msra.mxu0 0
      %1817 = vmatprep.subr.bf16.mxu0 0
      %1818 = vmatpush1.bf16.msra.mxu0 0
      %1819 = vmatprep.subr.bf16.mxu0 0
      %1820 = vmatpush1.bf16.msra.mxu0 0
      %1821 = vmatprep.mubr.bf16.mxu0 0
      %1822 = vmatmul.mubr.bf16.gmra.mrb[0].mxu0 %v1787
      %v1823 = vpop.f32.mrb[0].mxu0
      %v1824 = vadd.f32 0.0, %v1823
      %v1825 = vpop.f32.mrb[0].mxu0
      %v1826 = vpop.f32.mrb[0].mxu0
      %v1827 = vadd.f32 0.0, %v1826
      %v1828 = vpop.f32.mrb[0].mxu0
      %1829 = vdwg.mxu0
      %v1832 = vunpack.c.l.b16 %v261
      %v1833 = vunpack.c.l.b16 %v262
      %v1834 = vpack.c.b16 %v1833, %v1832
      %v1837 = vsel %vm347, %v1716, 0
      %1839 = vmatprep.subr.bf16.mxu0 0
      %1840 = vmatpush1.bf16.msra.mxu0 %v1834
      %1841 = vmatprep.subr.bf16.mxu0 0
      %1842 = vmatpush1.bf16.msra.mxu0 0
      %1843 = vmatprep.subr.bf16.mxu0 0
      %1844 = vmatpush1.bf16.msra.mxu0 0
      %1845 = vmatprep.subr.bf16.mxu0 0
      %1846 = vmatpush1.bf16.msra.mxu0 0
      %1847 = vmatprep.subr.bf16.mxu0 0
      %1848 = vmatpush1.bf16.msra.mxu0 0
      %1849 = vmatprep.subr.bf16.mxu0 0
      %1850 = vmatpush1.bf16.msra.mxu0 0
      %1851 = vmatprep.subr.bf16.mxu0 0
      %1852 = vmatpush1.bf16.msra.mxu0 0
      %1853 = vmatprep.subr.bf16.mxu0 0
      %1854 = vmatpush1.bf16.msra.mxu0 0
      %1855 = vmatprep.subr.bf16.mxu0 0
      %1856 = vmatpush1.bf16.msra.mxu0 0
      %1857 = vmatprep.subr.bf16.mxu0 0
      %1858 = vmatpush1.bf16.msra.mxu0 0
      %1859 = vmatprep.subr.bf16.mxu0 0
      %1860 = vmatpush1.bf16.msra.mxu0 0
      %1861 = vmatprep.subr.bf16.mxu0 0
      %1862 = vmatpush1.bf16.msra.mxu0 0
      %1863 = vmatprep.subr.bf16.mxu0 0
      %1864 = vmatpush1.bf16.msra.mxu0 0
      %1865 = vmatprep.subr.bf16.mxu0 0
      %1866 = vmatpush1.bf16.msra.mxu0 0
      %1867 = vmatprep.subr.bf16.mxu0 0
      %1868 = vmatpush1.bf16.msra.mxu0 0
      %1869 = vmatprep.subr.bf16.mxu0 0
      %1870 = vmatpush1.bf16.msra.mxu0 0
      %1871 = vmatprep.mubr.bf16.mxu0 0
      %1872 = vmatmul.mubr.bf16.gmra.mrb[0].mxu0 %v1837
      %v1873 = vpop.f32.mrb[0].mxu0
      %v1874 = vadd.f32 0.0, %v1873
      %v1875 = vpop.f32.mrb[0].mxu0
      %v1876 = vpop.f32.mrb[0].mxu0
      %v1877 = vadd.f32 0.0, %v1876
      %v1878 = vpop.f32.mrb[0].mxu0
      %1879 = vdwg.mxu0
      %v1882 = vunpack.c.l.b16 %v263
      %v1883 = vunpack.c.l.b16 %v264
      %v1884 = vpack.c.b16 %v1883, %v1882
      %v1887 = vsel %vm347, %v1717, 0
      %1889 = vmatprep.subr.bf16.mxu0 0
      %1890 = vmatpush1.bf16.msra.mxu0 %v1884
      %1891 = vmatprep.subr.bf16.mxu0 0
      %1892 = vmatpush1.bf16.msra.mxu0 0
      %1893 = vmatprep.subr.bf16.mxu0 0
      %1894 = vmatpush1.bf16.msra.mxu0 0
      %1895 = vmatprep.subr.bf16.mxu0 0
      %1896 = vmatpush1.bf16.msra.mxu0 0
      %1897 = vmatprep.subr.bf16.mxu0 0
      %1898 = vmatpush1.bf16.msra.mxu0 0
      %1899 = vmatprep.subr.bf16.mxu0 0
      %1900 = vmatpush1.bf16.msra.mxu0 0
      %1901 = vmatprep.subr.bf16.mxu0 0
      %1902 = vmatpush1.bf16.msra.mxu0 0
      %1903 = vmatprep.subr.bf16.mxu0 0
      %1904 = vmatpush1.bf16.msra.mxu0 0
      %1905 = vmatprep.subr.bf16.mxu0 0
      %1906 = vmatpush1.bf16.msra.mxu0 0
      %1907 = vmatprep.subr.bf16.mxu0 0
      %1908 = vmatpush1.bf16.msra.mxu0 0
      %1909 = vmatprep.subr.bf16.mxu0 0
      %1910 = vmatpush1.bf16.msra.mxu0 0
      %1911 = vmatprep.subr.bf16.mxu0 0
      %1912 = vmatpush1.bf16.msra.mxu0 0
      %1913 = vmatprep.subr.bf16.mxu0 0
      %1914 = vmatpush1.bf16.msra.mxu0 0
      %1915 = vmatprep.subr.bf16.mxu0 0
      %1916 = vmatpush1.bf16.msra.mxu0 0
      %1917 = vmatprep.subr.bf16.mxu0 0
      %1918 = vmatpush1.bf16.msra.mxu0 0
      %1919 = vmatprep.subr.bf16.mxu0 0
      %1920 = vmatpush1.bf16.msra.mxu0 0
      %1921 = vmatprep.mubr.bf16.mxu0 0
      %1922 = vmatmul.mubr.bf16.gmra.mrb[0].mxu0 %v1887
      %v1923 = vpop.f32.mrb[0].mxu0
      %v1924 = vadd.f32 0.0, %v1923
      %v1925 = vpop.f32.mrb[0].mxu0
      %v1926 = vpop.f32.mrb[0].mxu0
      %v1927 = vadd.f32 0.0, %v1926
      %v1928 = vpop.f32.mrb[0].mxu0
      %1929 = vdwg.mxu0
      %v1932 = vunpack.c.l.b16 %v281
      %v1933 = vunpack.c.l.b16 %v282
      %v1934 = vpack.c.b16 %v1933, %v1932
      %v1937 = vsel %vm347, %v1718, 0
      %1939 = vmatprep.subr.bf16.mxu0 0
      %1940 = vmatpush1.bf16.msra.mxu0 %v1934
      %1941 = vmatprep.subr.bf16.mxu0 0
      %1942 = vmatpush1.bf16.msra.mxu0 0
      %1943 = vmatprep.subr.bf16.mxu0 0
      %1944 = vmatpush1.bf16.msra.mxu0 0
      %1945 = vmatprep.subr.bf16.mxu0 0
      %1946 = vmatpush1.bf16.msra.mxu0 0
      %1947 = vmatprep.subr.bf16.mxu0 0
      %1948 = vmatpush1.bf16.msra.mxu0 0
      %1949 = vmatprep.subr.bf16.mxu0 0
      %1950 = vmatpush1.bf16.msra.mxu0 0
      %1951 = vmatprep.subr.bf16.mxu0 0
      %1952 = vmatpush1.bf16.msra.mxu0 0
      %1953 = vmatprep.subr.bf16.mxu0 0
      %1954 = vmatpush1.bf16.msra.mxu0 0
      %1955 = vmatprep.subr.bf16.mxu0 0
      %1956 = vmatpush1.bf16.msra.mxu0 0
      %1957 = vmatprep.subr.bf16.mxu0 0
      %1958 = vmatpush1.bf16.msra.mxu0 0
      %1959 = vmatprep.subr.bf16.mxu0 0
      %1960 = vmatpush1.bf16.msra.mxu0 0
      %1961 = vmatprep.subr.bf16.mxu0 0
      %1962 = vmatpush1.bf16.msra.mxu0 0
      %1963 = vmatprep.subr.bf16.mxu0 0
      %1964 = vmatpush1.bf16.msra.mxu0 0
      %1965 = vmatprep.subr.bf16.mxu0 0
      %1966 = vmatpush1.bf16.msra.mxu0 0
      %1967 = vmatprep.subr.bf16.mxu0 0
      %1968 = vmatpush1.bf16.msra.mxu0 0
      %1969 = vmatprep.subr.bf16.mxu0 0
      %1970 = vmatpush1.bf16.msra.mxu0 0
      %1971 = vmatprep.mubr.bf16.mxu0 0
      %1972 = vmatmul.mubr.bf16.gmra.mrb[0].mxu0 %v1937
      %v1973 = vpop.f32.mrb[0].mxu0
      %v1974 = vadd.f32 0.0, %v1973
      %v1975 = vpop.f32.mrb[0].mxu0
      %v1976 = vpop.f32.mrb[0].mxu0
      %v1977 = vadd.f32 0.0, %v1976
      %v1978 = vpop.f32.mrb[0].mxu0
      %1979 = vdwg.mxu0
      %v1982 = vunpack.c.l.b16 %v283
      %v1983 = vunpack.c.l.b16 %v284
      %v1984 = vpack.c.b16 %v1983, %v1982
      %v1987 = vsel %vm347, %v1719, 0
      %1989 = vmatprep.subr.bf16.mxu0 0
      %1990 = vmatpush1.bf16.msra.mxu0 %v1984
      %1991 = vmatprep.subr.bf16.mxu0 0
      %1992 = vmatpush1.bf16.msra.mxu0 0
      %1993 = vmatprep.subr.bf16.mxu0 0
      %1994 = vmatpush1.bf16.msra.mxu0 0
      %1995 = vmatprep.subr.bf16.mxu0 0
      %1996 = vmatpush1.bf16.msra.mxu0 0
      %1997 = vmatprep.subr.bf16.mxu0 0
      %1998 = vmatpush1.bf16.msra.mxu0 0
      %1999 = vmatprep.subr.bf16.mxu0 0
      %2000 = vmatpush1.bf16.msra.mxu0 0
      %2001 = vmatprep.subr.bf16.mxu0 0
      %2002 = vmatpush1.bf16.msra.mxu0 0
      %2003 = vmatprep.subr.bf16.mxu0 0
      %2004 = vmatpush1.bf16.msra.mxu0 0
      %2005 = vmatprep.subr.bf16.mxu0 0
      %2006 = vmatpush1.bf16.msra.mxu0 0
      %2007 = vmatprep.subr.bf16.mxu0 0
      %2008 = vmatpush1.bf16.msra.mxu0 0
      %2009 = vmatprep.subr.bf16.mxu0 0
      %2010 = vmatpush1.bf16.msra.mxu0 0
      %2011 = vmatprep.subr.bf16.mxu0 0
      %2012 = vmatpush1.bf16.msra.mxu0 0
      %2013 = vmatprep.subr.bf16.mxu0 0
      %2014 = vmatpush1.bf16.msra.mxu0 0
      %2015 = vmatprep.subr.bf16.mxu0 0
      %2016 = vmatpush1.bf16.msra.mxu0 0
      %2017 = vmatprep.subr.bf16.mxu0 0
      %2018 = vmatpush1.bf16.msra.mxu0 0
      %2019 = vmatprep.subr.bf16.mxu0 0
      %2020 = vmatpush1.bf16.msra.mxu0 0
      %2021 = vmatprep.mubr.bf16.mxu0 0
      %2022 = vmatmul.mubr.bf16.gmra.mrb[0].mxu0 %v1987
      %v2023 = vpop.f32.mrb[0].mxu0
      %v2024 = vadd.f32 0.0, %v2023
      %v2025 = vpop.f32.mrb[0].mxu0
      %v2026 = vpop.f32.mrb[0].mxu0
      %v2027 = vadd.f32 0.0, %v2026
      %v2028 = vpop.f32.mrb[0].mxu0
      %2029 = vdwg.mxu0
      %v2032 = vunpack.c.l.b16 %v285
      %v2033 = vunpack.c.l.b16 %v286
      %v2034 = vpack.c.b16 %v2033, %v2032
      %v2037 = vsel %vm347, %v1720, 0
      %2039 = vmatprep.subr.bf16.mxu0 0
      %2040 = vmatpush1.bf16.msra.mxu0 %v2034
      %2041 = vmatprep.subr.bf16.mxu0 0
      %2042 = vmatpush1.bf16.msra.mxu0 0
      %2043 = vmatprep.subr.bf16.mxu0 0
      %2044 = vmatpush1.bf16.msra.mxu0 0
      %2045 = vmatprep.subr.bf16.mxu0 0
      %2046 = vmatpush1.bf16.msra.mxu0 0
      %2047 = vmatprep.subr.bf16.mxu0 0
      %2048 = vmatpush1.bf16.msra.mxu0 0
      %2049 = vmatprep.subr.bf16.mxu0 0
      %2050 = vmatpush1.bf16.msra.mxu0 0
      %2051 = vmatprep.subr.bf16.mxu0 0
      %2052 = vmatpush1.bf16.msra.mxu0 0
      %2053 = vmatprep.subr.bf16.mxu0 0
      %2054 = vmatpush1.bf16.msra.mxu0 0
      %2055 = vmatprep.subr.bf16.mxu0 0
      %2056 = vmatpush1.bf16.msra.mxu0 0
      %2057 = vmatprep.subr.bf16.mxu0 0
      %2058 = vmatpush1.bf16.msra.mxu0 0
      %2059 = vmatprep.subr.bf16.mxu0 0
      %2060 = vmatpush1.bf16.msra.mxu0 0
      %2061 = vmatprep.subr.bf16.mxu0 0
      %2062 = vmatpush1.bf16.msra.mxu0 0
      %2063 = vmatprep.subr.bf16.mxu0 0
      %2064 = vmatpush1.bf16.msra.mxu0 0
      %2065 = vmatprep.subr.bf16.mxu0 0
      %2066 = vmatpush1.bf16.msra.mxu0 0
      %2067 = vmatprep.subr.bf16.mxu0 0
      %2068 = vmatpush1.bf16.msra.mxu0 0
      %2069 = vmatprep.subr.bf16.mxu0 0
      %2070 = vmatpush1.bf16.msra.mxu0 0
      %2071 = vmatprep.mubr.bf16.mxu0 0
      %2072 = vmatmul.mubr.bf16.gmra.mrb[0].mxu0 %v2037
      %v2073 = vpop.f32.mrb[0].mxu0
      %v2074 = vadd.f32 0.0, %v2073
      %v2075 = vpop.f32.mrb[0].mxu0
      %v2076 = vpop.f32.mrb[0].mxu0
      %v2077 = vadd.f32 0.0, %v2076
      %v2078 = vpop.f32.mrb[0].mxu0
      %2079 = vdwg.mxu0
      %v2082 = vunpack.c.l.b16 %v287
      %v2083 = vunpack.c.l.b16 %v288
      %v2084 = vpack.c.b16 %v2083, %v2082
      %v2087 = vsel %vm347, %v1721, 0
      %2089 = vmatprep.subr.bf16.mxu0 0
      %2090 = vmatpush1.bf16.msra.mxu0 %v2084
      %2091 = vmatprep.subr.bf16.mxu0 0
      %2092 = vmatpush1.bf16.msra.mxu0 0
      %2093 = vmatprep.subr.bf16.mxu0 0
      %2094 = vmatpush1.bf16.msra.mxu0 0
      %2095 = vmatprep.subr.bf16.mxu0 0
      %2096 = vmatpush1.bf16.msra.mxu0 0
      %2097 = vmatprep.subr.bf16.mxu0 0
      %2098 = vmatpush1.bf16.msra.mxu0 0
      %2099 = vmatprep.subr.bf16.mxu0 0
      %2100 = vmatpush1.bf16.msra.mxu0 0
      %2101 = vmatprep.subr.bf16.mxu0 0
      %2102 = vmatpush1.bf16.msra.mxu0 0
      %2103 = vmatprep.subr.bf16.mxu0 0
      %2104 = vmatpush1.bf16.msra.mxu0 0
      %2105 = vmatprep.subr.bf16.mxu0 0
      %2106 = vmatpush1.bf16.msra.mxu0 0
      %2107 = vmatprep.subr.bf16.mxu0 0
      %2108 = vmatpush1.bf16.msra.mxu0 0
      %2109 = vmatprep.subr.bf16.mxu0 0
      %2110 = vmatpush1.bf16.msra.mxu0 0
      %2111 = vmatprep.subr.bf16.mxu0 0
      %2112 = vmatpush1.bf16.msra.mxu0 0
      %2113 = vmatprep.subr.bf16.mxu0 0
      %2114 = vmatpush1.bf16.msra.mxu0 0
      %2115 = vmatprep.subr.bf16.mxu0 0
      %2116 = vmatpush1.bf16.msra.mxu0 0
      %2117 = vmatprep.subr.bf16.mxu0 0
      %2118 = vmatpush1.bf16.msra.mxu0 0
      %2119 = vmatprep.subr.bf16.mxu0 0
      %2120 = vmatpush1.bf16.msra.mxu0 0
      %2121 = vmatprep.mubr.bf16.mxu0 0
      %2122 = vmatmul.mubr.bf16.gmra.mrb[0].mxu0 %v2087
      %v2123 = vpop.f32.mrb[0].mxu0
      %v2124 = vadd.f32 0.0, %v2123
      %v2125 = vpop.f32.mrb[0].mxu0
      %v2126 = vpop.f32.mrb[0].mxu0
      %v2127 = vadd.f32 0.0, %v2126
      %v2128 = vpop.f32.mrb[0].mxu0
      %2129 = vdwg.mxu0
      %v2132 = vunpack.c.l.b16 %v305
      %v2133 = vunpack.c.l.b16 %v306
      %v2134 = vpack.c.b16 %v2133, %v2132
      %v2137 = vsel %vm347, %v1722, 0
      %2139 = vmatprep.subr.bf16.mxu0 0
      %2140 = vmatpush1.bf16.msra.mxu0 %v2134
      %2141 = vmatprep.subr.bf16.mxu0 0
      %2142 = vmatpush1.bf16.msra.mxu0 0
      %2143 = vmatprep.subr.bf16.mxu0 0
      %2144 = vmatpush1.bf16.msra.mxu0 0
      %2145 = vmatprep.subr.bf16.mxu0 0
      %2146 = vmatpush1.bf16.msra.mxu0 0
      %2147 = vmatprep.subr.bf16.mxu0 0
      %2148 = vmatpush1.bf16.msra.mxu0 0
      %2149 = vmatprep.subr.bf16.mxu0 0
      %2150 = vmatpush1.bf16.msra.mxu0 0
      %2151 = vmatprep.subr.bf16.mxu0 0
      %2152 = vmatpush1.bf16.msra.mxu0 0
      %2153 = vmatprep.subr.bf16.mxu0 0
      %2154 = vmatpush1.bf16.msra.mxu0 0
      %2155 = vmatprep.subr.bf16.mxu0 0
      %2156 = vmatpush1.bf16.msra.mxu0 0
      %2157 = vmatprep.subr.bf16.mxu0 0
      %2158 = vmatpush1.bf16.msra.mxu0 0
      %2159 = vmatprep.subr.bf16.mxu0 0
      %2160 = vmatpush1.bf16.msra.mxu0 0
      %2161 = vmatprep.subr.bf16.mxu0 0
      %2162 = vmatpush1.bf16.msra.mxu0 0
      %2163 = vmatprep.subr.bf16.mxu0 0
      %2164 = vmatpush1.bf16.msra.mxu0 0
      %2165 = vmatprep.subr.bf16.mxu0 0
      %2166 = vmatpush1.bf16.msra.mxu0 0
      %2167 = vmatprep.subr.bf16.mxu0 0
      %2168 = vmatpush1.bf16.msra.mxu0 0
      %2169 = vmatprep.subr.bf16.mxu0 0
      %2170 = vmatpush1.bf16.msra.mxu0 0
      %2171 = vmatprep.mubr.bf16.mxu0 0
      %2172 = vmatmul.mubr.bf16.gmra.mrb[0].mxu0 %v2137
      %v2173 = vpop.f32.mrb[0].mxu0
      %v2174 = vadd.f32 0.0, %v2173
      %v2175 = vpop.f32.mrb[0].mxu0
      %v2176 = vpop.f32.mrb[0].mxu0
      %v2177 = vadd.f32 0.0, %v2176
      %v2178 = vpop.f32.mrb[0].mxu0
      %2179 = vdwg.mxu0
      %v2182 = vunpack.c.l.b16 %v307
      %v2183 = vunpack.c.l.b16 %v308
      %v2184 = vpack.c.b16 %v2183, %v2182
      %v2187 = vsel %vm347, %v1723, 0
      %2189 = vmatprep.subr.bf16.mxu0 0
      %2190 = vmatpush1.bf16.msra.mxu0 %v2184
      %2191 = vmatprep.subr.bf16.mxu0 0
      %2192 = vmatpush1.bf16.msra.mxu0 0
      %2193 = vmatprep.subr.bf16.mxu0 0
      %2194 = vmatpush1.bf16.msra.mxu0 0
      %2195 = vmatprep.subr.bf16.mxu0 0
      %2196 = vmatpush1.bf16.msra.mxu0 0
      %2197 = vmatprep.subr.bf16.mxu0 0
      %2198 = vmatpush1.bf16.msra.mxu0 0
      %2199 = vmatprep.subr.bf16.mxu0 0
      %2200 = vmatpush1.bf16.msra.mxu0 0
      %2201 = vmatprep.subr.bf16.mxu0 0
      %2202 = vmatpush1.bf16.msra.mxu0 0
      %2203 = vmatprep.subr.bf16.mxu0 0
      %2204 = vmatpush1.bf16.msra.mxu0 0
      %2205 = vmatprep.subr.bf16.mxu0 0
      %2206 = vmatpush1.bf16.msra.mxu0 0
      %2207 = vmatprep.subr.bf16.mxu0 0
      %2208 = vmatpush1.bf16.msra.mxu0 0
      %2209 = vmatprep.subr.bf16.mxu0 0
      %2210 = vmatpush1.bf16.msra.mxu0 0
      %2211 = vmatprep.subr.bf16.mxu0 0
      %2212 = vmatpush1.bf16.msra.mxu0 0
      %2213 = vmatprep.subr.bf16.mxu0 0
      %2214 = vmatpush1.bf16.msra.mxu0 0
      %2215 = vmatprep.subr.bf16.mxu0 0
      %2216 = vmatpush1.bf16.msra.mxu0 0
      %2217 = vmatprep.subr.bf16.mxu0 0
      %2218 = vmatpush1.bf16.msra.mxu0 0
      %2219 = vmatprep.subr.bf16.mxu0 0
      %2220 = vmatpush1.bf16.msra.mxu0 0
      %2221 = vmatprep.mubr.bf16.mxu0 0
      %2222 = vmatmul.mubr.bf16.gmra.mrb[0].mxu0 %v2187
      %v2223 = vpop.f32.mrb[0].mxu0
      %v2224 = vadd.f32 0.0, %v2223
      %v2225 = vpop.f32.mrb[0].mxu0
      %v2226 = vpop.f32.mrb[0].mxu0
      %v2227 = vadd.f32 0.0, %v2226
      %v2228 = vpop.f32.mrb[0].mxu0
      %2229 = vdwg.mxu0
      %v2232 = vunpack.c.l.b16 %v309
      %v2233 = vunpack.c.l.b16 %v310
      %v2234 = vpack.c.b16 %v2233, %v2232
      %v2237 = vsel %vm347, %v1724, 0
      %2239 = vmatprep.subr.bf16.mxu0 0
      %2240 = vmatpush1.bf16.msra.mxu0 %v2234
      %2241 = vmatprep.subr.bf16.mxu0 0
      %2242 = vmatpush1.bf16.msra.mxu0 0
      %2243 = vmatprep.subr.bf16.mxu0 0
      %2244 = vmatpush1.bf16.msra.mxu0 0
      %2245 = vmatprep.subr.bf16.mxu0 0
      %2246 = vmatpush1.bf16.msra.mxu0 0
      %2247 = vmatprep.subr.bf16.mxu0 0
      %2248 = vmatpush1.bf16.msra.mxu0 0
      %2249 = vmatprep.subr.bf16.mxu0 0
      %2250 = vmatpush1.bf16.msra.mxu0 0
      %2251 = vmatprep.subr.bf16.mxu0 0
      %2252 = vmatpush1.bf16.msra.mxu0 0
      %2253 = vmatprep.subr.bf16.mxu0 0
      %2254 = vmatpush1.bf16.msra.mxu0 0
      %2255 = vmatprep.subr.bf16.mxu0 0
      %2256 = vmatpush1.bf16.msra.mxu0 0
      %2257 = vmatprep.subr.bf16.mxu0 0
      %2258 = vmatpush1.bf16.msra.mxu0 0
      %2259 = vmatprep.subr.bf16.mxu0 0
      %2260 = vmatpush1.bf16.msra.mxu0 0
      %2261 = vmatprep.subr.bf16.mxu0 0
      %2262 = vmatpush1.bf16.msra.mxu0 0
      %2263 = vmatprep.subr.bf16.mxu0 0
      %2264 = vmatpush1.bf16.msra.mxu0 0
      %2265 = vmatprep.subr.bf16.mxu0 0
      %2266 = vmatpush1.bf16.msra.mxu0 0
      %2267 = vmatprep.subr.bf16.mxu0 0
      %2268 = vmatpush1.bf16.msra.mxu0 0
      %2269 = vmatprep.subr.bf16.mxu0 0
      %2270 = vmatpush1.bf16.msra.mxu0 0
      %2271 = vmatprep.mubr.bf16.mxu0 0
      %2272 = vmatmul.mubr.bf16.gmra.mrb[0].mxu0 %v2237
      %v2273 = vpop.f32.mrb[0].mxu0
      %v2274 = vadd.f32 0.0, %v2273
      %v2275 = vpop.f32.mrb[0].mxu0
      %v2276 = vpop.f32.mrb[0].mxu0
      %v2277 = vadd.f32 0.0, %v2276
      %v2278 = vpop.f32.mrb[0].mxu0
      %2279 = vdwg.mxu0
      %v2282 = vunpack.c.l.b16 %v311
      %v2283 = vunpack.c.l.b16 %v312
      %v2284 = vpack.c.b16 %v2283, %v2282
      %v2287 = vsel %vm347, %v1725, 0
      %2289 = vmatprep.subr.bf16.mxu0 0
      %2290 = vmatpush1.bf16.msra.mxu0 %v2284
      %2291 = vmatprep.subr.bf16.mxu0 0
      %2292 = vmatpush1.bf16.msra.mxu0 0
      %2293 = vmatprep.subr.bf16.mxu0 0
      %2294 = vmatpush1.bf16.msra.mxu0 0
      %2295 = vmatprep.subr.bf16.mxu0 0
      %2296 = vmatpush1.bf16.msra.mxu0 0
      %2297 = vmatprep.subr.bf16.mxu0 0
      %2298 = vmatpush1.bf16.msra.mxu0 0
      %2299 = vmatprep.subr.bf16.mxu0 0
      %2300 = vmatpush1.bf16.msra.mxu0 0
      %2301 = vmatprep.subr.bf16.mxu0 0
      %2302 = vmatpush1.bf16.msra.mxu0 0
      %2303 = vmatprep.subr.bf16.mxu0 0
      %2304 = vmatpush1.bf16.msra.mxu0 0
      %2305 = vmatprep.subr.bf16.mxu0 0
      %2306 = vmatpush1.bf16.msra.mxu0 0
      %2307 = vmatprep.subr.bf16.mxu0 0
      %2308 = vmatpush1.bf16.msra.mxu0 0
      %2309 = vmatprep.subr.bf16.mxu0 0
      %2310 = vmatpush1.bf16.msra.mxu0 0
      %2311 = vmatprep.subr.bf16.mxu0 0
      %2312 = vmatpush1.bf16.msra.mxu0 0
      %2313 = vmatprep.subr.bf16.mxu0 0
      %2314 = vmatpush1.bf16.msra.mxu0 0
      %2315 = vmatprep.subr.bf16.mxu0 0
      %2316 = vmatpush1.bf16.msra.mxu0 0
      %2317 = vmatprep.subr.bf16.mxu0 0
      %2318 = vmatpush1.bf16.msra.mxu0 0
      %2319 = vmatprep.subr.bf16.mxu0 0
      %2320 = vmatpush1.bf16.msra.mxu0 0
      %2321 = vmatprep.mubr.bf16.mxu0 0
      %2322 = vmatmul.mubr.bf16.gmra.mrb[0].mxu0 %v2287
      %v2323 = vpop.f32.mrb[0].mxu0
      %v2324 = vadd.f32 0.0, %v2323
      %v2325 = vpop.f32.mrb[0].mxu0
      %v2326 = vpop.f32.mrb[0].mxu0
      %v2327 = vadd.f32 0.0, %v2326
      %v2328 = vpop.f32.mrb[0].mxu0
      %2329 = vdwg.mxu0
      %v2332 = vunpack.c.l.b16 %v329
      %v2333 = vunpack.c.l.b16 %v330
      %v2334 = vpack.c.b16 %v2333, %v2332
      %v2337 = vsel %vm347, %v1726, 0
      %2339 = vmatprep.subr.bf16.mxu0 0
      %2340 = vmatpush1.bf16.msra.mxu0 %v2334
      %2341 = vmatprep.subr.bf16.mxu0 0
      %2342 = vmatpush1.bf16.msra.mxu0 0
      %2343 = vmatprep.subr.bf16.mxu0 0
      %2344 = vmatpush1.bf16.msra.mxu0 0
      %2345 = vmatprep.subr.bf16.mxu0 0
      %2346 = vmatpush1.bf16.msra.mxu0 0
      %2347 = vmatprep.subr.bf16.mxu0 0
      %2348 = vmatpush1.bf16.msra.mxu0 0
      %2349 = vmatprep.subr.bf16.mxu0 0
      %2350 = vmatpush1.bf16.msra.mxu0 0
      %2351 = vmatprep.subr.bf16.mxu0 0
      %2352 = vmatpush1.bf16.msra.mxu0 0
      %2353 = vmatprep.subr.bf16.mxu0 0
      %2354 = vmatpush1.bf16.msra.mxu0 0
      %2355 = vmatprep.subr.bf16.mxu0 0
      %2356 = vmatpush1.bf16.msra.mxu0 0
      %2357 = vmatprep.subr.bf16.mxu0 0
      %2358 = vmatpush1.bf16.msra.mxu0 0
      %2359 = vmatprep.subr.bf16.mxu0 0
      %2360 = vmatpush1.bf16.msra.mxu0 0
      %2361 = vmatprep.subr.bf16.mxu0 0
      %2362 = vmatpush1.bf16.msra.mxu0 0
      %2363 = vmatprep.subr.bf16.mxu0 0
      %2364 = vmatpush1.bf16.msra.mxu0 0
      %2365 = vmatprep.subr.bf16.mxu0 0
      %2366 = vmatpush1.bf16.msra.mxu0 0
      %2367 = vmatprep.subr.bf16.mxu0 0
      %2368 = vmatpush1.bf16.msra.mxu0 0
      %2369 = vmatprep.subr.bf16.mxu0 0
      %2370 = vmatpush1.bf16.msra.mxu0 0
      %2371 = vmatprep.mubr.bf16.mxu0 0
      %2372 = vmatmul.mubr.bf16.gmra.mrb[0].mxu0 %v2337
      %v2373 = vpop.f32.mrb[0].mxu0
      %v2374 = vadd.f32 0.0, %v2373
      %v2375 = vpop.f32.mrb[0].mxu0
      %v2376 = vpop.f32.mrb[0].mxu0
      %v2377 = vadd.f32 0.0, %v2376
      %v2378 = vpop.f32.mrb[0].mxu0
      %2379 = vdwg.mxu0
      %v2382 = vunpack.c.l.b16 %v331
      %v2383 = vunpack.c.l.b16 %v332
      %v2384 = vpack.c.b16 %v2383, %v2382
      %v2387 = vsel %vm347, %v1727, 0
      %2389 = vmatprep.subr.bf16.mxu0 0
      %2390 = vmatpush1.bf16.msra.mxu0 %v2384
      %2391 = vmatprep.subr.bf16.mxu0 0
      %2392 = vmatpush1.bf16.msra.mxu0 0
      %2393 = vmatprep.subr.bf16.mxu0 0
      %2394 = vmatpush1.bf16.msra.mxu0 0
      %2395 = vmatprep.subr.bf16.mxu0 0
      %2396 = vmatpush1.bf16.msra.mxu0 0
      %2397 = vmatprep.subr.bf16.mxu0 0
      %2398 = vmatpush1.bf16.msra.mxu0 0
      %2399 = vmatprep.subr.bf16.mxu0 0
      %2400 = vmatpush1.bf16.msra.mxu0 0
      %2401 = vmatprep.subr.bf16.mxu0 0
      %2402 = vmatpush1.bf16.msra.mxu0 0
      %2403 = vmatprep.subr.bf16.mxu0 0
      %2404 = vmatpush1.bf16.msra.mxu0 0
      %2405 = vmatprep.subr.bf16.mxu0 0
      %2406 = vmatpush1.bf16.msra.mxu0 0
      %2407 = vmatprep.subr.bf16.mxu0 0
      %2408 = vmatpush1.bf16.msra.mxu0 0
      %2409 = vmatprep.subr.bf16.mxu0 0
      %2410 = vmatpush1.bf16.msra.mxu0 0
      %2411 = vmatprep.subr.bf16.mxu0 0
      %2412 = vmatpush1.bf16.msra.mxu0 0
      %2413 = vmatprep.subr.bf16.mxu0 0
      %2414 = vmatpush1.bf16.msra.mxu0 0
      %2415 = vmatprep.subr.bf16.mxu0 0
      %2416 = vmatpush1.bf16.msra.mxu0 0
      %2417 = vmatprep.subr.bf16.mxu0 0
      %2418 = vmatpush1.bf16.msra.mxu0 0
      %2419 = vmatprep.subr.bf16.mxu0 0
      %2420 = vmatpush1.bf16.msra.mxu0 0
      %2421 = vmatprep.mubr.bf16.mxu0 0
      %2422 = vmatmul.mubr.bf16.gmra.mrb[0].mxu0 %v2387
      %v2423 = vpop.f32.mrb[0].mxu0
      %v2424 = vadd.f32 0.0, %v2423
      %v2425 = vpop.f32.mrb[0].mxu0
      %v2426 = vpop.f32.mrb[0].mxu0
      %v2427 = vadd.f32 0.0, %v2426
      %v2428 = vpop.f32.mrb[0].mxu0
      %2429 = vdwg.mxu0
      %v2432 = vunpack.c.l.b16 %v333
      %v2433 = vunpack.c.l.b16 %v334
      %v2434 = vpack.c.b16 %v2433, %v2432
      %v2437 = vsel %vm347, %v1728, 0
      %2439 = vmatprep.subr.bf16.mxu0 0
      %2440 = vmatpush1.bf16.msra.mxu0 %v2434
      %2441 = vmatprep.subr.bf16.mxu0 0
      %2442 = vmatpush1.bf16.msra.mxu0 0
      %2443 = vmatprep.subr.bf16.mxu0 0
      %2444 = vmatpush1.bf16.msra.mxu0 0
      %2445 = vmatprep.subr.bf16.mxu0 0
      %2446 = vmatpush1.bf16.msra.mxu0 0
      %2447 = vmatprep.subr.bf16.mxu0 0
      %2448 = vmatpush1.bf16.msra.mxu0 0
      %2449 = vmatprep.subr.bf16.mxu0 0
      %2450 = vmatpush1.bf16.msra.mxu0 0
      %2451 = vmatprep.subr.bf16.mxu0 0
      %2452 = vmatpush1.bf16.msra.mxu0 0
      %2453 = vmatprep.subr.bf16.mxu0 0
      %2454 = vmatpush1.bf16.msra.mxu0 0
      %2455 = vmatprep.subr.bf16.mxu0 0
      %2456 = vmatpush1.bf16.msra.mxu0 0
      %2457 = vmatprep.subr.bf16.mxu0 0
      %2458 = vmatpush1.bf16.msra.mxu0 0
      %2459 = vmatprep.subr.bf16.mxu0 0
      %2460 = vmatpush1.bf16.msra.mxu0 0
      %2461 = vmatprep.subr.bf16.mxu0 0
      %2462 = vmatpush1.bf16.msra.mxu0 0
      %2463 = vmatprep.subr.bf16.mxu0 0
      %2464 = vmatpush1.bf16.msra.mxu0 0
      %2465 = vmatprep.subr.bf16.mxu0 0
      %2466 = vmatpush1.bf16.msra.mxu0 0
      %2467 = vmatprep.subr.bf16.mxu0 0
      %2468 = vmatpush1.bf16.msra.mxu0 0
      %2469 = vmatprep.subr.bf16.mxu0 0
      %2470 = vmatpush1.bf16.msra.mxu0 0
      %2471 = vmatprep.mubr.bf16.mxu0 0
      %2472 = vmatmul.mubr.bf16.gmra.mrb[0].mxu0 %v2437
      %v2473 = vpop.f32.mrb[0].mxu0
      %v2474 = vadd.f32 0.0, %v2473
      %v2475 = vpop.f32.mrb[0].mxu0
      %v2476 = vpop.f32.mrb[0].mxu0
      %v2477 = vadd.f32 0.0, %v2476
      %v2478 = vpop.f32.mrb[0].mxu0
      %2479 = vdwg.mxu0
      %v2482 = vunpack.c.l.b16 %v335
      %v2483 = vunpack.c.l.b16 %v336
      %v2484 = vpack.c.b16 %v2483, %v2482
      %v2487 = vsel %vm347, %v1729, 0
      %2489 = vmatprep.subr.bf16.mxu0 0
      %2490 = vmatpush1.bf16.msra.mxu0 %v2484
      %2491 = vmatprep.subr.bf16.mxu0 0
      %2492 = vmatpush1.bf16.msra.mxu0 0
      %2493 = vmatprep.subr.bf16.mxu0 0
      %2494 = vmatpush1.bf16.msra.mxu0 0
      %2495 = vmatprep.subr.bf16.mxu0 0
      %2496 = vmatpush1.bf16.msra.mxu0 0
      %2497 = vmatprep.subr.bf16.mxu0 0
      %2498 = vmatpush1.bf16.msra.mxu0 0
      %2499 = vmatprep.subr.bf16.mxu0 0
      %2500 = vmatpush1.bf16.msra.mxu0 0
      %2501 = vmatprep.subr.bf16.mxu0 0
      %2502 = vmatpush1.bf16.msra.mxu0 0
      %2503 = vmatprep.subr.bf16.mxu0 0
      %2504 = vmatpush1.bf16.msra.mxu0 0
      %2505 = vmatprep.subr.bf16.mxu0 0
      %2506 = vmatpush1.bf16.msra.mxu0 0
      %2507 = vmatprep.subr.bf16.mxu0 0
      %2508 = vmatpush1.bf16.msra.mxu0 0
      %2509 = vmatprep.subr.bf16.mxu0 0
      %2510 = vmatpush1.bf16.msra.mxu0 0
      %2511 = vmatprep.subr.bf16.mxu0 0
      %2512 = vmatpush1.bf16.msra.mxu0 0
      %2513 = vmatprep.subr.bf16.mxu0 0
      %2514 = vmatpush1.bf16.msra.mxu0 0
      %2515 = vmatprep.subr.bf16.mxu0 0
      %2516 = vmatpush1.bf16.msra.mxu0 0
      %2517 = vmatprep.subr.bf16.mxu0 0
      %2518 = vmatpush1.bf16.msra.mxu0 0
      %2519 = vmatprep.subr.bf16.mxu0 0
      %2520 = vmatpush1.bf16.msra.mxu0 0
      %2521 = vmatprep.mubr.bf16.mxu0 0
      %2522 = vmatmul.mubr.bf16.gmra.mrb[0].mxu0 %v2487
      %v2523 = vpop.f32.mrb[0].mxu0
      %v2524 = vadd.f32 0.0, %v2523
      %v2525 = vpop.f32.mrb[0].mxu0
      %v2526 = vpop.f32.mrb[0].mxu0
      %v2527 = vadd.f32 0.0, %v2526
      %v2528 = vpop.f32.mrb[0].mxu0
      %2529 = vdwg.mxu0
      %v2530 = vpack.c.bf16 %v1777, %v1774
      %v2531 = vpack.c.bf16 %v1827, %v1824
      %v2532 = vpack.c.bf16 %v1877, %v1874
      %v2533 = vpack.c.bf16 %v1927, %v1924
      %v2534 = vpack.c.bf16 %v1977, %v1974
      %v2535 = vpack.c.bf16 %v2027, %v2024
      %v2536 = vpack.c.bf16 %v2077, %v2074
      %v2537 = vpack.c.bf16 %v2127, %v2124
      %v2538 = vpack.c.bf16 %v2177, %v2174
      %v2539 = vpack.c.bf16 %v2227, %v2224
      %v2540 = vpack.c.bf16 %v2277, %v2274
      %v2541 = vpack.c.bf16 %v2327, %v2324
      %v2542 = vpack.c.bf16 %v2377, %v2374
      %v2543 = vpack.c.bf16 %v2427, %v2424
      %v2544 = vpack.c.bf16 %v2477, %v2474
      %v2545 = vpack.c.bf16 %v2527, %v2524
      %v2562 = vunpack.c.l.b16 %v2530
      %v2563 = vunpack.c.h.b16 %v2530
      %v2564 = vunpack.c.l.b16 %v2531
      %v2565 = vunpack.c.h.b16 %v2531
      %v2566 = vunpack.c.l.b16 %v2532
      %v2567 = vunpack.c.h.b16 %v2532
      %v2568 = vunpack.c.l.b16 %v2533
      %v2569 = vunpack.c.h.b16 %v2533
      %v2570 = vunpack.c.l.b16 %v2534
      %v2571 = vunpack.c.h.b16 %v2534
      %v2572 = vunpack.c.l.b16 %v2535
      %v2573 = vunpack.c.h.b16 %v2535
      %v2574 = vunpack.c.l.b16 %v2536
      %v2575 = vunpack.c.h.b16 %v2536
      %v2576 = vunpack.c.l.b16 %v2537
      %v2577 = vunpack.c.h.b16 %v2537
      %v2578 = vunpack.c.l.b16 %v2538
      %v2579 = vunpack.c.h.b16 %v2538
      %v2580 = vunpack.c.l.b16 %v2539
      %v2581 = vunpack.c.h.b16 %v2539
      %v2582 = vunpack.c.l.b16 %v2540
      %v2583 = vunpack.c.h.b16 %v2540
      %v2584 = vunpack.c.l.b16 %v2541
      %v2585 = vunpack.c.h.b16 %v2541
      %v2586 = vunpack.c.l.b16 %v2542
      %v2587 = vunpack.c.h.b16 %v2542
      %v2588 = vunpack.c.l.b16 %v2543
      %v2589 = vunpack.c.h.b16 %v2543
      %v2590 = vunpack.c.l.b16 %v2544
      %v2591 = vunpack.c.h.b16 %v2544
      %v2592 = vunpack.c.l.b16 %v2545
      %v2593 = vunpack.c.h.b16 %v2545
      %v2594 = vpack.c.b16 %v2562, %v2562
      %v2595 = vpack.c.b16 %v2563, %v2563
      %v2596 = vpack.c.b16 %v2564, %v2564
      %v2597 = vpack.c.b16 %v2565, %v2565
      %v2598 = vpack.c.b16 %v2566, %v2566
      %v2599 = vpack.c.b16 %v2567, %v2567
      %v2600 = vpack.c.b16 %v2568, %v2568
      %v2601 = vpack.c.b16 %v2569, %v2569
      %v2602 = vpack.c.b16 %v2570, %v2570
      %v2603 = vpack.c.b16 %v2571, %v2571
      %v2604 = vpack.c.b16 %v2572, %v2572
      %v2605 = vpack.c.b16 %v2573, %v2573
      %v2606 = vpack.c.b16 %v2574, %v2574
      %v2607 = vpack.c.b16 %v2575, %v2575
      %v2608 = vpack.c.b16 %v2576, %v2576
      %v2609 = vpack.c.b16 %v2577, %v2577
      %v2610 = vpack.c.b16 %v2578, %v2578
      %v2611 = vpack.c.b16 %v2579, %v2579
      %v2612 = vpack.c.b16 %v2580, %v2580
      %v2613 = vpack.c.b16 %v2581, %v2581
      %v2614 = vpack.c.b16 %v2582, %v2582
      %v2615 = vpack.c.b16 %v2583, %v2583
      %v2616 = vpack.c.b16 %v2584, %v2584
      %v2617 = vpack.c.b16 %v2585, %v2585
      %v2618 = vpack.c.b16 %v2586, %v2586
      %v2619 = vpack.c.b16 %v2587, %v2587
      %v2620 = vpack.c.b16 %v2588, %v2588
      %v2621 = vpack.c.b16 %v2589, %v2589
      %v2622 = vpack.c.b16 %v2590, %v2590
      %v2623 = vpack.c.b16 %v2591, %v2591
      %v2624 = vpack.c.b16 %v2592, %v2592
      %v2625 = vpack.c.b16 %v2593, %v2593
      %vm2658 = vcmask 125952
      %2659 = vst.msk [vmem:[%s238] sm:$0xf] %vm2658, %v2594
      %2660 = vst.msk [vmem:[%s238 + $0x4] sm:$0xf] %vm2658, %v2595
      %2661 = vst.msk [vmem:[%s238 + $0x8] sm:$0xf] %vm2658, %v2596
      %2662 = vst.msk [vmem:[%s238 + $0xc] sm:$0xf] %vm2658, %v2597
      %2663 = vst.msk [vmem:[%s238 + $0x10] sm:$0xf] %vm2658, %v2598
      %2664 = vst.msk [vmem:[%s238 + $0x14] sm:$0xf] %vm2658, %v2599
      %2665 = vst.msk [vmem:[%s238 + $0x18] sm:$0xf] %vm2658, %v2600
      %2666 = vst.msk [vmem:[%s238 + $0x1c] sm:$0xf] %vm2658, %v2601
      %2667 = vst.msk [vmem:[%s238 + $0x20] sm:$0xf] %vm2658, %v2602
      %2668 = vst.msk [vmem:[%s238 + $0x24] sm:$0xf] %vm2658, %v2603
      %2669 = vst.msk [vmem:[%s238 + $0x28] sm:$0xf] %vm2658, %v2604
      %2670 = vst.msk [vmem:[%s238 + $0x2c] sm:$0xf] %vm2658, %v2605
      %2671 = vst.msk [vmem:[%s238 + $0x30] sm:$0xf] %vm2658, %v2606
      %2672 = vst.msk [vmem:[%s238 + $0x34] sm:$0xf] %vm2658, %v2607
      %2673 = vst.msk [vmem:[%s238 + $0x38] sm:$0xf] %vm2658, %v2608
      %2674 = vst.msk [vmem:[%s238 + $0x3c] sm:$0xf] %vm2658, %v2609
      %2675 = vst.msk [vmem:[%s238 + $0x40] sm:$0xf] %vm2658, %v2610
      %2676 = vst.msk [vmem:[%s238 + $0x44] sm:$0xf] %vm2658, %v2611
      %2677 = vst.msk [vmem:[%s238 + $0x48] sm:$0xf] %vm2658, %v2612
      %2678 = vst.msk [vmem:[%s238 + $0x4c] sm:$0xf] %vm2658, %v2613
      %2679 = vst.msk [vmem:[%s238 + $0x50] sm:$0xf] %vm2658, %v2614
      %2680 = vst.msk [vmem:[%s238 + $0x54] sm:$0xf] %vm2658, %v2615
      %2681 = vst.msk [vmem:[%s238 + $0x58] sm:$0xf] %vm2658, %v2616
      %2682 = vst.msk [vmem:[%s238 + $0x5c] sm:$0xf] %vm2658, %v2617
      %2683 = vst.msk [vmem:[%s238 + $0x60] sm:$0xf] %vm2658, %v2618
      %2684 = vst.msk [vmem:[%s238 + $0x64] sm:$0xf] %vm2658, %v2619
      %2685 = vst.msk [vmem:[%s238 + $0x68] sm:$0xf] %vm2658, %v2620
      %2686 = vst.msk [vmem:[%s238 + $0x6c] sm:$0xf] %vm2658, %v2621
      %2687 = vst.msk [vmem:[%s238 + $0x70] sm:$0xf] %vm2658, %v2622
      %2688 = vst.msk [vmem:[%s238 + $0x74] sm:$0xf] %vm2658, %v2623
      %2689 = vst.msk [vmem:[%s238 + $0x78] sm:$0xf] %vm2658, %v2624
      %2690 = vst.msk [vmem:[%s238 + $0x7c] sm:$0xf] %vm2658, %v2625
      %s2691 = smul.u32 4, %s19
      %p2692 = scmp.lt.s32.totalorder %s18, 1
      %s2693 = scalar_select %p2692, %s18, 1
      %p2694 = scmp.lt.s32.totalorder %s2691, 3
      %s2695 = scalar_select %p2694, %s2691, 3
      %s2696 = smul.addr %s2695, 8
      %s2697 = smul.addr %s2693, 32
      %s2698 = sadd.s32 %s2696, %s2697
      %s2699 = smul.addr %s2698, 4
      %s2700 = scalar_lea.vmem %s3, %s2699
      // Predicated region
      $region33: #{residual_swin_block.27} parent=31 // pred_check
        %p2701 = pneg %p121
      $region34: #{residual_swin_block.27} parent=31 // pred_check_branch
        %2703 = sbr.rel (%p2701) target = $region36
      $region35: #{residual_swin_block.27} parent=31 // pred_region
        %s2704 = smul.u32 4, %s19
      $region36: #{residual_swin_block.27} parent=31 // pred_fallthru
        _
    $region32: #{residual_swin_block.27} parent=5 // pred_fallthru
      _
    %p2705 = scmp.le.s32.totalorder 2, %s9
    // Predicated region
    $region37: #{residual_swin_block.27} parent=5 // pred_check
      %p2706 = pneg %p2705
    $region38: #{residual_swin_block.27} parent=5 // pred_check_branch
      %2708 = sbr.rel (%p2706) target = $region40
    $region39: #{residual_swin_block.27} parent=5 // pred_region
      %s2709 = ssub.s32 %s9, 2
      // Predicated region
      $region41: #{residual_swin_block.27} parent=39 // pred_check
        %p2710 = pneg %p127
      $region42: #{residual_swin_block.27} parent=39 // pred_check_branch
        %2712 = sbr.rel (%p2710) target = $region44
      $region43: #{residual_swin_block.27} parent=39 // pred_region
        %s2713 = smul.u32 4, %s21
        %p2714 = scmp.lt.s32.totalorder %s20, 1
        %s2715 = scalar_select %p2714, %s20, 1
        %p2716 = scmp.lt.s32.totalorder %s2713, 3
        %s2717 = scalar_select %p2716, %s2713, 3
        %s2718 = smul.addr %s2717, 8
        %s2719 = smul.addr %s2715, 32
        %s2720 = sadd.s32 %s2718, %s2719
        %s2721 = smul.addr %s2720, 4
        %s2722 = scalar_lea.vmem %s3, %s2721
      $region44: #{residual_swin_block.27} parent=39 // pred_fallthru
        _
    $region40: #{residual_swin_block.27} parent=5 // pred_fallthru
      _
  $region6: #{residual_swin_block.27} parent=0 // loop_footer
    %s13 = sadd.s32 1, %s9
  $region7: #{residual_swin_block.27} parent=0 // loop_footer_branch
    %8 = sbr.rel target = $region3
  $region8: #{residual_swin_block.27} parent=0 // loop_exit
    _

// kernel: residual_swin_block.41
$region0: #{residual_swin_block.41}
  #allocation0 [shape = 'u32[]', space=smem, size = 0x4, offset = 0x4, fixed_abs, tag = 'smem constant byte address 0x4 - core index']
  #allocation1 [shape = 'u32[144,128]{1,0:T(1,128)}', space=vmem, size = 0x12000, scoped, tag = 'internal scratch']
  %s0 = inlined_call_operand.vmem [shape: bf16[2,10,10,64], index: 0, kind: input, shape index: {}]
  %s1 = inlined_call_operand.vmem [shape: bf16[9,64,64], index: 1, kind: input, shape index: {}]
  %s2 = inlined_call_operand.vmem [shape: f32[1,64], index: 2, kind: input, shape index: {}]
  %s3 = inlined_call_operand.vmem [shape: f32[2,8,8,64], index: 3, kind: input, shape index: {}]
  %s4 = inlined_call_operand.hbm [shape: f32[2,8,8,64], index: 4, kind: output, shape index: {}]
  %s5 = sld [smem:[#allocation0]]
  $region49: #{residual_swin_block.41} parent=0
    _
  %s7 = ssub.s32 1, %s5
  %s8 = scalar_select 0, %s7, %s5
  $region1: #{residual_swin_block.41} parent=0
    #allocation2 [shape = 'u8[65536]{0}', space=vmem, size = 0x10000, scoped, tag = 'output window, operand 0']
    #allocation3 [shape = 's32[2]{0}', space=sflag, size = 0x8, scoped, tag = 'scoped memory for residual_swin_block.41']
    %9 = vsyncpa [#allocation3], 0
    %s10 = scalar_lea.sflag [#allocation3], 1
    %11 = vsyncpa %s10, 0
    loop: start=0, step=1, limit=4
    $region2: #{residual_swin_block.41} parent=1 // loop_pre_header
      _
    $region3: #{residual_swin_block.41} parent=1 // loop_header
      %s13 = sphi 0, %s17
      %p14 = scmp.ge.s32.totalorder %s13, 4
      %s23 = sphi 0, %s25
      %s26 = sphi 0, %s23
      %s27 = sphi 0, %s26
      %s43 = sphi 0, %s27
      %s47 = sphi 0, %s47
      %s49 = sphi 0, %s47
      %s50 = sphi 0, %s49
      %s64 = sphi 0, %s50
      %s68 = sphi 0, %s68
      %s70 = sphi 0, %s68
      %s71 = sphi 0, %s70
      %s85 = sphi 0, %s71
      %s91 = sphi 0, %s93
      %s94 = sphi 0, %s91
      %s95 = sphi 0, %s94
      %s111 = sphi 0, %s95
      %s117 = sphi 0, %s119
      %s120 = sphi 0, %s117
      %s121 = sphi 0, %s120
      %s137 = sphi 0, %s121
    $region4: #{residual_swin_block.41} parent=1 // loop_header_branch
      %16 = sbr.rel (%p14) target = $region8
    $region5: #{residual_swin_block.41} parent=1 // loop_body
      %s18 = ssub.s32 %s13, 1
      %s19 = ssub.s32 %s13, 2
      %s20 = sadd.s32 %s13, 1
      %s21 = ssub.s32 %s13, %s20
      %p22 = scmp.eq.s32.totalorder %s21, 0
      %s24 = sadd.s32 %s23, 1
      %s25 = scalar_select %p22, %s23, %s24
      %p28 = pneg %p22
      %p29 = scmp.eq.s32.totalorder %s13, 1
      %p30 = por %p28, %p29
      %p31 = scmp.ne.s32.totalorder %s23, %s26
      %p32 = scmp.eq.s32.totalorder %s13, 0
      %p33 = por %p31, %p32
      %p34 = scmp.ne.s32.totalorder %s23, %s26
      %p35 = scmp.eq.s32.totalorder %s18, 1
      %p36 = por %p34, %p35
      %p37 = scmp.ne.s32.totalorder %s26, %s27
      %p38 = scmp.eq.s32.totalorder %s18, 0
      %p39 = por %p37, %p38
      %p40 = scmp.ne.s32.totalorder %s26, %s27
      %p41 = scmp.eq.s32.totalorder %s19, 1
      %p42 = por %p40, %p41
      %p44 = scmp.ne.s32.totalorder %s27, %s43
      %p45 = scmp.eq.s32.totalorder %s19, 0
      %p46 = por %p44, %p45
      %s48 = sadd.s32 %s47, 1
      %p51 = scmp.eq.s32.totalorder %s13, 1
      %p52 = scmp.ne.s32.totalorder %s47, %s49
      %p53 = scmp.eq.s32.totalorder %s13, 0
      %p54 = por %p52, %p53
      %p55 = scmp.ne.s32.totalorder %s47, %s49
      %p56 = scmp.eq.s32.totalorder %s18, 1
      %p57 = por %p55, %p56
      %p58 = scmp.ne.s32.totalorder %s49, %s50
      %p59 = scmp.eq.s32.totalorder %s18, 0
      %p60 = por %p58, %p59
      %p61 = scmp.ne.s32.totalorder %s49, %s50
      %p62 = scmp.eq.s32.totalorder %s19, 1
      %p63 = por %p61, %p62
      %p65 = scmp.ne.s32.totalorder %s50, %s64
      %p66 = scmp.eq.s32.totalorder %s19, 0
      %p67 = por %p65, %p66
      %s69 = sadd.s32 %s68, 1
      %p72 = scmp.eq.s32.totalorder %s13, 1
      %p73 = scmp.ne.s32.totalorder %s68, %s70
      %p74 = scmp.eq.s32.totalorder %s13, 0
      %p75 = por %p73, %p74
      %p76 = scmp.ne.s32.totalorder %s68, %s70
      %p77 = scmp.eq.s32.totalorder %s18, 1
      %p78 = por %p76, %p77
      %p79 = scmp.ne.s32.totalorder %s70, %s71
      %p80 = scmp.eq.s32.totalorder %s18, 0
      %p81 = por %p79, %p80
      %p82 = scmp.ne.s32.totalorder %s70, %s71
      %p83 = scmp.eq.s32.totalorder %s19, 1
      %p84 = por %p82, %p83
      %p86 = scmp.ne.s32.totalorder %s71, %s85
      %p87 = scmp.eq.s32.totalorder %s19, 0
      %p88 = por %p86, %p87
      %s89 = ssub.s32 %s13, %s20
      %p90 = scmp.eq.s32.totalorder %s89, 0
      %s92 = sadd.s32 %s91, 1
      %s93 = scalar_select %p90, %s91, %s92
      %p96 = pneg %p90
      %p97 = scmp.eq.s32.totalorder %s13, 1
      %p98 = por %p96, %p97
      %p99 = scmp.ne.s32.totalorder %s91, %s94
      %p100 = scmp.eq.s32.totalorder %s13, 0
      %p101 = por %p99, %p100
      %p102 = scmp.ne.s32.totalorder %s91, %s94
      %p103 = scmp.eq.s32.totalorder %s18, 1
      %p104 = por %p102, %p103
      %p105 = scmp.ne.s32.totalorder %s94, %s95
      %p106 = scmp.eq.s32.totalorder %s18, 0
      %p107 = por %p105, %p106
      %p108 = scmp.ne.s32.totalorder %s94, %s95
      %p109 = scmp.eq.s32.totalorder %s19, 1
      %p110 = por %p108, %p109
      %p112 = scmp.ne.s32.totalorder %s95, %s111
      %p113 = scmp.eq.s32.totalorder %s19, 0
      %p114 = por %p112, %p113
      %s115 = ssub.s32 %s13, %s20
      %p116 = scmp.eq.s32.totalorder %s115, 0
      %s118 = sadd.s32 %s117, 1
      %s119 = scalar_select %p116, %s117, %s118
      %p122 = pneg %p116
      %p123 = scmp.eq.s32.totalorder %s13, 1
      %p124 = por %p122, %p123
      %p125 = scmp.ne.s32.totalorder %s117, %s120
      %p126 = scmp.eq.s32.totalorder %s13, 0
      %p127 = por %p125, %p126
      %p128 = scmp.ne.s32.totalorder %s117, %s120
      %p129 = scmp.eq.s32.totalorder %s18, 1
      %p130 = por %p128, %p129
      %p131 = scmp.ne.s32.totalorder %s120, %s121
      %p132 = scmp.eq.s32.totalorder %s18, 0
      %p133 = por %p131, %p132
      %p134 = scmp.ne.s32.totalorder %s120, %s121
      %p135 = scmp.eq.s32.totalorder %s19, 1
      %p136 = por %p134, %p135
      %p138 = scmp.ne.s32.totalorder %s121, %s137
      %p139 = scmp.eq.s32.totalorder %s19, 0
      %p140 = por %p138, %p139
      %p141 = scmp.le.s32.totalorder 1, %s13
      %p142 = scmp.lt.s32.totalorder %s13, 3
      %p143 = pnand %p141, %p142
      %p144 = pneg %p143
      // Predicated region
      $region9: #{residual_swin_block.41} parent=5 // pred_check
        _
      $region10: #{residual_swin_block.41} parent=5 // pred_check_branch
        %146 = sbr.rel (%p143) target = $region12
      $region11: #{residual_swin_block.41} parent=5 // pred_region
        %s147 = ssub.s32 %s13, 1
        // Predicated region
        $region13: #{residual_swin_block.41} parent=11 // pred_check
          %p148 = pneg %p60
        $region14: #{residual_swin_block.41} parent=11 // pred_check_branch
          %150 = sbr.rel (%p148) target = $region16
        $region15: #{residual_swin_block.41} parent=11 // pred_region
          _
        $region16: #{residual_swin_block.41} parent=11 // pred_fallthru
          _
        // Predicated region
        $region17: #{residual_swin_block.41} parent=11 // pred_check
          %p151 = pneg %p81
        $region18: #{residual_swin_block.41} parent=11 // pred_check_branch
          %153 = sbr.rel (%p151) target = $region20
        $region19: #{residual_swin_block.41} parent=11 // pred_region
          _
        $region20: #{residual_swin_block.41} parent=11 // pred_fallthru
          _
      $region12: #{residual_swin_block.41} parent=5 // pred_fallthru
        _
      %p154 = scmp.lt.s32.totalorder %s13, 2
      // Predicated region
      $region21: #{residual_swin_block.41} parent=5 // pred_check
        %p155 = pneg %p154
      $region22: #{residual_swin_block.41} parent=5 // pred_check_branch
        %157 = sbr.rel (%p155) target = $region24
      $region23: #{residual_swin_block.41} parent=5 // pred_region
        // Predicated region
        $region25: #{residual_swin_block.41} parent=23 // pred_check
          %p158 = pneg %p33
        $region26: #{residual_swin_block.41} parent=23 // pred_check_branch
          %160 = sbr.rel (%p158) target = $region28
        $region27: #{residual_swin_block.41} parent=23 // pred_region
          %p161 = scmp.lt.s32.totalorder %s13, 1
          %s162 = scalar_select %p161, %s13, 1
          %s163 = smul.addr %s162, 20
          %s164 = smul.addr %s163, 4
          %s165 = scalar_lea.vmem %s0, %s164
        $region28: #{residual_swin_block.41} parent=23 // pred_fallthru
          _
        // Predicated region
        $region29: #{residual_swin_block.41} parent=23 // pred_check
          %p166 = pneg %p101
        $region30: #{residual_swin_block.41} parent=23 // pred_check_branch
          %168 = sbr.rel (%p166) target = $region32
        $region31: #{residual_swin_block.41} parent=23 // pred_region
          %p169 = scmp.lt.s32.totalorder %s13, 1
          %s170 = scalar_select %p169, %s13, 1
          %s171 = smul.addr %s170, 8
          %s172 = smul.addr %s171, 8
          %s173 = scalar_lea.vmem %s3, %s172
        $region32: #{residual_swin_block.41} parent=23 // pred_fallthru
          _
      $region24: #{residual_swin_block.41} parent=5 // pred_fallthru
        _
      %p174 = scmp.le.s32.totalorder 1, %s13
      %p175 = scmp.lt.s32.totalorder %s13, 3
      %p176 = pnand %p174, %p175
      %p177 = pneg %p176
      // Predicated region
      $region33: #{residual_swin_block.41} parent=5 // pred_check
        _
      $region34: #{residual_swin_block.41} parent=5 // pred_check_branch
        %179 = sbr.rel (%p176) target = $region36
      $region35: #{residual_swin_block.41} parent=5 // pred_region
        %s180 = ssub.s32 %s13, 1
        %p181 = scmp.lt.s32.totalorder %s18, 1
        %s182 = scalar_select %p181, %s18, 1
        %s183 = smul.addr %s182, 20
        %s184 = smul.addr %s183, 4
        %s185 = scalar_lea.vmem %s0, %s184
        %p186 = pneg %p39
        %p187 = pneg %p36
        %p188 = pneg %p60
        %p189 = pneg %p57
        %p190 = pneg %p81
        %p191 = pneg %p78
        %p192 = scmp.lt.s32.totalorder %s18, 1
        %s193 = scalar_select %p192, %s18, 1
        %s194 = smul.addr %s193, 8
        %s195 = smul.addr %s194, 8
        %s196 = scalar_lea.vmem %s3, %s195
        %p197 = pneg %p107
        %p198 = pneg %p104
        %p199 = pneg %p133
        %p200 = pneg %p130
        %s201 = sand.u32 %s120, 1
        %s202 = scalar_lea.sflag [#allocation3], %s201
        %s203 = sand.u32 %s120, 1
        %s204 = smul.addr %s203, 64
        %s205 = scalar_lea.vmem [#allocation2], %s204
        %p206 = scmp.lt.s32.totalorder %s18, 1
        %s207 = scalar_select %p206, %s18, 1
        %s208 = smul.addr %s207, 20
        %s209 = smul.addr %s208, 4
        %s210 = scalar_lea.vmem %s0, %s209
        %p211 = scmp.lt.s32.totalorder %s18, 1
        %s212 = scalar_select %p211, %s18, 1
        %s213 = smul.addr %s212, 8
        %s214 = smul.addr %s213, 8
        %s215 = scalar_lea.vmem %s3, %s214
        %v217 = vld [vmem:[%s210] sm:$0xf]
        %v218 = vld [vmem:[%s210 + $0x4] sm:$0x1]
        %v219 = vld [vmem:[%s210 + $0x8] sm:$0xf]
        %v220 = vld [vmem:[%s210 + $0xc] sm:$0x1]
        %v221 = vld [vmem:[%s210 + $0x10] sm:$0xf]
        %v222 = vld [vmem:[%s210 + $0x14] sm:$0x1]
        %v223 = vld [vmem:[%s210 + $0x18] sm:$0xf]
        %v224 = vld [vmem:[%s210 + $0x1c] sm:$0x1]
        %v225 = vld [vmem:[%s210 + $0x20] sm:$0xf]
        %v226 = vld [vmem:[%s210 + $0x24] sm:$0x1]
        %v227 = vld [vmem:[%s210 + $0x28] sm:$0xf]
        %v228 = vld [vmem:[%s210 + $0x2c] sm:$0x1]
        %v229 = vld [vmem:[%s210 + $0x30] sm:$0xf]
        %v230 = vld [vmem:[%s210 + $0x34] sm:$0x1]
        %v231 = vld [vmem:[%s210 + $0x38] sm:$0xf]
        %v232 = vld [vmem:[%s210 + $0x3c] sm:$0x1]
        %v233 = vld [vmem:[%s210 + $0x40] sm:$0xf]
        %v234 = vld [vmem:[%s210 + $0x44] sm:$0x1]
        %v235 = vld [vmem:[%s210 + $0x48] sm:$0xf]
        %v236 = vld [vmem:[%s210 + $0x4c] sm:$0x1]
        %v237 = vld [vmem:[%s1] sm:$0xf]
        %v238 = vld [vmem:[%s1 + $0x4] sm:$0xf]
        %v239 = vld [vmem:[%s1 + $0x8] sm:$0xf]
        %v240 = vld [vmem:[%s1 + $0xc] sm:$0xf]
        %v241 = vld [vmem:[%s1 + $0x10] sm:$0xf]
        %v242 = vld [vmem:[%s1 + $0x14] sm:$0xf]
        %v243 = vld [vmem:[%s1 + $0x18] sm:$0xf]
        %v244 = vld [vmem:[%s1 + $0x1c] sm:$0xf]
        %vm245 = vsmask.f32 3328
        %vm246 = vsmask.f32 7440
        %vm247 = vmor %vm245, %vm246
        %v249 = vshrl.u32 %v217, 16
        %v251 = vrot.slane %v249, 4
        %v252 = vshll.u32 %v217, 16
        %v254 = vrot.slane %v252, 5
        %v255 = vor.u32 %v251, %v254
        %v256 = vrot.slane %v255, 4
        %v258 = vshll.u32 %v218, 16
        %v260 = vrot.slane %v258, 5
        %v261 = vsel %vm247, %v256, %v260
        %v263 = vshrl.u32 %v219, 16
        %v265 = vrot.slane %v263, 4
        %v266 = vshll.u32 %v219, 16
        %v268 = vrot.slane %v266, 5
        %v269 = vor.u32 %v265, %v268
        %v270 = vrot.slane %v269, 4
        %v272 = vshll.u32 %v220, 16
        %v274 = vrot.slane %v272, 5
        %v275 = vsel %vm247, %v270, %v274
        %v277 = vshrl.u32 %v221, 16
        %v279 = vrot.slane %v277, 4
        %v280 = vshll.u32 %v221, 16
        %v282 = vrot.slane %v280, 5
        %v283 = vor.u32 %v279, %v282
        %v284 = vrot.slane %v283, 4
        %v286 = vshll.u32 %v222, 16
        %v288 = vrot.slane %v286, 5
        %v289 = vsel %vm247, %v284, %v288
        %v291 = vshrl.u32 %v223, 16
        %v293 = vrot.slane %v291, 4
        %v294 = vshll.u32 %v223, 16
        %v296 = vrot.slane %v294, 5
        %v297 = vor.u32 %v293, %v296
        %v298 = vrot.slane %v297, 4
        %v300 = vshll.u32 %v224, 16
        %v302 = vrot.slane %v300, 5
        %v303 = vsel %vm247, %v298, %v302
        %v305 = vshrl.u32 %v225, 16
        %v307 = vrot.slane %v305, 4
        %v308 = vshll.u32 %v225, 16
        %v310 = vrot.slane %v308, 5
        %v311 = vor.u32 %v307, %v310
        %v312 = vrot.slane %v311, 4
        %v314 = vshll.u32 %v226, 16
        %v316 = vrot.slane %v314, 5
        %v317 = vsel %vm247, %v312, %v316
        %v319 = vshrl.u32 %v227, 16
        %v321 = vrot.slane %v319, 4
        %v322 = vshll.u32 %v227, 16
        %v324 = vrot.slane %v322, 5
        %v325 = vor.u32 %v321, %v324
        %v326 = vrot.slane %v325, 4
        %v328 = vshll.u32 %v228, 16
        %v330 = vrot.slane %v328, 5
        %v331 = vsel %vm247, %v326, %v330
        %v333 = vshrl.u32 %v229, 16
        %v335 = vrot.slane %v333, 4
        %v336 = vshll.u32 %v229, 16
        %v338 = vrot.slane %v336, 5
        %v339 = vor.u32 %v335, %v338
        %v340 = vrot.slane %v339, 4
        %v342 = vshll.u32 %v230, 16
        %v344 = vrot.slane %v342, 5
        %v345 = vsel %vm247, %v340, %v344
        %v347 = vshrl.u32 %v231, 16
        %v349 = vrot.slane %v347, 4
        %v350 = vshll.u32 %v231, 16
        %v352 = vrot.slane %v350, 5
        %v353 = vor.u32 %v349, %v352
        %v354 = vrot.slane %v353, 4
        %v356 = vshll.u32 %v232, 16
        %v358 = vrot.slane %v356, 5
        %v359 = vsel %vm247, %v354, %v358
        %s360 = scalar_lea.vmem %s1, 32
        %v361 = vld [vmem:[%s360] sm:$0xf]
        %v362 = vld [vmem:[%s360 + $0x4] sm:$0xf]
        %v363 = vld [vmem:[%s360 + $0x8] sm:$0xf]
        %v364 = vld [vmem:[%s360 + $0xc] sm:$0xf]
        %v365 = vld [vmem:[%s360 + $0x10] sm:$0xf]
        %v366 = vld [vmem:[%s360 + $0x14] sm:$0xf]
        %v367 = vld [vmem:[%s360 + $0x18] sm:$0xf]
        %v368 = vld [vmem:[%s360 + $0x1c] sm:$0xf]
        %v369 = vunpack.c.l.b16 %v261
        %v370 = vunpack.c.l.b16 %v275
        %v371 = vunpack.c.l.b16 %v289
        %v372 = vunpack.c.l.b16 %v303
        %v373 = vunpack.c.l.b16 %v317
        %v374 = vunpack.c.l.b16 %v331
        %v375 = vunpack.c.l.b16 %v345
        %v376 = vunpack.c.l.b16 %v359
        %v377 = vpack.c.b16 %v370, %v369
        %v378 = vpack.c.b16 %v372, %v371
        %v379 = vpack.c.b16 %v374, %v373
        %v380 = vpack.c.b16 %v376, %v375
        %v389 = vunpack.c.l.b16 %v361
        %v390 = vunpack.c.l.b16 %v362
        %v391 = vunpack.c.l.b16 %v363
        %v392 = vunpack.c.l.b16 %v364
        %v393 = vunpack.c.l.b16 %v365
        %v394 = vunpack.c.l.b16 %v366
        %v395 = vunpack.c.l.b16 %v367
        %v396 = vunpack.c.l.b16 %v368
        %v397 = vpack.c.b16 %v390, %v389
        %v398 = vpack.c.b16 %v392, %v391
        %v399 = vpack.c.b16 %v394, %v393
        %v400 = vpack.c.b16 %v396, %v395
        %vm405 = vcmask 523264
        %v407 = vsel %vm405, %v377, 0
        %v410 = vsel %vm405, %v378, 0
        %v413 = vsel %vm405, %v379, 0
        %v416 = vsel %vm405, %v380, 0
        %418 = vmatprep.subr.bf16.mxu0 0
        %419 = vmatpush1.bf16.msra.mxu0 %v397
        %420 = vmatprep.subr.bf16.mxu0 0
        %421 = vmatpush1.bf16.msra.mxu0 %v398
        %422 = vmatprep.subr.bf16.mxu0 0
        %423 = vmatpush1.bf16.msra.mxu0 %v399
        %424 = vmatprep.subr.bf16.mxu0 0
        %425 = vmatpush1.bf16.msra.mxu0 %v400
        %426 = vmatprep.subr.bf16.mxu0 0
        %427 = vmatpush1.bf16.msra.mxu0 0
        %428 = vmatprep.subr.bf16.mxu0 0
        %429 = vmatpush1.bf16.msra.mxu0 0
        %430 = vmatprep.subr.bf16.mxu0 0
        %431 = vmatpush1.bf16.msra.mxu0 0
        %432 = vmatprep.subr.bf16.mxu0 0
        %433 = vmatpush1.bf16.msra.mxu0 0
        %434 = vmatprep.subr.bf16.mxu0 0
        %435 = vmatpush1.bf16.msra.mxu0 0
        %436 = vmatprep.subr.bf16.mxu0 0
        %437 = vmatpush1.bf16.msra.mxu0 0
        %438 = vmatprep.subr.bf16.mxu0 0
        %439 = vmatpush1.bf16.msra.mxu0 0
        %440 = vmatprep.subr.bf16.mxu0 0
        %441 = vmatpush1.bf16.msra.mxu0 0
        %442 = vmatprep.subr.bf16.mxu0 0
        %443 = vmatpush1.bf16.msra.mxu0 0
        %444 = vmatprep.subr.bf16.mxu0 0
        %445 = vmatpush1.bf16.msra.mxu0 0
        %446 = vmatprep.subr.bf16.mxu0 0
        %447 = vmatpush1.bf16.msra.mxu0 0
        %448 = vmatprep.subr.bf16.mxu0 0
        %449 = vmatpush1.bf16.msra.mxu0 0
        %450 = vmatprep.mubr.bf16.mxu0 0
        %451 = vmatmul.mubr.bf16.gmra.mrb[0].mxu0 %v407
        %v452 = vpop.f32.mrb[0].mxu0
        %v453 = vadd.f32 0.0, %v452
        %v454 = vpop.f32.mrb[0].mxu0
        %v455 = vpop.f32.mrb[0].mxu0
        %v456 = vadd.f32 0.0, %v455
        %v457 = vpop.f32.mrb[0].mxu0
        %458 = vmatprep.mubr.bf16.mxu0 0
        %459 = vmatmul.mubr.bf16.gmra.mrb[0].mxu0 %v410
        %v460 = vpop.f32.mrb[0].mxu0
        %v461 = vadd.f32 0.0, %v460
        %v462 = vpop.f32.mrb[0].mxu0
        %v463 = vpop.f32.mrb[0].mxu0
        %v464 = vadd.f32 0.0, %v463
        %v465 = vpop.f32.mrb[0].mxu0
        %466 = vmatprep.mubr.bf16.mxu0 0
        %467 = vmatmul.mubr.bf16.gmra.mrb[0].mxu0 %v413
        %v468 = vpop.f32.mrb[0].mxu0
        %v469 = vadd.f32 0.0, %v468
        %v470 = vpop.f32.mrb[0].mxu0
        %v471 = vpop.f32.mrb[0].mxu0
        %v472 = vadd.f32 0.0, %v471
        %v473 = vpop.f32.mrb[0].mxu0
        %474 = vmatprep.mubr.bf16.mxu0 0
        %475 = vmatmul.mubr.bf16.gmra.mrb[0].mxu0 %v416
        %v476 = vpop.f32.mrb[0].mxu0
        %v477 = vadd.f32 0.0, %v476
        %v478 = vpop.f32.mrb[0].mxu0
        %v479 = vpop.f32.mrb[0].mxu0
        %v480 = vadd.f32 0.0, %v479
        %v481 = vpop.f32.mrb[0].mxu0
        %482 = vdwg.mxu0
        %v491 = vunpack.c.l.b16 %v217
        %v492 = vunpack.c.l.b16 %v219
        %v493 = vunpack.c.l.b16 %v221
        %v494 = vunpack.c.l.b16 %v223
        %v495 = vunpack.c.l.b16 %v225
        %v496 = vunpack.c.l.b16 %v227
        %v497 = vunpack.c.l.b16 %v229
        %v498 = vunpack.c.l.b16 %v231
        %v499 = vpack.c.b16 %v492, %v491
        %v500 = vpack.c.b16 %v494, %v493
        %v501 = vpack.c.b16 %v496, %v495
        %v502 = vpack.c.b16 %v498, %v497
        %v511 = vunpack.c.l.b16 %v237
        %v512 = vunpack.c.l.b16 %v238
        %v513 = vunpack.c.l.b16 %v239
        %v514 = vunpack.c.l.b16 %v240
        %v515 = vunpack.c.l.b16 %v241
        %v516 = vunpack.c.l.b16 %v242
        %v517 = vunpack.c.l.b16 %v243
        %v518 = vunpack.c.l.b16 %v244
        %v519 = vpack.c.b16 %v512, %v511
        %v520 = vpack.c.b16 %v514, %v513
        %v521 = vpack.c.b16 %v516, %v515
        %v522 = vpack.c.b16 %v518, %v517
        %v528 = vsel %vm405, %v499, 0
        %v531 = vsel %vm405, %v500, 0
        %v534 = vsel %vm405, %v501, 0
        %v537 = vsel %vm405, %v502, 0
        %539 = vmatprep.subr.bf16.mxu0 0
        %540 = vmatpush1.bf16.msra.mxu0 %v519
        %541 = vmatprep.subr.bf16.mxu0 0
        %542 = vmatpush1.bf16.msra.mxu0 %v520
        %543 = vmatprep.subr.bf16.mxu0 0
        %544 = vmatpush1.bf16.msra.mxu0 %v521
        %545 = vmatprep.subr.bf16.mxu0 0
        %546 = vmatpush1.bf16.msra.mxu0 %v522
        %547 = vmatprep.subr.bf16.mxu0 0
        %548 = vmatpush1.bf16.msra.mxu0 0
        %549 = vmatprep.subr.bf16.mxu0 0
        %550 = vmatpush1.bf16.msra.mxu0 0
        %551 = vmatprep.subr.bf16.mxu0 0
        %552 = vmatpush1.bf16.msra.mxu0 0
        %553 = vmatprep.subr.bf16.mxu0 0
        %554 = vmatpush1.bf16.msra.mxu0 0
        %555 = vmatprep.subr.bf16.mxu0 0
        %556 = vmatpush1.bf16.msra.mxu0 0
        %557 = vmatprep.subr.bf16.mxu0 0
        %558 = vmatpush1.bf16.msra.mxu0 0
        %559 = vmatprep.subr.bf16.mxu0 0
        %560 = vmatpush1.bf16.msra.mxu0 0
        %561 = vmatprep.subr.bf16.mxu0 0
        %562 = vmatpush1.bf16.msra.mxu0 0
        %563 = vmatprep.subr.bf16.mxu0 0
        %564 = vmatpush1.bf16.msra.mxu0 0
        %565 = vmatprep.subr.bf16.mxu0 0
        %566 = vmatpush1.bf16.msra.mxu0 0
        %567 = vmatprep.subr.bf16.mxu0 0
        %568 = vmatpush1.bf16.msra.mxu0 0
        %569 = vmatprep.subr.bf16.mxu0 0
        %570 = vmatpush1.bf16.msra.mxu0 0
        %571 = vmatprep.mubr.bf16.mxu0 0
        %572 = vmatmul.mubr.bf16.gmra.mrb[0].mxu0 %v528
        %v573 = vpop.f32.mrb[0].mxu0
        %v574 = vadd.f32 %v453, %v573
        %v575 = vpop.f32.mrb[0].mxu0
        %v576 = vpop.f32.mrb[0].mxu0
        %v577 = vadd.f32 %v456, %v576
        %v578 = vpop.f32.mrb[0].mxu0
        %579 = vmatprep.mubr.bf16.mxu0 0
        %580 = vmatmul.mubr.bf16.gmra.mrb[0].mxu0 %v531
        %v581 = vpop.f32.mrb[0].mxu0
        %v582 = vadd.f32 %v461, %v581
        %v583 = vpop.f32.mrb[0].mxu0
        %v584 = vpop.f32.mrb[0].mxu0
        %v585 = vadd.f32 %v464, %v584
        %v586 = vpop.f32.mrb[0].mxu0
        %587 = vmatprep.mubr.bf16.mxu0 0
        %588 = vmatmul.mubr.bf16.gmra.mrb[0].mxu0 %v534
        %v589 = vpop.f32.mrb[0].mxu0
        %v590 = vadd.f32 %v469, %v589
        %v591 = vpop.f32.mrb[0].mxu0
        %v592 = vpop.f32.mrb[0].mxu0
        %v593 = vadd.f32 %v472, %v592
        %v594 = vpop.f32.mrb[0].mxu0
        %595 = vmatprep.mubr.bf16.mxu0 0
        %596 = vmatmul.mubr.bf16.gmra.mrb[0].mxu0 %v537
        %v597 = vpop.f32.mrb[0].mxu0
        %v598 = vadd.f32 %v477, %v597
        %v599 = vpop.f32.mrb[0].mxu0
        %v600 = vpop.f32.mrb[0].mxu0
        %v601 = vadd.f32 %v480, %v600
        %v602 = vpop.f32.mrb[0].mxu0
        %603 = vdwg.mxu0
        %vm612 = vcmask 1042432
        %vm613 = vcmask 1046532
        %vm614 = vmor %vm612, %vm613
        %v615 = vrot.slane %v217, 5
        %v616 = vrot.slane %v615, 4
        %v617 = vrot.slane %v218, 5
        %v618 = vsel %vm614, %v616, %v617
        %v619 = vrot.slane %v219, 5
        %v620 = vrot.slane %v619, 4
        %v621 = vrot.slane %v220, 5
        %v622 = vsel %vm614, %v620, %v621
        %v623 = vrot.slane %v221, 5
        %v624 = vrot.slane %v623, 4
        %v625 = vrot.slane %v222, 5
        %v626 = vsel %vm614, %v624, %v625
        %v627 = vrot.slane %v223, 5
        %v628 = vrot.slane %v627, 4
        %v629 = vrot.slane %v224, 5
        %v630 = vsel %vm614, %v628, %v629
        %v631 = vrot.slane %v225, 5
        %v632 = vrot.slane %v631, 4
        %v633 = vrot.slane %v226, 5
        %v634 = vsel %vm614, %v632, %v633
        %v635 = vrot.slane %v227, 5
        %v636 = vrot.slane %v635, 4
        %v637 = vrot.slane %v228, 5
        %v638 = vsel %vm614, %v636, %v637
        %v639 = vrot.slane %v229, 5
        %v640 = vrot.slane %v639, 4
        %v641 = vrot.slane %v230, 5
        %v642 = vsel %vm614, %v640, %v641
        %v643 = vrot.slane %v231, 5
        %v644 = vrot.slane %v643, 4
        %v645 = vrot.slane %v232, 5
        %v646 = vsel %vm614, %v644, %v645
        %s647 = scalar_lea.vmem %s1, 64
        %v648 = vld [vmem:[%s647] sm:$0xf]
        %v649 = vld [vmem:[%s647 + $0x4] sm:$0xf]
        %v650 = vld [vmem:[%s647 + $0x8] sm:$0xf]
        %v651 = vld [vmem:[%s647 + $0xc] sm:$0xf]
        %v652 = vld [vmem:[%s647 + $0x10] sm:$0xf]
        %v653 = vld [vmem:[%s647 + $0x14] sm:$0xf]
        %v654 = vld [vmem:[%s647 + $0x18] sm:$0xf]
        %v655 = vld [vmem:[%s647 + $0x1c] sm:$0xf]
        %v656 = vunpack.c.l.b16 %v618
        %v657 = vunpack.c.l.b16 %v622
        %v658 = vunpack.c.l.b16 %v626
        %v659 = vunpack.c.l.b16 %v630
        %v660 = vunpack.c.l.b16 %v634
        %v661 = vunpack.c.l.b16 %v638
        %v662 = vunpack.c.l.b16 %v642
        %v663 = vunpack.c.l.b16 %v646
        %v664 = vpack.c.b16 %v657, %v656
        %v665 = vpack.c.b16 %v659, %v658
        %v666 = vpack.c.b16 %v661, %v660
        %v667 = vpack.c.b16 %v663, %v662
        %v676 = vunpack.c.l.b16 %v648
        %v677 = vunpack.c.l.b16 %v649
        %v678 = vunpack.c.l.b16 %v650
        %v679 = vunpack.c.l.b16 %v651
        %v680 = vunpack.c.l.b16 %v652
        %v681 = vunpack.c.l.b16 %v653
        %v682 = vunpack.c.l.b16 %v654
        %v683 = vunpack.c.l.b16 %v655
        %v684 = vpack.c.b16 %v677, %v676
        %v685 = vpack.c.b16 %v679, %v678
        %v686 = vpack.c.b16 %v681, %v680
        %v687 = vpack.c.b16 %v683, %v682
        %v693 = vsel %vm405, %v664, 0
        %v696 = vsel %vm405, %v665, 0
        %v699 = vsel %vm405, %v666, 0
        %v702 = vsel %vm405, %v667, 0
        %704 = vmatprep.subr.bf16.mxu0 0
        %705 = vmatpush1.bf16.msra.mxu0 %v684
        %706 = vmatprep.subr.bf16.mxu0 0
        %707 = vmatpush1.bf16.msra.mxu0 %v685
        %708 = vmatprep.subr.bf16.mxu0 0
        %709 = vmatpush1.bf16.msra.mxu0 %v686
        %710 = vmatprep.subr.bf16.mxu0 0
        %711 = vmatpush1.bf16.msra.mxu0 %v687
        %712 = vmatprep.subr.bf16.mxu0 0
        %713 = vmatpush1.bf16.msra.mxu0 0
        %714 = vmatprep.subr.bf16.mxu0 0
        %715 = vmatpush1.bf16.msra.mxu0 0
        %716 = vmatprep.subr.bf16.mxu0 0
        %717 = vmatpush1.bf16.msra.mxu0 0
        %718 = vmatprep.subr.bf16.mxu0 0
        %719 = vmatpush1.bf16.msra.mxu0 0
        %720 = vmatprep.subr.bf16.mxu0 0
        %721 = vmatpush1.bf16.msra.mxu0 0
        %722 = vmatprep.subr.bf16.mxu0 0
        %723 = vmatpush1.bf16.msra.mxu0 0
        %724 = vmatprep.subr.bf16.mxu0 0
        %725 = vmatpush1.bf16.msra.mxu0 0
        %726 = vmatprep.subr.bf16.mxu0 0
        %727 = vmatpush1.bf16.msra.mxu0 0
        %728 = vmatprep.subr.bf16.mxu0 0
        %729 = vmatpush1.bf16.msra.mxu0 0
        %730 = vmatprep.subr.bf16.mxu0 0
        %731 = vmatpush1.bf16.msra.mxu0 0
        %732 = vmatprep.subr.bf16.mxu0 0
        %733 = vmatpush1.bf16.msra.mxu0 0
        %734 = vmatprep.subr.bf16.mxu0 0
        %735 = vmatpush1.bf16.msra.mxu0 0
        %736 = vmatprep.mubr.bf16.mxu0 0
        %737 = vmatmul.mubr.bf16.gmra.mrb[0].mxu0 %v693
        %v738 = vpop.f32.mrb[0].mxu0
        %v739 = vadd.f32 0.0, %v738
        %v740 = vpop.f32.mrb[0].mxu0
        %v741 = vpop.f32.mrb[0].mxu0
        %v742 = vadd.f32 0.0, %v741
        %v743 = vpop.f32.mrb[0].mxu0
        %744 = vmatprep.mubr.bf16.mxu0 0
        %745 = vmatmul.mubr.bf16.gmra.mrb[0].mxu0 %v696
        %v746 = vpop.f32.mrb[0].mxu0
        %v747 = vadd.f32 0.0, %v746
        %v748 = vpop.f32.mrb[0].mxu0
        %v749 = vpop.f32.mrb[0].mxu0
        %v750 = vadd.f32 0.0, %v749
        %v751 = vpop.f32.mrb[0].mxu0
        %752 = vmatprep.mubr.bf16.mxu0 0
        %753 = vmatmul.mubr.bf16.gmra.mrb[0].mxu0 %v699
        %v754 = vpop.f32.mrb[0].mxu0
        %v755 = vadd.f32 0.0, %v754
        %v756 = vpop.f32.mrb[0].mxu0
        %v757 = vpop.f32.mrb[0].mxu0
        %v758 = vadd.f32 0.0, %v757
        %v759 = vpop.f32.mrb[0].mxu0
        %760 = vmatprep.mubr.bf16.mxu0 0
        %761 = vmatmul.mubr.bf16.gmra.mrb[0].mxu0 %v702
        %v762 = vpop.f32.mrb[0].mxu0
        %v763 = vadd.f32 0.0, %v762
        %v764 = vpop.f32.mrb[0].mxu0
        %v765 = vpop.f32.mrb[0].mxu0
        %v766 = vadd.f32 0.0, %v765
        %v767 = vpop.f32.mrb[0].mxu0
        %768 = vdwg.mxu0
        %v769 = vadd.f32 %v574, %v739
        %v770 = vadd.f32 %v577, %v742
        %v771 = vadd.f32 %v582, %v747
        %v772 = vadd.f32 %v585, %v750
        %v773 = vadd.f32 %v590, %v755
        %v774 = vadd.f32 %v593, %v758
        %v775 = vadd.f32 %v598, %v763
        %v776 = vadd.f32 %v601, %v766
        %s777 = scalar_lea.vmem %s1, 96
        %v778 = vld [vmem:[%s777] sm:$0xf]
        %v779 = vld [vmem:[%s777 + $0x4] sm:$0xf]
        %v780 = vld [vmem:[%s777 + $0x8] sm:$0xf]
        %v781 = vld [vmem:[%s777 + $0xc] sm:$0xf]
        %v782 = vld [vmem:[%s777 + $0x10] sm:$0xf]
        %v783 = vld [vmem:[%s777 + $0x14] sm:$0xf]
        %v784 = vld [vmem:[%s777 + $0x18] sm:$0xf]
        %v785 = vld [vmem:[%s777 + $0x1c] sm:$0xf]
        %v787 = vunpack.c.l.b16 %v233
        %v788 = vpack.c.b16 %v493, %v492
        %v789 = vpack.c.b16 %v495, %v494
        %v790 = vpack.c.b16 %v497, %v496
        %v791 = vpack.c.b16 %v787, %v498
        %v800 = vunpack.c.l.b16 %v778
        %v801 = vunpack.c.l.b16 %v779
        %v802 = vunpack.c.l.b16 %v780
        %v803 = vunpack.c.l.b16 %v781
        %v804 = vunpack.c.l.b16 %v782
        %v805 = vunpack.c.l.b16 %v783
        %v806 = vunpack.c.l.b16 %v784
        %v807 = vunpack.c.l.b16 %v785
        %v808 = vpack.c.b16 %v801, %v800
        %v809 = vpack.c.b16 %v803, %v802
        %v810 = vpack.c.b16 %v805, %v804
        %v811 = vpack.c.b16 %v807, %v806
        %v817 = vsel %vm405, %v788, 0
        %v820 = vsel %vm405, %v789, 0
        %v823 = vsel %vm405, %v790, 0
        %v826 = vsel %vm405, %v791, 0
        %828 = vmatprep.subr.bf16.mxu0 0
        %829 = vmatpush1.bf16.msra.mxu0 %v808
        %830 = vmatprep.subr.bf16.mxu0 0
        %831 = vmatpush1.bf16.msra.mxu0 %v809
        %832 = vmatprep.subr.bf16.mxu0 0
        %833 = vmatpush1.bf16.msra.mxu0 %v810
        %834 = vmatprep.subr.bf16.mxu0 0
        %835 = vmatpush1.bf16.msra.mxu0 %v811
        %836 = vmatprep.subr.bf16.mxu0 0
        %837 = vmatpush1.bf16.msra.mxu0 0
        %838 = vmatprep.subr.bf16.mxu0 0
        %839 = vmatpush1.bf16.msra.mxu0 0
        %840 = vmatprep.subr.bf16.mxu0 0
        %841 = vmatpush1.bf16.msra.mxu0 0
        %842 = vmatprep.subr.bf16.mxu0 0
        %843 = vmatpush1.bf16.msra.mxu0 0
        %844 = vmatprep.subr.bf16.mxu0 0
        %845 = vmatpush1.bf16.msra.mxu0 0
        %846 = vmatprep.subr.bf16.mxu0 0
        %847 = vmatpush1.bf16.msra.mxu0 0
        %848 = vmatprep.subr.bf16.mxu0 0
        %849 = vmatpush1.bf16.msra.mxu0 0
        %850 = vmatprep.subr.bf16.mxu0 0
        %851 = vmatpush1.bf16.msra.mxu0 0
        %852 = vmatprep.subr.bf16.mxu0 0
        %853 = vmatpush1.bf16.msra.mxu0 0
        %854 = vmatprep.subr.bf16.mxu0 0
        %855 = vmatpush1.bf16.msra.mxu0 0
        %856 = vmatprep.subr.bf16.mxu0 0
        %857 = vmatpush1.bf16.msra.mxu0 0
        %858 = vmatprep.subr.bf16.mxu0 0
        %859 = vmatpush1.bf16.msra.mxu0 0
        %860 = vmatprep.mubr.bf16.mxu0 0
        %861 = vmatmul.mubr.bf16.gmra.mrb[0].mxu0 %v817
        %v862 = vpop.f32.mrb[0].mxu0
        %v863 = vadd.f32 0.0, %v862
        %v864 = vpop.f32.mrb[0].mxu0
        %v865 = vpop.f32.mrb[0].mxu0
        %v866 = vadd.f32 0.0, %v865
        %v867 = vpop.f32.mrb[0].mxu0
        %868 = vmatprep.mubr.bf16.mxu0 0
        %869 = vmatmul.mubr.bf16.gmra.mrb[0].mxu0 %v820
        %v870 = vpop.f32.mrb[0].mxu0
        %v871 = vadd.f32 0.0, %v870
        %v872 = vpop.f32.mrb[0].mxu0
        %v873 = vpop.f32.mrb[0].mxu0
        %v874 = vadd.f32 0.0, %v873
        %v875 = vpop.f32.mrb[0].mxu0
        %876 = vmatprep.mubr.bf16.mxu0 0
        %877 = vmatmul.mubr.bf16.gmra.mrb[0].mxu0 %v823
        %v878 = vpop.f32.mrb[0].mxu0
        %v879 = vadd.f32 0.0, %v878
        %v880 = vpop.f32.mrb[0].mxu0
        %v881 = vpop.f32.mrb[0].mxu0
        %v882 = vadd.f32 0.0, %v881
        %v883 = vpop.f32.mrb[0].mxu0
        %884 = vmatprep.mubr.bf16.mxu0 0
        %885 = vmatmul.mubr.bf16.gmra.mrb[0].mxu0 %v826
        %v886 = vpop.f32.mrb[0].mxu0
        %v887 = vadd.f32 0.0, %v886
        %v888 = vpop.f32.mrb[0].mxu0
        %v889 = vpop.f32.mrb[0].mxu0
        %v890 = vadd.f32 0.0, %v889
        %v891 = vpop.f32.mrb[0].mxu0
        %892 = vdwg.mxu0
        %v893 = vadd.f32 %v769, %v863
        %v894 = vadd.f32 %v770, %v866
        %v895 = vadd.f32 %v771, %v871
        %v896 = vadd.f32 %v772, %v874
        %v897 = vadd.f32 %v773, %v879
        %v898 = vadd.f32 %v774, %v882
        %v899 = vadd.f32 %v775, %v887
        %v900 = vadd.f32 %v776, %v890
        %v902 = vshrl.u32 %v233, 16
        %v904 = vrot.slane %v902, 4
        %v905 = vshll.u32 %v233, 16
        %v907 = vrot.slane %v905, 5
        %v908 = vor.u32 %v904, %v907
        %v909 = vrot.slane %v908, 4
        %v911 = vshll.u32 %v234, 16
        %v913 = vrot.slane %v911, 5
        %v914 = vsel %vm247, %v909, %v913
        %s915 = scalar_lea.vmem %s1, 128
        %v916 = vld [vmem:[%s915] sm:$0xf]
        %v917 = vld [vmem:[%s915 + $0x4] sm:$0xf]
        %v918 = vld [vmem:[%s915 + $0x8] sm:$0xf]
        %v919 = vld [vmem:[%s915 + $0xc] sm:$0xf]
        %v920 = vld [vmem:[%s915 + $0x10] sm:$0xf]
        %v921 = vld [vmem:[%s915 + $0x14] sm:$0xf]
        %v922 = vld [vmem:[%s915 + $0x18] sm:$0xf]
        %v923 = vld [vmem:[%s915 + $0x1c] sm:$0xf]
        %v924 = vunpack.c.l.b16 %v914
        %v925 = vpack.c.b16 %v371, %v370
        %v926 = vpack.c.b16 %v373, %v372
        %v927 = vpack.c.b16 %v375, %v374
        %v928 = vpack.c.b16 %v924, %v376
        %v937 = vunpack.c.l.b16 %v916
        %v938 = vunpack.c.l.b16 %v917
        %v939 = vunpack.c.l.b16 %v918
        %v940 = vunpack.c.l.b16 %v919
        %v941 = vunpack.c.l.b16 %v920
        %v942 = vunpack.c.l.b16 %v921
        %v943 = vunpack.c.l.b16 %v922
        %v944 = vunpack.c.l.b16 %v923
        %v945 = vpack.c.b16 %v938, %v937
        %v946 = vpack.c.b16 %v940, %v939
        %v947 = vpack.c.b16 %v942, %v941
        %v948 = vpack.c.b16 %v944, %v943
        %v954 = vsel %vm405, %v925, 0
        %v957 = vsel %vm405, %v926, 0
        %v960 = vsel %vm405, %v927, 0
        %v963 = vsel %vm405, %v928, 0
        %965 = vmatprep.subr.bf16.mxu0 0
        %966 = vmatpush1.bf16.msra.mxu0 %v945
        %967 = vmatprep.subr.bf16.mxu0 0
        %968 = vmatpush1.bf16.msra.mxu0 %v946
        %969 = vmatprep.subr.bf16.mxu0 0
        %970 = vmatpush1.bf16.msra.mxu0 %v947
        %971 = vmatprep.subr.bf16.mxu0 0
        %972 = vmatpush1.bf16.msra.mxu0 %v948
        %973 = vmatprep.subr.bf16.mxu0 0
        %974 = vmatpush1.bf16.msra.mxu0 0
        %975 = vmatprep.subr.bf16.mxu0 0
        %976 = vmatpush1.bf16.msra.mxu0 0
        %977 = vmatprep.subr.bf16.mxu0 0
        %978 = vmatpush1.bf16.msra.mxu0 0
        %979 = vmatprep.subr.bf16.mxu0 0
        %980 = vmatpush1.bf16.msra.mxu0 0
        %981 = vmatprep.subr.bf16.mxu0 0
        %982 = vmatpush1.bf16.msra.mxu0 0
        %983 = vmatprep.subr.bf16.mxu0 0
        %984 = vmatpush1.bf16.msra.mxu0 0
        %985 = vmatprep.subr.bf16.mxu0 0
        %986 = vmatpush1.bf16.msra.mxu0 0
        %987 = vmatprep.subr.bf16.mxu0 0
        %988 = vmatpush1.bf16.msra.mxu0 0
        %989 = vmatprep.subr.bf16.mxu0 0
        %990 = vmatpush1.bf16.msra.mxu0 0
        %991 = vmatprep.subr.bf16.mxu0 0
        %992 = vmatpush1.bf16.msra.mxu0 0
        %993 = vmatprep.subr.bf16.mxu0 0
        %994 = vmatpush1.bf16.msra.mxu0 0
        %995 = vmatprep.subr.bf16.mxu0 0
        %996 = vmatpush1.bf16.msra.mxu0 0
        %997 = vmatprep.mubr.bf16.mxu0 0
        %998 = vmatmul.mubr.bf16.gmra.mrb[0].mxu0 %v954
        %v999 = vpop.f32.mrb[0].mxu0
        %v1000 = vadd.f32 0.0, %v999
        %v1001 = vpop.f32.mrb[0].mxu0
        %v1002 = vpop.f32.mrb[0].mxu0
        %v1003 = vadd.f32 0.0, %v1002
        %v1004 = vpop.f32.mrb[0].mxu0
        %1005 = vmatprep.mubr.bf16.mxu0 0
        %1006 = vmatmul.mubr.bf16.gmra.mrb[0].mxu0 %v957
        %v1007 = vpop.f32.mrb[0].mxu0
        %v1008 = vadd.f32 0.0, %v1007
        %v1009 = vpop.f32.mrb[0].mxu0
        %v1010 = vpop.f32.mrb[0].mxu0
        %v1011 = vadd.f32 0.0, %v1010
        %v1012 = vpop.f32.mrb[0].mxu0
        %1013 = vmatprep.mubr.bf16.mxu0 0
        %1014 = vmatmul.mubr.bf16.gmra.mrb[0].mxu0 %v960
        %v1015 = vpop.f32.mrb[0].mxu0
        %v1016 = vadd.f32 0.0, %v1015
        %v1017 = vpop.f32.mrb[0].mxu0
        %v1018 = vpop.f32.mrb[0].mxu0
        %v1019 = vadd.f32 0.0, %v1018
        %v1020 = vpop.f32.mrb[0].mxu0
        %1021 = vmatprep.mubr.bf16.mxu0 0
        %1022 = vmatmul.mubr.bf16.gmra.mrb[0].mxu0 %v963
        %v1023 = vpop.f32.mrb[0].mxu0
        %v1024 = vadd.f32 0.0, %v1023
        %v1025 = vpop.f32.mrb[0].mxu0
        %v1026 = vpop.f32.mrb[0].mxu0
        %v1027 = vadd.f32 0.0, %v1026
        %v1028 = vpop.f32.mrb[0].mxu0
        %1029 = vdwg.mxu0
        %v1030 = vadd.f32 %v893, %v1000
        %v1031 = vadd.f32 %v894, %v1003
        %v1032 = vadd.f32 %v895, %v1008
        %v1033 = vadd.f32 %v896, %v1011
        %v1034 = vadd.f32 %v897, %v1016
        %v1035 = vadd.f32 %v898, %v1019
        %v1036 = vadd.f32 %v899, %v1024
        %v1037 = vadd.f32 %v900, %v1027
        %v1039 = vrot.slane %v233, 5
        %v1040 = vrot.slane %v1039, 4
        %v1041 = vrot.slane %v234, 5
        %v1042 = vsel %vm614, %v1040, %v1041
        %s1043 = scalar_lea.vmem %s1, 160
        %v1044 = vld [vmem:[%s1043] sm:$0xf]
        %v1045 = vld [vmem:[%s1043 + $0x4] sm:$0xf]
        %v1046 = vld [vmem:[%s1043 + $0x8] sm:$0xf]
        %v1047 = vld [vmem:[%s1043 + $0xc] sm:$0xf]
        %v1048 = vld [vmem:[%s1043 + $0x10] sm:$0xf]
        %v1049 = vld [vmem:[%s1043 + $0x14] sm:$0xf]
        %v1050 = vld [vmem:[%s1043 + $0x18] sm:$0xf]
        %v1051 = vld [vmem:[%s1043 + $0x1c] sm:$0xf]
        %v1052 = vunpack.c.l.b16 %v1042
        %v1053 = vpack.c.b16 %v658, %v657
        %v1054 = vpack.c.b16 %v660, %v659
        %v1055 = vpack.c.b16 %v662, %v661
        %v1056 = vpack.c.b16 %v1052, %v663
        %v1065 = vunpack.c.l.b16 %v1044
        %v1066 = vunpack.c.l.b16 %v1045
        %v1067 = vunpack.c.l.b16 %v1046
        %v1068 = vunpack.c.l.b16 %v1047
        %v1069 = vunpack.c.l.b16 %v1048
        %v1070 = vunpack.c.l.b16 %v1049
        %v1071 = vunpack.c.l.b16 %v1050
        %v1072 = vunpack.c.l.b16 %v1051
        %v1073 = vpack.c.b16 %v1066, %v1065
        %v1074 = vpack.c.b16 %v1068, %v1067
        %v1075 = vpack.c.b16 %v1070, %v1069
        %v1076 = vpack.c.b16 %v1072, %v1071
        %v1082 = vsel %vm405, %v1053, 0
        %v1085 = vsel %vm405, %v1054, 0
        %v1088 = vsel %vm405, %v1055, 0
        %v1091 = vsel %vm405, %v1056, 0
        %1093 = vmatprep.subr.bf16.mxu0 0
        %1094 = vmatpush1.bf16.msra.mxu0 %v1073
        %1095 = vmatprep.subr.bf16.mxu0 0
        %1096 = vmatpush1.bf16.msra.mxu0 %v1074
        %1097 = vmatprep.subr.bf16.mxu0 0
        %1098 = vmatpush1.bf16.msra.mxu0 %v1075
        %1099 = vmatprep.subr.bf16.mxu0 0
        %1100 = vmatpush1.bf16.msra.mxu0 %v1076
        %1101 = vmatprep.subr.bf16.mxu0 0
        %1102 = vmatpush1.bf16.msra.mxu0 0
        %1103 = vmatprep.subr.bf16.mxu0 0
        %1104 = vmatpush1.bf16.msra.mxu0 0
        %1105 = vmatprep.subr.bf16.mxu0 0
        %1106 = vmatpush1.bf16.msra.mxu0 0
        %1107 = vmatprep.subr.bf16.mxu0 0
        %1108 = vmatpush1.bf16.msra.mxu0 0
        %1109 = vmatprep.subr.bf16.mxu0 0
        %1110 = vmatpush1.bf16.msra.mxu0 0
        %1111 = vmatprep.subr.bf16.mxu0 0
        %1112 = vmatpush1.bf16.msra.mxu0 0
        %1113 = vmatprep.subr.bf16.mxu0 0
        %1114 = vmatpush1.bf16.msra.mxu0 0
        %1115 = vmatprep.subr.bf16.mxu0 0
        %1116 = vmatpush1.bf16.msra.mxu0 0
        %1117 = vmatprep.subr.bf16.mxu0 0
        %1118 = vmatpush1.bf16.msra.mxu0 0
        %1119 = vmatprep.subr.bf16.mxu0 0
        %1120 = vmatpush1.bf16.msra.mxu0 0
        %1121 = vmatprep.subr.bf16.mxu0 0
        %1122 = vmatpush1.bf16.msra.mxu0 0
        %1123 = vmatprep.subr.bf16.mxu0 0
        %1124 = vmatpush1.bf16.msra.mxu0 0
        %1125 = vmatprep.mubr.bf16.mxu0 0
        %1126 = vmatmul.mubr.bf16.gmra.mrb[0].mxu0 %v1082
        %v1127 = vpop.f32.mrb[0].mxu0
        %v1128 = vadd.f32 0.0, %v1127
        %v1129 = vpop.f32.mrb[0].mxu0
        %v1130 = vpop.f32.mrb[0].mxu0
        %v1131 = vadd.f32 0.0, %v1130
        %v1132 = vpop.f32.mrb[0].mxu0
        %1133 = vmatprep.mubr.bf16.mxu0 0
        %1134 = vmatmul.mubr.bf16.gmra.mrb[0].mxu0 %v1085
        %v1135 = vpop.f32.mrb[0].mxu0
        %v1136 = vadd.f32 0.0, %v1135
        %v1137 = vpop.f32.mrb[0].mxu0
        %v1138 = vpop.f32.mrb[0].mxu0
        %v1139 = vadd.f32 0.0, %v1138
        %v1140 = vpop.f32.mrb[0].mxu0
        %1141 = vmatprep.mubr.bf16.mxu0 0
        %1142 = vmatmul.mubr.bf16.gmra.mrb[0].mxu0 %v1088
        %v1143 = vpop.f32.mrb[0].mxu0
        %v1144 = vadd.f32 0.0, %v1143
        %v1145 = vpop.f32.mrb[0].mxu0
        %v1146 = vpop.f32.mrb[0].mxu0
        %v1147 = vadd.f32 0.0, %v1146
        %v1148 = vpop.f32.mrb[0].mxu0
        %1149 = vmatprep.mubr.bf16.mxu0 0
        %1150 = vmatmul.mubr.bf16.gmra.mrb[0].mxu0 %v1091
        %v1151 = vpop.f32.mrb[0].mxu0
        %v1152 = vadd.f32 0.0, %v1151
        %v1153 = vpop.f32.mrb[0].mxu0
        %v1154 = vpop.f32.mrb[0].mxu0
        %v1155 = vadd.f32 0.0, %v1154
        %v1156 = vpop.f32.mrb[0].mxu0
        %1157 = vdwg.mxu0
        %v1158 = vadd.f32 %v1030, %v1128
        %v1159 = vadd.f32 %v1031, %v1131
        %v1160 = vadd.f32 %v1032, %v1136
        %v1161 = vadd.f32 %v1033, %v1139
        %v1162 = vadd.f32 %v1034, %v1144
        %v1163 = vadd.f32 %v1035, %v1147
        %v1164 = vadd.f32 %v1036, %v1152
        %v1165 = vadd.f32 %v1037, %v1155
        %s1166 = scalar_lea.vmem %s1, 192
        %v1167 = vld [vmem:[%s1166] sm:$0xf]
        %v1168 = vld [vmem:[%s1166 + $0x4] sm:$0xf]
        %v1169 = vld [vmem:[%s1166 + $0x8] sm:$0xf]
        %v1170 = vld [vmem:[%s1166 + $0xc] sm:$0xf]
        %v1171 = vld [vmem:[%s1166 + $0x10] sm:$0xf]
        %v1172 = vld [vmem:[%s1166 + $0x14] sm:$0xf]
        %v1173 = vld [vmem:[%s1166 + $0x18] sm:$0xf]
        %v1174 = vld [vmem:[%s1166 + $0x1c] sm:$0xf]
        %v1176 = vunpack.c.l.b16 %v235
        %v1177 = vpack.c.b16 %v1176, %v787
        %v1186 = vunpack.c.l.b16 %v1167
        %v1187 = vunpack.c.l.b16 %v1168
        %v1188 = vunpack.c.l.b16 %v1169
        %v1189 = vunpack.c.l.b16 %v1170
        %v1190 = vunpack.c.l.b16 %v1171
        %v1191 = vunpack.c.l.b16 %v1172
        %v1192 = vunpack.c.l.b16 %v1173
        %v1193 = vunpack.c.l.b16 %v1174
        %v1194 = vpack.c.b16 %v1187, %v1186
        %v1195 = vpack.c.b16 %v1189, %v1188
        %v1196 = vpack.c.b16 %v1191, %v1190
        %v1197 = vpack.c.b16 %v1193, %v1192
        %v1203 = vsel %vm405, %v1177, 0
        %1205 = vmatprep.subr.bf16.mxu0 0
        %1206 = vmatpush1.bf16.msra.mxu0 %v1194
        %1207 = vmatprep.subr.bf16.mxu0 0
        %1208 = vmatpush1.bf16.msra.mxu0 %v1195
        %1209 = vmatprep.subr.bf16.mxu0 0
        %1210 = vmatpush1.bf16.msra.mxu0 %v1196
        %1211 = vmatprep.subr.bf16.mxu0 0
        %1212 = vmatpush1.bf16.msra.mxu0 %v1197
        %1213 = vmatprep.subr.bf16.mxu0 0
        %1214 = vmatpush1.bf16.msra.mxu0 0
        %1215 = vmatprep.subr.bf16.mxu0 0
        %1216 = vmatpush1.bf16.msra.mxu0 0
        %1217 = vmatprep.subr.bf16.mxu0 0
        %1218 = vmatpush1.bf16.msra.mxu0 0
        %1219 = vmatprep.subr.bf16.mxu0 0
        %1220 = vmatpush1.bf16.msra.mxu0 0
        %1221 = vmatprep.subr.bf16.mxu0 0
        %1222 = vmatpush1.bf16.msra.mxu0 0
        %1223 = vmatprep.subr.bf16.mxu0 0
        %1224 = vmatpush1.bf16.msra.mxu0 0
        %1225 = vmatprep.subr.bf16.mxu0 0
        %1226 = vmatpush1.bf16.msra.mxu0 0
        %1227 = vmatprep.subr.bf16.mxu0 0
        %1228 = vmatpush1.bf16.msra.mxu0 0
        %1229 = vmatprep.subr.bf16.mxu0 0
        %1230 = vmatpush1.bf16.msra.mxu0 0
        %1231 = vmatprep.subr.bf16.mxu0 0
        %1232 = vmatpush1.bf16.msra.mxu0 0
        %1233 = vmatprep.subr.bf16.mxu0 0
        %1234 = vmatpush1.bf16.msra.mxu0 0
        %1235 = vmatprep.subr.bf16.mxu0 0
        %1236 = vmatpush1.bf16.msra.mxu0 0
        %1237 = vmatprep.mubr.bf16.mxu0 0
        %1238 = vmatmul.mubr.bf16.gmra.mrb[0].mxu0 %v531
        %v1239 = vpop.f32.mrb[0].mxu0
        %v1240 = vadd.f32 0.0, %v1239
        %v1241 = vpop.f32.mrb[0].mxu0
        %v1242 = vpop.f32.mrb[0].mxu0
        %v1243 = vadd.f32 0.0, %v1242
        %v1244 = vpop.f32.mrb[0].mxu0
        %1245 = vmatprep.mubr.bf16.mxu0 0
        %1246 = vmatmul.mubr.bf16.gmra.mrb[0].mxu0 %v534
        %v1247 = vpop.f32.mrb[0].mxu0
        %v1248 = vadd.f32 0.0, %v1247
        %v1249 = vpop.f32.mrb[0].mxu0
        %v1250 = vpop.f32.mrb[0].mxu0
        %v1251 = vadd.f32 0.0, %v1250
        %v1252 = vpop.f32.mrb[0].mxu0
        %1253 = vmatprep.mubr.bf16.mxu0 0
        %1254 = vmatmul.mubr.bf16.gmra.mrb[0].mxu0 %v537
        %v1255 = vpop.f32.mrb[0].mxu0
        %v1256 = vadd.f32 0.0, %v1255
        %v1257 = vpop.f32.mrb[0].mxu0
        %v1258 = vpop.f32.mrb[0].mxu0
        %v1259 = vadd.f32 0.0, %v1258
        %v1260 = vpop.f32.mrb[0].mxu0
        %1261 = vmatprep.mubr.bf16.mxu0 0
        %1262 = vmatmul.mubr.bf16.gmra.mrb[0].mxu0 %v1203
        %v1263 = vpop.f32.mrb[0].mxu0
        %v1264 = vadd.f32 0.0, %v1263
        %v1265 = vpop.f32.mrb[0].mxu0
        %v1266 = vpop.f32.mrb[0].mxu0
        %v1267 = vadd.f32 0.0, %v1266
        %v1268 = vpop.f32.mrb[0].mxu0
        %1269 = vdwg.mxu0
        %v1270 = vadd.f32 %v1158, %v1240
        %v1271 = vadd.f32 %v1159, %v1243
        %v1272 = vadd.f32 %v1160, %v1248
        %v1273 = vadd.f32 %v1161, %v1251
        %v1274 = vadd.f32 %v1162, %v1256
        %v1275 = vadd.f32 %v1163, %v1259
        %v1276 = vadd.f32 %v1164, %v1264
        %v1277 = vadd.f32 %v1165, %v1267
        %v1279 = vshrl.u32 %v235, 16
        %v1281 = vrot.slane %v1279, 4
        %v1282 = vshll.u32 %v235, 16
        %v1284 = vrot.slane %v1282, 5
        %v1285 = vor.u32 %v1281, %v1284
        %v1286 = vrot.slane %v1285, 4
        %v1288 = vshll.u32 %v236, 16
        %v1290 = vrot.slane %v1288, 5
        %v1291 = vsel %vm247, %v1286, %v1290
        %s1292 = scalar_lea.vmem %s1, 224
        %v1293 = vld [vmem:[%s1292] sm:$0xf]
        %v1294 = vld [vmem:[%s1292 + $0x4] sm:$0xf]
        %v1295 = vld [vmem:[%s1292 + $0x8] sm:$0xf]
        %v1296 = vld [vmem:[%s1292 + $0xc] sm:$0xf]
        %v1297 = vld [vmem:[%s1292 + $0x10] sm:$0xf]
        %v1298 = vld [vmem:[%s1292 + $0x14] sm:$0xf]
        %v1299 = vld [vmem:[%s1292 + $0x18] sm:$0xf]
        %v1300 = vld [vmem:[%s1292 + $0x1c] sm:$0xf]
        %v1301 = vunpack.c.l.b16 %v1291
        %v1302 = vpack.c.b16 %v1301, %v924
        %v1311 = vunpack.c.l.b16 %v1293
        %v1312 = vunpack.c.l.b16 %v1294
        %v1313 = vunpack.c.l.b16 %v1295
        %v1314 = vunpack.c.l.b16 %v1296
        %v1315 = vunpack.c.l.b16 %v1297
        %v1316 = vunpack.c.l.b16 %v1298
        %v1317 = vunpack.c.l.b16 %v1299
        %v1318 = vunpack.c.l.b16 %v1300
        %v1319 = vpack.c.b16 %v1312, %v1311
        %v1320 = vpack.c.b16 %v1314, %v1313
        %v1321 = vpack.c.b16 %v1316, %v1315
        %v1322 = vpack.c.b16 %v1318, %v1317
        %v1328 = vsel %vm405, %v1302, 0
        %1330 = vmatprep.subr.bf16.mxu0 0
        %1331 = vmatpush1.bf16.msra.mxu0 %v1319
        %1332 = vmatprep.subr.bf16.mxu0 0
        %1333 = vmatpush1.bf16.msra.mxu0 %v1320
        %1334 = vmatprep.subr.bf16.mxu0 0
        %1335 = vmatpush1.bf16.msra.mxu0 %v1321
        %1336 = vmatprep.subr.bf16.mxu0 0
        %1337 = vmatpush1.bf16.msra.mxu0 %v1322
        %1338 = vmatprep.subr.bf16.mxu0 0
        %1339 = vmatpush1.bf16.msra.mxu0 0
        %1340 = vmatprep.subr.bf16.mxu0 0
        %1341 = vmatpush1.bf16.msra.mxu0 0
        %1342 = vmatprep.subr.bf16.mxu0 0
        %1343 = vmatpush1.bf16.msra.mxu0 0
        %1344 = vmatprep.subr.bf16.mxu0 0
        %1345 = vmatpush1.bf16.msra.mxu0 0
        %1346 = vmatprep.subr.bf16.mxu0 0
        %1347 = vmatpush1.bf16.msra.mxu0 0
        %1348 = vmatprep.subr.bf16.mxu0 0
        %1349 = vmatpush1.bf16.msra.mxu0 0
        %1350 = vmatprep.subr.bf16.mxu0 0
        %1351 = vmatpush1.bf16.msra.mxu0 0
        %1352 = vmatprep.subr.bf16.mxu0 0
        %1353 = vmatpush1.bf16.msra.mxu0 0
        %1354 = vmatprep.subr.bf16.mxu0 0
        %1355 = vmatpush1.bf16.msra.mxu0 0
        %1356 = vmatprep.subr.bf16.mxu0 0
        %1357 = vmatpush1.bf16.msra.mxu0 0
        %1358 = vmatprep.subr.bf16.mxu0 0
        %1359 = vmatpush1.bf16.msra.mxu0 0
        %1360 = vmatprep.subr.bf16.mxu0 0
        %1361 = vmatpush1.bf16.msra.mxu0 0
        %1362 = vmatprep.mubr.bf16.mxu0 0
        %1363 = vmatmul.mubr.bf16.gmra.mrb[0].mxu0 %v410
        %v1364 = vpop.f32.mrb[0].mxu0
        %v1365 = vadd.f32 0.0, %v1364
        %v1366 = vpop.f32.mrb[0].mxu0
        %v1367 = vpop.f32.mrb[0].mxu0
        %v1368 = vadd.f32 0.0, %v1367
        %v1369 = vpop.f32.mrb[0].mxu0
        %1370 = vmatprep.mubr.bf16.mxu0 0
        %1371 = vmatmul.mubr.bf16.gmra.mrb[0].mxu0 %v413
        %v1372 = vpop.f32.mrb[0].mxu0
        %v1373 = vadd.f32 0.0, %v1372
        %v1374 = vpop.f32.mrb[0].mxu0
        %v1375 = vpop.f32.mrb[0].mxu0
        %v1376 = vadd.f32 0.0, %v1375
        %v1377 = vpop.f32.mrb[0].mxu0
        %1378 = vmatprep.mubr.bf16.mxu0 0
        %1379 = vmatmul.mubr.bf16.gmra.mrb[0].mxu0 %v416
        %v1380 = vpop.f32.mrb[0].mxu0
        %v1381 = vadd.f32 0.0, %v1380
        %v1382 = vpop.f32.mrb[0].mxu0
        %v1383 = vpop.f32.mrb[0].mxu0
        %v1384 = vadd.f32 0.0, %v1383
        %v1385 = vpop.f32.mrb[0].mxu0
        %1386 = vmatprep.mubr.bf16.mxu0 0
        %1387 = vmatmul.mubr.bf16.gmra.mrb[0].mxu0 %v1328
        %v1388 = vpop.f32.mrb[0].mxu0
        %v1389 = vadd.f32 0.0, %v1388
        %v1390 = vpop.f32.mrb[0].mxu0
        %v1391 = vpop.f32.mrb[0].mxu0
        %v1392 = vadd.f32 0.0, %v1391
        %v1393 = vpop.f32.mrb[0].mxu0
        %1394 = vdwg.mxu0
        %v1395 = vadd.f32 %v1270, %v1365
        %v1396 = vadd.f32 %v1271, %v1368
        %v1397 = vadd.f32 %v1272, %v1373
        %v1398 = vadd.f32 %v1273, %v1376
        %v1399 = vadd.f32 %v1274, %v1381
        %v1400 = vadd.f32 %v1275, %v1384
        %v1401 = vadd.f32 %v1276, %v1389
        %v1402 = vadd.f32 %v1277, %v1392
        %v1404 = vrot.slane %v235, 5
        %v1405 = vrot.slane %v1404, 4
        %v1406 = vrot.slane %v236, 5
        %v1407 = vsel %vm614, %v1405, %v1406
        %s1408 = scalar_lea.vmem %s1, 256
        %v1409 = vld [vmem:[%s1408] sm:$0xf]
        %v1410 = vld [vmem:[%s1408 + $0x4] sm:$0xf]
        %v1411 = vld [vmem:[%s1408 + $0x8] sm:$0xf]
        %v1412 = vld [vmem:[%s1408 + $0xc] sm:$0xf]
        %v1413 = vld [vmem:[%s1408 + $0x10] sm:$0xf]
        %v1414 = vld [vmem:[%s1408 + $0x14] sm:$0xf]
        %v1415 = vld [vmem:[%s1408 + $0x18] sm:$0xf]
        %v1416 = vld [vmem:[%s1408 + $0x1c] sm:$0xf]
        %v1417 = vunpack.c.l.b16 %v1407
        %v1418 = vpack.c.b16 %v1417, %v1052
        %v1427 = vunpack.c.l.b16 %v1409
        %v1428 = vunpack.c.l.b16 %v1410
        %v1429 = vunpack.c.l.b16 %v1411
        %v1430 = vunpack.c.l.b16 %v1412
        %v1431 = vunpack.c.l.b16 %v1413
        %v1432 = vunpack.c.l.b16 %v1414
        %v1433 = vunpack.c.l.b16 %v1415
        %v1434 = vunpack.c.l.b16 %v1416
        %v1435 = vpack.c.b16 %v1428, %v1427
        %v1436 = vpack.c.b16 %v1430, %v1429
        %v1437 = vpack.c.b16 %v1432, %v1431
        %v1438 = vpack.c.b16 %v1434, %v1433
        %v1444 = vsel %vm405, %v1418, 0
        %1446 = vmatprep.subr.bf16.mxu0 0
        %1447 = vmatpush1.bf16.msra.mxu0 %v1435
        %1448 = vmatprep.subr.bf16.mxu0 0
        %1449 = vmatpush1.bf16.msra.mxu0 %v1436
        %1450 = vmatprep.subr.bf16.mxu0 0
        %1451 = vmatpush1.bf16.msra.mxu0 %v1437
        %1452 = vmatprep.subr.bf16.mxu0 0
        %1453 = vmatpush1.bf16.msra.mxu0 %v1438
        %1454 = vmatprep.subr.bf16.mxu0 0
        %1455 = vmatpush1.bf16.msra.mxu0 0
        %1456 = vmatprep.subr.bf16.mxu0 0
        %1457 = vmatpush1.bf16.msra.mxu0 0
        %1458 = vmatprep.subr.bf16.mxu0 0
        %1459 = vmatpush1.bf16.msra.mxu0 0
        %1460 = vmatprep.subr.bf16.mxu0 0
        %1461 = vmatpush1.bf16.msra.mxu0 0
        %1462 = vmatprep.subr.bf16.mxu0 0
        %1463 = vmatpush1.bf16.msra.mxu0 0
        %1464 = vmatprep.subr.bf16.mxu0 0
        %1465 = vmatpush1.bf16.msra.mxu0 0
        %1466 = vmatprep.subr.bf16.mxu0 0
        %1467 = vmatpush1.bf16.msra.mxu0 0
        %1468 = vmatprep.subr.bf16.mxu0 0
        %1469 = vmatpush1.bf16.msra.mxu0 0
        %1470 = vmatprep.subr.bf16.mxu0 0
        %1471 = vmatpush1.bf16.msra.mxu0 0
        %1472 = vmatprep.subr.bf16.mxu0 0
        %1473 = vmatpush1.bf16.msra.mxu0 0
        %1474 = vmatprep.subr.bf16.mxu0 0
        %1475 = vmatpush1.bf16.msra.mxu0 0
        %1476 = vmatprep.subr.bf16.mxu0 0
        %1477 = vmatpush1.bf16.msra.mxu0 0
        %1478 = vmatprep.mubr.bf16.mxu0 0
        %1479 = vmatmul.mubr.bf16.gmra.mrb[0].mxu0 %v696
        %v1480 = vpop.f32.mrb[0].mxu0
        %v1481 = vadd.f32 0.0, %v1480
        %v1482 = vpop.f32.mrb[0].mxu0
        %v1483 = vpop.f32.mrb[0].mxu0
        %v1484 = vadd.f32 0.0, %v1483
        %v1485 = vpop.f32.mrb[0].mxu0
        %1486 = vmatprep.mubr.bf16.mxu0 0
        %1487 = vmatmul.mubr.bf16.gmra.mrb[0].mxu0 %v699
        %v1488 = vpop.f32.mrb[0].mxu0
        %v1489 = vadd.f32 0.0, %v1488
        %v1490 = vpop.f32.mrb[0].mxu0
        %v1491 = vpop.f32.mrb[0].mxu0
        %v1492 = vadd.f32 0.0, %v1491
        %v1493 = vpop.f32.mrb[0].mxu0
        %1494 = vmatprep.mubr.bf16.mxu0 0
        %1495 = vmatmul.mubr.bf16.gmra.mrb[0].mxu0 %v702
        %v1496 = vpop.f32.mrb[0].mxu0
        %v1497 = vadd.f32 0.0, %v1496
        %v1498 = vpop.f32.mrb[0].mxu0
        %v1499 = vpop.f32.mrb[0].mxu0
        %v1500 = vadd.f32 0.0, %v1499
        %v1501 = vpop.f32.mrb[0].mxu0
        %1502 = vmatprep.mubr.bf16.mxu0 0
        %1503 = vmatmul.mubr.bf16.gmra.mrb[0].mxu0 %v1444
        %v1504 = vpop.f32.mrb[0].mxu0
        %v1505 = vadd.f32 0.0, %v1504
        %v1506 = vpop.f32.mrb[0].mxu0
        %v1507 = vpop.f32.mrb[0].mxu0
        %v1508 = vadd.f32 0.0, %v1507
        %v1509 = vpop.f32.mrb[0].mxu0
        %1510 = vdwg.mxu0
        %v1511 = vadd.f32 %v1395, %v1481
        %v1512 = vadd.f32 %v1396, %v1484
        %v1513 = vadd.f32 %v1397, %v1489
        %v1514 = vadd.f32 %v1398, %v1492
        %v1515 = vadd.f32 %v1399, %v1497
        %v1516 = vadd.f32 %v1400, %v1500
        %v1517 = vadd.f32 %v1401, %v1505
        %v1518 = vadd.f32 %v1402, %v1508
        %v1519 = vld [vmem:[%s2] sm:$0x1]
        %v1521 = vlaneseq
        %v1522 = vshrl.u32 %v1521, 7
        %v1523 = vsub.s32 0, %v1522
        %v1524 = vrot.slane %v1519, %v1523
        %v1526 = vadd.f32 %v1511, %v1524
        %v1527 = vadd.f32 %v1512, %v1524
        %v1528 = vadd.f32 %v1513, %v1524
        %v1529 = vadd.f32 %v1514, %v1524
        %v1530 = vadd.f32 %v1515, %v1524
        %v1531 = vadd.f32 %v1516, %v1524
        %v1532 = vadd.f32 %v1517, %v1524
        %v1533 = vadd.f32 %v1518, %v1524
        %v1534 = vld [vmem:[%s215] sm:$0xff]
        %v1535 = vld [vmem:[%s215 + $0x8] sm:$0xff]
        %v1536 = vld [vmem:[%s215 + $0x10] sm:$0xff]
        %v1537 = vld [vmem:[%s215 + $0x18] sm:$0xff]
        %v1538 = vld [vmem:[%s215 + $0x20] sm:$0xff]
        %v1539 = vld [vmem:[%s215 + $0x28] sm:$0xff]
        %v1540 = vld [vmem:[%s215 + $0x30] sm:$0xff]
        %v1541 = vld [vmem:[%s215 + $0x38] sm:$0xff]
        %v1542 = vadd.f32 %v1526, %v1534
        %v1543 = vadd.f32 %v1527, %v1535
        %v1544 = vadd.f32 %v1528, %v1536
        %v1545 = vadd.f32 %v1529, %v1537
        %v1546 = vadd.f32 %v1530, %v1538
        %v1547 = vadd.f32 %v1531, %v1539
        %v1548 = vadd.f32 %v1532, %v1540
        %v1549 = vadd.f32 %v1533, %v1541
        %1550 = vst.msk [vmem:[%s205] sm:$0xff] %vm405, %v1542
        %1551 = vst.msk [vmem:[%s205 + $0x8] sm:$0xff] %vm405, %v1543
        %1552 = vst.msk [vmem:[%s205 + $0x10] sm:$0xff] %vm405, %v1544
        %1553 = vst.msk [vmem:[%s205 + $0x18] sm:$0xff] %vm405, %v1545
        %1554 = vst.msk [vmem:[%s205 + $0x20] sm:$0xff] %vm405, %v1546
        %1555 = vst.msk [vmem:[%s205 + $0x28] sm:$0xff] %vm405, %v1547
        %1556 = vst.msk [vmem:[%s205 + $0x30] sm:$0xff] %vm405, %v1548
        %1557 = vst.msk [vmem:[%s205 + $0x38] sm:$0xff] %vm405, %v1549
        %s1558 = sand.u32 %s120, 1
        %s1559 = scalar_lea.sflag [#allocation3], %s1558
        %s1560 = sand.u32 %s120, 1
        %s1561 = smul.addr %s1560, 64
        %s1562 = scalar_lea.vmem [#allocation2], %s1561
        // Predicated region
        $region37: #{residual_swin_block.41} parent=35 // pred_check
          %p1563 = pneg %p130
        $region38: #{residual_swin_block.41} parent=35 // pred_check_branch
          %1565 = sbr.rel (%p1563) target = $region40
        $region39: #{residual_swin_block.41} parent=35 // pred_region
          %s1567 = ssub.s32 1024, 1024
          %1568 = vsyncadd %s1559, %s1567
          %s1569 = smul.addr %s18, 8
          %s1570 = smul.addr %s1569, 128
          %s1571 = scalar_lea.hbm %s4, %s1570
          %s1572 = sshll.u32 %s1562, 4
          %s1573 = int_to_ptr.vmem [resolvable:$true] %s1572
          %1578 = dma.vmem_to_hbm [thread:$0]  %s1573, 1024, %s1571, %s1559, 128, 128, 8
        $region40: #{residual_swin_block.41} parent=35 // pred_fallthru
          _
      $region36: #{residual_swin_block.41} parent=5 // pred_fallthru
        _
      %p1579 = scmp.le.s32.totalorder 2, %s13
      // Predicated region
      $region41: #{residual_swin_block.41} parent=5 // pred_check
        %p1580 = pneg %p1579
      $region42: #{residual_swin_block.41} parent=5 // pred_check_branch
        %1582 = sbr.rel (%p1580) target = $region44
      $region43: #{residual_swin_block.41} parent=5 // pred_region
        %s1583 = ssub.s32 %s13, 2
        // Predicated region
        $region45: #{residual_swin_block.41} parent=43 // pred_check
          %p1584 = pneg %p136
        $region46: #{residual_swin_block.41} parent=43 // pred_check_branch
          %1586 = sbr.rel (%p1584) target = $region48
        $region47: #{residual_swin_block.41} parent=43 // pred_region
          %s1587 = sand.u32 %s121, 1
          %s1588 = scalar_lea.sflag [#allocation3], %s1587
          %s1589 = sand.u32 %s121, 1
          %s1590 = smul.addr %s1589, 64
          %s1591 = scalar_lea.vmem [#allocation2], %s1590
          %1592 = dma.done %s1588, 1024
        $region48: #{residual_swin_block.41} parent=43 // pred_fallthru
          _
      $region44: #{residual_swin_block.41} parent=5 // pred_fallthru
        _
    $region6: #{residual_swin_block.41} parent=1 // loop_footer
      %s17 = sadd.s32 1, %s13
    $region7: #{residual_swin_block.41} parent=1 // loop_footer_branch
      %12 = sbr.rel target = $region3
    $region8: #{residual_swin_block.41} parent=1 // loop_exit
      _
    %1593 = vsyncpa [#allocation3], 1
    %s1594 = scalar_lea.sflag [#allocation3], 1
    %1595 = vsyncpa %s1594, 1

</llo_original>
